<compile_context>
chip_gen: v6e
topology: v6e:2x2x1
jax: 0.10.0
libtpu: 0.0.40
codegen_flags: <defaults>
</compile_context>

<pallas_src>
import functools

import jax
import jax.numpy as jnp
import numpy as np
from jax.experimental import pallas as pl
from jax.experimental.pallas import tpu as pltpu

EPS = 1e-5  # BatchNorm1d eps (training-mode batch statistics, biased var)


def _make_kernel(K, D, b, b_bar, c, sigma, b_f, b_f_bar, c_f, precision):
    coef = -c / c_f

    def kernel(scal_ref, dW_ref, x0_ref, v0_ref, g0_ref,
               W1_ref, W2_ref, W3_ref, P_ref,
               v_out_ref, x_out_ref, path_ref, grad_ref):
        g = pl.program_id(0)

        # Seed the carried (resident) output blocks on the first time block.
        @pl.when(g == 0)
        def _seed():
            x_out_ref[...] = x0_ref[...]
            v_out_ref[...] = jnp.broadcast_to(v0_ref[...], x0_ref.shape)

        x = x_out_ref[...]
        v = v_out_ref[...]

        for j in range(K):            # fully unrolled; K is small and static
            i = g * K + j             # global timestep index
            h = scal_ref[0, i]        # timegrid[i+1] - timegrid[i]
            xbar_i = scal_ref[1, i]   # x_bar[i]
            xbar_im1 = scal_ref[2, i] # x_bar[i-1] (python wrap-around at i==0)
            eta_i = scal_ref[3, i]    # eta[i]
            xi = dW_ref[j]            # (B, D) Brownian increment

            # grad network: (Linear -> BatchNorm(batch stats) -> ReLU) x2 -> Linear
            h1 = jnp.dot(x, W1_ref[j], preferred_element_type=jnp.float32,
                         precision=precision) + P_ref[j, 0:1, :]
            mu = jnp.mean(h1, axis=0, keepdims=True)
            var = jnp.mean((h1 - mu) ** 2, axis=0, keepdims=True)
            h1 = jnp.maximum((h1 - mu) * jax.lax.rsqrt(var + EPS)
                             * P_ref[j, 1:2, :] + P_ref[j, 2:3, :], 0.0)

            h2 = jnp.dot(h1, W2_ref[j], preferred_element_type=jnp.float32,
                         precision=precision) + P_ref[j, 3:4, :]
            mu = jnp.mean(h2, axis=0, keepdims=True)
            var = jnp.mean((h2 - mu) ** 2, axis=0, keepdims=True)
            h2 = jnp.maximum((h2 - mu) * jax.lax.rsqrt(var + EPS)
                             * P_ref[j, 4:5, :] + P_ref[j, 5:6, :], 0.0)

            b3_row = P_ref[j, 6:7, :]           # (1, H); first D lanes hold b3
            grad = jnp.dot(h2, W3_ref[j], preferred_element_type=jnp.float32,
                           precision=precision) + b3_row[:, :D]

            if j == 0:
                # Only global step 0 uses the learned grad_v0 parameter.
                grad = jnp.where(g == 0,
                                 jnp.broadcast_to(g0_ref[...], x.shape), grad)

            alpha = coef * grad
            f = (0.5 * (b_f * x - b_f_bar * xbar_i - eta_i) ** 2
                 + 0.5 * c_f * alpha * alpha)
            v = v - f * h + (sigma * grad) * xi
            x = x + (b * x + b_bar * xbar_im1 + c * alpha) * h + sigma * xi

            path_ref[j] = x
            grad_ref[j] = grad

        x_out_ref[...] = x
        v_out_ref[...] = v

    return kernel


def net_stacked_major_forward(x0, dW, params, timegrid, x_bar, eta, consts,
                              block_steps=8,
                              precision=jax.lax.Precision.HIGHEST):
    """Returns (v, x_final, path, grad_path, dW) matching the torch forward."""
    b, b_bar, c, sigma, b_f, b_f_bar, c_f = consts
    (v0, grad_v0, W1, b1, gam1, bet1, W2, b2, gam2, bet2, W3, b3) = params

    T = int(timegrid.shape[0])
    n_steps = T - 1
    B, D = x0.shape
    H = D + 10

    K = max(1, min(int(block_steps), n_steps))
    n_blocks = -(-n_steps // K)
    n_pad = n_blocks * K

    # per-step scalars packed long-axis-last for SMEM: rows = [h, xbar_i, xbar_{i-1}, eta_i]
    hs = timegrid[1:] - timegrid[:-1]
    scal = jnp.stack([hs, x_bar, jnp.roll(x_bar, 1), eta], axis=0)
    scal = jnp.pad(scal.astype(jnp.float32), ((0, 0), (0, n_pad - n_steps)))

    # dummy tail steps: h = 0, xi = 0  ->  x, v are unchanged (pure no-ops)
    dW_p = jnp.pad(dW.astype(jnp.float32),
                   ((0, n_pad - n_steps), (0, 0), (0, 0)))

    def pad_nets(w):
        # (n_nets, ...) -> (n_pad, ...): dummy (zero) net at index 0 (global step 0
        # has no net) and zero nets in the tail, so padded index == global step.
        return jnp.pad(
            w, ((1, n_pad - 1 - w.shape[0]),) + ((0, 0),) * (w.ndim - 1))

    W1p = pad_nets(W1)
    W2p = pad_nets(W2)
    W3p = pad_nets(W3)

    # pack small per-step params into one (n_pad, 8, H) tensor:
    # rows: [b1, gamma1, beta1, b2, gamma2, beta2, b3(padded to H), 0]
    b3_pad = jnp.pad(b3, ((0, 0), (0, 0), (0, H - D)))
    P = jnp.concatenate(
        [b1, gam1, bet1, b2, gam2, bet2, b3_pad, jnp.zeros_like(b1)], axis=1)
    Pp = pad_nets(P)

    tmap = lambda g: (g, 0, 0)
    cmap2 = lambda g: (0, 0)

    grid_spec = pltpu.PrefetchScalarGridSpec(
        num_scalar_prefetch=0,
        grid=(n_blocks,),
        in_specs=[
            pl.BlockSpec(memory_space=pltpu.MemorySpace.SMEM),   # scal (4, n_pad)
            pl.BlockSpec((K, B, D), tmap),                       # dW
            pl.BlockSpec((B, D), cmap2),                         # x0
            pl.BlockSpec((1, D), cmap2),                         # v0
            pl.BlockSpec((1, D), cmap2),                         # grad_v0
            pl.BlockSpec((K, D, H), tmap),                       # W1 stack
            pl.BlockSpec((K, H, H), tmap),                       # W2 stack
            pl.BlockSpec((K, H, D), tmap),                       # W3 stack
            pl.BlockSpec((K, 8, H), tmap),                       # packed small params
        ],
        out_specs=[
            pl.BlockSpec((B, D), cmap2),                         # v (carried)
            pl.BlockSpec((B, D), cmap2),                         # x final (carried)
            pl.BlockSpec((K, B, D), tmap),                       # path tail
            pl.BlockSpec((K, B, D), tmap),                       # grad path
        ],
    )

    out_shapes = (
        jax.ShapeDtypeStruct((B, D), jnp.float32),
        jax.ShapeDtypeStruct((B, D), jnp.float32),
        jax.ShapeDtypeStruct((n_pad, B, D), jnp.float32),
        jax.ShapeDtypeStruct((n_pad, B, D), jnp.float32),
    )

    kernel = _make_kernel(K, D, b, b_bar, c, sigma, b_f, b_f_bar, c_f, precision)
    v, x_final, path_tail, grad_path = pl.pallas_call(
        kernel,
        out_shape=out_shapes,
        grid_spec=grid_spec,
        compiler_params=pltpu.CompilerParams(
            dimension_semantics=("arbitrary",)),
    )(scal, dW_p, x0,
      v0.reshape(1, D), grad_v0.reshape(1, D),
      W1p, W2p, W3p, Pp)

    # path includes the initial state, like the torch `path = [x]` + appends
    path = jnp.concatenate([x0[None], path_tail[:n_steps]], axis=0)
    # TODO(synk): torch's grad_path[0] is the raw (dim,) parameter; here it is
    # returned broadcast to (batch, dim) for a homogeneous stacked output.
    return v, x_final, path, grad_path[:n_steps], dW


# ---------------- pure-JAX reference for validation ----------------
def reference_forward(x0, dW, params, timegrid, x_bar, eta, consts):
    b, b_bar, c, sigma, b_f, b_f_bar, c_f = consts
    (v0, grad_v0, W1, b1, gam1, bet1, W2, b2, gam2, bet2, W3, b3) = params
    x = x0
    n_steps = timegrid.shape[0] - 1
    v = None
    path = [x0]
    grads = []
    for i in range(n_steps):
        h = timegrid[i + 1] - timegrid[i]
        xi = dW[i]
        if i == 0:
            grad = jnp.broadcast_to(grad_v0[None, :], x.shape)
            alpha = -c / c_f * grad
            f = 0.5 * (b_f * x - b_f_bar * x_bar[i] - eta[i]) ** 2 + 0.5 * c_f * alpha ** 2
            v = v0[None, :] - f * h + grad_v0[None, :] * sigma * xi
        else:
            j = i - 1
            h1 = x @ W1[j] + b1[j]
            mu = h1.mean(0, keepdims=True)
            var = ((h1 - mu) ** 2).mean(0, keepdims=True)
            h1 = jnp.maximum((h1 - mu) / jnp.sqrt(var + EPS) * gam1[j] + bet1[j], 0.0)
            h2 = h1 @ W2[j] + b2[j]
            mu = h2.mean(0, keepdims=True)
            var = ((h2 - mu) ** 2).mean(0, keepdims=True)
            h2 = jnp.maximum((h2 - mu) / jnp.sqrt(var + EPS) * gam2[j] + bet2[j], 0.0)
            grad = h2 @ W3[j] + b3[j]
            alpha = -c / c_f * grad
            f = 0.5 * (b_f * x - b_f_bar * x_bar[i] - eta[i]) ** 2 + 0.5 * c_f * alpha ** 2
            v = v - f * h + grad * sigma * xi
        grads.append(grad)
        x = x + (b * x + b_bar * x_bar[i - 1] + c * alpha) * h + sigma * xi  # [-1] wraps, as in torch
        path.append(x)
    return v, x, jnp.stack(path), jnp.stack(grads)


if __name__ == "__main__":
    key = jax.random.PRNGKey(0)
    B, D = 8, 16
    H = D + 10
    T = 6                     # timegrid points -> 5 SDE steps, 4 per-step nets
    n_steps, n_nets = T - 1, T - 2

    timegrid = jnp.linspace(0.0, 1.0, T).astype(jnp.float32)
    hs = timegrid[1:] - timegrid[:-1]

    # model constants
    b_c, b_bar_c, c_c, sigma_c = 0.5, 0.3, 0.8, 1.0
    b_f_c, b_f_bar_c, c_f_c = 0.6, 0.2, 0.9
    consts = (b_c, b_bar_c, c_c, sigma_c, b_f_c, b_f_bar_c, c_f_c)

    keys = jax.random.split(key, 12)
    x_bar = 0.5 * jax.random.normal(keys[0], (n_steps,), jnp.float32)
    eta = 0.5 * jax.random.normal(keys[1], (n_steps,), jnp.float32)

    v0 = jax.random.normal(keys[2], (D,), jnp.float32)
    grad_v0 = jax.random.normal(keys[3], (D,), jnp.float32)
    W1 = 0.3 * jax.random.normal(keys[4], (n_nets, D, H), jnp.float32)
    b1 = 0.1 * jax.random.normal(keys[5], (n_nets, 1, H), jnp.float32)
    gam1 = jnp.ones((n_nets, 1, H), jnp.float32)
    bet1 = jnp.zeros((n_nets, 1, H), jnp.float32)
    W2 = 0.3 * jax.random.normal(keys[6], (n_nets, H, H), jnp.float32)
    b2 = 0.1 * jax.random.normal(keys[7], (n_nets, 1, H), jnp.float32)
    gam2 = jnp.ones((n_nets, 1, H), jnp.float32)
    bet2 = jnp.zeros((n_nets, 1, H), jnp.float32)
    W3 = 0.3 * jax.random.normal(keys[8], (n_nets, H, D), jnp.float32)
    b3 = 0.1 * jax.random.normal(keys[9], (n_nets, 1, D), jnp.float32)
    params = (v0, grad_v0, W1, b1, gam1, bet1, W2, b2, gam2, bet2, W3, b3)

    x0 = jax.random.normal(keys[10], (B, D), jnp.float32)
    # Brownian increments: sqrt(h) * N(0,1), pre-sampled deterministically
    # (torch samples them inside forward; here they are an explicit input).
    dW = jnp.sqrt(hs)[:, None, None] * jax.random.normal(
        keys[11], (n_steps, B, D), jnp.float32)

    v_r, x_r, path_r, grad_r = reference_forward(
        x0, dW, params, timegrid, x_bar, eta, consts)

    # block_steps=8 -> single time block; block_steps=2 -> multi-block grid with
    # a padded dummy tail step (exercises the cross-block x/v carry + padding).
    for bs in (8, 2):
        v, x_final, path, grad_path, dW_out = jax.block_until_ready(
            net_stacked_major_forward(x0, dW, params, timegrid, x_bar, eta,
                                      consts, block_steps=bs))
        np.testing.assert_allclose(np.asarray(v), np.asarray(v_r),
                                   rtol=1e-3, atol=1e-3)
        np.testing.assert_allclose(np.asarray(x_final), np.asarray(x_r),
                                   rtol=1e-3, atol=1e-3)
        np.testing.assert_allclose(np.asarray(path), np.asarray(path_r),
                                   rtol=1e-3, atol=1e-3)
        np.testing.assert_allclose(np.asarray(grad_path), np.asarray(grad_r),
                                   rtol=1e-3, atol=1e-3)

    print("KERNEL_OK")
</pallas_src>

<mosaic_0001>
module attributes {stable_mosaic.version = 11 : i64} {
  func.func @kernel(%arg0: i32, %arg1: memref<4x5xf32, #tpu.memory_space<smem>>, %arg2: memref<5x8x16xf32, #tpu.memory_space<vmem>>, %arg3: memref<8x16xf32, #tpu.memory_space<vmem>>, %arg4: memref<1x16xf32, #tpu.memory_space<vmem>>, %arg5: memref<1x16xf32, #tpu.memory_space<vmem>>, %arg6: memref<5x16x26xf32, #tpu.memory_space<vmem>>, %arg7: memref<5x26x26xf32, #tpu.memory_space<vmem>>, %arg8: memref<5x26x16xf32, #tpu.memory_space<vmem>>, %arg9: memref<5x8x26xf32, #tpu.memory_space<vmem>>, %arg10: memref<8x16xf32, #tpu.memory_space<vmem>>, %arg11: memref<8x16xf32, #tpu.memory_space<vmem>>, %arg12: memref<5x8x16xf32, #tpu.memory_space<vmem>>, %arg13: memref<5x8x16xf32, #tpu.memory_space<vmem>>) attributes {dimension_semantics = [#tpu.dimension_semantics<arbitrary>], iteration_bounds = array<i64: 1>, scalar_prefetch = 0 : i64, scratch_operands = 0 : i64, tpu.core_type = #tpu.core_type<tc>, window_params = [{transform_indices = @transform_0, window_bounds = array<i64: 4, 5>}, {transform_indices = @transform_1, window_bounds = array<i64: 5, 8, 16>}, {pipeline_mode = #tpu.pipeline_mode<synchronous>, transform_indices = @transform_2, window_bounds = array<i64: 8, 16>}, {pipeline_mode = #tpu.pipeline_mode<synchronous>, transform_indices = @transform_3, window_bounds = array<i64: 1, 16>}, {pipeline_mode = #tpu.pipeline_mode<synchronous>, transform_indices = @transform_4, window_bounds = array<i64: 1, 16>}, {transform_indices = @transform_5, window_bounds = array<i64: 5, 16, 26>}, {transform_indices = @transform_6, window_bounds = array<i64: 5, 26, 26>}, {transform_indices = @transform_7, window_bounds = array<i64: 5, 26, 16>}, {transform_indices = @transform_8, window_bounds = array<i64: 5, 8, 26>}, {pipeline_mode = #tpu.pipeline_mode<synchronous>, transform_indices = @transform_9, window_bounds = array<i64: 8, 16>}, {pipeline_mode = #tpu.pipeline_mode<synchronous>, transform_indices = @transform_10, window_bounds = array<i64: 8, 16>}, {transform_indices = @transform_11, window_bounds = array<i64: 5, 8, 16>}, {transform_indices = @transform_12, window_bounds = array<i64: 5, 8, 16>}]} {
    %c0_i32 = arith.constant 0 : i32
    %0 = arith.cmpi eq, %arg0, %c0_i32 : i32
    %1 = arith.extui %0 : i1 to i32
    %c0_i32_0 = arith.constant 0 : i32
    %2 = arith.cmpi ne, %1, %c0_i32_0 : i32
    scf.if %2 {
      %c0_349 = arith.constant 0 : index
      %c0_350 = arith.constant 0 : index
      %677 = vector.load %arg3[%c0_349, %c0_350] : memref<8x16xf32, #tpu.memory_space<vmem>>, vector<8x16xf32>
      %c0_351 = arith.constant 0 : index
      %c0_352 = arith.constant 0 : index
      %678 = vector.load %arg11[%c0_351, %c0_352] : memref<8x16xf32, #tpu.memory_space<vmem>>, vector<8x16xf32>
      tpu.vector_store %arg11[%c0_351, %c0_352], %677 {strides = array<i32>} : memref<8x16xf32, #tpu.memory_space<vmem>>, vector<8x16xf32>,
      %c0_353 = arith.constant 0 : index
      %c0_354 = arith.constant 0 : index
      %679 = vector.load %arg4[%c0_353, %c0_354] : memref<1x16xf32, #tpu.memory_space<vmem>>, vector<1x16xf32>
      %680 = vector.shape_cast %679 : vector<1x16xf32> to vector<1x16xf32>
      %681 = vector.broadcast %680 : vector<1x16xf32> to vector<8x16xf32>
      %c0_355 = arith.constant 0 : index
      %c0_356 = arith.constant 0 : index
      %682 = vector.load %arg10[%c0_355, %c0_356] : memref<8x16xf32, #tpu.memory_space<vmem>>, vector<8x16xf32>
      tpu.vector_store %arg10[%c0_355, %c0_356], %681 {strides = array<i32>} : memref<8x16xf32, #tpu.memory_space<vmem>>, vector<8x16xf32>,
    } else {
    }
    %c0 = arith.constant 0 : index
    %c0_1 = arith.constant 0 : index
    %3 = vector.load %arg11[%c0, %c0_1] : memref<8x16xf32, #tpu.memory_space<vmem>>, vector<8x16xf32>
    %c0_2 = arith.constant 0 : index
    %c0_3 = arith.constant 0 : index
    %4 = vector.load %arg10[%c0_2, %c0_3] : memref<8x16xf32, #tpu.memory_space<vmem>>, vector<8x16xf32>
    %c5_i32 = arith.constant 5 : i32
    %5 = arith.muli %arg0, %c5_i32 : i32
    %c0_i32_4 = arith.constant 0 : i32
    %6 = arith.addi %5, %c0_i32_4 : i32
    %c0_5 = arith.constant 0 : index
    %7 = arith.index_cast %6 : i32 to index
    %8 = memref.load %arg1[%c0_5, %7] : memref<4x5xf32, #tpu.memory_space<smem>>
    %c1 = arith.constant 1 : index
    %9 = arith.index_cast %6 : i32 to index
    %10 = memref.load %arg1[%c1, %9] : memref<4x5xf32, #tpu.memory_space<smem>>
    %c2 = arith.constant 2 : index
    %11 = arith.index_cast %6 : i32 to index
    %12 = memref.load %arg1[%c2, %11] : memref<4x5xf32, #tpu.memory_space<smem>>
    %c3 = arith.constant 3 : index
    %13 = arith.index_cast %6 : i32 to index
    %14 = memref.load %arg1[%c3, %13] : memref<4x5xf32, #tpu.memory_space<smem>>
    %c0_6 = arith.constant 0 : index
    %c0_7 = arith.constant 0 : index
    %c0_8 = arith.constant 0 : index
    %15 = vector.load %arg2[%c0_6, %c0_7, %c0_8] : memref<5x8x16xf32, #tpu.memory_space<vmem>>, vector<1x8x16xf32>
    %16 = vector.shape_cast %15 : vector<1x8x16xf32> to vector<8x16xf32>
    %c0_9 = arith.constant 0 : index
    %c0_10 = arith.constant 0 : index
    %c0_11 = arith.constant 0 : index
    %17 = vector.load %arg6[%c0_9, %c0_10, %c0_11] : memref<5x16x26xf32, #tpu.memory_space<vmem>>, vector<1x16x26xf32>
    %18 = vector.shape_cast %17 : vector<1x16x26xf32> to vector<16x26xf32>
    %cst = arith.constant dense<0.000000e+00> : vector<8x26xf32>
    %19 = tpu.matmul %3, %18, %cst {dimension_numbers = #tpu.dot_dimension_numbers<[1], [0], [0], [1], [0, 0, 1, 1], [], []>, precision = #tpu.contract_precision<fp32>} : vector<8x16xf32>, vector<16x26xf32>, vector<8x26xf32> -> vector<8x26xf32>
    %c0_12 = arith.constant 0 : index
    %c0_13 = arith.constant 0 : index
    %c0_14 = arith.constant 0 : index
    %20 = vector.load %arg9[%c0_12, %c0_13, %c0_14] : memref<5x8x26xf32, #tpu.memory_space<vmem>>, vector<1x1x26xf32>
    %21 = vector.shape_cast %20 : vector<1x1x26xf32> to vector<1x26xf32>
    %22 = vector.broadcast %21 : vector<1x26xf32> to vector<8x26xf32>
    %23 = arith.addf %19, %22 : vector<8x26xf32>
    %cst_15 = arith.constant dense<0.000000e+00> : vector<26xf32>
    %24 = vector.multi_reduction <add>, %23, %cst_15 [0] : vector<8x26xf32> to vector<26xf32>
    %25 = vector.shape_cast %24 : vector<26xf32> to vector<1x26xf32>
    %cst_16 = arith.constant 8.000000e+00 : f32
    %26 = vector.broadcast %cst_16 : f32 to vector<1x26xf32>
    %27 = arith.divf %25, %26 : vector<1x26xf32>
    %28 = vector.broadcast %27 : vector<1x26xf32> to vector<8x26xf32>
    %29 = arith.subf %23, %28 : vector<8x26xf32>
    %30 = arith.mulf %29, %29 : vector<8x26xf32>
    %cst_17 = arith.constant dense<0.000000e+00> : vector<26xf32>
    %31 = vector.multi_reduction <add>, %30, %cst_17 [0] : vector<8x26xf32> to vector<26xf32>
    %32 = vector.shape_cast %31 : vector<26xf32> to vector<1x26xf32>
    %cst_18 = arith.constant 8.000000e+00 : f32
    %33 = vector.broadcast %cst_18 : f32 to vector<1x26xf32>
    %34 = arith.divf %32, %33 : vector<1x26xf32>
    %35 = vector.broadcast %27 : vector<1x26xf32> to vector<8x26xf32>
    %36 = arith.subf %23, %35 : vector<8x26xf32>
    %cst_19 = arith.constant 9.99999974E-6 : f32
    %37 = vector.broadcast %cst_19 : f32 to vector<1x26xf32>
    %38 = arith.addf %34, %37 : vector<1x26xf32>
    %39 = math.rsqrt %38 : vector<1x26xf32>
    %40 = vector.broadcast %39 : vector<1x26xf32> to vector<8x26xf32>
    %41 = arith.mulf %36, %40 : vector<8x26xf32>
    %c0_20 = arith.constant 0 : index
    %c1_21 = arith.constant 1 : index
    %c0_22 = arith.constant 0 : index
    %42 = vector.load %arg9[%c0_20, %c1_21, %c0_22] : memref<5x8x26xf32, #tpu.memory_space<vmem>>, vector<1x1x26xf32>
    %43 = vector.shape_cast %42 : vector<1x1x26xf32> to vector<1x26xf32>
    %44 = vector.broadcast %43 : vector<1x26xf32> to vector<8x26xf32>
    %45 = arith.mulf %41, %44 : vector<8x26xf32>
    %c0_23 = arith.constant 0 : index
    %c2_24 = arith.constant 2 : index
    %c0_25 = arith.constant 0 : index
    %46 = vector.load %arg9[%c0_23, %c2_24, %c0_25] : memref<5x8x26xf32, #tpu.memory_space<vmem>>, vector<1x1x26xf32>
    %47 = vector.shape_cast %46 : vector<1x1x26xf32> to vector<1x26xf32>
    %48 = vector.broadcast %47 : vector<1x26xf32> to vector<8x26xf32>
    %49 = arith.addf %45, %48 : vector<8x26xf32>
    %cst_26 = arith.constant 0.000000e+00 : f32
    %50 = vector.broadcast %cst_26 : f32 to vector<8x26xf32>
    %51 = arith.maximumf %49, %50 : vector<8x26xf32>
    %c0_27 = arith.constant 0 : index
    %c0_28 = arith.constant 0 : index
    %c0_29 = arith.constant 0 : index
    %52 = vector.load %arg7[%c0_27, %c0_28, %c0_29] : memref<5x26x26xf32, #tpu.memory_space<vmem>>, vector<1x26x26xf32>
    %53 = vector.shape_cast %52 : vector<1x26x26xf32> to vector<26x26xf32>
    %cst_30 = arith.constant dense<0.000000e+00> : vector<8x26xf32>
    %54 = tpu.matmul %51, %53, %cst_30 {dimension_numbers = #tpu.dot_dimension_numbers<[1], [0], [0], [1], [0, 0, 1, 1], [], []>, precision = #tpu.contract_precision<fp32>} : vector<8x26xf32>, vector<26x26xf32>, vector<8x26xf32> -> vector<8x26xf32>
    %c0_31 = arith.constant 0 : index
    %c3_32 = arith.constant 3 : index
    %c0_33 = arith.constant 0 : index
    %55 = vector.load %arg9[%c0_31, %c3_32, %c0_33] : memref<5x8x26xf32, #tpu.memory_space<vmem>>, vector<1x1x26xf32>
    %56 = vector.shape_cast %55 : vector<1x1x26xf32> to vector<1x26xf32>
    %57 = vector.broadcast %56 : vector<1x26xf32> to vector<8x26xf32>
    %58 = arith.addf %54, %57 : vector<8x26xf32>
    %cst_34 = arith.constant dense<0.000000e+00> : vector<26xf32>
    %59 = vector.multi_reduction <add>, %58, %cst_34 [0] : vector<8x26xf32> to vector<26xf32>
    %60 = vector.shape_cast %59 : vector<26xf32> to vector<1x26xf32>
    %cst_35 = arith.constant 8.000000e+00 : f32
    %61 = vector.broadcast %cst_35 : f32 to vector<1x26xf32>
    %62 = arith.divf %60, %61 : vector<1x26xf32>
    %63 = vector.broadcast %62 : vector<1x26xf32> to vector<8x26xf32>
    %64 = arith.subf %58, %63 : vector<8x26xf32>
    %65 = arith.mulf %64, %64 : vector<8x26xf32>
    %cst_36 = arith.constant dense<0.000000e+00> : vector<26xf32>
    %66 = vector.multi_reduction <add>, %65, %cst_36 [0] : vector<8x26xf32> to vector<26xf32>
    %67 = vector.shape_cast %66 : vector<26xf32> to vector<1x26xf32>
    %cst_37 = arith.constant 8.000000e+00 : f32
    %68 = vector.broadcast %cst_37 : f32 to vector<1x26xf32>
    %69 = arith.divf %67, %68 : vector<1x26xf32>
    %70 = vector.broadcast %62 : vector<1x26xf32> to vector<8x26xf32>
    %71 = arith.subf %58, %70 : vector<8x26xf32>
    %cst_38 = arith.constant 9.99999974E-6 : f32
    %72 = vector.broadcast %cst_38 : f32 to vector<1x26xf32>
    %73 = arith.addf %69, %72 : vector<1x26xf32>
    %74 = math.rsqrt %73 : vector<1x26xf32>
    %75 = vector.broadcast %74 : vector<1x26xf32> to vector<8x26xf32>
    %76 = arith.mulf %71, %75 : vector<8x26xf32>
    %c0_39 = arith.constant 0 : index
    %c4 = arith.constant 4 : index
    %c0_40 = arith.constant 0 : index
    %77 = vector.load %arg9[%c0_39, %c4, %c0_40] : memref<5x8x26xf32, #tpu.memory_space<vmem>>, vector<1x1x26xf32>
    %78 = vector.shape_cast %77 : vector<1x1x26xf32> to vector<1x26xf32>
    %79 = vector.broadcast %78 : vector<1x26xf32> to vector<8x26xf32>
    %80 = arith.mulf %76, %79 : vector<8x26xf32>
    %c0_41 = arith.constant 0 : index
    %c5 = arith.constant 5 : index
    %c0_42 = arith.constant 0 : index
    %81 = vector.load %arg9[%c0_41, %c5, %c0_42] : memref<5x8x26xf32, #tpu.memory_space<vmem>>, vector<1x1x26xf32>
    %82 = vector.shape_cast %81 : vector<1x1x26xf32> to vector<1x26xf32>
    %83 = vector.broadcast %82 : vector<1x26xf32> to vector<8x26xf32>
    %84 = arith.addf %80, %83 : vector<8x26xf32>
    %cst_43 = arith.constant 0.000000e+00 : f32
    %85 = vector.broadcast %cst_43 : f32 to vector<8x26xf32>
    %86 = arith.maximumf %84, %85 : vector<8x26xf32>
    %c0_44 = arith.constant 0 : index
    %c6 = arith.constant 6 : index
    %c0_45 = arith.constant 0 : index
    %87 = vector.load %arg9[%c0_44, %c6, %c0_45] : memref<5x8x26xf32, #tpu.memory_space<vmem>>, vector<1x1x26xf32>
    %88 = vector.shape_cast %87 : vector<1x1x26xf32> to vector<1x26xf32>
    %c0_46 = arith.constant 0 : index
    %c0_47 = arith.constant 0 : index
    %c0_48 = arith.constant 0 : index
    %89 = vector.load %arg8[%c0_46, %c0_47, %c0_48] : memref<5x26x16xf32, #tpu.memory_space<vmem>>, vector<1x26x16xf32>
    %90 = vector.shape_cast %89 : vector<1x26x16xf32> to vector<26x16xf32>
    %cst_49 = arith.constant dense<0.000000e+00> : vector<8x16xf32>
    %91 = tpu.matmul %86, %90, %cst_49 {dimension_numbers = #tpu.dot_dimension_numbers<[1], [0], [0], [1], [0, 0, 1, 1], [], []>, precision = #tpu.contract_precision<fp32>} : vector<8x26xf32>, vector<26x16xf32>, vector<8x16xf32> -> vector<8x16xf32>
    %92 = vector.extract_strided_slice %88 {offsets = [0, 0], sizes = [1, 16], strides = [1, 1]} : vector<1x26xf32> to vector<1x16xf32>
    %93 = vector.broadcast %92 : vector<1x16xf32> to vector<8x16xf32>
    %94 = arith.addf %91, %93 : vector<8x16xf32>
    %c0_i32_50 = arith.constant 0 : i32
    %95 = arith.cmpi eq, %arg0, %c0_i32_50 : i32
    %c0_51 = arith.constant 0 : index
    %c0_52 = arith.constant 0 : index
    %96 = vector.load %arg5[%c0_51, %c0_52] : memref<1x16xf32, #tpu.memory_space<vmem>>, vector<1x16xf32>
    %97 = vector.shape_cast %96 : vector<1x16xf32> to vector<1x16xf32>
    %98 = vector.broadcast %97 : vector<1x16xf32> to vector<8x16xf32>
    %99 = arith.select %95, %98, %94 : vector<8x16xf32>
    %cst_53 = arith.constant -0.888888895 : f32
    %100 = vector.broadcast %cst_53 : f32 to vector<8x16xf32>
    %101 = arith.mulf %100, %99 : vector<8x16xf32>
    %cst_54 = arith.constant 6.000000e-01 : f32
    %102 = vector.broadcast %cst_54 : f32 to vector<8x16xf32>
    %103 = arith.mulf %102, %3 : vector<8x16xf32>
    %cst_55 = arith.constant 2.000000e-01 : f32
    %104 = arith.mulf %cst_55, %10 : f32
    %105 = vector.broadcast %104 : f32 to vector<8x16xf32>
    %106 = arith.subf %103, %105 : vector<8x16xf32>
    %107 = vector.broadcast %14 : f32 to vector<8x16xf32>
    %108 = arith.subf %106, %107 : vector<8x16xf32>
    %109 = arith.mulf %108, %108 : vector<8x16xf32>
    %cst_56 = arith.constant 5.000000e-01 : f32
    %110 = vector.broadcast %cst_56 : f32 to vector<8x16xf32>
    %111 = arith.mulf %110, %109 : vector<8x16xf32>
    %cst_57 = arith.constant 4.500000e-01 : f32
    %112 = vector.broadcast %cst_57 : f32 to vector<8x16xf32>
    %113 = arith.mulf %112, %101 : vector<8x16xf32>
    %114 = arith.mulf %113, %101 : vector<8x16xf32>
    %115 = arith.addf %111, %114 : vector<8x16xf32>
    %116 = vector.broadcast %8 : f32 to vector<8x16xf32>
    %117 = arith.mulf %115, %116 : vector<8x16xf32>
    %118 = arith.subf %4, %117 : vector<8x16xf32>
    %cst_58 = arith.constant 1.000000e+00 : f32
    %119 = vector.broadcast %cst_58 : f32 to vector<8x16xf32>
    %120 = arith.mulf %119, %99 : vector<8x16xf32>
    %121 = arith.mulf %120, %16 : vector<8x16xf32>
    %122 = arith.addf %118, %121 : vector<8x16xf32>
    %cst_59 = arith.constant 5.000000e-01 : f32
    %123 = vector.broadcast %cst_59 : f32 to vector<8x16xf32>
    %124 = arith.mulf %123, %3 : vector<8x16xf32>
    %cst_60 = arith.constant 3.000000e-01 : f32
    %125 = arith.mulf %cst_60, %12 : f32
    %126 = vector.broadcast %125 : f32 to vector<8x16xf32>
    %127 = arith.addf %124, %126 : vector<8x16xf32>
    %cst_61 = arith.constant 8.000000e-01 : f32
    %128 = vector.broadcast %cst_61 : f32 to vector<8x16xf32>
    %129 = arith.mulf %128, %101 : vector<8x16xf32>
    %130 = arith.addf %127, %129 : vector<8x16xf32>
    %131 = vector.broadcast %8 : f32 to vector<8x16xf32>
    %132 = arith.mulf %130, %131 : vector<8x16xf32>
    %133 = arith.addf %3, %132 : vector<8x16xf32>
    %cst_62 = arith.constant 1.000000e+00 : f32
    %134 = vector.broadcast %cst_62 : f32 to vector<8x16xf32>
    %135 = arith.mulf %134, %16 : vector<8x16xf32>
    %136 = arith.addf %133, %135 : vector<8x16xf32>
    %c0_63 = arith.constant 0 : index
    %c0_64 = arith.constant 0 : index
    %c0_65 = arith.constant 0 : index
    %137 = vector.load %arg12[%c0_63, %c0_64, %c0_65] : memref<5x8x16xf32, #tpu.memory_space<vmem>>, vector<1x8x16xf32>
    %138 = vector.shape_cast %137 : vector<1x8x16xf32> to vector<8x16xf32>
    %139 = vector.shape_cast %136 : vector<8x16xf32> to vector<1x8x16xf32>
    tpu.vector_store %arg12[%c0_63, %c0_64, %c0_65], %139 {strides = array<i32>} : memref<5x8x16xf32, #tpu.memory_space<vmem>>, vector<1x8x16xf32>,
    %c0_66 = arith.constant 0 : index
    %c0_67 = arith.constant 0 : index
    %c0_68 = arith.constant 0 : index
    %140 = vector.load %arg13[%c0_66, %c0_67, %c0_68] : memref<5x8x16xf32, #tpu.memory_space<vmem>>, vector<1x8x16xf32>
    %141 = vector.shape_cast %140 : vector<1x8x16xf32> to vector<8x16xf32>
    %142 = vector.shape_cast %99 : vector<8x16xf32> to vector<1x8x16xf32>
    tpu.vector_store %arg13[%c0_66, %c0_67, %c0_68], %142 {strides = array<i32>} : memref<5x8x16xf32, #tpu.memory_space<vmem>>, vector<1x8x16xf32>,
    %c5_i32_69 = arith.constant 5 : i32
    %143 = arith.muli %arg0, %c5_i32_69 : i32
    %c1_i32 = arith.constant 1 : i32
    %144 = arith.addi %143, %c1_i32 : i32
    %c0_70 = arith.constant 0 : index
    %145 = arith.index_cast %144 : i32 to index
    %146 = memref.load %arg1[%c0_70, %145] : memref<4x5xf32, #tpu.memory_space<smem>>
    %c1_71 = arith.constant 1 : index
    %147 = arith.index_cast %144 : i32 to index
    %148 = memref.load %arg1[%c1_71, %147] : memref<4x5xf32, #tpu.memory_space<smem>>
    %c2_72 = arith.constant 2 : index
    %149 = arith.index_cast %144 : i32 to index
    %150 = memref.load %arg1[%c2_72, %149] : memref<4x5xf32, #tpu.memory_space<smem>>
    %c3_73 = arith.constant 3 : index
    %151 = arith.index_cast %144 : i32 to index
    %152 = memref.load %arg1[%c3_73, %151] : memref<4x5xf32, #tpu.memory_space<smem>>
    %c1_74 = arith.constant 1 : index
    %c0_75 = arith.constant 0 : index
    %c0_76 = arith.constant 0 : index
    %153 = vector.load %arg2[%c1_74, %c0_75, %c0_76] : memref<5x8x16xf32, #tpu.memory_space<vmem>>, vector<1x8x16xf32>
    %154 = vector.shape_cast %153 : vector<1x8x16xf32> to vector<8x16xf32>
    %c1_77 = arith.constant 1 : index
    %c0_78 = arith.constant 0 : index
    %c0_79 = arith.constant 0 : index
    %155 = vector.load %arg6[%c1_77, %c0_78, %c0_79] : memref<5x16x26xf32, #tpu.memory_space<vmem>>, vector<1x16x26xf32>
    %156 = vector.shape_cast %155 : vector<1x16x26xf32> to vector<16x26xf32>
    %cst_80 = arith.constant dense<0.000000e+00> : vector<8x26xf32>
    %157 = tpu.matmul %136, %156, %cst_80 {dimension_numbers = #tpu.dot_dimension_numbers<[1], [0], [0], [1], [0, 0, 1, 1], [], []>, precision = #tpu.contract_precision<fp32>} : vector<8x16xf32>, vector<16x26xf32>, vector<8x26xf32> -> vector<8x26xf32>
    %c1_81 = arith.constant 1 : index
    %c0_82 = arith.constant 0 : index
    %c0_83 = arith.constant 0 : index
    %158 = vector.load %arg9[%c1_81, %c0_82, %c0_83] : memref<5x8x26xf32, #tpu.memory_space<vmem>>, vector<1x1x26xf32>
    %159 = vector.shape_cast %158 : vector<1x1x26xf32> to vector<1x26xf32>
    %160 = vector.broadcast %159 : vector<1x26xf32> to vector<8x26xf32>
    %161 = arith.addf %157, %160 : vector<8x26xf32>
    %cst_84 = arith.constant dense<0.000000e+00> : vector<26xf32>
    %162 = vector.multi_reduction <add>, %161, %cst_84 [0] : vector<8x26xf32> to vector<26xf32>
    %163 = vector.shape_cast %162 : vector<26xf32> to vector<1x26xf32>
    %cst_85 = arith.constant 8.000000e+00 : f32
    %164 = vector.broadcast %cst_85 : f32 to vector<1x26xf32>
    %165 = arith.divf %163, %164 : vector<1x26xf32>
    %166 = vector.broadcast %165 : vector<1x26xf32> to vector<8x26xf32>
    %167 = arith.subf %161, %166 : vector<8x26xf32>
    %168 = arith.mulf %167, %167 : vector<8x26xf32>
    %cst_86 = arith.constant dense<0.000000e+00> : vector<26xf32>
    %169 = vector.multi_reduction <add>, %168, %cst_86 [0] : vector<8x26xf32> to vector<26xf32>
    %170 = vector.shape_cast %169 : vector<26xf32> to vector<1x26xf32>
    %cst_87 = arith.constant 8.000000e+00 : f32
    %171 = vector.broadcast %cst_87 : f32 to vector<1x26xf32>
    %172 = arith.divf %170, %171 : vector<1x26xf32>
    %173 = vector.broadcast %165 : vector<1x26xf32> to vector<8x26xf32>
    %174 = arith.subf %161, %173 : vector<8x26xf32>
    %cst_88 = arith.constant 9.99999974E-6 : f32
    %175 = vector.broadcast %cst_88 : f32 to vector<1x26xf32>
    %176 = arith.addf %172, %175 : vector<1x26xf32>
    %177 = math.rsqrt %176 : vector<1x26xf32>
    %178 = vector.broadcast %177 : vector<1x26xf32> to vector<8x26xf32>
    %179 = arith.mulf %174, %178 : vector<8x26xf32>
    %c1_89 = arith.constant 1 : index
    %c1_90 = arith.constant 1 : index
    %c0_91 = arith.constant 0 : index
    %180 = vector.load %arg9[%c1_89, %c1_90, %c0_91] : memref<5x8x26xf32, #tpu.memory_space<vmem>>, vector<1x1x26xf32>
    %181 = vector.shape_cast %180 : vector<1x1x26xf32> to vector<1x26xf32>
    %182 = vector.broadcast %181 : vector<1x26xf32> to vector<8x26xf32>
    %183 = arith.mulf %179, %182 : vector<8x26xf32>
    %c1_92 = arith.constant 1 : index
    %c2_93 = arith.constant 2 : index
    %c0_94 = arith.constant 0 : index
    %184 = vector.load %arg9[%c1_92, %c2_93, %c0_94] : memref<5x8x26xf32, #tpu.memory_space<vmem>>, vector<1x1x26xf32>
    %185 = vector.shape_cast %184 : vector<1x1x26xf32> to vector<1x26xf32>
    %186 = vector.broadcast %185 : vector<1x26xf32> to vector<8x26xf32>
    %187 = arith.addf %183, %186 : vector<8x26xf32>
    %cst_95 = arith.constant 0.000000e+00 : f32
    %188 = vector.broadcast %cst_95 : f32 to vector<8x26xf32>
    %189 = arith.maximumf %187, %188 : vector<8x26xf32>
    %c1_96 = arith.constant 1 : index
    %c0_97 = arith.constant 0 : index
    %c0_98 = arith.constant 0 : index
    %190 = vector.load %arg7[%c1_96, %c0_97, %c0_98] : memref<5x26x26xf32, #tpu.memory_space<vmem>>, vector<1x26x26xf32>
    %191 = vector.shape_cast %190 : vector<1x26x26xf32> to vector<26x26xf32>
    %cst_99 = arith.constant dense<0.000000e+00> : vector<8x26xf32>
    %192 = tpu.matmul %189, %191, %cst_99 {dimension_numbers = #tpu.dot_dimension_numbers<[1], [0], [0], [1], [0, 0, 1, 1], [], []>, precision = #tpu.contract_precision<fp32>} : vector<8x26xf32>, vector<26x26xf32>, vector<8x26xf32> -> vector<8x26xf32>
    %c1_100 = arith.constant 1 : index
    %c3_101 = arith.constant 3 : index
    %c0_102 = arith.constant 0 : index
    %193 = vector.load %arg9[%c1_100, %c3_101, %c0_102] : memref<5x8x26xf32, #tpu.memory_space<vmem>>, vector<1x1x26xf32>
    %194 = vector.shape_cast %193 : vector<1x1x26xf32> to vector<1x26xf32>
    %195 = vector.broadcast %194 : vector<1x26xf32> to vector<8x26xf32>
    %196 = arith.addf %192, %195 : vector<8x26xf32>
    %cst_103 = arith.constant dense<0.000000e+00> : vector<26xf32>
    %197 = vector.multi_reduction <add>, %196, %cst_103 [0] : vector<8x26xf32> to vector<26xf32>
    %198 = vector.shape_cast %197 : vector<26xf32> to vector<1x26xf32>
    %cst_104 = arith.constant 8.000000e+00 : f32
    %199 = vector.broadcast %cst_104 : f32 to vector<1x26xf32>
    %200 = arith.divf %198, %199 : vector<1x26xf32>
    %201 = vector.broadcast %200 : vector<1x26xf32> to vector<8x26xf32>
    %202 = arith.subf %196, %201 : vector<8x26xf32>
    %203 = arith.mulf %202, %202 : vector<8x26xf32>
    %cst_105 = arith.constant dense<0.000000e+00> : vector<26xf32>
    %204 = vector.multi_reduction <add>, %203, %cst_105 [0] : vector<8x26xf32> to vector<26xf32>
    %205 = vector.shape_cast %204 : vector<26xf32> to vector<1x26xf32>
    %cst_106 = arith.constant 8.000000e+00 : f32
    %206 = vector.broadcast %cst_106 : f32 to vector<1x26xf32>
    %207 = arith.divf %205, %206 : vector<1x26xf32>
    %208 = vector.broadcast %200 : vector<1x26xf32> to vector<8x26xf32>
    %209 = arith.subf %196, %208 : vector<8x26xf32>
    %cst_107 = arith.constant 9.99999974E-6 : f32
    %210 = vector.broadcast %cst_107 : f32 to vector<1x26xf32>
    %211 = arith.addf %207, %210 : vector<1x26xf32>
    %212 = math.rsqrt %211 : vector<1x26xf32>
    %213 = vector.broadcast %212 : vector<1x26xf32> to vector<8x26xf32>
    %214 = arith.mulf %209, %213 : vector<8x26xf32>
    %c1_108 = arith.constant 1 : index
    %c4_109 = arith.constant 4 : index
    %c0_110 = arith.constant 0 : index
    %215 = vector.load %arg9[%c1_108, %c4_109, %c0_110] : memref<5x8x26xf32, #tpu.memory_space<vmem>>, vector<1x1x26xf32>
    %216 = vector.shape_cast %215 : vector<1x1x26xf32> to vector<1x26xf32>
    %217 = vector.broadcast %216 : vector<1x26xf32> to vector<8x26xf32>
    %218 = arith.mulf %214, %217 : vector<8x26xf32>
    %c1_111 = arith.constant 1 : index
    %c5_112 = arith.constant 5 : index
    %c0_113 = arith.constant 0 : index
    %219 = vector.load %arg9[%c1_111, %c5_112, %c0_113] : memref<5x8x26xf32, #tpu.memory_space<vmem>>, vector<1x1x26xf32>
    %220 = vector.shape_cast %219 : vector<1x1x26xf32> to vector<1x26xf32>
    %221 = vector.broadcast %220 : vector<1x26xf32> to vector<8x26xf32>
    %222 = arith.addf %218, %221 : vector<8x26xf32>
    %cst_114 = arith.constant 0.000000e+00 : f32
    %223 = vector.broadcast %cst_114 : f32 to vector<8x26xf32>
    %224 = arith.maximumf %222, %223 : vector<8x26xf32>
    %c1_115 = arith.constant 1 : index
    %c6_116 = arith.constant 6 : index
    %c0_117 = arith.constant 0 : index
    %225 = vector.load %arg9[%c1_115, %c6_116, %c0_117] : memref<5x8x26xf32, #tpu.memory_space<vmem>>, vector<1x1x26xf32>
    %226 = vector.shape_cast %225 : vector<1x1x26xf32> to vector<1x26xf32>
    %c1_118 = arith.constant 1 : index
    %c0_119 = arith.constant 0 : index
    %c0_120 = arith.constant 0 : index
    %227 = vector.load %arg8[%c1_118, %c0_119, %c0_120] : memref<5x26x16xf32, #tpu.memory_space<vmem>>, vector<1x26x16xf32>
    %228 = vector.shape_cast %227 : vector<1x26x16xf32> to vector<26x16xf32>
    %cst_121 = arith.constant dense<0.000000e+00> : vector<8x16xf32>
    %229 = tpu.matmul %224, %228, %cst_121 {dimension_numbers = #tpu.dot_dimension_numbers<[1], [0], [0], [1], [0, 0, 1, 1], [], []>, precision = #tpu.contract_precision<fp32>} : vector<8x26xf32>, vector<26x16xf32>, vector<8x16xf32> -> vector<8x16xf32>
    %230 = vector.extract_strided_slice %226 {offsets = [0, 0], sizes = [1, 16], strides = [1, 1]} : vector<1x26xf32> to vector<1x16xf32>
    %231 = vector.broadcast %230 : vector<1x16xf32> to vector<8x16xf32>
    %232 = arith.addf %229, %231 : vector<8x16xf32>
    %cst_122 = arith.constant -0.888888895 : f32
    %233 = vector.broadcast %cst_122 : f32 to vector<8x16xf32>
    %234 = arith.mulf %233, %232 : vector<8x16xf32>
    %cst_123 = arith.constant 6.000000e-01 : f32
    %235 = vector.broadcast %cst_123 : f32 to vector<8x16xf32>
    %236 = arith.mulf %235, %136 : vector<8x16xf32>
    %cst_124 = arith.constant 2.000000e-01 : f32
    %237 = arith.mulf %cst_124, %148 : f32
    %238 = vector.broadcast %237 : f32 to vector<8x16xf32>
    %239 = arith.subf %236, %238 : vector<8x16xf32>
    %240 = vector.broadcast %152 : f32 to vector<8x16xf32>
    %241 = arith.subf %239, %240 : vector<8x16xf32>
    %242 = arith.mulf %241, %241 : vector<8x16xf32>
    %cst_125 = arith.constant 5.000000e-01 : f32
    %243 = vector.broadcast %cst_125 : f32 to vector<8x16xf32>
    %244 = arith.mulf %243, %242 : vector<8x16xf32>
    %cst_126 = arith.constant 4.500000e-01 : f32
    %245 = vector.broadcast %cst_126 : f32 to vector<8x16xf32>
    %246 = arith.mulf %245, %234 : vector<8x16xf32>
    %247 = arith.mulf %246, %234 : vector<8x16xf32>
    %248 = arith.addf %244, %247 : vector<8x16xf32>
    %249 = vector.broadcast %146 : f32 to vector<8x16xf32>
    %250 = arith.mulf %248, %249 : vector<8x16xf32>
    %251 = arith.subf %122, %250 : vector<8x16xf32>
    %cst_127 = arith.constant 1.000000e+00 : f32
    %252 = vector.broadcast %cst_127 : f32 to vector<8x16xf32>
    %253 = arith.mulf %252, %232 : vector<8x16xf32>
    %254 = arith.mulf %253, %154 : vector<8x16xf32>
    %255 = arith.addf %251, %254 : vector<8x16xf32>
    %cst_128 = arith.constant 5.000000e-01 : f32
    %256 = vector.broadcast %cst_128 : f32 to vector<8x16xf32>
    %257 = arith.mulf %256, %136 : vector<8x16xf32>
    %cst_129 = arith.constant 3.000000e-01 : f32
    %258 = arith.mulf %cst_129, %150 : f32
    %259 = vector.broadcast %258 : f32 to vector<8x16xf32>
    %260 = arith.addf %257, %259 : vector<8x16xf32>
    %cst_130 = arith.constant 8.000000e-01 : f32
    %261 = vector.broadcast %cst_130 : f32 to vector<8x16xf32>
    %262 = arith.mulf %261, %234 : vector<8x16xf32>
    %263 = arith.addf %260, %262 : vector<8x16xf32>
    %264 = vector.broadcast %146 : f32 to vector<8x16xf32>
    %265 = arith.mulf %263, %264 : vector<8x16xf32>
    %266 = arith.addf %136, %265 : vector<8x16xf32>
    %cst_131 = arith.constant 1.000000e+00 : f32
    %267 = vector.broadcast %cst_131 : f32 to vector<8x16xf32>
    %268 = arith.mulf %267, %154 : vector<8x16xf32>
    %269 = arith.addf %266, %268 : vector<8x16xf32>
    %c1_132 = arith.constant 1 : index
    %c0_133 = arith.constant 0 : index
    %c0_134 = arith.constant 0 : index
    %270 = vector.load %arg12[%c1_132, %c0_133, %c0_134] : memref<5x8x16xf32, #tpu.memory_space<vmem>>, vector<1x8x16xf32>
    %271 = vector.shape_cast %270 : vector<1x8x16xf32> to vector<8x16xf32>
    %272 = vector.shape_cast %269 : vector<8x16xf32> to vector<1x8x16xf32>
    tpu.vector_store %arg12[%c1_132, %c0_133, %c0_134], %272 {strides = array<i32>} : memref<5x8x16xf32, #tpu.memory_space<vmem>>, vector<1x8x16xf32>,
    %c1_135 = arith.constant 1 : index
    %c0_136 = arith.constant 0 : index
    %c0_137 = arith.constant 0 : index
    %273 = vector.load %arg13[%c1_135, %c0_136, %c0_137] : memref<5x8x16xf32, #tpu.memory_space<vmem>>, vector<1x8x16xf32>
    %274 = vector.shape_cast %273 : vector<1x8x16xf32> to vector<8x16xf32>
    %275 = vector.shape_cast %232 : vector<8x16xf32> to vector<1x8x16xf32>
    tpu.vector_store %arg13[%c1_135, %c0_136, %c0_137], %275 {strides = array<i32>} : memref<5x8x16xf32, #tpu.memory_space<vmem>>, vector<1x8x16xf32>,
    %c5_i32_138 = arith.constant 5 : i32
    %276 = arith.muli %arg0, %c5_i32_138 : i32
    %c2_i32 = arith.constant 2 : i32
    %277 = arith.addi %276, %c2_i32 : i32
    %c0_139 = arith.constant 0 : index
    %278 = arith.index_cast %277 : i32 to index
    %279 = memref.load %arg1[%c0_139, %278] : memref<4x5xf32, #tpu.memory_space<smem>>
    %c1_140 = arith.constant 1 : index
    %280 = arith.index_cast %277 : i32 to index
    %281 = memref.load %arg1[%c1_140, %280] : memref<4x5xf32, #tpu.memory_space<smem>>
    %c2_141 = arith.constant 2 : index
    %282 = arith.index_cast %277 : i32 to index
    %283 = memref.load %arg1[%c2_141, %282] : memref<4x5xf32, #tpu.memory_space<smem>>
    %c3_142 = arith.constant 3 : index
    %284 = arith.index_cast %277 : i32 to index
    %285 = memref.load %arg1[%c3_142, %284] : memref<4x5xf32, #tpu.memory_space<smem>>
    %c2_143 = arith.constant 2 : index
    %c0_144 = arith.constant 0 : index
    %c0_145 = arith.constant 0 : index
    %286 = vector.load %arg2[%c2_143, %c0_144, %c0_145] : memref<5x8x16xf32, #tpu.memory_space<vmem>>, vector<1x8x16xf32>
    %287 = vector.shape_cast %286 : vector<1x8x16xf32> to vector<8x16xf32>
    %c2_146 = arith.constant 2 : index
    %c0_147 = arith.constant 0 : index
    %c0_148 = arith.constant 0 : index
    %288 = vector.load %arg6[%c2_146, %c0_147, %c0_148] : memref<5x16x26xf32, #tpu.memory_space<vmem>>, vector<1x16x26xf32>
    %289 = vector.shape_cast %288 : vector<1x16x26xf32> to vector<16x26xf32>
    %cst_149 = arith.constant dense<0.000000e+00> : vector<8x26xf32>
    %290 = tpu.matmul %269, %289, %cst_149 {dimension_numbers = #tpu.dot_dimension_numbers<[1], [0], [0], [1], [0, 0, 1, 1], [], []>, precision = #tpu.contract_precision<fp32>} : vector<8x16xf32>, vector<16x26xf32>, vector<8x26xf32> -> vector<8x26xf32>
    %c2_150 = arith.constant 2 : index
    %c0_151 = arith.constant 0 : index
    %c0_152 = arith.constant 0 : index
    %291 = vector.load %arg9[%c2_150, %c0_151, %c0_152] : memref<5x8x26xf32, #tpu.memory_space<vmem>>, vector<1x1x26xf32>
    %292 = vector.shape_cast %291 : vector<1x1x26xf32> to vector<1x26xf32>
    %293 = vector.broadcast %292 : vector<1x26xf32> to vector<8x26xf32>
    %294 = arith.addf %290, %293 : vector<8x26xf32>
    %cst_153 = arith.constant dense<0.000000e+00> : vector<26xf32>
    %295 = vector.multi_reduction <add>, %294, %cst_153 [0] : vector<8x26xf32> to vector<26xf32>
    %296 = vector.shape_cast %295 : vector<26xf32> to vector<1x26xf32>
    %cst_154 = arith.constant 8.000000e+00 : f32
    %297 = vector.broadcast %cst_154 : f32 to vector<1x26xf32>
    %298 = arith.divf %296, %297 : vector<1x26xf32>
    %299 = vector.broadcast %298 : vector<1x26xf32> to vector<8x26xf32>
    %300 = arith.subf %294, %299 : vector<8x26xf32>
    %301 = arith.mulf %300, %300 : vector<8x26xf32>
    %cst_155 = arith.constant dense<0.000000e+00> : vector<26xf32>
    %302 = vector.multi_reduction <add>, %301, %cst_155 [0] : vector<8x26xf32> to vector<26xf32>
    %303 = vector.shape_cast %302 : vector<26xf32> to vector<1x26xf32>
    %cst_156 = arith.constant 8.000000e+00 : f32
    %304 = vector.broadcast %cst_156 : f32 to vector<1x26xf32>
    %305 = arith.divf %303, %304 : vector<1x26xf32>
    %306 = vector.broadcast %298 : vector<1x26xf32> to vector<8x26xf32>
    %307 = arith.subf %294, %306 : vector<8x26xf32>
    %cst_157 = arith.constant 9.99999974E-6 : f32
    %308 = vector.broadcast %cst_157 : f32 to vector<1x26xf32>
    %309 = arith.addf %305, %308 : vector<1x26xf32>
    %310 = math.rsqrt %309 : vector<1x26xf32>
    %311 = vector.broadcast %310 : vector<1x26xf32> to vector<8x26xf32>
    %312 = arith.mulf %307, %311 : vector<8x26xf32>
    %c2_158 = arith.constant 2 : index
    %c1_159 = arith.constant 1 : index
    %c0_160 = arith.constant 0 : index
    %313 = vector.load %arg9[%c2_158, %c1_159, %c0_160] : memref<5x8x26xf32, #tpu.memory_space<vmem>>, vector<1x1x26xf32>
    %314 = vector.shape_cast %313 : vector<1x1x26xf32> to vector<1x26xf32>
    %315 = vector.broadcast %314 : vector<1x26xf32> to vector<8x26xf32>
    %316 = arith.mulf %312, %315 : vector<8x26xf32>
    %c2_161 = arith.constant 2 : index
    %c2_162 = arith.constant 2 : index
    %c0_163 = arith.constant 0 : index
    %317 = vector.load %arg9[%c2_161, %c2_162, %c0_163] : memref<5x8x26xf32, #tpu.memory_space<vmem>>, vector<1x1x26xf32>
    %318 = vector.shape_cast %317 : vector<1x1x26xf32> to vector<1x26xf32>
    %319 = vector.broadcast %318 : vector<1x26xf32> to vector<8x26xf32>
    %320 = arith.addf %316, %319 : vector<8x26xf32>
    %cst_164 = arith.constant 0.000000e+00 : f32
    %321 = vector.broadcast %cst_164 : f32 to vector<8x26xf32>
    %322 = arith.maximumf %320, %321 : vector<8x26xf32>
    %c2_165 = arith.constant 2 : index
    %c0_166 = arith.constant 0 : index
    %c0_167 = arith.constant 0 : index
    %323 = vector.load %arg7[%c2_165, %c0_166, %c0_167] : memref<5x26x26xf32, #tpu.memory_space<vmem>>, vector<1x26x26xf32>
    %324 = vector.shape_cast %323 : vector<1x26x26xf32> to vector<26x26xf32>
    %cst_168 = arith.constant dense<0.000000e+00> : vector<8x26xf32>
    %325 = tpu.matmul %322, %324, %cst_168 {dimension_numbers = #tpu.dot_dimension_numbers<[1], [0], [0], [1], [0, 0, 1, 1], [], []>, precision = #tpu.contract_precision<fp32>} : vector<8x26xf32>, vector<26x26xf32>, vector<8x26xf32> -> vector<8x26xf32>
    %c2_169 = arith.constant 2 : index
    %c3_170 = arith.constant 3 : index
    %c0_171 = arith.constant 0 : index
    %326 = vector.load %arg9[%c2_169, %c3_170, %c0_171] : memref<5x8x26xf32, #tpu.memory_space<vmem>>, vector<1x1x26xf32>
    %327 = vector.shape_cast %326 : vector<1x1x26xf32> to vector<1x26xf32>
    %328 = vector.broadcast %327 : vector<1x26xf32> to vector<8x26xf32>
    %329 = arith.addf %325, %328 : vector<8x26xf32>
    %cst_172 = arith.constant dense<0.000000e+00> : vector<26xf32>
    %330 = vector.multi_reduction <add>, %329, %cst_172 [0] : vector<8x26xf32> to vector<26xf32>
    %331 = vector.shape_cast %330 : vector<26xf32> to vector<1x26xf32>
    %cst_173 = arith.constant 8.000000e+00 : f32
    %332 = vector.broadcast %cst_173 : f32 to vector<1x26xf32>
    %333 = arith.divf %331, %332 : vector<1x26xf32>
    %334 = vector.broadcast %333 : vector<1x26xf32> to vector<8x26xf32>
    %335 = arith.subf %329, %334 : vector<8x26xf32>
    %336 = arith.mulf %335, %335 : vector<8x26xf32>
    %cst_174 = arith.constant dense<0.000000e+00> : vector<26xf32>
    %337 = vector.multi_reduction <add>, %336, %cst_174 [0] : vector<8x26xf32> to vector<26xf32>
    %338 = vector.shape_cast %337 : vector<26xf32> to vector<1x26xf32>
    %cst_175 = arith.constant 8.000000e+00 : f32
    %339 = vector.broadcast %cst_175 : f32 to vector<1x26xf32>
    %340 = arith.divf %338, %339 : vector<1x26xf32>
    %341 = vector.broadcast %333 : vector<1x26xf32> to vector<8x26xf32>
    %342 = arith.subf %329, %341 : vector<8x26xf32>
    %cst_176 = arith.constant 9.99999974E-6 : f32
    %343 = vector.broadcast %cst_176 : f32 to vector<1x26xf32>
    %344 = arith.addf %340, %343 : vector<1x26xf32>
    %345 = math.rsqrt %344 : vector<1x26xf32>
    %346 = vector.broadcast %345 : vector<1x26xf32> to vector<8x26xf32>
    %347 = arith.mulf %342, %346 : vector<8x26xf32>
    %c2_177 = arith.constant 2 : index
    %c4_178 = arith.constant 4 : index
    %c0_179 = arith.constant 0 : index
    %348 = vector.load %arg9[%c2_177, %c4_178, %c0_179] : memref<5x8x26xf32, #tpu.memory_space<vmem>>, vector<1x1x26xf32>
    %349 = vector.shape_cast %348 : vector<1x1x26xf32> to vector<1x26xf32>
    %350 = vector.broadcast %349 : vector<1x26xf32> to vector<8x26xf32>
    %351 = arith.mulf %347, %350 : vector<8x26xf32>
    %c2_180 = arith.constant 2 : index
    %c5_181 = arith.constant 5 : index
    %c0_182 = arith.constant 0 : index
    %352 = vector.load %arg9[%c2_180, %c5_181, %c0_182] : memref<5x8x26xf32, #tpu.memory_space<vmem>>, vector<1x1x26xf32>
    %353 = vector.shape_cast %352 : vector<1x1x26xf32> to vector<1x26xf32>
    %354 = vector.broadcast %353 : vector<1x26xf32> to vector<8x26xf32>
    %355 = arith.addf %351, %354 : vector<8x26xf32>
    %cst_183 = arith.constant 0.000000e+00 : f32
    %356 = vector.broadcast %cst_183 : f32 to vector<8x26xf32>
    %357 = arith.maximumf %355, %356 : vector<8x26xf32>
    %c2_184 = arith.constant 2 : index
    %c6_185 = arith.constant 6 : index
    %c0_186 = arith.constant 0 : index
    %358 = vector.load %arg9[%c2_184, %c6_185, %c0_186] : memref<5x8x26xf32, #tpu.memory_space<vmem>>, vector<1x1x26xf32>
    %359 = vector.shape_cast %358 : vector<1x1x26xf32> to vector<1x26xf32>
    %c2_187 = arith.constant 2 : index
    %c0_188 = arith.constant 0 : index
    %c0_189 = arith.constant 0 : index
    %360 = vector.load %arg8[%c2_187, %c0_188, %c0_189] : memref<5x26x16xf32, #tpu.memory_space<vmem>>, vector<1x26x16xf32>
    %361 = vector.shape_cast %360 : vector<1x26x16xf32> to vector<26x16xf32>
    %cst_190 = arith.constant dense<0.000000e+00> : vector<8x16xf32>
    %362 = tpu.matmul %357, %361, %cst_190 {dimension_numbers = #tpu.dot_dimension_numbers<[1], [0], [0], [1], [0, 0, 1, 1], [], []>, precision = #tpu.contract_precision<fp32>} : vector<8x26xf32>, vector<26x16xf32>, vector<8x16xf32> -> vector<8x16xf32>
    %363 = vector.extract_strided_slice %359 {offsets = [0, 0], sizes = [1, 16], strides = [1, 1]} : vector<1x26xf32> to vector<1x16xf32>
    %364 = vector.broadcast %363 : vector<1x16xf32> to vector<8x16xf32>
    %365 = arith.addf %362, %364 : vector<8x16xf32>
    %cst_191 = arith.constant -0.888888895 : f32
    %366 = vector.broadcast %cst_191 : f32 to vector<8x16xf32>
    %367 = arith.mulf %366, %365 : vector<8x16xf32>
    %cst_192 = arith.constant 6.000000e-01 : f32
    %368 = vector.broadcast %cst_192 : f32 to vector<8x16xf32>
    %369 = arith.mulf %368, %269 : vector<8x16xf32>
    %cst_193 = arith.constant 2.000000e-01 : f32
    %370 = arith.mulf %cst_193, %281 : f32
    %371 = vector.broadcast %370 : f32 to vector<8x16xf32>
    %372 = arith.subf %369, %371 : vector<8x16xf32>
    %373 = vector.broadcast %285 : f32 to vector<8x16xf32>
    %374 = arith.subf %372, %373 : vector<8x16xf32>
    %375 = arith.mulf %374, %374 : vector<8x16xf32>
    %cst_194 = arith.constant 5.000000e-01 : f32
    %376 = vector.broadcast %cst_194 : f32 to vector<8x16xf32>
    %377 = arith.mulf %376, %375 : vector<8x16xf32>
    %cst_195 = arith.constant 4.500000e-01 : f32
    %378 = vector.broadcast %cst_195 : f32 to vector<8x16xf32>
    %379 = arith.mulf %378, %367 : vector<8x16xf32>
    %380 = arith.mulf %379, %367 : vector<8x16xf32>
    %381 = arith.addf %377, %380 : vector<8x16xf32>
    %382 = vector.broadcast %279 : f32 to vector<8x16xf32>
    %383 = arith.mulf %381, %382 : vector<8x16xf32>
    %384 = arith.subf %255, %383 : vector<8x16xf32>
    %cst_196 = arith.constant 1.000000e+00 : f32
    %385 = vector.broadcast %cst_196 : f32 to vector<8x16xf32>
    %386 = arith.mulf %385, %365 : vector<8x16xf32>
    %387 = arith.mulf %386, %287 : vector<8x16xf32>
    %388 = arith.addf %384, %387 : vector<8x16xf32>
    %cst_197 = arith.constant 5.000000e-01 : f32
    %389 = vector.broadcast %cst_197 : f32 to vector<8x16xf32>
    %390 = arith.mulf %389, %269 : vector<8x16xf32>
    %cst_198 = arith.constant 3.000000e-01 : f32
    %391 = arith.mulf %cst_198, %283 : f32
    %392 = vector.broadcast %391 : f32 to vector<8x16xf32>
    %393 = arith.addf %390, %392 : vector<8x16xf32>
    %cst_199 = arith.constant 8.000000e-01 : f32
    %394 = vector.broadcast %cst_199 : f32 to vector<8x16xf32>
    %395 = arith.mulf %394, %367 : vector<8x16xf32>
    %396 = arith.addf %393, %395 : vector<8x16xf32>
    %397 = vector.broadcast %279 : f32 to vector<8x16xf32>
    %398 = arith.mulf %396, %397 : vector<8x16xf32>
    %399 = arith.addf %269, %398 : vector<8x16xf32>
    %cst_200 = arith.constant 1.000000e+00 : f32
    %400 = vector.broadcast %cst_200 : f32 to vector<8x16xf32>
    %401 = arith.mulf %400, %287 : vector<8x16xf32>
    %402 = arith.addf %399, %401 : vector<8x16xf32>
    %c2_201 = arith.constant 2 : index
    %c0_202 = arith.constant 0 : index
    %c0_203 = arith.constant 0 : index
    %403 = vector.load %arg12[%c2_201, %c0_202, %c0_203] : memref<5x8x16xf32, #tpu.memory_space<vmem>>, vector<1x8x16xf32>
    %404 = vector.shape_cast %403 : vector<1x8x16xf32> to vector<8x16xf32>
    %405 = vector.shape_cast %402 : vector<8x16xf32> to vector<1x8x16xf32>
    tpu.vector_store %arg12[%c2_201, %c0_202, %c0_203], %405 {strides = array<i32>} : memref<5x8x16xf32, #tpu.memory_space<vmem>>, vector<1x8x16xf32>,
    %c2_204 = arith.constant 2 : index
    %c0_205 = arith.constant 0 : index
    %c0_206 = arith.constant 0 : index
    %406 = vector.load %arg13[%c2_204, %c0_205, %c0_206] : memref<5x8x16xf32, #tpu.memory_space<vmem>>, vector<1x8x16xf32>
    %407 = vector.shape_cast %406 : vector<1x8x16xf32> to vector<8x16xf32>
    %408 = vector.shape_cast %365 : vector<8x16xf32> to vector<1x8x16xf32>
    tpu.vector_store %arg13[%c2_204, %c0_205, %c0_206], %408 {strides = array<i32>} : memref<5x8x16xf32, #tpu.memory_space<vmem>>, vector<1x8x16xf32>,
    %c5_i32_207 = arith.constant 5 : i32
    %409 = arith.muli %arg0, %c5_i32_207 : i32
    %c3_i32 = arith.constant 3 : i32
    %410 = arith.addi %409, %c3_i32 : i32
    %c0_208 = arith.constant 0 : index
    %411 = arith.index_cast %410 : i32 to index
    %412 = memref.load %arg1[%c0_208, %411] : memref<4x5xf32, #tpu.memory_space<smem>>
    %c1_209 = arith.constant 1 : index
    %413 = arith.index_cast %410 : i32 to index
    %414 = memref.load %arg1[%c1_209, %413] : memref<4x5xf32, #tpu.memory_space<smem>>
    %c2_210 = arith.constant 2 : index
    %415 = arith.index_cast %410 : i32 to index
    %416 = memref.load %arg1[%c2_210, %415] : memref<4x5xf32, #tpu.memory_space<smem>>
    %c3_211 = arith.constant 3 : index
    %417 = arith.index_cast %410 : i32 to index
    %418 = memref.load %arg1[%c3_211, %417] : memref<4x5xf32, #tpu.memory_space<smem>>
    %c3_212 = arith.constant 3 : index
    %c0_213 = arith.constant 0 : index
    %c0_214 = arith.constant 0 : index
    %419 = vector.load %arg2[%c3_212, %c0_213, %c0_214] : memref<5x8x16xf32, #tpu.memory_space<vmem>>, vector<1x8x16xf32>
    %420 = vector.shape_cast %419 : vector<1x8x16xf32> to vector<8x16xf32>
    %c3_215 = arith.constant 3 : index
    %c0_216 = arith.constant 0 : index
    %c0_217 = arith.constant 0 : index
    %421 = vector.load %arg6[%c3_215, %c0_216, %c0_217] : memref<5x16x26xf32, #tpu.memory_space<vmem>>, vector<1x16x26xf32>
    %422 = vector.shape_cast %421 : vector<1x16x26xf32> to vector<16x26xf32>
    %cst_218 = arith.constant dense<0.000000e+00> : vector<8x26xf32>
    %423 = tpu.matmul %402, %422, %cst_218 {dimension_numbers = #tpu.dot_dimension_numbers<[1], [0], [0], [1], [0, 0, 1, 1], [], []>, precision = #tpu.contract_precision<fp32>} : vector<8x16xf32>, vector<16x26xf32>, vector<8x26xf32> -> vector<8x26xf32>
    %c3_219 = arith.constant 3 : index
    %c0_220 = arith.constant 0 : index
    %c0_221 = arith.constant 0 : index
    %424 = vector.load %arg9[%c3_219, %c0_220, %c0_221] : memref<5x8x26xf32, #tpu.memory_space<vmem>>, vector<1x1x26xf32>
    %425 = vector.shape_cast %424 : vector<1x1x26xf32> to vector<1x26xf32>
    %426 = vector.broadcast %425 : vector<1x26xf32> to vector<8x26xf32>
    %427 = arith.addf %423, %426 : vector<8x26xf32>
    %cst_222 = arith.constant dense<0.000000e+00> : vector<26xf32>
    %428 = vector.multi_reduction <add>, %427, %cst_222 [0] : vector<8x26xf32> to vector<26xf32>
    %429 = vector.shape_cast %428 : vector<26xf32> to vector<1x26xf32>
    %cst_223 = arith.constant 8.000000e+00 : f32
    %430 = vector.broadcast %cst_223 : f32 to vector<1x26xf32>
    %431 = arith.divf %429, %430 : vector<1x26xf32>
    %432 = vector.broadcast %431 : vector<1x26xf32> to vector<8x26xf32>
    %433 = arith.subf %427, %432 : vector<8x26xf32>
    %434 = arith.mulf %433, %433 : vector<8x26xf32>
    %cst_224 = arith.constant dense<0.000000e+00> : vector<26xf32>
    %435 = vector.multi_reduction <add>, %434, %cst_224 [0] : vector<8x26xf32> to vector<26xf32>
    %436 = vector.shape_cast %435 : vector<26xf32> to vector<1x26xf32>
    %cst_225 = arith.constant 8.000000e+00 : f32
    %437 = vector.broadcast %cst_225 : f32 to vector<1x26xf32>
    %438 = arith.divf %436, %437 : vector<1x26xf32>
    %439 = vector.broadcast %431 : vector<1x26xf32> to vector<8x26xf32>
    %440 = arith.subf %427, %439 : vector<8x26xf32>
    %cst_226 = arith.constant 9.99999974E-6 : f32
    %441 = vector.broadcast %cst_226 : f32 to vector<1x26xf32>
    %442 = arith.addf %438, %441 : vector<1x26xf32>
    %443 = math.rsqrt %442 : vector<1x26xf32>
    %444 = vector.broadcast %443 : vector<1x26xf32> to vector<8x26xf32>
    %445 = arith.mulf %440, %444 : vector<8x26xf32>
    %c3_227 = arith.constant 3 : index
    %c1_228 = arith.constant 1 : index
    %c0_229 = arith.constant 0 : index
    %446 = vector.load %arg9[%c3_227, %c1_228, %c0_229] : memref<5x8x26xf32, #tpu.memory_space<vmem>>, vector<1x1x26xf32>
    %447 = vector.shape_cast %446 : vector<1x1x26xf32> to vector<1x26xf32>
    %448 = vector.broadcast %447 : vector<1x26xf32> to vector<8x26xf32>
    %449 = arith.mulf %445, %448 : vector<8x26xf32>
    %c3_230 = arith.constant 3 : index
    %c2_231 = arith.constant 2 : index
    %c0_232 = arith.constant 0 : index
    %450 = vector.load %arg9[%c3_230, %c2_231, %c0_232] : memref<5x8x26xf32, #tpu.memory_space<vmem>>, vector<1x1x26xf32>
    %451 = vector.shape_cast %450 : vector<1x1x26xf32> to vector<1x26xf32>
    %452 = vector.broadcast %451 : vector<1x26xf32> to vector<8x26xf32>
    %453 = arith.addf %449, %452 : vector<8x26xf32>
    %cst_233 = arith.constant 0.000000e+00 : f32
    %454 = vector.broadcast %cst_233 : f32 to vector<8x26xf32>
    %455 = arith.maximumf %453, %454 : vector<8x26xf32>
    %c3_234 = arith.constant 3 : index
    %c0_235 = arith.constant 0 : index
    %c0_236 = arith.constant 0 : index
    %456 = vector.load %arg7[%c3_234, %c0_235, %c0_236] : memref<5x26x26xf32, #tpu.memory_space<vmem>>, vector<1x26x26xf32>
    %457 = vector.shape_cast %456 : vector<1x26x26xf32> to vector<26x26xf32>
    %cst_237 = arith.constant dense<0.000000e+00> : vector<8x26xf32>
    %458 = tpu.matmul %455, %457, %cst_237 {dimension_numbers = #tpu.dot_dimension_numbers<[1], [0], [0], [1], [0, 0, 1, 1], [], []>, precision = #tpu.contract_precision<fp32>} : vector<8x26xf32>, vector<26x26xf32>, vector<8x26xf32> -> vector<8x26xf32>
    %c3_238 = arith.constant 3 : index
    %c3_239 = arith.constant 3 : index
    %c0_240 = arith.constant 0 : index
    %459 = vector.load %arg9[%c3_238, %c3_239, %c0_240] : memref<5x8x26xf32, #tpu.memory_space<vmem>>, vector<1x1x26xf32>
    %460 = vector.shape_cast %459 : vector<1x1x26xf32> to vector<1x26xf32>
    %461 = vector.broadcast %460 : vector<1x26xf32> to vector<8x26xf32>
    %462 = arith.addf %458, %461 : vector<8x26xf32>
    %cst_241 = arith.constant dense<0.000000e+00> : vector<26xf32>
    %463 = vector.multi_reduction <add>, %462, %cst_241 [0] : vector<8x26xf32> to vector<26xf32>
    %464 = vector.shape_cast %463 : vector<26xf32> to vector<1x26xf32>
    %cst_242 = arith.constant 8.000000e+00 : f32
    %465 = vector.broadcast %cst_242 : f32 to vector<1x26xf32>
    %466 = arith.divf %464, %465 : vector<1x26xf32>
    %467 = vector.broadcast %466 : vector<1x26xf32> to vector<8x26xf32>
    %468 = arith.subf %462, %467 : vector<8x26xf32>
    %469 = arith.mulf %468, %468 : vector<8x26xf32>
    %cst_243 = arith.constant dense<0.000000e+00> : vector<26xf32>
    %470 = vector.multi_reduction <add>, %469, %cst_243 [0] : vector<8x26xf32> to vector<26xf32>
    %471 = vector.shape_cast %470 : vector<26xf32> to vector<1x26xf32>
    %cst_244 = arith.constant 8.000000e+00 : f32
    %472 = vector.broadcast %cst_244 : f32 to vector<1x26xf32>
    %473 = arith.divf %471, %472 : vector<1x26xf32>
    %474 = vector.broadcast %466 : vector<1x26xf32> to vector<8x26xf32>
    %475 = arith.subf %462, %474 : vector<8x26xf32>
    %cst_245 = arith.constant 9.99999974E-6 : f32
    %476 = vector.broadcast %cst_245 : f32 to vector<1x26xf32>
    %477 = arith.addf %473, %476 : vector<1x26xf32>
    %478 = math.rsqrt %477 : vector<1x26xf32>
    %479 = vector.broadcast %478 : vector<1x26xf32> to vector<8x26xf32>
    %480 = arith.mulf %475, %479 : vector<8x26xf32>
    %c3_246 = arith.constant 3 : index
    %c4_247 = arith.constant 4 : index
    %c0_248 = arith.constant 0 : index
    %481 = vector.load %arg9[%c3_246, %c4_247, %c0_248] : memref<5x8x26xf32, #tpu.memory_space<vmem>>, vector<1x1x26xf32>
    %482 = vector.shape_cast %481 : vector<1x1x26xf32> to vector<1x26xf32>
    %483 = vector.broadcast %482 : vector<1x26xf32> to vector<8x26xf32>
    %484 = arith.mulf %480, %483 : vector<8x26xf32>
    %c3_249 = arith.constant 3 : index
    %c5_250 = arith.constant 5 : index
    %c0_251 = arith.constant 0 : index
    %485 = vector.load %arg9[%c3_249, %c5_250, %c0_251] : memref<5x8x26xf32, #tpu.memory_space<vmem>>, vector<1x1x26xf32>
    %486 = vector.shape_cast %485 : vector<1x1x26xf32> to vector<1x26xf32>
    %487 = vector.broadcast %486 : vector<1x26xf32> to vector<8x26xf32>
    %488 = arith.addf %484, %487 : vector<8x26xf32>
    %cst_252 = arith.constant 0.000000e+00 : f32
    %489 = vector.broadcast %cst_252 : f32 to vector<8x26xf32>
    %490 = arith.maximumf %488, %489 : vector<8x26xf32>
    %c3_253 = arith.constant 3 : index
    %c6_254 = arith.constant 6 : index
    %c0_255 = arith.constant 0 : index
    %491 = vector.load %arg9[%c3_253, %c6_254, %c0_255] : memref<5x8x26xf32, #tpu.memory_space<vmem>>, vector<1x1x26xf32>
    %492 = vector.shape_cast %491 : vector<1x1x26xf32> to vector<1x26xf32>
    %c3_256 = arith.constant 3 : index
    %c0_257 = arith.constant 0 : index
    %c0_258 = arith.constant 0 : index
    %493 = vector.load %arg8[%c3_256, %c0_257, %c0_258] : memref<5x26x16xf32, #tpu.memory_space<vmem>>, vector<1x26x16xf32>
    %494 = vector.shape_cast %493 : vector<1x26x16xf32> to vector<26x16xf32>
    %cst_259 = arith.constant dense<0.000000e+00> : vector<8x16xf32>
    %495 = tpu.matmul %490, %494, %cst_259 {dimension_numbers = #tpu.dot_dimension_numbers<[1], [0], [0], [1], [0, 0, 1, 1], [], []>, precision = #tpu.contract_precision<fp32>} : vector<8x26xf32>, vector<26x16xf32>, vector<8x16xf32> -> vector<8x16xf32>
    %496 = vector.extract_strided_slice %492 {offsets = [0, 0], sizes = [1, 16], strides = [1, 1]} : vector<1x26xf32> to vector<1x16xf32>
    %497 = vector.broadcast %496 : vector<1x16xf32> to vector<8x16xf32>
    %498 = arith.addf %495, %497 : vector<8x16xf32>
    %cst_260 = arith.constant -0.888888895 : f32
    %499 = vector.broadcast %cst_260 : f32 to vector<8x16xf32>
    %500 = arith.mulf %499, %498 : vector<8x16xf32>
    %cst_261 = arith.constant 6.000000e-01 : f32
    %501 = vector.broadcast %cst_261 : f32 to vector<8x16xf32>
    %502 = arith.mulf %501, %402 : vector<8x16xf32>
    %cst_262 = arith.constant 2.000000e-01 : f32
    %503 = arith.mulf %cst_262, %414 : f32
    %504 = vector.broadcast %503 : f32 to vector<8x16xf32>
    %505 = arith.subf %502, %504 : vector<8x16xf32>
    %506 = vector.broadcast %418 : f32 to vector<8x16xf32>
    %507 = arith.subf %505, %506 : vector<8x16xf32>
    %508 = arith.mulf %507, %507 : vector<8x16xf32>
    %cst_263 = arith.constant 5.000000e-01 : f32
    %509 = vector.broadcast %cst_263 : f32 to vector<8x16xf32>
    %510 = arith.mulf %509, %508 : vector<8x16xf32>
    %cst_264 = arith.constant 4.500000e-01 : f32
    %511 = vector.broadcast %cst_264 : f32 to vector<8x16xf32>
    %512 = arith.mulf %511, %500 : vector<8x16xf32>
    %513 = arith.mulf %512, %500 : vector<8x16xf32>
    %514 = arith.addf %510, %513 : vector<8x16xf32>
    %515 = vector.broadcast %412 : f32 to vector<8x16xf32>
    %516 = arith.mulf %514, %515 : vector<8x16xf32>
    %517 = arith.subf %388, %516 : vector<8x16xf32>
    %cst_265 = arith.constant 1.000000e+00 : f32
    %518 = vector.broadcast %cst_265 : f32 to vector<8x16xf32>
    %519 = arith.mulf %518, %498 : vector<8x16xf32>
    %520 = arith.mulf %519, %420 : vector<8x16xf32>
    %521 = arith.addf %517, %520 : vector<8x16xf32>
    %cst_266 = arith.constant 5.000000e-01 : f32
    %522 = vector.broadcast %cst_266 : f32 to vector<8x16xf32>
    %523 = arith.mulf %522, %402 : vector<8x16xf32>
    %cst_267 = arith.constant 3.000000e-01 : f32
    %524 = arith.mulf %cst_267, %416 : f32
    %525 = vector.broadcast %524 : f32 to vector<8x16xf32>
    %526 = arith.addf %523, %525 : vector<8x16xf32>
    %cst_268 = arith.constant 8.000000e-01 : f32
    %527 = vector.broadcast %cst_268 : f32 to vector<8x16xf32>
    %528 = arith.mulf %527, %500 : vector<8x16xf32>
    %529 = arith.addf %526, %528 : vector<8x16xf32>
    %530 = vector.broadcast %412 : f32 to vector<8x16xf32>
    %531 = arith.mulf %529, %530 : vector<8x16xf32>
    %532 = arith.addf %402, %531 : vector<8x16xf32>
    %cst_269 = arith.constant 1.000000e+00 : f32
    %533 = vector.broadcast %cst_269 : f32 to vector<8x16xf32>
    %534 = arith.mulf %533, %420 : vector<8x16xf32>
    %535 = arith.addf %532, %534 : vector<8x16xf32>
    %c3_270 = arith.constant 3 : index
    %c0_271 = arith.constant 0 : index
    %c0_272 = arith.constant 0 : index
    %536 = vector.load %arg12[%c3_270, %c0_271, %c0_272] : memref<5x8x16xf32, #tpu.memory_space<vmem>>, vector<1x8x16xf32>
    %537 = vector.shape_cast %536 : vector<1x8x16xf32> to vector<8x16xf32>
    %538 = vector.shape_cast %535 : vector<8x16xf32> to vector<1x8x16xf32>
    tpu.vector_store %arg12[%c3_270, %c0_271, %c0_272], %538 {strides = array<i32>} : memref<5x8x16xf32, #tpu.memory_space<vmem>>, vector<1x8x16xf32>,
    %c3_273 = arith.constant 3 : index
    %c0_274 = arith.constant 0 : index
    %c0_275 = arith.constant 0 : index
    %539 = vector.load %arg13[%c3_273, %c0_274, %c0_275] : memref<5x8x16xf32, #tpu.memory_space<vmem>>, vector<1x8x16xf32>
    %540 = vector.shape_cast %539 : vector<1x8x16xf32> to vector<8x16xf32>
    %541 = vector.shape_cast %498 : vector<8x16xf32> to vector<1x8x16xf32>
    tpu.vector_store %arg13[%c3_273, %c0_274, %c0_275], %541 {strides = array<i32>} : memref<5x8x16xf32, #tpu.memory_space<vmem>>, vector<1x8x16xf32>,
    %c5_i32_276 = arith.constant 5 : i32
    %542 = arith.muli %arg0, %c5_i32_276 : i32
    %c4_i32 = arith.constant 4 : i32
    %543 = arith.addi %542, %c4_i32 : i32
    %c0_277 = arith.constant 0 : index
    %544 = arith.index_cast %543 : i32 to index
    %545 = memref.load %arg1[%c0_277, %544] : memref<4x5xf32, #tpu.memory_space<smem>>
    %c1_278 = arith.constant 1 : index
    %546 = arith.index_cast %543 : i32 to index
    %547 = memref.load %arg1[%c1_278, %546] : memref<4x5xf32, #tpu.memory_space<smem>>
    %c2_279 = arith.constant 2 : index
    %548 = arith.index_cast %543 : i32 to index
    %549 = memref.load %arg1[%c2_279, %548] : memref<4x5xf32, #tpu.memory_space<smem>>
    %c3_280 = arith.constant 3 : index
    %550 = arith.index_cast %543 : i32 to index
    %551 = memref.load %arg1[%c3_280, %550] : memref<4x5xf32, #tpu.memory_space<smem>>
    %c4_281 = arith.constant 4 : index
    %c0_282 = arith.constant 0 : index
    %c0_283 = arith.constant 0 : index
    %552 = vector.load %arg2[%c4_281, %c0_282, %c0_283] : memref<5x8x16xf32, #tpu.memory_space<vmem>>, vector<1x8x16xf32>
    %553 = vector.shape_cast %552 : vector<1x8x16xf32> to vector<8x16xf32>
    %c4_284 = arith.constant 4 : index
    %c0_285 = arith.constant 0 : index
    %c0_286 = arith.constant 0 : index
    %554 = vector.load %arg6[%c4_284, %c0_285, %c0_286] : memref<5x16x26xf32, #tpu.memory_space<vmem>>, vector<1x16x26xf32>
    %555 = vector.shape_cast %554 : vector<1x16x26xf32> to vector<16x26xf32>
    %cst_287 = arith.constant dense<0.000000e+00> : vector<8x26xf32>
    %556 = tpu.matmul %535, %555, %cst_287 {dimension_numbers = #tpu.dot_dimension_numbers<[1], [0], [0], [1], [0, 0, 1, 1], [], []>, precision = #tpu.contract_precision<fp32>} : vector<8x16xf32>, vector<16x26xf32>, vector<8x26xf32> -> vector<8x26xf32>
    %c4_288 = arith.constant 4 : index
    %c0_289 = arith.constant 0 : index
    %c0_290 = arith.constant 0 : index
    %557 = vector.load %arg9[%c4_288, %c0_289, %c0_290] : memref<5x8x26xf32, #tpu.memory_space<vmem>>, vector<1x1x26xf32>
    %558 = vector.shape_cast %557 : vector<1x1x26xf32> to vector<1x26xf32>
    %559 = vector.broadcast %558 : vector<1x26xf32> to vector<8x26xf32>
    %560 = arith.addf %556, %559 : vector<8x26xf32>
    %cst_291 = arith.constant dense<0.000000e+00> : vector<26xf32>
    %561 = vector.multi_reduction <add>, %560, %cst_291 [0] : vector<8x26xf32> to vector<26xf32>
    %562 = vector.shape_cast %561 : vector<26xf32> to vector<1x26xf32>
    %cst_292 = arith.constant 8.000000e+00 : f32
    %563 = vector.broadcast %cst_292 : f32 to vector<1x26xf32>
    %564 = arith.divf %562, %563 : vector<1x26xf32>
    %565 = vector.broadcast %564 : vector<1x26xf32> to vector<8x26xf32>
    %566 = arith.subf %560, %565 : vector<8x26xf32>
    %567 = arith.mulf %566, %566 : vector<8x26xf32>
    %cst_293 = arith.constant dense<0.000000e+00> : vector<26xf32>
    %568 = vector.multi_reduction <add>, %567, %cst_293 [0] : vector<8x26xf32> to vector<26xf32>
    %569 = vector.shape_cast %568 : vector<26xf32> to vector<1x26xf32>
    %cst_294 = arith.constant 8.000000e+00 : f32
    %570 = vector.broadcast %cst_294 : f32 to vector<1x26xf32>
    %571 = arith.divf %569, %570 : vector<1x26xf32>
    %572 = vector.broadcast %564 : vector<1x26xf32> to vector<8x26xf32>
    %573 = arith.subf %560, %572 : vector<8x26xf32>
    %cst_295 = arith.constant 9.99999974E-6 : f32
    %574 = vector.broadcast %cst_295 : f32 to vector<1x26xf32>
    %575 = arith.addf %571, %574 : vector<1x26xf32>
    %576 = math.rsqrt %575 : vector<1x26xf32>
    %577 = vector.broadcast %576 : vector<1x26xf32> to vector<8x26xf32>
    %578 = arith.mulf %573, %577 : vector<8x26xf32>
    %c4_296 = arith.constant 4 : index
    %c1_297 = arith.constant 1 : index
    %c0_298 = arith.constant 0 : index
    %579 = vector.load %arg9[%c4_296, %c1_297, %c0_298] : memref<5x8x26xf32, #tpu.memory_space<vmem>>, vector<1x1x26xf32>
    %580 = vector.shape_cast %579 : vector<1x1x26xf32> to vector<1x26xf32>
    %581 = vector.broadcast %580 : vector<1x26xf32> to vector<8x26xf32>
    %582 = arith.mulf %578, %581 : vector<8x26xf32>
    %c4_299 = arith.constant 4 : index
    %c2_300 = arith.constant 2 : index
    %c0_301 = arith.constant 0 : index
    %583 = vector.load %arg9[%c4_299, %c2_300, %c0_301] : memref<5x8x26xf32, #tpu.memory_space<vmem>>, vector<1x1x26xf32>
    %584 = vector.shape_cast %583 : vector<1x1x26xf32> to vector<1x26xf32>
    %585 = vector.broadcast %584 : vector<1x26xf32> to vector<8x26xf32>
    %586 = arith.addf %582, %585 : vector<8x26xf32>
    %cst_302 = arith.constant 0.000000e+00 : f32
    %587 = vector.broadcast %cst_302 : f32 to vector<8x26xf32>
    %588 = arith.maximumf %586, %587 : vector<8x26xf32>
    %c4_303 = arith.constant 4 : index
    %c0_304 = arith.constant 0 : index
    %c0_305 = arith.constant 0 : index
    %589 = vector.load %arg7[%c4_303, %c0_304, %c0_305] : memref<5x26x26xf32, #tpu.memory_space<vmem>>, vector<1x26x26xf32>
    %590 = vector.shape_cast %589 : vector<1x26x26xf32> to vector<26x26xf32>
    %cst_306 = arith.constant dense<0.000000e+00> : vector<8x26xf32>
    %591 = tpu.matmul %588, %590, %cst_306 {dimension_numbers = #tpu.dot_dimension_numbers<[1], [0], [0], [1], [0, 0, 1, 1], [], []>, precision = #tpu.contract_precision<fp32>} : vector<8x26xf32>, vector<26x26xf32>, vector<8x26xf32> -> vector<8x26xf32>
    %c4_307 = arith.constant 4 : index
    %c3_308 = arith.constant 3 : index
    %c0_309 = arith.constant 0 : index
    %592 = vector.load %arg9[%c4_307, %c3_308, %c0_309] : memref<5x8x26xf32, #tpu.memory_space<vmem>>, vector<1x1x26xf32>
    %593 = vector.shape_cast %592 : vector<1x1x26xf32> to vector<1x26xf32>
    %594 = vector.broadcast %593 : vector<1x26xf32> to vector<8x26xf32>
    %595 = arith.addf %591, %594 : vector<8x26xf32>
    %cst_310 = arith.constant dense<0.000000e+00> : vector<26xf32>
    %596 = vector.multi_reduction <add>, %595, %cst_310 [0] : vector<8x26xf32> to vector<26xf32>
    %597 = vector.shape_cast %596 : vector<26xf32> to vector<1x26xf32>
    %cst_311 = arith.constant 8.000000e+00 : f32
    %598 = vector.broadcast %cst_311 : f32 to vector<1x26xf32>
    %599 = arith.divf %597, %598 : vector<1x26xf32>
    %600 = vector.broadcast %599 : vector<1x26xf32> to vector<8x26xf32>
    %601 = arith.subf %595, %600 : vector<8x26xf32>
    %602 = arith.mulf %601, %601 : vector<8x26xf32>
    %cst_312 = arith.constant dense<0.000000e+00> : vector<26xf32>
    %603 = vector.multi_reduction <add>, %602, %cst_312 [0] : vector<8x26xf32> to vector<26xf32>
    %604 = vector.shape_cast %603 : vector<26xf32> to vector<1x26xf32>
    %cst_313 = arith.constant 8.000000e+00 : f32
    %605 = vector.broadcast %cst_313 : f32 to vector<1x26xf32>
    %606 = arith.divf %604, %605 : vector<1x26xf32>
    %607 = vector.broadcast %599 : vector<1x26xf32> to vector<8x26xf32>
    %608 = arith.subf %595, %607 : vector<8x26xf32>
    %cst_314 = arith.constant 9.99999974E-6 : f32
    %609 = vector.broadcast %cst_314 : f32 to vector<1x26xf32>
    %610 = arith.addf %606, %609 : vector<1x26xf32>
    %611 = math.rsqrt %610 : vector<1x26xf32>
    %612 = vector.broadcast %611 : vector<1x26xf32> to vector<8x26xf32>
    %613 = arith.mulf %608, %612 : vector<8x26xf32>
    %c4_315 = arith.constant 4 : index
    %c4_316 = arith.constant 4 : index
    %c0_317 = arith.constant 0 : index
    %614 = vector.load %arg9[%c4_315, %c4_316, %c0_317] : memref<5x8x26xf32, #tpu.memory_space<vmem>>, vector<1x1x26xf32>
    %615 = vector.shape_cast %614 : vector<1x1x26xf32> to vector<1x26xf32>
    %616 = vector.broadcast %615 : vector<1x26xf32> to vector<8x26xf32>
    %617 = arith.mulf %613, %616 : vector<8x26xf32>
    %c4_318 = arith.constant 4 : index
    %c5_319 = arith.constant 5 : index
    %c0_320 = arith.constant 0 : index
    %618 = vector.load %arg9[%c4_318, %c5_319, %c0_320] : memref<5x8x26xf32, #tpu.memory_space<vmem>>, vector<1x1x26xf32>
    %619 = vector.shape_cast %618 : vector<1x1x26xf32> to vector<1x26xf32>
    %620 = vector.broadcast %619 : vector<1x26xf32> to vector<8x26xf32>
    %621 = arith.addf %617, %620 : vector<8x26xf32>
    %cst_321 = arith.constant 0.000000e+00 : f32
    %622 = vector.broadcast %cst_321 : f32 to vector<8x26xf32>
    %623 = arith.maximumf %621, %622 : vector<8x26xf32>
    %c4_322 = arith.constant 4 : index
    %c6_323 = arith.constant 6 : index
    %c0_324 = arith.constant 0 : index
    %624 = vector.load %arg9[%c4_322, %c6_323, %c0_324] : memref<5x8x26xf32, #tpu.memory_space<vmem>>, vector<1x1x26xf32>
    %625 = vector.shape_cast %624 : vector<1x1x26xf32> to vector<1x26xf32>
    %c4_325 = arith.constant 4 : index
    %c0_326 = arith.constant 0 : index
    %c0_327 = arith.constant 0 : index
    %626 = vector.load %arg8[%c4_325, %c0_326, %c0_327] : memref<5x26x16xf32, #tpu.memory_space<vmem>>, vector<1x26x16xf32>
    %627 = vector.shape_cast %626 : vector<1x26x16xf32> to vector<26x16xf32>
    %cst_328 = arith.constant dense<0.000000e+00> : vector<8x16xf32>
    %628 = tpu.matmul %623, %627, %cst_328 {dimension_numbers = #tpu.dot_dimension_numbers<[1], [0], [0], [1], [0, 0, 1, 1], [], []>, precision = #tpu.contract_precision<fp32>} : vector<8x26xf32>, vector<26x16xf32>, vector<8x16xf32> -> vector<8x16xf32>
    %629 = vector.extract_strided_slice %625 {offsets = [0, 0], sizes = [1, 16], strides = [1, 1]} : vector<1x26xf32> to vector<1x16xf32>
    %630 = vector.broadcast %629 : vector<1x16xf32> to vector<8x16xf32>
    %631 = arith.addf %628, %630 : vector<8x16xf32>
    %cst_329 = arith.constant -0.888888895 : f32
    %632 = vector.broadcast %cst_329 : f32 to vector<8x16xf32>
    %633 = arith.mulf %632, %631 : vector<8x16xf32>
    %cst_330 = arith.constant 6.000000e-01 : f32
    %634 = vector.broadcast %cst_330 : f32 to vector<8x16xf32>
    %635 = arith.mulf %634, %535 : vector<8x16xf32>
    %cst_331 = arith.constant 2.000000e-01 : f32
    %636 = arith.mulf %cst_331, %547 : f32
    %637 = vector.broadcast %636 : f32 to vector<8x16xf32>
    %638 = arith.subf %635, %637 : vector<8x16xf32>
    %639 = vector.broadcast %551 : f32 to vector<8x16xf32>
    %640 = arith.subf %638, %639 : vector<8x16xf32>
    %641 = arith.mulf %640, %640 : vector<8x16xf32>
    %cst_332 = arith.constant 5.000000e-01 : f32
    %642 = vector.broadcast %cst_332 : f32 to vector<8x16xf32>
    %643 = arith.mulf %642, %641 : vector<8x16xf32>
    %cst_333 = arith.constant 4.500000e-01 : f32
    %644 = vector.broadcast %cst_333 : f32 to vector<8x16xf32>
    %645 = arith.mulf %644, %633 : vector<8x16xf32>
    %646 = arith.mulf %645, %633 : vector<8x16xf32>
    %647 = arith.addf %643, %646 : vector<8x16xf32>
    %648 = vector.broadcast %545 : f32 to vector<8x16xf32>
    %649 = arith.mulf %647, %648 : vector<8x16xf32>
    %650 = arith.subf %521, %649 : vector<8x16xf32>
    %cst_334 = arith.constant 1.000000e+00 : f32
    %651 = vector.broadcast %cst_334 : f32 to vector<8x16xf32>
    %652 = arith.mulf %651, %631 : vector<8x16xf32>
    %653 = arith.mulf %652, %553 : vector<8x16xf32>
    %654 = arith.addf %650, %653 : vector<8x16xf32>
    %cst_335 = arith.constant 5.000000e-01 : f32
    %655 = vector.broadcast %cst_335 : f32 to vector<8x16xf32>
    %656 = arith.mulf %655, %535 : vector<8x16xf32>
    %cst_336 = arith.constant 3.000000e-01 : f32
    %657 = arith.mulf %cst_336, %549 : f32
    %658 = vector.broadcast %657 : f32 to vector<8x16xf32>
    %659 = arith.addf %656, %658 : vector<8x16xf32>
    %cst_337 = arith.constant 8.000000e-01 : f32
    %660 = vector.broadcast %cst_337 : f32 to vector<8x16xf32>
    %661 = arith.mulf %660, %633 : vector<8x16xf32>
    %662 = arith.addf %659, %661 : vector<8x16xf32>
    %663 = vector.broadcast %545 : f32 to vector<8x16xf32>
    %664 = arith.mulf %662, %663 : vector<8x16xf32>
    %665 = arith.addf %535, %664 : vector<8x16xf32>
    %cst_338 = arith.constant 1.000000e+00 : f32
    %666 = vector.broadcast %cst_338 : f32 to vector<8x16xf32>
    %667 = arith.mulf %666, %553 : vector<8x16xf32>
    %668 = arith.addf %665, %667 : vector<8x16xf32>
    %c4_339 = arith.constant 4 : index
    %c0_340 = arith.constant 0 : index
    %c0_341 = arith.constant 0 : index
    %669 = vector.load %arg12[%c4_339, %c0_340, %c0_341] : memref<5x8x16xf32, #tpu.memory_space<vmem>>, vector<1x8x16xf32>
    %670 = vector.shape_cast %669 : vector<1x8x16xf32> to vector<8x16xf32>
    %671 = vector.shape_cast %668 : vector<8x16xf32> to vector<1x8x16xf32>
    tpu.vector_store %arg12[%c4_339, %c0_340, %c0_341], %671 {strides = array<i32>} : memref<5x8x16xf32, #tpu.memory_space<vmem>>, vector<1x8x16xf32>,
    %c4_342 = arith.constant 4 : index
    %c0_343 = arith.constant 0 : index
    %c0_344 = arith.constant 0 : index
    %672 = vector.load %arg13[%c4_342, %c0_343, %c0_344] : memref<5x8x16xf32, #tpu.memory_space<vmem>>, vector<1x8x16xf32>
    %673 = vector.shape_cast %672 : vector<1x8x16xf32> to vector<8x16xf32>
    %674 = vector.shape_cast %631 : vector<8x16xf32> to vector<1x8x16xf32>
    tpu.vector_store %arg13[%c4_342, %c0_343, %c0_344], %674 {strides = array<i32>} : memref<5x8x16xf32, #tpu.memory_space<vmem>>, vector<1x8x16xf32>,
    %c0_345 = arith.constant 0 : index
    %c0_346 = arith.constant 0 : index
    %675 = vector.load %arg11[%c0_345, %c0_346] : memref<8x16xf32, #tpu.memory_space<vmem>>, vector<8x16xf32>
    tpu.vector_store %arg11[%c0_345, %c0_346], %668 {strides = array<i32>} : memref<8x16xf32, #tpu.memory_space<vmem>>, vector<8x16xf32>,
    %c0_347 = arith.constant 0 : index
    %c0_348 = arith.constant 0 : index
    %676 = vector.load %arg10[%c0_347, %c0_348] : memref<8x16xf32, #tpu.memory_space<vmem>>, vector<8x16xf32>
    tpu.vector_store %arg10[%c0_347, %c0_348], %654 {strides = array<i32>} : memref<8x16xf32, #tpu.memory_space<vmem>>, vector<8x16xf32>,
    return
  }
  func.func @transform_0(%arg0: i32) -> (i32, i32) {
    %c0_i32 = arith.constant 0 : i32
    %c0_i32_0 = arith.constant 0 : i32
    %c0_i32_1 = arith.constant 0 : i32
    return %c0_i32, %c0_i32_0 : i32, i32
  }
  func.func @transform_1(%arg0: i32) -> (i32, i32, i32) {
    %c0_i32 = arith.constant 0 : i32
    %c0_i32_0 = arith.constant 0 : i32
    %c0_i32_1 = arith.constant 0 : i32
    return %arg0, %c0_i32, %c0_i32_0 : i32, i32, i32
  }
  func.func @transform_2(%arg0: i32) -> (i32, i32) {
    %c0_i32 = arith.constant 0 : i32
    %c0_i32_0 = arith.constant 0 : i32
    %c0_i32_1 = arith.constant 0 : i32
    return %c0_i32, %c0_i32_0 : i32, i32
  }
  func.func @transform_3(%arg0: i32) -> (i32, i32) {
    %c0_i32 = arith.constant 0 : i32
    %c0_i32_0 = arith.constant 0 : i32
    %c0_i32_1 = arith.constant 0 : i32
    return %c0_i32, %c0_i32_0 : i32, i32
  }
  func.func @transform_4(%arg0: i32) -> (i32, i32) {
    %c0_i32 = arith.constant 0 : i32
    %c0_i32_0 = arith.constant 0 : i32
    %c0_i32_1 = arith.constant 0 : i32
    return %c0_i32, %c0_i32_0 : i32, i32
  }
  func.func @transform_5(%arg0: i32) -> (i32, i32, i32) {
    %c0_i32 = arith.constant 0 : i32
    %c0_i32_0 = arith.constant 0 : i32
    %c0_i32_1 = arith.constant 0 : i32
    return %arg0, %c0_i32, %c0_i32_0 : i32, i32, i32
  }
  func.func @transform_6(%arg0: i32) -> (i32, i32, i32) {
    %c0_i32 = arith.constant 0 : i32
    %c0_i32_0 = arith.constant 0 : i32
    %c0_i32_1 = arith.constant 0 : i32
    return %arg0, %c0_i32, %c0_i32_0 : i32, i32, i32
  }
  func.func @transform_7(%arg0: i32) -> (i32, i32, i32) {
    %c0_i32 = arith.constant 0 : i32
    %c0_i32_0 = arith.constant 0 : i32
    %c0_i32_1 = arith.constant 0 : i32
    return %arg0, %c0_i32, %c0_i32_0 : i32, i32, i32
  }
  func.func @transform_8(%arg0: i32) -> (i32, i32, i32) {
    %c0_i32 = arith.constant 0 : i32
    %c0_i32_0 = arith.constant 0 : i32
    %c0_i32_1 = arith.constant 0 : i32
    return %arg0, %c0_i32, %c0_i32_0 : i32, i32, i32
  }
  func.func @transform_9(%arg0: i32) -> (i32, i32) {
    %c0_i32 = arith.constant 0 : i32
    %c0_i32_0 = arith.constant 0 : i32
    %c0_i32_1 = arith.constant 0 : i32
    return %c0_i32, %c0_i32_0 : i32, i32
  }
  func.func @transform_10(%arg0: i32) -> (i32, i32) {
    %c0_i32 = arith.constant 0 : i32
    %c0_i32_0 = arith.constant 0 : i32
    %c0_i32_1 = arith.constant 0 : i32
    return %c0_i32, %c0_i32_0 : i32, i32
  }
  func.func @transform_11(%arg0: i32) -> (i32, i32, i32) {
    %c0_i32 = arith.constant 0 : i32
    %c0_i32_0 = arith.constant 0 : i32
    %c0_i32_1 = arith.constant 0 : i32
    return %arg0, %c0_i32, %c0_i32_0 : i32, i32, i32
  }
  func.func @transform_12(%arg0: i32) -> (i32, i32, i32) {
    %c0_i32 = arith.constant 0 : i32
    %c0_i32_0 = arith.constant 0 : i32
    %c0_i32_1 = arith.constant 0 : i32
    return %arg0, %c0_i32, %c0_i32_0 : i32, i32, i32
  }
}

</mosaic_0001>

<llo_original>
// kernel: tpu_custom_call.1
$region0: #{tpu_custom_call.1}
  #allocation0 [shape = 'u32[]', space=smem, size = 0x4, offset = 0x4, fixed_abs, tag = 'smem constant byte address 0x4 - core index']
  #allocation1 [shape = 'u32[144,128]{1,0:T(1,128)}', space=vmem, size = 0x12000, scoped, tag = 'internal scratch']
  %s0 = inlined_call_operand.hbm [shape: f32[4,5], index: 0, kind: input, shape index: {}]
  %s1 = inlined_call_operand.hbm [shape: f32[5,8,16], index: 1, kind: input, shape index: {}]
  %s2 = inlined_call_operand.vmem [shape: f32[8,16], index: 2, kind: input, shape index: {}]
  %s3 = inlined_call_operand.vmem [shape: f32[1,16], index: 3, kind: input, shape index: {}]
  %s4 = inlined_call_operand.vmem [shape: f32[1,16], index: 4, kind: input, shape index: {}]
  %s5 = inlined_call_operand.vmem [shape: f32[5,16,26], index: 5, kind: input, shape index: {}]
  %s6 = inlined_call_operand.vmem [shape: f32[5,26,26], index: 6, kind: input, shape index: {}]
  %s7 = inlined_call_operand.vmem [shape: f32[5,26,16], index: 7, kind: input, shape index: {}]
  %s8 = inlined_call_operand.hbm [shape: f32[5,8,26], index: 8, kind: input, shape index: {}]
  %s9 = inlined_call_operand.hbm [shape: f32[8,16], index: 9, kind: output, shape index: {0}]
  %s10 = inlined_call_operand.hbm [shape: f32[8,16], index: 10, kind: output, shape index: {1}]
  %s11 = inlined_call_operand.hbm [shape: f32[5,8,16], index: 11, kind: output, shape index: {2}]
  %s12 = inlined_call_operand.hbm [shape: f32[5,8,16], index: 12, kind: output, shape index: {3}]
  %13 = xla_tuple %s9, %s10, %s11, %s12
  %s14 = sld [smem:[#allocation0]]
  $region86: #{tpu_custom_call.1} parent=0
    _
  %s16 = ssub.s32 1, %s14
  %s17 = scalar_select 0, %s16, %s14
  $region1: #{tpu_custom_call.1} parent=0
    #allocation2 [shape = 'u8[2048]{0}', space=smem, size = 0x800, scoped, tag = 'input window, operand 0, single buffered']
    #allocation3 [shape = 's32[1]{0}', space=sflag, size = 0x4, scoped, tag = 'scoped memory for tpu_custom_call.1']
    #allocation4 [shape = 's32[1]{0}', space=sflag, size = 0x4, scoped, tag = 'scoped memory for tpu_custom_call.1']
    #allocation5 [shape = 's32[1]{0}', space=sflag, size = 0x4, scoped, tag = 'scoped memory for tpu_custom_call.1']
    #allocation6 [shape = 'u8[20480]{0}', space=vmem, size = 0x5000, scoped, tag = 'input window, operand 1, single buffered']
    #allocation7 [shape = 'u8[20480]{0}', space=vmem, size = 0x5000, scoped, tag = 'input window, operand 8, single buffered']
    #allocation8 [shape = 's32[1]{0}', space=sflag, size = 0x4, scoped, tag = 'scoped memory for tpu_custom_call.1']
    #allocation9 [shape = 'u8[4096]{0}', space=vmem, size = 0x1000, scoped, tag = 'output window, operand 0, single buffered']
    #allocation10 [shape = 'u8[4096]{0}', space=vmem, size = 0x1000, scoped, tag = 'output window, operand 1, single buffered']
    #allocation11 [shape = 's32[1]{0}', space=sflag, size = 0x4, scoped, tag = 'scoped memory for tpu_custom_call.1']
    #allocation12 [shape = 'u8[20480]{0}', space=vmem, size = 0x5000, scoped, tag = 'output window, operand 2, single buffered']
    #allocation13 [shape = 'u8[20480]{0}', space=vmem, size = 0x5000, scoped, tag = 'output window, operand 3, single buffered']
    #allocation14 [shape = 's32[1]{0}', space=sflag, size = 0x4, scoped, tag = 'scoped memory for tpu_custom_call.1']
    %18 = vsyncpa [#allocation5], 0
    %19 = vsyncpa [#allocation3], 0
    %20 = vsyncpa [#allocation8], 0
    %21 = vsyncpa [#allocation4], 0
    %22 = vsyncpa [#allocation11], 0
    %23 = vsyncpa [#allocation14], 0
    // Predicated region
    $region2: #{tpu_custom_call.1} parent=1 // pred_check
      _
    $region3: #{tpu_custom_call.1} parent=1 // pred_check_branch
      %25 = sbr.rel (0) target = $region5
    $region4: #{tpu_custom_call.1} parent=1 // pred_region
      %s27 = ssub.s32 64, 64
      %28 = vsyncadd [#allocation5], %s27
      %31 = dma.hbm_to_smem %s0, 64, [#allocation2], [#allocation5]
    $region5: #{tpu_custom_call.1} parent=1 // pred_fallthru
      _
    // Predicated region
    $region6: #{tpu_custom_call.1} parent=1 // pred_check
      _
    $region7: #{tpu_custom_call.1} parent=1 // pred_check_branch
      %33 = sbr.rel (0) target = $region9
    $region8: #{tpu_custom_call.1} parent=1 // pred_region
      %s35 = ssub.s32 640, 640
      %36 = vsyncadd [#allocation3], %s35
      %s37 = sshll.u32 [#allocation6], 4
      %s38 = int_to_ptr.vmem [resolvable:$true] %s37
      %43 = dma.hbm_to_vmem [thread:$0]  %s1, 640, %s38, [#allocation3], 128, 128, 8
    $region9: #{tpu_custom_call.1} parent=1 // pred_fallthru
      _
    // Predicated region
    $region10: #{tpu_custom_call.1} parent=1 // pred_check
      _
    $region11: #{tpu_custom_call.1} parent=1 // pred_check_branch
      %45 = sbr.rel (0) target = $region13
    $region12: #{tpu_custom_call.1} parent=1 // pred_region
      _
    $region13: #{tpu_custom_call.1} parent=1 // pred_fallthru
      _
    // Predicated region
    $region14: #{tpu_custom_call.1} parent=1 // pred_check
      _
    $region15: #{tpu_custom_call.1} parent=1 // pred_check_branch
      %47 = sbr.rel (0) target = $region17
    $region16: #{tpu_custom_call.1} parent=1 // pred_region
      _
    $region17: #{tpu_custom_call.1} parent=1 // pred_fallthru
      _
    // Predicated region
    $region18: #{tpu_custom_call.1} parent=1 // pred_check
      _
    $region19: #{tpu_custom_call.1} parent=1 // pred_check_branch
      %49 = sbr.rel (0) target = $region21
    $region20: #{tpu_custom_call.1} parent=1 // pred_region
      _
    $region21: #{tpu_custom_call.1} parent=1 // pred_fallthru
      _
    // Predicated region
    $region22: #{tpu_custom_call.1} parent=1 // pred_check
      _
    $region23: #{tpu_custom_call.1} parent=1 // pred_check_branch
      %51 = sbr.rel (0) target = $region25
    $region24: #{tpu_custom_call.1} parent=1 // pred_region
      _
    $region25: #{tpu_custom_call.1} parent=1 // pred_fallthru
      _
    // Predicated region
    $region26: #{tpu_custom_call.1} parent=1 // pred_check
      _
    $region27: #{tpu_custom_call.1} parent=1 // pred_check_branch
      %53 = sbr.rel (0) target = $region29
    $region28: #{tpu_custom_call.1} parent=1 // pred_region
      _
    $region29: #{tpu_custom_call.1} parent=1 // pred_fallthru
      _
    // Predicated region
    $region30: #{tpu_custom_call.1} parent=1 // pred_check
      _
    $region31: #{tpu_custom_call.1} parent=1 // pred_check_branch
      %55 = sbr.rel (0) target = $region33
    $region32: #{tpu_custom_call.1} parent=1 // pred_region
      _
    $region33: #{tpu_custom_call.1} parent=1 // pred_fallthru
      _
    // Predicated region
    $region34: #{tpu_custom_call.1} parent=1 // pred_check
      _
    $region35: #{tpu_custom_call.1} parent=1 // pred_check_branch
      %57 = sbr.rel (0) target = $region37
    $region36: #{tpu_custom_call.1} parent=1 // pred_region
      %s59 = ssub.s32 640, 640
      %60 = vsyncadd [#allocation8], %s59
      %s61 = sshll.u32 [#allocation7], 4
      %s62 = int_to_ptr.vmem [resolvable:$true] %s61
      %67 = dma.hbm_to_vmem [thread:$0]  %s8, 640, %s62, [#allocation8], 128, 128, 8
    $region37: #{tpu_custom_call.1} parent=1 // pred_fallthru
      _
    // Predicated region
    $region38: #{tpu_custom_call.1} parent=1 // pred_check
      _
    $region39: #{tpu_custom_call.1} parent=1 // pred_check_branch
      %69 = sbr.rel (0) target = $region41
    $region40: #{tpu_custom_call.1} parent=1 // pred_region
      %70 = dma.done [#allocation5], 64
    $region41: #{tpu_custom_call.1} parent=1 // pred_fallthru
      _
    // Predicated region
    $region42: #{tpu_custom_call.1} parent=1 // pred_check
      _
    $region43: #{tpu_custom_call.1} parent=1 // pred_check_branch
      %72 = sbr.rel (0) target = $region45
    $region44: #{tpu_custom_call.1} parent=1 // pred_region
      %73 = dma.done [#allocation3], 640
    $region45: #{tpu_custom_call.1} parent=1 // pred_fallthru
      _
    // Predicated region
    $region46: #{tpu_custom_call.1} parent=1 // pred_check
      _
    $region47: #{tpu_custom_call.1} parent=1 // pred_check_branch
      %75 = sbr.rel (0) target = $region49
    $region48: #{tpu_custom_call.1} parent=1 // pred_region
      %76 = dma.done [#allocation8], 640
    $region49: #{tpu_custom_call.1} parent=1 // pred_fallthru
      _
    %77 = sfence
    %p78 = scmp.eq.s32.totalorder 0, 0
    // Predicated region
    $region50: #{tpu_custom_call.1} parent=1 // pred_check
      %p79 = pneg %p78
    $region51: #{tpu_custom_call.1} parent=1 // pred_check_branch
      %81 = sbr.rel (%p79) target = $region53
    $region52: #{tpu_custom_call.1} parent=1 // pred_region
      %v82 = vld [vmem:[%s2] sm:$0xff]
      %vm83 = vcmask 130048
      %84 = vst.msk [vmem:[#allocation10] sm:$0xff] %vm83, %v82
      %v85 = vld [vmem:[%s3] sm:$0x1]
      %v87 = vlaneseq
      %v88 = vshrl.u32 %v87, 7
      %v89 = vsub.s32 0, %v88
      %v90 = vrot.slane %v85, %v89
      %92 = vst.msk [vmem:[#allocation9] sm:$0xff] %vm83, %v90
    $region53: #{tpu_custom_call.1} parent=1 // pred_fallthru
      _
    %v93 = vld [vmem:[#allocation10] sm:$0xff]
    %v94 = vld [vmem:[#allocation9] sm:$0xff]
    %s95 = smul.u32 0, 5
    %s96 = sld [smem:[#allocation2 + %s95]]
    %s97 = sshra.s32 %s95, 7
    %s98 = sand.u32 %s95, 127
    %s99 = sadd.s32 %s97, 1
    %s100 = smul.u32 %s99, 128
    %s101 = sshra.s32 %s95, 7
    %s102 = sand.u32 %s95, 127
    %s103 = sadd.s32 %s100, %s102
    %s104 = sld [smem:[#allocation2 + %s103]]
    %s105 = sadd.s32 %s97, 2
    %s106 = smul.u32 %s105, 128
    %s107 = sadd.s32 %s106, %s102
    %s108 = sld [smem:[#allocation2 + %s107]]
    %s109 = sadd.s32 %s97, 3
    %s110 = smul.u32 %s109, 128
    %s111 = sadd.s32 %s110, %s102
    %s112 = sld [smem:[#allocation2 + %s111]]
    %v113 = vld [vmem:[#allocation6] sm:$0xff]
    %v114 = vld [vmem:[%s5] sm:$0xff]
    %v115 = vld [vmem:[%s5 + $0x8] sm:$0xff]
    %v116 = vld [vmem:[#allocation7] sm:$0x1]
    %v117 = vlaneseq
    %v118 = vshrl.u32 %v117, 7
    %v119 = vsub.s32 0, %v118
    %v120 = vrot.slane %v116, %v119
    %vm121 = vcmask 130048
    %v123 = vsel %vm121, %v93, 0
    %125 = vmatprep.subr.mxu0 0.0
    %126 = vmatpush1.msra.mxu0 0.0
    %127 = vmatprep.subr.mxu0 0.0
    %128 = vmatpush1.msra.mxu0 0.0
    %129 = vmatprep.subr.mxu0 0.0
    %130 = vmatpush1.msra.mxu0 0.0
    %131 = vmatprep.subr.mxu0 0.0
    %132 = vmatpush1.msra.mxu0 0.0
    %133 = vmatprep.subr.mxu0 0.0
    %134 = vmatpush1.msra.mxu0 0.0
    %135 = vmatprep.subr.mxu0 0.0
    %136 = vmatpush1.msra.mxu0 0.0
    %137 = vmatprep.subr.mxu0 0.0
    %138 = vmatpush1.msra.mxu0 0.0
    %139 = vmatprep.subr.mxu0 0.0
    %140 = vmatpush1.msra.mxu0 0.0
    %141 = vmatprep.subr.mxu0 0.0
    %142 = vmatpush1.msra.mxu0 0.0
    %143 = vmatprep.subr.mxu0 0.0
    %144 = vmatpush1.msra.mxu0 0.0
    %145 = vmatprep.subr.mxu0 0.0
    %146 = vmatpush1.msra.mxu0 0.0
    %147 = vmatprep.subr.mxu0 0.0
    %148 = vmatpush1.msra.mxu0 0.0
    %149 = vmatprep.subr.mxu0 0.0
    %150 = vmatpush1.msra.mxu0 0.0
    %151 = vmatprep.subr.mxu0 0.0
    %152 = vmatpush1.msra.mxu0 0.0
    %153 = vmatprep.subr.mxu0 0.0
    %v154 = vand.u32 %v115, 4294901760
    %155 = vmatpush1.msra.mxu0 %v154
    %156 = vmatprep.subr.mxu0 0.0
    %v157 = vand.u32 %v114, 4294901760
    %158 = vmatpush1.msra.mxu0 %v157
    %159 = vmatprep.subr.mxu0 0.0
    %160 = vmatpush2.msra.mxu0 0.0
    %161 = vmatprep.subr.mxu0 0.0
    %162 = vmatpush2.msra.mxu0 0.0
    %163 = vmatprep.subr.mxu0 0.0
    %164 = vmatpush2.msra.mxu0 0.0
    %165 = vmatprep.subr.mxu0 0.0
    %166 = vmatpush2.msra.mxu0 0.0
    %167 = vmatprep.subr.mxu0 0.0
    %168 = vmatpush2.msra.mxu0 0.0
    %169 = vmatprep.subr.mxu0 0.0
    %170 = vmatpush2.msra.mxu0 0.0
    %171 = vmatprep.subr.mxu0 0.0
    %172 = vmatpush2.msra.mxu0 0.0
    %173 = vmatprep.subr.mxu0 0.0
    %174 = vmatpush2.msra.mxu0 0.0
    %175 = vmatprep.subr.mxu0 0.0
    %176 = vmatpush2.msra.mxu0 0.0
    %177 = vmatprep.subr.mxu0 0.0
    %178 = vmatpush2.msra.mxu0 0.0
    %179 = vmatprep.subr.mxu0 0.0
    %180 = vmatpush2.msra.mxu0 0.0
    %181 = vmatprep.subr.mxu0 0.0
    %182 = vmatpush2.msra.mxu0 0.0
    %183 = vmatprep.subr.mxu0 0.0
    %184 = vmatpush2.msra.mxu0 0.0
    %185 = vmatprep.subr.mxu0 0.0
    %186 = vmatpush2.msra.mxu0 0.0
    %187 = vmatprep.subr.mxu0 0.0
    %188 = vmatpush2.msra.mxu0 0.0
    %189 = vmatprep.subr.mxu0 0.0
    %190 = vmatpush2.msra.mxu0 0.0
    %191 = vmatprep.mubr.f32.mxu0 0.0
    %v192 = vand.u32 %v123, 4294901760
    %v193 = vsub.f32 %v123, %v192
    %v194 = vand.u32 %v193, 4294901760
    %v195 = vsub.f32 %v193, %v194
    %v196 = vand.u32 %v195, 4294901760
    %197 = vmatmul.mubr.f32.gmra.mxu0 %v196
    %v198 = vpop.f32.mrf.mxu0
    %v199 = vadd.f32 %v120, %v198
    %v200 = vpop.f32.mrf.mxu0
    %201 = vdwg.mxu0
    %202 = vmatprep.subr.mxu0 0.0
    %203 = vmatpush1.msra.mxu0 0.0
    %204 = vmatprep.subr.mxu0 0.0
    %205 = vmatpush1.msra.mxu0 0.0
    %206 = vmatprep.subr.mxu0 0.0
    %207 = vmatpush1.msra.mxu0 0.0
    %208 = vmatprep.subr.mxu0 0.0
    %209 = vmatpush1.msra.mxu0 0.0
    %210 = vmatprep.subr.mxu0 0.0
    %211 = vmatpush1.msra.mxu0 0.0
    %212 = vmatprep.subr.mxu0 0.0
    %213 = vmatpush1.msra.mxu0 0.0
    %214 = vmatprep.subr.mxu0 0.0
    %215 = vmatpush1.msra.mxu0 0.0
    %216 = vmatprep.subr.mxu0 0.0
    %217 = vmatpush1.msra.mxu0 0.0
    %218 = vmatprep.subr.mxu0 0.0
    %219 = vmatpush1.msra.mxu0 0.0
    %220 = vmatprep.subr.mxu0 0.0
    %221 = vmatpush1.msra.mxu0 0.0
    %222 = vmatprep.subr.mxu0 0.0
    %223 = vmatpush1.msra.mxu0 0.0
    %224 = vmatprep.subr.mxu0 0.0
    %225 = vmatpush1.msra.mxu0 0.0
    %226 = vmatprep.subr.mxu0 0.0
    %227 = vmatpush1.msra.mxu0 0.0
    %228 = vmatprep.subr.mxu0 0.0
    %229 = vmatpush1.msra.mxu0 0.0
    %230 = vmatprep.subr.mxu0 0.0
    %v231 = vand.u32 %v115, 4294901760
    %v232 = vsub.f32 %v115, %v231
    %v233 = vand.u32 %v232, 4294901760
    %v234 = vsub.f32 %v232, %v233
    %v235 = vand.u32 %v234, 4294901760
    %236 = vmatpush1.msra.mxu0 %v235
    %237 = vmatprep.subr.mxu0 0.0
    %v238 = vand.u32 %v114, 4294901760
    %v239 = vsub.f32 %v114, %v238
    %v240 = vand.u32 %v239, 4294901760
    %v241 = vsub.f32 %v239, %v240
    %v242 = vand.u32 %v241, 4294901760
    %243 = vmatpush1.msra.mxu0 %v242
    %244 = vmatprep.subr.mxu0 0.0
    %245 = vmatpush2.msra.mxu0 0.0
    %246 = vmatprep.subr.mxu0 0.0
    %247 = vmatpush2.msra.mxu0 0.0
    %248 = vmatprep.subr.mxu0 0.0
    %249 = vmatpush2.msra.mxu0 0.0
    %250 = vmatprep.subr.mxu0 0.0
    %251 = vmatpush2.msra.mxu0 0.0
    %252 = vmatprep.subr.mxu0 0.0
    %253 = vmatpush2.msra.mxu0 0.0
    %254 = vmatprep.subr.mxu0 0.0
    %255 = vmatpush2.msra.mxu0 0.0
    %256 = vmatprep.subr.mxu0 0.0
    %257 = vmatpush2.msra.mxu0 0.0
    %258 = vmatprep.subr.mxu0 0.0
    %259 = vmatpush2.msra.mxu0 0.0
    %260 = vmatprep.subr.mxu0 0.0
    %261 = vmatpush2.msra.mxu0 0.0
    %262 = vmatprep.subr.mxu0 0.0
    %263 = vmatpush2.msra.mxu0 0.0
    %264 = vmatprep.subr.mxu0 0.0
    %265 = vmatpush2.msra.mxu0 0.0
    %266 = vmatprep.subr.mxu0 0.0
    %267 = vmatpush2.msra.mxu0 0.0
    %268 = vmatprep.subr.mxu0 0.0
    %269 = vmatpush2.msra.mxu0 0.0
    %270 = vmatprep.subr.mxu0 0.0
    %271 = vmatpush2.msra.mxu0 0.0
    %272 = vmatprep.subr.mxu0 0.0
    %273 = vmatpush2.msra.mxu0 0.0
    %274 = vmatprep.subr.mxu0 0.0
    %275 = vmatpush2.msra.mxu0 0.0
    %276 = vmatprep.mubr.f32.mxu0 0.0
    %v277 = vand.u32 %v123, 4294901760
    %278 = vmatmul.mubr.f32.gmra.mxu0 %v277
    %v279 = vpop.f32.mrf.mxu0
    %v280 = vadd.f32 %v199, %v279
    %v281 = vpop.f32.mrf.mxu0
    %282 = vdwg.mxu0
    %283 = vmatprep.subr.mxu0 0.0
    %284 = vmatpush1.msra.mxu0 0.0
    %285 = vmatprep.subr.mxu0 0.0
    %286 = vmatpush1.msra.mxu0 0.0
    %287 = vmatprep.subr.mxu0 0.0
    %288 = vmatpush1.msra.mxu0 0.0
    %289 = vmatprep.subr.mxu0 0.0
    %290 = vmatpush1.msra.mxu0 0.0
    %291 = vmatprep.subr.mxu0 0.0
    %292 = vmatpush1.msra.mxu0 0.0
    %293 = vmatprep.subr.mxu0 0.0
    %294 = vmatpush1.msra.mxu0 0.0
    %295 = vmatprep.subr.mxu0 0.0
    %296 = vmatpush1.msra.mxu0 0.0
    %297 = vmatprep.subr.mxu0 0.0
    %298 = vmatpush1.msra.mxu0 0.0
    %299 = vmatprep.subr.mxu0 0.0
    %300 = vmatpush1.msra.mxu0 0.0
    %301 = vmatprep.subr.mxu0 0.0
    %302 = vmatpush1.msra.mxu0 0.0
    %303 = vmatprep.subr.mxu0 0.0
    %304 = vmatpush1.msra.mxu0 0.0
    %305 = vmatprep.subr.mxu0 0.0
    %306 = vmatpush1.msra.mxu0 0.0
    %307 = vmatprep.subr.mxu0 0.0
    %308 = vmatpush1.msra.mxu0 0.0
    %309 = vmatprep.subr.mxu0 0.0
    %310 = vmatpush1.msra.mxu0 0.0
    %311 = vmatprep.subr.mxu0 0.0
    %v312 = vand.u32 %v115, 4294901760
    %v313 = vsub.f32 %v115, %v312
    %314 = vmatpush1.msra.mxu0 %v313
    %315 = vmatprep.subr.mxu0 0.0
    %v316 = vand.u32 %v114, 4294901760
    %v317 = vsub.f32 %v114, %v316
    %318 = vmatpush1.msra.mxu0 %v317
    %319 = vmatprep.subr.mxu0 0.0
    %320 = vmatpush2.msra.mxu0 0.0
    %321 = vmatprep.subr.mxu0 0.0
    %322 = vmatpush2.msra.mxu0 0.0
    %323 = vmatprep.subr.mxu0 0.0
    %324 = vmatpush2.msra.mxu0 0.0
    %325 = vmatprep.subr.mxu0 0.0
    %326 = vmatpush2.msra.mxu0 0.0
    %327 = vmatprep.subr.mxu0 0.0
    %328 = vmatpush2.msra.mxu0 0.0
    %329 = vmatprep.subr.mxu0 0.0
    %330 = vmatpush2.msra.mxu0 0.0
    %331 = vmatprep.subr.mxu0 0.0
    %332 = vmatpush2.msra.mxu0 0.0
    %333 = vmatprep.subr.mxu0 0.0
    %334 = vmatpush2.msra.mxu0 0.0
    %335 = vmatprep.subr.mxu0 0.0
    %336 = vmatpush2.msra.mxu0 0.0
    %337 = vmatprep.subr.mxu0 0.0
    %338 = vmatpush2.msra.mxu0 0.0
    %339 = vmatprep.subr.mxu0 0.0
    %340 = vmatpush2.msra.mxu0 0.0
    %341 = vmatprep.subr.mxu0 0.0
    %342 = vmatpush2.msra.mxu0 0.0
    %343 = vmatprep.subr.mxu0 0.0
    %344 = vmatpush2.msra.mxu0 0.0
    %345 = vmatprep.subr.mxu0 0.0
    %346 = vmatpush2.msra.mxu0 0.0
    %347 = vmatprep.subr.mxu0 0.0
    %348 = vmatpush2.msra.mxu0 0.0
    %349 = vmatprep.subr.mxu0 0.0
    %350 = vmatpush2.msra.mxu0 0.0
    %351 = vmatprep.mubr.f32.mxu0 0.0
    %v352 = vand.u32 %v123, 4294901760
    %v353 = vsub.f32 %v123, %v352
    %354 = vmatmul.mubr.f32.gmra.mxu0 %v353
    %v355 = vpop.f32.mrf.mxu0
    %v356 = vadd.f32 %v280, %v355
    %v357 = vpop.f32.mrf.mxu0
    %358 = vdwg.mxu0
    %359 = vmatprep.subr.mxu0 0.0
    %360 = vmatpush1.msra.mxu0 0.0
    %361 = vmatprep.subr.mxu0 0.0
    %362 = vmatpush1.msra.mxu0 0.0
    %363 = vmatprep.subr.mxu0 0.0
    %364 = vmatpush1.msra.mxu0 0.0
    %365 = vmatprep.subr.mxu0 0.0
    %366 = vmatpush1.msra.mxu0 0.0
    %367 = vmatprep.subr.mxu0 0.0
    %368 = vmatpush1.msra.mxu0 0.0
    %369 = vmatprep.subr.mxu0 0.0
    %370 = vmatpush1.msra.mxu0 0.0
    %371 = vmatprep.subr.mxu0 0.0
    %372 = vmatpush1.msra.mxu0 0.0
    %373 = vmatprep.subr.mxu0 0.0
    %374 = vmatpush1.msra.mxu0 0.0
    %375 = vmatprep.subr.mxu0 0.0
    %376 = vmatpush1.msra.mxu0 0.0
    %377 = vmatprep.subr.mxu0 0.0
    %378 = vmatpush1.msra.mxu0 0.0
    %379 = vmatprep.subr.mxu0 0.0
    %380 = vmatpush1.msra.mxu0 0.0
    %381 = vmatprep.subr.mxu0 0.0
    %382 = vmatpush1.msra.mxu0 0.0
    %383 = vmatprep.subr.mxu0 0.0
    %384 = vmatpush1.msra.mxu0 0.0
    %385 = vmatprep.subr.mxu0 0.0
    %386 = vmatpush1.msra.mxu0 0.0
    %387 = vmatprep.subr.mxu0 0.0
    %v388 = vand.u32 %v115, 4294901760
    %389 = vmatpush1.msra.mxu0 %v388
    %390 = vmatprep.subr.mxu0 0.0
    %v391 = vand.u32 %v114, 4294901760
    %392 = vmatpush1.msra.mxu0 %v391
    %393 = vmatprep.subr.mxu0 0.0
    %394 = vmatpush2.msra.mxu0 0.0
    %395 = vmatprep.subr.mxu0 0.0
    %396 = vmatpush2.msra.mxu0 0.0
    %397 = vmatprep.subr.mxu0 0.0
    %398 = vmatpush2.msra.mxu0 0.0
    %399 = vmatprep.subr.mxu0 0.0
    %400 = vmatpush2.msra.mxu0 0.0
    %401 = vmatprep.subr.mxu0 0.0
    %402 = vmatpush2.msra.mxu0 0.0
    %403 = vmatprep.subr.mxu0 0.0
    %404 = vmatpush2.msra.mxu0 0.0
    %405 = vmatprep.subr.mxu0 0.0
    %406 = vmatpush2.msra.mxu0 0.0
    %407 = vmatprep.subr.mxu0 0.0
    %408 = vmatpush2.msra.mxu0 0.0
    %409 = vmatprep.subr.mxu0 0.0
    %410 = vmatpush2.msra.mxu0 0.0
    %411 = vmatprep.subr.mxu0 0.0
    %412 = vmatpush2.msra.mxu0 0.0
    %413 = vmatprep.subr.mxu0 0.0
    %414 = vmatpush2.msra.mxu0 0.0
    %415 = vmatprep.subr.mxu0 0.0
    %416 = vmatpush2.msra.mxu0 0.0
    %417 = vmatprep.subr.mxu0 0.0
    %418 = vmatpush2.msra.mxu0 0.0
    %419 = vmatprep.subr.mxu0 0.0
    %420 = vmatpush2.msra.mxu0 0.0
    %421 = vmatprep.subr.mxu0 0.0
    %422 = vmatpush2.msra.mxu0 0.0
    %423 = vmatprep.subr.mxu0 0.0
    %424 = vmatpush2.msra.mxu0 0.0
    %425 = vmatprep.mubr.f32.mxu0 0.0
    %v426 = vand.u32 %v123, 4294901760
    %v427 = vsub.f32 %v123, %v426
    %v428 = vand.u32 %v427, 4294901760
    %429 = vmatmul.mubr.f32.gmra.mxu0 %v428
    %v430 = vpop.f32.mrf.mxu0
    %v431 = vadd.f32 %v356, %v430
    %v432 = vpop.f32.mrf.mxu0
    %433 = vdwg.mxu0
    %434 = vmatprep.subr.mxu0 0.0
    %435 = vmatpush1.msra.mxu0 0.0
    %436 = vmatprep.subr.mxu0 0.0
    %437 = vmatpush1.msra.mxu0 0.0
    %438 = vmatprep.subr.mxu0 0.0
    %439 = vmatpush1.msra.mxu0 0.0
    %440 = vmatprep.subr.mxu0 0.0
    %441 = vmatpush1.msra.mxu0 0.0
    %442 = vmatprep.subr.mxu0 0.0
    %443 = vmatpush1.msra.mxu0 0.0
    %444 = vmatprep.subr.mxu0 0.0
    %445 = vmatpush1.msra.mxu0 0.0
    %446 = vmatprep.subr.mxu0 0.0
    %447 = vmatpush1.msra.mxu0 0.0
    %448 = vmatprep.subr.mxu0 0.0
    %449 = vmatpush1.msra.mxu0 0.0
    %450 = vmatprep.subr.mxu0 0.0
    %451 = vmatpush1.msra.mxu0 0.0
    %452 = vmatprep.subr.mxu0 0.0
    %453 = vmatpush1.msra.mxu0 0.0
    %454 = vmatprep.subr.mxu0 0.0
    %455 = vmatpush1.msra.mxu0 0.0
    %456 = vmatprep.subr.mxu0 0.0
    %457 = vmatpush1.msra.mxu0 0.0
    %458 = vmatprep.subr.mxu0 0.0
    %459 = vmatpush1.msra.mxu0 0.0
    %460 = vmatprep.subr.mxu0 0.0
    %461 = vmatpush1.msra.mxu0 0.0
    %462 = vmatprep.subr.mxu0 0.0
    %v463 = vand.u32 %v115, 4294901760
    %v464 = vsub.f32 %v115, %v463
    %v465 = vand.u32 %v464, 4294901760
    %466 = vmatpush1.msra.mxu0 %v465
    %467 = vmatprep.subr.mxu0 0.0
    %v468 = vand.u32 %v114, 4294901760
    %v469 = vsub.f32 %v114, %v468
    %v470 = vand.u32 %v469, 4294901760
    %471 = vmatpush1.msra.mxu0 %v470
    %472 = vmatprep.subr.mxu0 0.0
    %473 = vmatpush2.msra.mxu0 0.0
    %474 = vmatprep.subr.mxu0 0.0
    %475 = vmatpush2.msra.mxu0 0.0
    %476 = vmatprep.subr.mxu0 0.0
    %477 = vmatpush2.msra.mxu0 0.0
    %478 = vmatprep.subr.mxu0 0.0
    %479 = vmatpush2.msra.mxu0 0.0
    %480 = vmatprep.subr.mxu0 0.0
    %481 = vmatpush2.msra.mxu0 0.0
    %482 = vmatprep.subr.mxu0 0.0
    %483 = vmatpush2.msra.mxu0 0.0
    %484 = vmatprep.subr.mxu0 0.0
    %485 = vmatpush2.msra.mxu0 0.0
    %486 = vmatprep.subr.mxu0 0.0
    %487 = vmatpush2.msra.mxu0 0.0
    %488 = vmatprep.subr.mxu0 0.0
    %489 = vmatpush2.msra.mxu0 0.0
    %490 = vmatprep.subr.mxu0 0.0
    %491 = vmatpush2.msra.mxu0 0.0
    %492 = vmatprep.subr.mxu0 0.0
    %493 = vmatpush2.msra.mxu0 0.0
    %494 = vmatprep.subr.mxu0 0.0
    %495 = vmatpush2.msra.mxu0 0.0
    %496 = vmatprep.subr.mxu0 0.0
    %497 = vmatpush2.msra.mxu0 0.0
    %498 = vmatprep.subr.mxu0 0.0
    %499 = vmatpush2.msra.mxu0 0.0
    %500 = vmatprep.subr.mxu0 0.0
    %501 = vmatpush2.msra.mxu0 0.0
    %502 = vmatprep.subr.mxu0 0.0
    %503 = vmatpush2.msra.mxu0 0.0
    %504 = vmatprep.mubr.f32.mxu0 0.0
    %v505 = vand.u32 %v123, 4294901760
    %506 = vmatmul.mubr.f32.gmra.mxu0 %v505
    %v507 = vpop.f32.mrf.mxu0
    %v508 = vadd.f32 %v431, %v507
    %v509 = vpop.f32.mrf.mxu0
    %510 = vdwg.mxu0
    %511 = vmatprep.subr.mxu0 0.0
    %512 = vmatpush1.msra.mxu0 0.0
    %513 = vmatprep.subr.mxu0 0.0
    %514 = vmatpush1.msra.mxu0 0.0
    %515 = vmatprep.subr.mxu0 0.0
    %516 = vmatpush1.msra.mxu0 0.0
    %517 = vmatprep.subr.mxu0 0.0
    %518 = vmatpush1.msra.mxu0 0.0
    %519 = vmatprep.subr.mxu0 0.0
    %520 = vmatpush1.msra.mxu0 0.0
    %521 = vmatprep.subr.mxu0 0.0
    %522 = vmatpush1.msra.mxu0 0.0
    %523 = vmatprep.subr.mxu0 0.0
    %524 = vmatpush1.msra.mxu0 0.0
    %525 = vmatprep.subr.mxu0 0.0
    %526 = vmatpush1.msra.mxu0 0.0
    %527 = vmatprep.subr.mxu0 0.0
    %528 = vmatpush1.msra.mxu0 0.0
    %529 = vmatprep.subr.mxu0 0.0
    %530 = vmatpush1.msra.mxu0 0.0
    %531 = vmatprep.subr.mxu0 0.0
    %532 = vmatpush1.msra.mxu0 0.0
    %533 = vmatprep.subr.mxu0 0.0
    %534 = vmatpush1.msra.mxu0 0.0
    %535 = vmatprep.subr.mxu0 0.0
    %536 = vmatpush1.msra.mxu0 0.0
    %537 = vmatprep.subr.mxu0 0.0
    %538 = vmatpush1.msra.mxu0 0.0
    %539 = vmatprep.subr.mxu0 0.0
    %v540 = vand.u32 %v115, 4294901760
    %541 = vmatpush1.msra.mxu0 %v540
    %542 = vmatprep.subr.mxu0 0.0
    %v543 = vand.u32 %v114, 4294901760
    %544 = vmatpush1.msra.mxu0 %v543
    %545 = vmatprep.subr.mxu0 0.0
    %546 = vmatpush2.msra.mxu0 0.0
    %547 = vmatprep.subr.mxu0 0.0
    %548 = vmatpush2.msra.mxu0 0.0
    %549 = vmatprep.subr.mxu0 0.0
    %550 = vmatpush2.msra.mxu0 0.0
    %551 = vmatprep.subr.mxu0 0.0
    %552 = vmatpush2.msra.mxu0 0.0
    %553 = vmatprep.subr.mxu0 0.0
    %554 = vmatpush2.msra.mxu0 0.0
    %555 = vmatprep.subr.mxu0 0.0
    %556 = vmatpush2.msra.mxu0 0.0
    %557 = vmatprep.subr.mxu0 0.0
    %558 = vmatpush2.msra.mxu0 0.0
    %559 = vmatprep.subr.mxu0 0.0
    %560 = vmatpush2.msra.mxu0 0.0
    %561 = vmatprep.subr.mxu0 0.0
    %562 = vmatpush2.msra.mxu0 0.0
    %563 = vmatprep.subr.mxu0 0.0
    %564 = vmatpush2.msra.mxu0 0.0
    %565 = vmatprep.subr.mxu0 0.0
    %566 = vmatpush2.msra.mxu0 0.0
    %567 = vmatprep.subr.mxu0 0.0
    %568 = vmatpush2.msra.mxu0 0.0
    %569 = vmatprep.subr.mxu0 0.0
    %570 = vmatpush2.msra.mxu0 0.0
    %571 = vmatprep.subr.mxu0 0.0
    %572 = vmatpush2.msra.mxu0 0.0
    %573 = vmatprep.subr.mxu0 0.0
    %574 = vmatpush2.msra.mxu0 0.0
    %575 = vmatprep.subr.mxu0 0.0
    %576 = vmatpush2.msra.mxu0 0.0
    %577 = vmatprep.mubr.f32.mxu0 0.0
    %v578 = vand.u32 %v123, 4294901760
    %579 = vmatmul.mubr.f32.gmra.mxu0 %v578
    %v580 = vpop.f32.mrf.mxu0
    %v581 = vadd.f32 %v508, %v580
    %v582 = vpop.f32.mrf.mxu0
    %583 = vdwg.mxu0
    %vm584 = vcmask 211968
    %v585 = vsel %vm584, %v581, 0.0
    %v586 = vrot.slane %v585, 4
    %v587 = vadd.f32 %v585, %v586
    %v588 = vrot.slane %v587, 2
    %v589 = vadd.f32 %v587, %v588
    %v590 = vrot.slane %v589, 1
    %v591 = vadd.f32 %v589, %v590
    %v592 = vrcp.pop 8.0
    %v593 = vmul.f32 %v591, %v592
    %v594 = vsub.f32 %v581, %v593
    %v595 = vmul.f32 %v594, %v594
    %v596 = vsel %vm584, %v595, 0.0
    %v597 = vrot.slane %v596, 4
    %v598 = vadd.f32 %v596, %v597
    %v599 = vrot.slane %v598, 2
    %v600 = vadd.f32 %v598, %v599
    %v601 = vrot.slane %v600, 1
    %v602 = vadd.f32 %v600, %v601
    %v603 = vmul.f32 %v602, %v592
    %v604 = vadd.f32 %v603, 1e-05
    %v605 = vrsqrt.pop %v604
    %v606 = vmul.f32 %v594, %v605
    %v607 = vld [vmem:[#allocation7 + $0x1] sm:$0x1]
    %v608 = vlaneseq
    %v609 = vshrl.u32 %v608, 7
    %v610 = vsub.s32 0, %v609
    %v611 = vrot.slane %v607, %v610
    %v612 = vmul.f32 %v606, %v611
    %v613 = vld [vmem:[#allocation7 + $0x2] sm:$0x1]
    %v614 = vlaneseq
    %v615 = vshrl.u32 %v614, 7
    %v616 = vsub.s32 0, %v615
    %v617 = vrot.slane %v613, %v616
    %v618 = vadd.f32 %v612, %v617
    %v619 = vmax.f32 %v618, 0.0
    %v620 = vld [vmem:[%s6] sm:$0xff]
    %v621 = vld [vmem:[%s6 + $0x8] sm:$0xff]
    %v622 = vld [vmem:[%s6 + $0x10] sm:$0xff]
    %v623 = vld [vmem:[%s6 + $0x18] sm:$0x3]
    %v624 = vld [vmem:[#allocation7 + $0x3] sm:$0x1]
    %v625 = vlaneseq
    %v626 = vshrl.u32 %v625, 7
    %v627 = vsub.s32 0, %v626
    %v628 = vrot.slane %v624, %v627
    %v630 = vsel %vm584, %v619, 0
    %vm632 = vcmask 1041408
    %v634 = vsel %vm632, %v623, 0
    %636 = vmatprep.subr.mxu0 0.0
    %637 = vmatpush1.msra.mxu0 0.0
    %638 = vmatprep.subr.mxu0 0.0
    %639 = vmatpush1.msra.mxu0 0.0
    %640 = vmatprep.subr.mxu0 0.0
    %641 = vmatpush1.msra.mxu0 0.0
    %642 = vmatprep.subr.mxu0 0.0
    %643 = vmatpush1.msra.mxu0 0.0
    %644 = vmatprep.subr.mxu0 0.0
    %645 = vmatpush1.msra.mxu0 0.0
    %646 = vmatprep.subr.mxu0 0.0
    %647 = vmatpush1.msra.mxu0 0.0
    %648 = vmatprep.subr.mxu0 0.0
    %649 = vmatpush1.msra.mxu0 0.0
    %650 = vmatprep.subr.mxu0 0.0
    %651 = vmatpush1.msra.mxu0 0.0
    %652 = vmatprep.subr.mxu0 0.0
    %653 = vmatpush1.msra.mxu0 0.0
    %654 = vmatprep.subr.mxu0 0.0
    %655 = vmatpush1.msra.mxu0 0.0
    %656 = vmatprep.subr.mxu0 0.0
    %657 = vmatpush1.msra.mxu0 0.0
    %658 = vmatprep.subr.mxu0 0.0
    %659 = vmatpush1.msra.mxu0 0.0
    %660 = vmatprep.subr.mxu0 0.0
    %v661 = vand.u32 %v634, 4294901760
    %662 = vmatpush1.msra.mxu0 %v661
    %663 = vmatprep.subr.mxu0 0.0
    %v664 = vand.u32 %v622, 4294901760
    %665 = vmatpush1.msra.mxu0 %v664
    %666 = vmatprep.subr.mxu0 0.0
    %v667 = vand.u32 %v621, 4294901760
    %668 = vmatpush1.msra.mxu0 %v667
    %669 = vmatprep.subr.mxu0 0.0
    %v670 = vand.u32 %v620, 4294901760
    %671 = vmatpush1.msra.mxu0 %v670
    %672 = vmatprep.subr.mxu0 0.0
    %673 = vmatpush2.msra.mxu0 0.0
    %674 = vmatprep.subr.mxu0 0.0
    %675 = vmatpush2.msra.mxu0 0.0
    %676 = vmatprep.subr.mxu0 0.0
    %677 = vmatpush2.msra.mxu0 0.0
    %678 = vmatprep.subr.mxu0 0.0
    %679 = vmatpush2.msra.mxu0 0.0
    %680 = vmatprep.subr.mxu0 0.0
    %681 = vmatpush2.msra.mxu0 0.0
    %682 = vmatprep.subr.mxu0 0.0
    %683 = vmatpush2.msra.mxu0 0.0
    %684 = vmatprep.subr.mxu0 0.0
    %685 = vmatpush2.msra.mxu0 0.0
    %686 = vmatprep.subr.mxu0 0.0
    %687 = vmatpush2.msra.mxu0 0.0
    %688 = vmatprep.subr.mxu0 0.0
    %689 = vmatpush2.msra.mxu0 0.0
    %690 = vmatprep.subr.mxu0 0.0
    %691 = vmatpush2.msra.mxu0 0.0
    %692 = vmatprep.subr.mxu0 0.0
    %693 = vmatpush2.msra.mxu0 0.0
    %694 = vmatprep.subr.mxu0 0.0
    %695 = vmatpush2.msra.mxu0 0.0
    %696 = vmatprep.subr.mxu0 0.0
    %697 = vmatpush2.msra.mxu0 0.0
    %698 = vmatprep.subr.mxu0 0.0
    %699 = vmatpush2.msra.mxu0 0.0
    %700 = vmatprep.subr.mxu0 0.0
    %701 = vmatpush2.msra.mxu0 0.0
    %702 = vmatprep.subr.mxu0 0.0
    %703 = vmatpush2.msra.mxu0 0.0
    %704 = vmatprep.mubr.f32.mxu0 0.0
    %v705 = vand.u32 %v630, 4294901760
    %v706 = vsub.f32 %v630, %v705
    %v707 = vand.u32 %v706, 4294901760
    %v708 = vsub.f32 %v706, %v707
    %v709 = vand.u32 %v708, 4294901760
    %710 = vmatmul.mubr.f32.gmra.mxu0 %v709
    %v711 = vpop.f32.mrf.mxu0
    %v712 = vadd.f32 %v628, %v711
    %v713 = vpop.f32.mrf.mxu0
    %714 = vdwg.mxu0
    %715 = vmatprep.subr.mxu0 0.0
    %716 = vmatpush1.msra.mxu0 0.0
    %717 = vmatprep.subr.mxu0 0.0
    %718 = vmatpush1.msra.mxu0 0.0
    %719 = vmatprep.subr.mxu0 0.0
    %720 = vmatpush1.msra.mxu0 0.0
    %721 = vmatprep.subr.mxu0 0.0
    %722 = vmatpush1.msra.mxu0 0.0
    %723 = vmatprep.subr.mxu0 0.0
    %724 = vmatpush1.msra.mxu0 0.0
    %725 = vmatprep.subr.mxu0 0.0
    %726 = vmatpush1.msra.mxu0 0.0
    %727 = vmatprep.subr.mxu0 0.0
    %728 = vmatpush1.msra.mxu0 0.0
    %729 = vmatprep.subr.mxu0 0.0
    %730 = vmatpush1.msra.mxu0 0.0
    %731 = vmatprep.subr.mxu0 0.0
    %732 = vmatpush1.msra.mxu0 0.0
    %733 = vmatprep.subr.mxu0 0.0
    %734 = vmatpush1.msra.mxu0 0.0
    %735 = vmatprep.subr.mxu0 0.0
    %736 = vmatpush1.msra.mxu0 0.0
    %737 = vmatprep.subr.mxu0 0.0
    %738 = vmatpush1.msra.mxu0 0.0
    %739 = vmatprep.subr.mxu0 0.0
    %v740 = vand.u32 %v634, 4294901760
    %v741 = vsub.f32 %v634, %v740
    %v742 = vand.u32 %v741, 4294901760
    %v743 = vsub.f32 %v741, %v742
    %v744 = vand.u32 %v743, 4294901760
    %745 = vmatpush1.msra.mxu0 %v744
    %746 = vmatprep.subr.mxu0 0.0
    %v747 = vand.u32 %v622, 4294901760
    %v748 = vsub.f32 %v622, %v747
    %v749 = vand.u32 %v748, 4294901760
    %v750 = vsub.f32 %v748, %v749
    %v751 = vand.u32 %v750, 4294901760
    %752 = vmatpush1.msra.mxu0 %v751
    %753 = vmatprep.subr.mxu0 0.0
    %v754 = vand.u32 %v621, 4294901760
    %v755 = vsub.f32 %v621, %v754
    %v756 = vand.u32 %v755, 4294901760
    %v757 = vsub.f32 %v755, %v756
    %v758 = vand.u32 %v757, 4294901760
    %759 = vmatpush1.msra.mxu0 %v758
    %760 = vmatprep.subr.mxu0 0.0
    %v761 = vand.u32 %v620, 4294901760
    %v762 = vsub.f32 %v620, %v761
    %v763 = vand.u32 %v762, 4294901760
    %v764 = vsub.f32 %v762, %v763
    %v765 = vand.u32 %v764, 4294901760
    %766 = vmatpush1.msra.mxu0 %v765
    %767 = vmatprep.subr.mxu0 0.0
    %768 = vmatpush2.msra.mxu0 0.0
    %769 = vmatprep.subr.mxu0 0.0
    %770 = vmatpush2.msra.mxu0 0.0
    %771 = vmatprep.subr.mxu0 0.0
    %772 = vmatpush2.msra.mxu0 0.0
    %773 = vmatprep.subr.mxu0 0.0
    %774 = vmatpush2.msra.mxu0 0.0
    %775 = vmatprep.subr.mxu0 0.0
    %776 = vmatpush2.msra.mxu0 0.0
    %777 = vmatprep.subr.mxu0 0.0
    %778 = vmatpush2.msra.mxu0 0.0
    %779 = vmatprep.subr.mxu0 0.0
    %780 = vmatpush2.msra.mxu0 0.0
    %781 = vmatprep.subr.mxu0 0.0
    %782 = vmatpush2.msra.mxu0 0.0
    %783 = vmatprep.subr.mxu0 0.0
    %784 = vmatpush2.msra.mxu0 0.0
    %785 = vmatprep.subr.mxu0 0.0
    %786 = vmatpush2.msra.mxu0 0.0
    %787 = vmatprep.subr.mxu0 0.0
    %788 = vmatpush2.msra.mxu0 0.0
    %789 = vmatprep.subr.mxu0 0.0
    %790 = vmatpush2.msra.mxu0 0.0
    %791 = vmatprep.subr.mxu0 0.0
    %792 = vmatpush2.msra.mxu0 0.0
    %793 = vmatprep.subr.mxu0 0.0
    %794 = vmatpush2.msra.mxu0 0.0
    %795 = vmatprep.subr.mxu0 0.0
    %796 = vmatpush2.msra.mxu0 0.0
    %797 = vmatprep.subr.mxu0 0.0
    %798 = vmatpush2.msra.mxu0 0.0
    %799 = vmatprep.mubr.f32.mxu0 0.0
    %v800 = vand.u32 %v630, 4294901760
    %801 = vmatmul.mubr.f32.gmra.mxu0 %v800
    %v802 = vpop.f32.mrf.mxu0
    %v803 = vadd.f32 %v712, %v802
    %v804 = vpop.f32.mrf.mxu0
    %805 = vdwg.mxu0
    %806 = vmatprep.subr.mxu0 0.0
    %807 = vmatpush1.msra.mxu0 0.0
    %808 = vmatprep.subr.mxu0 0.0
    %809 = vmatpush1.msra.mxu0 0.0
    %810 = vmatprep.subr.mxu0 0.0
    %811 = vmatpush1.msra.mxu0 0.0
    %812 = vmatprep.subr.mxu0 0.0
    %813 = vmatpush1.msra.mxu0 0.0
    %814 = vmatprep.subr.mxu0 0.0
    %815 = vmatpush1.msra.mxu0 0.0
    %816 = vmatprep.subr.mxu0 0.0
    %817 = vmatpush1.msra.mxu0 0.0
    %818 = vmatprep.subr.mxu0 0.0
    %819 = vmatpush1.msra.mxu0 0.0
    %820 = vmatprep.subr.mxu0 0.0
    %821 = vmatpush1.msra.mxu0 0.0
    %822 = vmatprep.subr.mxu0 0.0
    %823 = vmatpush1.msra.mxu0 0.0
    %824 = vmatprep.subr.mxu0 0.0
    %825 = vmatpush1.msra.mxu0 0.0
    %826 = vmatprep.subr.mxu0 0.0
    %827 = vmatpush1.msra.mxu0 0.0
    %828 = vmatprep.subr.mxu0 0.0
    %829 = vmatpush1.msra.mxu0 0.0
    %830 = vmatprep.subr.mxu0 0.0
    %v831 = vand.u32 %v634, 4294901760
    %v832 = vsub.f32 %v634, %v831
    %833 = vmatpush1.msra.mxu0 %v832
    %834 = vmatprep.subr.mxu0 0.0
    %v835 = vand.u32 %v622, 4294901760
    %v836 = vsub.f32 %v622, %v835
    %837 = vmatpush1.msra.mxu0 %v836
    %838 = vmatprep.subr.mxu0 0.0
    %v839 = vand.u32 %v621, 4294901760
    %v840 = vsub.f32 %v621, %v839
    %841 = vmatpush1.msra.mxu0 %v840
    %842 = vmatprep.subr.mxu0 0.0
    %v843 = vand.u32 %v620, 4294901760
    %v844 = vsub.f32 %v620, %v843
    %845 = vmatpush1.msra.mxu0 %v844
    %846 = vmatprep.subr.mxu0 0.0
    %847 = vmatpush2.msra.mxu0 0.0
    %848 = vmatprep.subr.mxu0 0.0
    %849 = vmatpush2.msra.mxu0 0.0
    %850 = vmatprep.subr.mxu0 0.0
    %851 = vmatpush2.msra.mxu0 0.0
    %852 = vmatprep.subr.mxu0 0.0
    %853 = vmatpush2.msra.mxu0 0.0
    %854 = vmatprep.subr.mxu0 0.0
    %855 = vmatpush2.msra.mxu0 0.0
    %856 = vmatprep.subr.mxu0 0.0
    %857 = vmatpush2.msra.mxu0 0.0
    %858 = vmatprep.subr.mxu0 0.0
    %859 = vmatpush2.msra.mxu0 0.0
    %860 = vmatprep.subr.mxu0 0.0
    %861 = vmatpush2.msra.mxu0 0.0
    %862 = vmatprep.subr.mxu0 0.0
    %863 = vmatpush2.msra.mxu0 0.0
    %864 = vmatprep.subr.mxu0 0.0
    %865 = vmatpush2.msra.mxu0 0.0
    %866 = vmatprep.subr.mxu0 0.0
    %867 = vmatpush2.msra.mxu0 0.0
    %868 = vmatprep.subr.mxu0 0.0
    %869 = vmatpush2.msra.mxu0 0.0
    %870 = vmatprep.subr.mxu0 0.0
    %871 = vmatpush2.msra.mxu0 0.0
    %872 = vmatprep.subr.mxu0 0.0
    %873 = vmatpush2.msra.mxu0 0.0
    %874 = vmatprep.subr.mxu0 0.0
    %875 = vmatpush2.msra.mxu0 0.0
    %876 = vmatprep.subr.mxu0 0.0
    %877 = vmatpush2.msra.mxu0 0.0
    %878 = vmatprep.mubr.f32.mxu0 0.0
    %v879 = vand.u32 %v630, 4294901760
    %v880 = vsub.f32 %v630, %v879
    %881 = vmatmul.mubr.f32.gmra.mxu0 %v880
    %v882 = vpop.f32.mrf.mxu0
    %v883 = vadd.f32 %v803, %v882
    %v884 = vpop.f32.mrf.mxu0
    %885 = vdwg.mxu0
    %886 = vmatprep.subr.mxu0 0.0
    %887 = vmatpush1.msra.mxu0 0.0
    %888 = vmatprep.subr.mxu0 0.0
    %889 = vmatpush1.msra.mxu0 0.0
    %890 = vmatprep.subr.mxu0 0.0
    %891 = vmatpush1.msra.mxu0 0.0
    %892 = vmatprep.subr.mxu0 0.0
    %893 = vmatpush1.msra.mxu0 0.0
    %894 = vmatprep.subr.mxu0 0.0
    %895 = vmatpush1.msra.mxu0 0.0
    %896 = vmatprep.subr.mxu0 0.0
    %897 = vmatpush1.msra.mxu0 0.0
    %898 = vmatprep.subr.mxu0 0.0
    %899 = vmatpush1.msra.mxu0 0.0
    %900 = vmatprep.subr.mxu0 0.0
    %901 = vmatpush1.msra.mxu0 0.0
    %902 = vmatprep.subr.mxu0 0.0
    %903 = vmatpush1.msra.mxu0 0.0
    %904 = vmatprep.subr.mxu0 0.0
    %905 = vmatpush1.msra.mxu0 0.0
    %906 = vmatprep.subr.mxu0 0.0
    %907 = vmatpush1.msra.mxu0 0.0
    %908 = vmatprep.subr.mxu0 0.0
    %909 = vmatpush1.msra.mxu0 0.0
    %910 = vmatprep.subr.mxu0 0.0
    %v911 = vand.u32 %v634, 4294901760
    %912 = vmatpush1.msra.mxu0 %v911
    %913 = vmatprep.subr.mxu0 0.0
    %v914 = vand.u32 %v622, 4294901760
    %915 = vmatpush1.msra.mxu0 %v914
    %916 = vmatprep.subr.mxu0 0.0
    %v917 = vand.u32 %v621, 4294901760
    %918 = vmatpush1.msra.mxu0 %v917
    %919 = vmatprep.subr.mxu0 0.0
    %v920 = vand.u32 %v620, 4294901760
    %921 = vmatpush1.msra.mxu0 %v920
    %922 = vmatprep.subr.mxu0 0.0
    %923 = vmatpush2.msra.mxu0 0.0
    %924 = vmatprep.subr.mxu0 0.0
    %925 = vmatpush2.msra.mxu0 0.0
    %926 = vmatprep.subr.mxu0 0.0
    %927 = vmatpush2.msra.mxu0 0.0
    %928 = vmatprep.subr.mxu0 0.0
    %929 = vmatpush2.msra.mxu0 0.0
    %930 = vmatprep.subr.mxu0 0.0
    %931 = vmatpush2.msra.mxu0 0.0
    %932 = vmatprep.subr.mxu0 0.0
    %933 = vmatpush2.msra.mxu0 0.0
    %934 = vmatprep.subr.mxu0 0.0
    %935 = vmatpush2.msra.mxu0 0.0
    %936 = vmatprep.subr.mxu0 0.0
    %937 = vmatpush2.msra.mxu0 0.0
    %938 = vmatprep.subr.mxu0 0.0
    %939 = vmatpush2.msra.mxu0 0.0
    %940 = vmatprep.subr.mxu0 0.0
    %941 = vmatpush2.msra.mxu0 0.0
    %942 = vmatprep.subr.mxu0 0.0
    %943 = vmatpush2.msra.mxu0 0.0
    %944 = vmatprep.subr.mxu0 0.0
    %945 = vmatpush2.msra.mxu0 0.0
    %946 = vmatprep.subr.mxu0 0.0
    %947 = vmatpush2.msra.mxu0 0.0
    %948 = vmatprep.subr.mxu0 0.0
    %949 = vmatpush2.msra.mxu0 0.0
    %950 = vmatprep.subr.mxu0 0.0
    %951 = vmatpush2.msra.mxu0 0.0
    %952 = vmatprep.subr.mxu0 0.0
    %953 = vmatpush2.msra.mxu0 0.0
    %954 = vmatprep.mubr.f32.mxu0 0.0
    %v955 = vand.u32 %v630, 4294901760
    %v956 = vsub.f32 %v630, %v955
    %v957 = vand.u32 %v956, 4294901760
    %958 = vmatmul.mubr.f32.gmra.mxu0 %v957
    %v959 = vpop.f32.mrf.mxu0
    %v960 = vadd.f32 %v883, %v959
    %v961 = vpop.f32.mrf.mxu0
    %962 = vdwg.mxu0
    %963 = vmatprep.subr.mxu0 0.0
    %964 = vmatpush1.msra.mxu0 0.0
    %965 = vmatprep.subr.mxu0 0.0
    %966 = vmatpush1.msra.mxu0 0.0
    %967 = vmatprep.subr.mxu0 0.0
    %968 = vmatpush1.msra.mxu0 0.0
    %969 = vmatprep.subr.mxu0 0.0
    %970 = vmatpush1.msra.mxu0 0.0
    %971 = vmatprep.subr.mxu0 0.0
    %972 = vmatpush1.msra.mxu0 0.0
    %973 = vmatprep.subr.mxu0 0.0
    %974 = vmatpush1.msra.mxu0 0.0
    %975 = vmatprep.subr.mxu0 0.0
    %976 = vmatpush1.msra.mxu0 0.0
    %977 = vmatprep.subr.mxu0 0.0
    %978 = vmatpush1.msra.mxu0 0.0
    %979 = vmatprep.subr.mxu0 0.0
    %980 = vmatpush1.msra.mxu0 0.0
    %981 = vmatprep.subr.mxu0 0.0
    %982 = vmatpush1.msra.mxu0 0.0
    %983 = vmatprep.subr.mxu0 0.0
    %984 = vmatpush1.msra.mxu0 0.0
    %985 = vmatprep.subr.mxu0 0.0
    %986 = vmatpush1.msra.mxu0 0.0
    %987 = vmatprep.subr.mxu0 0.0
    %v988 = vand.u32 %v634, 4294901760
    %v989 = vsub.f32 %v634, %v988
    %v990 = vand.u32 %v989, 4294901760
    %991 = vmatpush1.msra.mxu0 %v990
    %992 = vmatprep.subr.mxu0 0.0
    %v993 = vand.u32 %v622, 4294901760
    %v994 = vsub.f32 %v622, %v993
    %v995 = vand.u32 %v994, 4294901760
    %996 = vmatpush1.msra.mxu0 %v995
    %997 = vmatprep.subr.mxu0 0.0
    %v998 = vand.u32 %v621, 4294901760
    %v999 = vsub.f32 %v621, %v998
    %v1000 = vand.u32 %v999, 4294901760
    %1001 = vmatpush1.msra.mxu0 %v1000
    %1002 = vmatprep.subr.mxu0 0.0
    %v1003 = vand.u32 %v620, 4294901760
    %v1004 = vsub.f32 %v620, %v1003
    %v1005 = vand.u32 %v1004, 4294901760
    %1006 = vmatpush1.msra.mxu0 %v1005
    %1007 = vmatprep.subr.mxu0 0.0
    %1008 = vmatpush2.msra.mxu0 0.0
    %1009 = vmatprep.subr.mxu0 0.0
    %1010 = vmatpush2.msra.mxu0 0.0
    %1011 = vmatprep.subr.mxu0 0.0
    %1012 = vmatpush2.msra.mxu0 0.0
    %1013 = vmatprep.subr.mxu0 0.0
    %1014 = vmatpush2.msra.mxu0 0.0
    %1015 = vmatprep.subr.mxu0 0.0
    %1016 = vmatpush2.msra.mxu0 0.0
    %1017 = vmatprep.subr.mxu0 0.0
    %1018 = vmatpush2.msra.mxu0 0.0
    %1019 = vmatprep.subr.mxu0 0.0
    %1020 = vmatpush2.msra.mxu0 0.0
    %1021 = vmatprep.subr.mxu0 0.0
    %1022 = vmatpush2.msra.mxu0 0.0
    %1023 = vmatprep.subr.mxu0 0.0
    %1024 = vmatpush2.msra.mxu0 0.0
    %1025 = vmatprep.subr.mxu0 0.0
    %1026 = vmatpush2.msra.mxu0 0.0
    %1027 = vmatprep.subr.mxu0 0.0
    %1028 = vmatpush2.msra.mxu0 0.0
    %1029 = vmatprep.subr.mxu0 0.0
    %1030 = vmatpush2.msra.mxu0 0.0
    %1031 = vmatprep.subr.mxu0 0.0
    %1032 = vmatpush2.msra.mxu0 0.0
    %1033 = vmatprep.subr.mxu0 0.0
    %1034 = vmatpush2.msra.mxu0 0.0
    %1035 = vmatprep.subr.mxu0 0.0
    %1036 = vmatpush2.msra.mxu0 0.0
    %1037 = vmatprep.subr.mxu0 0.0
    %1038 = vmatpush2.msra.mxu0 0.0
    %1039 = vmatprep.mubr.f32.mxu0 0.0
    %v1040 = vand.u32 %v630, 4294901760
    %1041 = vmatmul.mubr.f32.gmra.mxu0 %v1040
    %v1042 = vpop.f32.mrf.mxu0
    %v1043 = vadd.f32 %v960, %v1042
    %v1044 = vpop.f32.mrf.mxu0
    %1045 = vdwg.mxu0
    %1046 = vmatprep.subr.mxu0 0.0
    %1047 = vmatpush1.msra.mxu0 0.0
    %1048 = vmatprep.subr.mxu0 0.0
    %1049 = vmatpush1.msra.mxu0 0.0
    %1050 = vmatprep.subr.mxu0 0.0
    %1051 = vmatpush1.msra.mxu0 0.0
    %1052 = vmatprep.subr.mxu0 0.0
    %1053 = vmatpush1.msra.mxu0 0.0
    %1054 = vmatprep.subr.mxu0 0.0
    %1055 = vmatpush1.msra.mxu0 0.0
    %1056 = vmatprep.subr.mxu0 0.0
    %1057 = vmatpush1.msra.mxu0 0.0
    %1058 = vmatprep.subr.mxu0 0.0
    %1059 = vmatpush1.msra.mxu0 0.0
    %1060 = vmatprep.subr.mxu0 0.0
    %1061 = vmatpush1.msra.mxu0 0.0
    %1062 = vmatprep.subr.mxu0 0.0
    %1063 = vmatpush1.msra.mxu0 0.0
    %1064 = vmatprep.subr.mxu0 0.0
    %1065 = vmatpush1.msra.mxu0 0.0
    %1066 = vmatprep.subr.mxu0 0.0
    %1067 = vmatpush1.msra.mxu0 0.0
    %1068 = vmatprep.subr.mxu0 0.0
    %1069 = vmatpush1.msra.mxu0 0.0
    %1070 = vmatprep.subr.mxu0 0.0
    %v1071 = vand.u32 %v634, 4294901760
    %1072 = vmatpush1.msra.mxu0 %v1071
    %1073 = vmatprep.subr.mxu0 0.0
    %v1074 = vand.u32 %v622, 4294901760
    %1075 = vmatpush1.msra.mxu0 %v1074
    %1076 = vmatprep.subr.mxu0 0.0
    %v1077 = vand.u32 %v621, 4294901760
    %1078 = vmatpush1.msra.mxu0 %v1077
    %1079 = vmatprep.subr.mxu0 0.0
    %v1080 = vand.u32 %v620, 4294901760
    %1081 = vmatpush1.msra.mxu0 %v1080
    %1082 = vmatprep.subr.mxu0 0.0
    %1083 = vmatpush2.msra.mxu0 0.0
    %1084 = vmatprep.subr.mxu0 0.0
    %1085 = vmatpush2.msra.mxu0 0.0
    %1086 = vmatprep.subr.mxu0 0.0
    %1087 = vmatpush2.msra.mxu0 0.0
    %1088 = vmatprep.subr.mxu0 0.0
    %1089 = vmatpush2.msra.mxu0 0.0
    %1090 = vmatprep.subr.mxu0 0.0
    %1091 = vmatpush2.msra.mxu0 0.0
    %1092 = vmatprep.subr.mxu0 0.0
    %1093 = vmatpush2.msra.mxu0 0.0
    %1094 = vmatprep.subr.mxu0 0.0
    %1095 = vmatpush2.msra.mxu0 0.0
    %1096 = vmatprep.subr.mxu0 0.0
    %1097 = vmatpush2.msra.mxu0 0.0
    %1098 = vmatprep.subr.mxu0 0.0
    %1099 = vmatpush2.msra.mxu0 0.0
    %1100 = vmatprep.subr.mxu0 0.0
    %1101 = vmatpush2.msra.mxu0 0.0
    %1102 = vmatprep.subr.mxu0 0.0
    %1103 = vmatpush2.msra.mxu0 0.0
    %1104 = vmatprep.subr.mxu0 0.0
    %1105 = vmatpush2.msra.mxu0 0.0
    %1106 = vmatprep.subr.mxu0 0.0
    %1107 = vmatpush2.msra.mxu0 0.0
    %1108 = vmatprep.subr.mxu0 0.0
    %1109 = vmatpush2.msra.mxu0 0.0
    %1110 = vmatprep.subr.mxu0 0.0
    %1111 = vmatpush2.msra.mxu0 0.0
    %1112 = vmatprep.subr.mxu0 0.0
    %1113 = vmatpush2.msra.mxu0 0.0
    %1114 = vmatprep.mubr.f32.mxu0 0.0
    %v1115 = vand.u32 %v630, 4294901760
    %1116 = vmatmul.mubr.f32.gmra.mxu0 %v1115
    %v1117 = vpop.f32.mrf.mxu0
    %v1118 = vadd.f32 %v1043, %v1117
    %v1119 = vpop.f32.mrf.mxu0
    %1120 = vdwg.mxu0
    %v1121 = vsel %vm584, %v1118, 0.0
    %v1122 = vrot.slane %v1121, 4
    %v1123 = vadd.f32 %v1121, %v1122
    %v1124 = vrot.slane %v1123, 2
    %v1125 = vadd.f32 %v1123, %v1124
    %v1126 = vrot.slane %v1125, 1
    %v1127 = vadd.f32 %v1125, %v1126
    %v1128 = vmul.f32 %v1127, %v592
    %v1129 = vsub.f32 %v1118, %v1128
    %v1130 = vmul.f32 %v1129, %v1129
    %v1131 = vsel %vm584, %v1130, 0.0
    %v1132 = vrot.slane %v1131, 4
    %v1133 = vadd.f32 %v1131, %v1132
    %v1134 = vrot.slane %v1133, 2
    %v1135 = vadd.f32 %v1133, %v1134
    %v1136 = vrot.slane %v1135, 1
    %v1137 = vadd.f32 %v1135, %v1136
    %v1138 = vmul.f32 %v1137, %v592
    %v1139 = vadd.f32 %v1138, 1e-05
    %v1140 = vrsqrt.pop %v1139
    %v1141 = vmul.f32 %v1129, %v1140
    %v1142 = vld [vmem:[#allocation7 + $0x4] sm:$0x1]
    %v1143 = vlaneseq
    %v1144 = vshrl.u32 %v1143, 7
    %v1145 = vsub.s32 0, %v1144
    %v1146 = vrot.slane %v1142, %v1145
    %v1147 = vmul.f32 %v1141, %v1146
    %v1148 = vld [vmem:[#allocation7 + $0x5] sm:$0x1]
    %v1149 = vlaneseq
    %v1150 = vshrl.u32 %v1149, 7
    %v1151 = vsub.s32 0, %v1150
    %v1152 = vrot.slane %v1148, %v1151
    %v1153 = vadd.f32 %v1147, %v1152
    %v1154 = vmax.f32 %v1153, 0.0
    %v1155 = vld [vmem:[#allocation7 + $0x6] sm:$0x1]
    %v1156 = vld [vmem:[%s7] sm:$0xff]
    %v1157 = vld [vmem:[%s7 + $0x8] sm:$0xff]
    %v1158 = vld [vmem:[%s7 + $0x10] sm:$0xff]
    %v1159 = vld [vmem:[%s7 + $0x18] sm:$0x3]
    %v1160 = vlaneseq
    %v1161 = vshrl.u32 %v1160, 7
    %v1162 = vsub.s32 0, %v1161
    %v1163 = vrot.slane %v1155, %v1162
    %v1165 = vsel %vm584, %v1154, 0
    %v1168 = vsel %vm632, %v1159, 0
    %1170 = vmatprep.subr.mxu0 0.0
    %1171 = vmatpush1.msra.mxu0 0.0
    %1172 = vmatprep.subr.mxu0 0.0
    %1173 = vmatpush1.msra.mxu0 0.0
    %1174 = vmatprep.subr.mxu0 0.0
    %1175 = vmatpush1.msra.mxu0 0.0
    %1176 = vmatprep.subr.mxu0 0.0
    %1177 = vmatpush1.msra.mxu0 0.0
    %1178 = vmatprep.subr.mxu0 0.0
    %1179 = vmatpush1.msra.mxu0 0.0
    %1180 = vmatprep.subr.mxu0 0.0
    %1181 = vmatpush1.msra.mxu0 0.0
    %1182 = vmatprep.subr.mxu0 0.0
    %1183 = vmatpush1.msra.mxu0 0.0
    %1184 = vmatprep.subr.mxu0 0.0
    %1185 = vmatpush1.msra.mxu0 0.0
    %1186 = vmatprep.subr.mxu0 0.0
    %1187 = vmatpush1.msra.mxu0 0.0
    %1188 = vmatprep.subr.mxu0 0.0
    %1189 = vmatpush1.msra.mxu0 0.0
    %1190 = vmatprep.subr.mxu0 0.0
    %1191 = vmatpush1.msra.mxu0 0.0
    %1192 = vmatprep.subr.mxu0 0.0
    %1193 = vmatpush1.msra.mxu0 0.0
    %1194 = vmatprep.subr.mxu0 0.0
    %v1195 = vand.u32 %v1168, 4294901760
    %1196 = vmatpush1.msra.mxu0 %v1195
    %1197 = vmatprep.subr.mxu0 0.0
    %v1198 = vand.u32 %v1158, 4294901760
    %1199 = vmatpush1.msra.mxu0 %v1198
    %1200 = vmatprep.subr.mxu0 0.0
    %v1201 = vand.u32 %v1157, 4294901760
    %1202 = vmatpush1.msra.mxu0 %v1201
    %1203 = vmatprep.subr.mxu0 0.0
    %v1204 = vand.u32 %v1156, 4294901760
    %1205 = vmatpush1.msra.mxu0 %v1204
    %1206 = vmatprep.subr.mxu0 0.0
    %1207 = vmatpush2.msra.mxu0 0.0
    %1208 = vmatprep.subr.mxu0 0.0
    %1209 = vmatpush2.msra.mxu0 0.0
    %1210 = vmatprep.subr.mxu0 0.0
    %1211 = vmatpush2.msra.mxu0 0.0
    %1212 = vmatprep.subr.mxu0 0.0
    %1213 = vmatpush2.msra.mxu0 0.0
    %1214 = vmatprep.subr.mxu0 0.0
    %1215 = vmatpush2.msra.mxu0 0.0
    %1216 = vmatprep.subr.mxu0 0.0
    %1217 = vmatpush2.msra.mxu0 0.0
    %1218 = vmatprep.subr.mxu0 0.0
    %1219 = vmatpush2.msra.mxu0 0.0
    %1220 = vmatprep.subr.mxu0 0.0
    %1221 = vmatpush2.msra.mxu0 0.0
    %1222 = vmatprep.subr.mxu0 0.0
    %1223 = vmatpush2.msra.mxu0 0.0
    %1224 = vmatprep.subr.mxu0 0.0
    %1225 = vmatpush2.msra.mxu0 0.0
    %1226 = vmatprep.subr.mxu0 0.0
    %1227 = vmatpush2.msra.mxu0 0.0
    %1228 = vmatprep.subr.mxu0 0.0
    %1229 = vmatpush2.msra.mxu0 0.0
    %1230 = vmatprep.subr.mxu0 0.0
    %1231 = vmatpush2.msra.mxu0 0.0
    %1232 = vmatprep.subr.mxu0 0.0
    %1233 = vmatpush2.msra.mxu0 0.0
    %1234 = vmatprep.subr.mxu0 0.0
    %1235 = vmatpush2.msra.mxu0 0.0
    %1236 = vmatprep.subr.mxu0 0.0
    %1237 = vmatpush2.msra.mxu0 0.0
    %1238 = vmatprep.mubr.f32.mxu0 0.0
    %v1239 = vand.u32 %v1165, 4294901760
    %v1240 = vsub.f32 %v1165, %v1239
    %v1241 = vand.u32 %v1240, 4294901760
    %v1242 = vsub.f32 %v1240, %v1241
    %v1243 = vand.u32 %v1242, 4294901760
    %1244 = vmatmul.mubr.f32.gmra.mxu0 %v1243
    %v1245 = vpop.f32.mrf.mxu0
    %v1246 = vadd.f32 %v1163, %v1245
    %v1247 = vpop.f32.mrf.mxu0
    %1248 = vdwg.mxu0
    %1249 = vmatprep.subr.mxu0 0.0
    %1250 = vmatpush1.msra.mxu0 0.0
    %1251 = vmatprep.subr.mxu0 0.0
    %1252 = vmatpush1.msra.mxu0 0.0
    %1253 = vmatprep.subr.mxu0 0.0
    %1254 = vmatpush1.msra.mxu0 0.0
    %1255 = vmatprep.subr.mxu0 0.0
    %1256 = vmatpush1.msra.mxu0 0.0
    %1257 = vmatprep.subr.mxu0 0.0
    %1258 = vmatpush1.msra.mxu0 0.0
    %1259 = vmatprep.subr.mxu0 0.0
    %1260 = vmatpush1.msra.mxu0 0.0
    %1261 = vmatprep.subr.mxu0 0.0
    %1262 = vmatpush1.msra.mxu0 0.0
    %1263 = vmatprep.subr.mxu0 0.0
    %1264 = vmatpush1.msra.mxu0 0.0
    %1265 = vmatprep.subr.mxu0 0.0
    %1266 = vmatpush1.msra.mxu0 0.0
    %1267 = vmatprep.subr.mxu0 0.0
    %1268 = vmatpush1.msra.mxu0 0.0
    %1269 = vmatprep.subr.mxu0 0.0
    %1270 = vmatpush1.msra.mxu0 0.0
    %1271 = vmatprep.subr.mxu0 0.0
    %1272 = vmatpush1.msra.mxu0 0.0
    %1273 = vmatprep.subr.mxu0 0.0
    %v1274 = vand.u32 %v1168, 4294901760
    %v1275 = vsub.f32 %v1168, %v1274
    %v1276 = vand.u32 %v1275, 4294901760
    %v1277 = vsub.f32 %v1275, %v1276
    %v1278 = vand.u32 %v1277, 4294901760
    %1279 = vmatpush1.msra.mxu0 %v1278
    %1280 = vmatprep.subr.mxu0 0.0
    %v1281 = vand.u32 %v1158, 4294901760
    %v1282 = vsub.f32 %v1158, %v1281
    %v1283 = vand.u32 %v1282, 4294901760
    %v1284 = vsub.f32 %v1282, %v1283
    %v1285 = vand.u32 %v1284, 4294901760
    %1286 = vmatpush1.msra.mxu0 %v1285
    %1287 = vmatprep.subr.mxu0 0.0
    %v1288 = vand.u32 %v1157, 4294901760
    %v1289 = vsub.f32 %v1157, %v1288
    %v1290 = vand.u32 %v1289, 4294901760
    %v1291 = vsub.f32 %v1289, %v1290
    %v1292 = vand.u32 %v1291, 4294901760
    %1293 = vmatpush1.msra.mxu0 %v1292
    %1294 = vmatprep.subr.mxu0 0.0
    %v1295 = vand.u32 %v1156, 4294901760
    %v1296 = vsub.f32 %v1156, %v1295
    %v1297 = vand.u32 %v1296, 4294901760
    %v1298 = vsub.f32 %v1296, %v1297
    %v1299 = vand.u32 %v1298, 4294901760
    %1300 = vmatpush1.msra.mxu0 %v1299
    %1301 = vmatprep.subr.mxu0 0.0
    %1302 = vmatpush2.msra.mxu0 0.0
    %1303 = vmatprep.subr.mxu0 0.0
    %1304 = vmatpush2.msra.mxu0 0.0
    %1305 = vmatprep.subr.mxu0 0.0
    %1306 = vmatpush2.msra.mxu0 0.0
    %1307 = vmatprep.subr.mxu0 0.0
    %1308 = vmatpush2.msra.mxu0 0.0
    %1309 = vmatprep.subr.mxu0 0.0
    %1310 = vmatpush2.msra.mxu0 0.0
    %1311 = vmatprep.subr.mxu0 0.0
    %1312 = vmatpush2.msra.mxu0 0.0
    %1313 = vmatprep.subr.mxu0 0.0
    %1314 = vmatpush2.msra.mxu0 0.0
    %1315 = vmatprep.subr.mxu0 0.0
    %1316 = vmatpush2.msra.mxu0 0.0
    %1317 = vmatprep.subr.mxu0 0.0
    %1318 = vmatpush2.msra.mxu0 0.0
    %1319 = vmatprep.subr.mxu0 0.0
    %1320 = vmatpush2.msra.mxu0 0.0
    %1321 = vmatprep.subr.mxu0 0.0
    %1322 = vmatpush2.msra.mxu0 0.0
    %1323 = vmatprep.subr.mxu0 0.0
    %1324 = vmatpush2.msra.mxu0 0.0
    %1325 = vmatprep.subr.mxu0 0.0
    %1326 = vmatpush2.msra.mxu0 0.0
    %1327 = vmatprep.subr.mxu0 0.0
    %1328 = vmatpush2.msra.mxu0 0.0
    %1329 = vmatprep.subr.mxu0 0.0
    %1330 = vmatpush2.msra.mxu0 0.0
    %1331 = vmatprep.subr.mxu0 0.0
    %1332 = vmatpush2.msra.mxu0 0.0
    %1333 = vmatprep.mubr.f32.mxu0 0.0
    %v1334 = vand.u32 %v1165, 4294901760
    %1335 = vmatmul.mubr.f32.gmra.mxu0 %v1334
    %v1336 = vpop.f32.mrf.mxu0
    %v1337 = vadd.f32 %v1246, %v1336
    %v1338 = vpop.f32.mrf.mxu0
    %1339 = vdwg.mxu0
    %1340 = vmatprep.subr.mxu0 0.0
    %1341 = vmatpush1.msra.mxu0 0.0
    %1342 = vmatprep.subr.mxu0 0.0
    %1343 = vmatpush1.msra.mxu0 0.0
    %1344 = vmatprep.subr.mxu0 0.0
    %1345 = vmatpush1.msra.mxu0 0.0
    %1346 = vmatprep.subr.mxu0 0.0
    %1347 = vmatpush1.msra.mxu0 0.0
    %1348 = vmatprep.subr.mxu0 0.0
    %1349 = vmatpush1.msra.mxu0 0.0
    %1350 = vmatprep.subr.mxu0 0.0
    %1351 = vmatpush1.msra.mxu0 0.0
    %1352 = vmatprep.subr.mxu0 0.0
    %1353 = vmatpush1.msra.mxu0 0.0
    %1354 = vmatprep.subr.mxu0 0.0
    %1355 = vmatpush1.msra.mxu0 0.0
    %1356 = vmatprep.subr.mxu0 0.0
    %1357 = vmatpush1.msra.mxu0 0.0
    %1358 = vmatprep.subr.mxu0 0.0
    %1359 = vmatpush1.msra.mxu0 0.0
    %1360 = vmatprep.subr.mxu0 0.0
    %1361 = vmatpush1.msra.mxu0 0.0
    %1362 = vmatprep.subr.mxu0 0.0
    %1363 = vmatpush1.msra.mxu0 0.0
    %1364 = vmatprep.subr.mxu0 0.0
    %v1365 = vand.u32 %v1168, 4294901760
    %v1366 = vsub.f32 %v1168, %v1365
    %1367 = vmatpush1.msra.mxu0 %v1366
    %1368 = vmatprep.subr.mxu0 0.0
    %v1369 = vand.u32 %v1158, 4294901760
    %v1370 = vsub.f32 %v1158, %v1369
    %1371 = vmatpush1.msra.mxu0 %v1370
    %1372 = vmatprep.subr.mxu0 0.0
    %v1373 = vand.u32 %v1157, 4294901760
    %v1374 = vsub.f32 %v1157, %v1373
    %1375 = vmatpush1.msra.mxu0 %v1374
    %1376 = vmatprep.subr.mxu0 0.0
    %v1377 = vand.u32 %v1156, 4294901760
    %v1378 = vsub.f32 %v1156, %v1377
    %1379 = vmatpush1.msra.mxu0 %v1378
    %1380 = vmatprep.subr.mxu0 0.0
    %1381 = vmatpush2.msra.mxu0 0.0
    %1382 = vmatprep.subr.mxu0 0.0
    %1383 = vmatpush2.msra.mxu0 0.0
    %1384 = vmatprep.subr.mxu0 0.0
    %1385 = vmatpush2.msra.mxu0 0.0
    %1386 = vmatprep.subr.mxu0 0.0
    %1387 = vmatpush2.msra.mxu0 0.0
    %1388 = vmatprep.subr.mxu0 0.0
    %1389 = vmatpush2.msra.mxu0 0.0
    %1390 = vmatprep.subr.mxu0 0.0
    %1391 = vmatpush2.msra.mxu0 0.0
    %1392 = vmatprep.subr.mxu0 0.0
    %1393 = vmatpush2.msra.mxu0 0.0
    %1394 = vmatprep.subr.mxu0 0.0
    %1395 = vmatpush2.msra.mxu0 0.0
    %1396 = vmatprep.subr.mxu0 0.0
    %1397 = vmatpush2.msra.mxu0 0.0
    %1398 = vmatprep.subr.mxu0 0.0
    %1399 = vmatpush2.msra.mxu0 0.0
    %1400 = vmatprep.subr.mxu0 0.0
    %1401 = vmatpush2.msra.mxu0 0.0
    %1402 = vmatprep.subr.mxu0 0.0
    %1403 = vmatpush2.msra.mxu0 0.0
    %1404 = vmatprep.subr.mxu0 0.0
    %1405 = vmatpush2.msra.mxu0 0.0
    %1406 = vmatprep.subr.mxu0 0.0
    %1407 = vmatpush2.msra.mxu0 0.0
    %1408 = vmatprep.subr.mxu0 0.0
    %1409 = vmatpush2.msra.mxu0 0.0
    %1410 = vmatprep.subr.mxu0 0.0
    %1411 = vmatpush2.msra.mxu0 0.0
    %1412 = vmatprep.mubr.f32.mxu0 0.0
    %v1413 = vand.u32 %v1165, 4294901760
    %v1414 = vsub.f32 %v1165, %v1413
    %1415 = vmatmul.mubr.f32.gmra.mxu0 %v1414
    %v1416 = vpop.f32.mrf.mxu0
    %v1417 = vadd.f32 %v1337, %v1416
    %v1418 = vpop.f32.mrf.mxu0
    %1419 = vdwg.mxu0
    %1420 = vmatprep.subr.mxu0 0.0
    %1421 = vmatpush1.msra.mxu0 0.0
    %1422 = vmatprep.subr.mxu0 0.0
    %1423 = vmatpush1.msra.mxu0 0.0
    %1424 = vmatprep.subr.mxu0 0.0
    %1425 = vmatpush1.msra.mxu0 0.0
    %1426 = vmatprep.subr.mxu0 0.0
    %1427 = vmatpush1.msra.mxu0 0.0
    %1428 = vmatprep.subr.mxu0 0.0
    %1429 = vmatpush1.msra.mxu0 0.0
    %1430 = vmatprep.subr.mxu0 0.0
    %1431 = vmatpush1.msra.mxu0 0.0
    %1432 = vmatprep.subr.mxu0 0.0
    %1433 = vmatpush1.msra.mxu0 0.0
    %1434 = vmatprep.subr.mxu0 0.0
    %1435 = vmatpush1.msra.mxu0 0.0
    %1436 = vmatprep.subr.mxu0 0.0
    %1437 = vmatpush1.msra.mxu0 0.0
    %1438 = vmatprep.subr.mxu0 0.0
    %1439 = vmatpush1.msra.mxu0 0.0
    %1440 = vmatprep.subr.mxu0 0.0
    %1441 = vmatpush1.msra.mxu0 0.0
    %1442 = vmatprep.subr.mxu0 0.0
    %1443 = vmatpush1.msra.mxu0 0.0
    %1444 = vmatprep.subr.mxu0 0.0
    %v1445 = vand.u32 %v1168, 4294901760
    %1446 = vmatpush1.msra.mxu0 %v1445
    %1447 = vmatprep.subr.mxu0 0.0
    %v1448 = vand.u32 %v1158, 4294901760
    %1449 = vmatpush1.msra.mxu0 %v1448
    %1450 = vmatprep.subr.mxu0 0.0
    %v1451 = vand.u32 %v1157, 4294901760
    %1452 = vmatpush1.msra.mxu0 %v1451
    %1453 = vmatprep.subr.mxu0 0.0
    %v1454 = vand.u32 %v1156, 4294901760
    %1455 = vmatpush1.msra.mxu0 %v1454
    %1456 = vmatprep.subr.mxu0 0.0
    %1457 = vmatpush2.msra.mxu0 0.0
    %1458 = vmatprep.subr.mxu0 0.0
    %1459 = vmatpush2.msra.mxu0 0.0
    %1460 = vmatprep.subr.mxu0 0.0
    %1461 = vmatpush2.msra.mxu0 0.0
    %1462 = vmatprep.subr.mxu0 0.0
    %1463 = vmatpush2.msra.mxu0 0.0
    %1464 = vmatprep.subr.mxu0 0.0
    %1465 = vmatpush2.msra.mxu0 0.0
    %1466 = vmatprep.subr.mxu0 0.0
    %1467 = vmatpush2.msra.mxu0 0.0
    %1468 = vmatprep.subr.mxu0 0.0
    %1469 = vmatpush2.msra.mxu0 0.0
    %1470 = vmatprep.subr.mxu0 0.0
    %1471 = vmatpush2.msra.mxu0 0.0
    %1472 = vmatprep.subr.mxu0 0.0
    %1473 = vmatpush2.msra.mxu0 0.0
    %1474 = vmatprep.subr.mxu0 0.0
    %1475 = vmatpush2.msra.mxu0 0.0
    %1476 = vmatprep.subr.mxu0 0.0
    %1477 = vmatpush2.msra.mxu0 0.0
    %1478 = vmatprep.subr.mxu0 0.0
    %1479 = vmatpush2.msra.mxu0 0.0
    %1480 = vmatprep.subr.mxu0 0.0
    %1481 = vmatpush2.msra.mxu0 0.0
    %1482 = vmatprep.subr.mxu0 0.0
    %1483 = vmatpush2.msra.mxu0 0.0
    %1484 = vmatprep.subr.mxu0 0.0
    %1485 = vmatpush2.msra.mxu0 0.0
    %1486 = vmatprep.subr.mxu0 0.0
    %1487 = vmatpush2.msra.mxu0 0.0
    %1488 = vmatprep.mubr.f32.mxu0 0.0
    %v1489 = vand.u32 %v1165, 4294901760
    %v1490 = vsub.f32 %v1165, %v1489
    %v1491 = vand.u32 %v1490, 4294901760
    %1492 = vmatmul.mubr.f32.gmra.mxu0 %v1491
    %v1493 = vpop.f32.mrf.mxu0
    %v1494 = vadd.f32 %v1417, %v1493
    %v1495 = vpop.f32.mrf.mxu0
    %1496 = vdwg.mxu0
    %1497 = vmatprep.subr.mxu0 0.0
    %1498 = vmatpush1.msra.mxu0 0.0
    %1499 = vmatprep.subr.mxu0 0.0
    %1500 = vmatpush1.msra.mxu0 0.0
    %1501 = vmatprep.subr.mxu0 0.0
    %1502 = vmatpush1.msra.mxu0 0.0
    %1503 = vmatprep.subr.mxu0 0.0
    %1504 = vmatpush1.msra.mxu0 0.0
    %1505 = vmatprep.subr.mxu0 0.0
    %1506 = vmatpush1.msra.mxu0 0.0
    %1507 = vmatprep.subr.mxu0 0.0
    %1508 = vmatpush1.msra.mxu0 0.0
    %1509 = vmatprep.subr.mxu0 0.0
    %1510 = vmatpush1.msra.mxu0 0.0
    %1511 = vmatprep.subr.mxu0 0.0
    %1512 = vmatpush1.msra.mxu0 0.0
    %1513 = vmatprep.subr.mxu0 0.0
    %1514 = vmatpush1.msra.mxu0 0.0
    %1515 = vmatprep.subr.mxu0 0.0
    %1516 = vmatpush1.msra.mxu0 0.0
    %1517 = vmatprep.subr.mxu0 0.0
    %1518 = vmatpush1.msra.mxu0 0.0
    %1519 = vmatprep.subr.mxu0 0.0
    %1520 = vmatpush1.msra.mxu0 0.0
    %1521 = vmatprep.subr.mxu0 0.0
    %v1522 = vand.u32 %v1168, 4294901760
    %v1523 = vsub.f32 %v1168, %v1522
    %v1524 = vand.u32 %v1523, 4294901760
    %1525 = vmatpush1.msra.mxu0 %v1524
    %1526 = vmatprep.subr.mxu0 0.0
    %v1527 = vand.u32 %v1158, 4294901760
    %v1528 = vsub.f32 %v1158, %v1527
    %v1529 = vand.u32 %v1528, 4294901760
    %1530 = vmatpush1.msra.mxu0 %v1529
    %1531 = vmatprep.subr.mxu0 0.0
    %v1532 = vand.u32 %v1157, 4294901760
    %v1533 = vsub.f32 %v1157, %v1532
    %v1534 = vand.u32 %v1533, 4294901760
    %1535 = vmatpush1.msra.mxu0 %v1534
    %1536 = vmatprep.subr.mxu0 0.0
    %v1537 = vand.u32 %v1156, 4294901760
    %v1538 = vsub.f32 %v1156, %v1537
    %v1539 = vand.u32 %v1538, 4294901760
    %1540 = vmatpush1.msra.mxu0 %v1539
    %1541 = vmatprep.subr.mxu0 0.0
    %1542 = vmatpush2.msra.mxu0 0.0
    %1543 = vmatprep.subr.mxu0 0.0
    %1544 = vmatpush2.msra.mxu0 0.0
    %1545 = vmatprep.subr.mxu0 0.0
    %1546 = vmatpush2.msra.mxu0 0.0
    %1547 = vmatprep.subr.mxu0 0.0
    %1548 = vmatpush2.msra.mxu0 0.0
    %1549 = vmatprep.subr.mxu0 0.0
    %1550 = vmatpush2.msra.mxu0 0.0
    %1551 = vmatprep.subr.mxu0 0.0
    %1552 = vmatpush2.msra.mxu0 0.0
    %1553 = vmatprep.subr.mxu0 0.0
    %1554 = vmatpush2.msra.mxu0 0.0
    %1555 = vmatprep.subr.mxu0 0.0
    %1556 = vmatpush2.msra.mxu0 0.0
    %1557 = vmatprep.subr.mxu0 0.0
    %1558 = vmatpush2.msra.mxu0 0.0
    %1559 = vmatprep.subr.mxu0 0.0
    %1560 = vmatpush2.msra.mxu0 0.0
    %1561 = vmatprep.subr.mxu0 0.0
    %1562 = vmatpush2.msra.mxu0 0.0
    %1563 = vmatprep.subr.mxu0 0.0
    %1564 = vmatpush2.msra.mxu0 0.0
    %1565 = vmatprep.subr.mxu0 0.0
    %1566 = vmatpush2.msra.mxu0 0.0
    %1567 = vmatprep.subr.mxu0 0.0
    %1568 = vmatpush2.msra.mxu0 0.0
    %1569 = vmatprep.subr.mxu0 0.0
    %1570 = vmatpush2.msra.mxu0 0.0
    %1571 = vmatprep.subr.mxu0 0.0
    %1572 = vmatpush2.msra.mxu0 0.0
    %1573 = vmatprep.mubr.f32.mxu0 0.0
    %v1574 = vand.u32 %v1165, 4294901760
    %1575 = vmatmul.mubr.f32.gmra.mxu0 %v1574
    %v1576 = vpop.f32.mrf.mxu0
    %v1577 = vadd.f32 %v1494, %v1576
    %v1578 = vpop.f32.mrf.mxu0
    %1579 = vdwg.mxu0
    %1580 = vmatprep.subr.mxu0 0.0
    %1581 = vmatpush1.msra.mxu0 0.0
    %1582 = vmatprep.subr.mxu0 0.0
    %1583 = vmatpush1.msra.mxu0 0.0
    %1584 = vmatprep.subr.mxu0 0.0
    %1585 = vmatpush1.msra.mxu0 0.0
    %1586 = vmatprep.subr.mxu0 0.0
    %1587 = vmatpush1.msra.mxu0 0.0
    %1588 = vmatprep.subr.mxu0 0.0
    %1589 = vmatpush1.msra.mxu0 0.0
    %1590 = vmatprep.subr.mxu0 0.0
    %1591 = vmatpush1.msra.mxu0 0.0
    %1592 = vmatprep.subr.mxu0 0.0
    %1593 = vmatpush1.msra.mxu0 0.0
    %1594 = vmatprep.subr.mxu0 0.0
    %1595 = vmatpush1.msra.mxu0 0.0
    %1596 = vmatprep.subr.mxu0 0.0
    %1597 = vmatpush1.msra.mxu0 0.0
    %1598 = vmatprep.subr.mxu0 0.0
    %1599 = vmatpush1.msra.mxu0 0.0
    %1600 = vmatprep.subr.mxu0 0.0
    %1601 = vmatpush1.msra.mxu0 0.0
    %1602 = vmatprep.subr.mxu0 0.0
    %1603 = vmatpush1.msra.mxu0 0.0
    %1604 = vmatprep.subr.mxu0 0.0
    %v1605 = vand.u32 %v1168, 4294901760
    %1606 = vmatpush1.msra.mxu0 %v1605
    %1607 = vmatprep.subr.mxu0 0.0
    %v1608 = vand.u32 %v1158, 4294901760
    %1609 = vmatpush1.msra.mxu0 %v1608
    %1610 = vmatprep.subr.mxu0 0.0
    %v1611 = vand.u32 %v1157, 4294901760
    %1612 = vmatpush1.msra.mxu0 %v1611
    %1613 = vmatprep.subr.mxu0 0.0
    %v1614 = vand.u32 %v1156, 4294901760
    %1615 = vmatpush1.msra.mxu0 %v1614
    %1616 = vmatprep.subr.mxu0 0.0
    %1617 = vmatpush2.msra.mxu0 0.0
    %1618 = vmatprep.subr.mxu0 0.0
    %1619 = vmatpush2.msra.mxu0 0.0
    %1620 = vmatprep.subr.mxu0 0.0
    %1621 = vmatpush2.msra.mxu0 0.0
    %1622 = vmatprep.subr.mxu0 0.0
    %1623 = vmatpush2.msra.mxu0 0.0
    %1624 = vmatprep.subr.mxu0 0.0
    %1625 = vmatpush2.msra.mxu0 0.0
    %1626 = vmatprep.subr.mxu0 0.0
    %1627 = vmatpush2.msra.mxu0 0.0
    %1628 = vmatprep.subr.mxu0 0.0
    %1629 = vmatpush2.msra.mxu0 0.0
    %1630 = vmatprep.subr.mxu0 0.0
    %1631 = vmatpush2.msra.mxu0 0.0
    %1632 = vmatprep.subr.mxu0 0.0
    %1633 = vmatpush2.msra.mxu0 0.0
    %1634 = vmatprep.subr.mxu0 0.0
    %1635 = vmatpush2.msra.mxu0 0.0
    %1636 = vmatprep.subr.mxu0 0.0
    %1637 = vmatpush2.msra.mxu0 0.0
    %1638 = vmatprep.subr.mxu0 0.0
    %1639 = vmatpush2.msra.mxu0 0.0
    %1640 = vmatprep.subr.mxu0 0.0
    %1641 = vmatpush2.msra.mxu0 0.0
    %1642 = vmatprep.subr.mxu0 0.0
    %1643 = vmatpush2.msra.mxu0 0.0
    %1644 = vmatprep.subr.mxu0 0.0
    %1645 = vmatpush2.msra.mxu0 0.0
    %1646 = vmatprep.subr.mxu0 0.0
    %1647 = vmatpush2.msra.mxu0 0.0
    %1648 = vmatprep.mubr.f32.mxu0 0.0
    %v1649 = vand.u32 %v1165, 4294901760
    %1650 = vmatmul.mubr.f32.gmra.mxu0 %v1649
    %v1651 = vpop.f32.mrf.mxu0
    %v1652 = vadd.f32 %v1577, %v1651
    %v1653 = vpop.f32.mrf.mxu0
    %1654 = vdwg.mxu0
    %v1655 = vld [vmem:[%s4] sm:$0x1]
    %v1657 = vlaneseq
    %v1658 = vshrl.u32 %v1657, 7
    %v1659 = vsub.s32 0, %v1658
    %v1660 = vrot.slane %v1655, %v1659
    %s1662 = scalar_select %p78, 1, 0
    %v1663 = vstv %s1662
    %vm1664 = vcmp.eq.s32.totalorder %v1663, 1
    %v1665 = vsel %vm1664, %v1660, %v1652
    %v1666 = vmul.f32 %v1665, -0.8888889
    %v1667 = vmul.f32 %v93, 0.6
    %s1668 = smul.f32 %s104, 0.2
    %v1669 = vstv %s1668
    %v1670 = vsub.f32 %v1667, %v1669
    %v1671 = vstv %s112
    %v1672 = vsub.f32 %v1670, %v1671
    %v1673 = vmul.f32 %v1672, %v1672
    %v1674 = vmul.f32 %v1673, 0.5
    %v1675 = vmul.f32 %v1666, 0.45
    %v1676 = vmul.f32 %v1675, %v1666
    %v1677 = vadd.f32 %v1674, %v1676
    %v1678 = vstv %s96
    %v1679 = vmul.f32 %v1677, %v1678
    %v1680 = vsub.f32 %v94, %v1679
    %v1681 = vmul.f32 %v1665, %v113
    %v1682 = vadd.f32 %v1680, %v1681
    %v1683 = vmul.f32 %v93, 0.5
    %s1684 = smul.f32 %s108, 0.3
    %v1685 = vstv %s1684
    %v1686 = vadd.f32 %v1683, %v1685
    %v1687 = vmul.f32 %v1666, 0.8
    %v1688 = vadd.f32 %v1686, %v1687
    %v1689 = vmul.f32 %v1688, %v1678
    %v1690 = vadd.f32 %v93, %v1689
    %v1691 = vadd.f32 %v1690, %v113
    %1692 = vst.msk [vmem:[#allocation12] sm:$0xff] %vm121, %v1691
    %1693 = vst.msk [vmem:[#allocation13] sm:$0xff] %vm121, %v1665
    %s1694 = sadd.s32 %s95, 1
    %s1695 = sld [smem:[#allocation2 + %s1694]]
    %s1696 = sshra.s32 %s1694, 7
    %s1697 = sand.u32 %s1694, 127
    %s1698 = sadd.s32 %s1696, 1
    %s1699 = smul.u32 %s1698, 128
    %s1700 = sshra.s32 %s1694, 7
    %s1701 = sand.u32 %s1694, 127
    %s1702 = sadd.s32 %s1699, %s1701
    %s1703 = sld [smem:[#allocation2 + %s1702]]
    %s1704 = sadd.s32 %s1696, 2
    %s1705 = smul.u32 %s1704, 128
    %s1706 = sadd.s32 %s1705, %s1701
    %s1707 = sld [smem:[#allocation2 + %s1706]]
    %s1708 = sadd.s32 %s1696, 3
    %s1709 = smul.u32 %s1708, 128
    %s1710 = sadd.s32 %s1709, %s1701
    %s1711 = sld [smem:[#allocation2 + %s1710]]
    %s1712 = scalar_lea.vmem [#allocation6], 8
    %v1713 = vld [vmem:[%s1712] sm:$0xff]
    %s1714 = scalar_lea.vmem %s5, 16
    %v1715 = vld [vmem:[%s1714] sm:$0xff]
    %v1716 = vld [vmem:[%s1714 + $0x8] sm:$0xff]
    %s1717 = scalar_lea.vmem [#allocation7], 8
    %v1718 = vld [vmem:[%s1717] sm:$0x1]
    %v1719 = vlaneseq
    %v1720 = vshrl.u32 %v1719, 7
    %v1721 = vsub.s32 0, %v1720
    %v1722 = vrot.slane %v1718, %v1721
    %v1724 = vsel %vm121, %v1691, 0
    %1726 = vmatprep.subr.mxu0 0.0
    %1727 = vmatpush1.msra.mxu0 0.0
    %1728 = vmatprep.subr.mxu0 0.0
    %1729 = vmatpush1.msra.mxu0 0.0
    %1730 = vmatprep.subr.mxu0 0.0
    %1731 = vmatpush1.msra.mxu0 0.0
    %1732 = vmatprep.subr.mxu0 0.0
    %1733 = vmatpush1.msra.mxu0 0.0
    %1734 = vmatprep.subr.mxu0 0.0
    %1735 = vmatpush1.msra.mxu0 0.0
    %1736 = vmatprep.subr.mxu0 0.0
    %1737 = vmatpush1.msra.mxu0 0.0
    %1738 = vmatprep.subr.mxu0 0.0
    %1739 = vmatpush1.msra.mxu0 0.0
    %1740 = vmatprep.subr.mxu0 0.0
    %1741 = vmatpush1.msra.mxu0 0.0
    %1742 = vmatprep.subr.mxu0 0.0
    %1743 = vmatpush1.msra.mxu0 0.0
    %1744 = vmatprep.subr.mxu0 0.0
    %1745 = vmatpush1.msra.mxu0 0.0
    %1746 = vmatprep.subr.mxu0 0.0
    %1747 = vmatpush1.msra.mxu0 0.0
    %1748 = vmatprep.subr.mxu0 0.0
    %1749 = vmatpush1.msra.mxu0 0.0
    %1750 = vmatprep.subr.mxu0 0.0
    %1751 = vmatpush1.msra.mxu0 0.0
    %1752 = vmatprep.subr.mxu0 0.0
    %1753 = vmatpush1.msra.mxu0 0.0
    %1754 = vmatprep.subr.mxu0 0.0
    %v1755 = vand.u32 %v1716, 4294901760
    %1756 = vmatpush1.msra.mxu0 %v1755
    %1757 = vmatprep.subr.mxu0 0.0
    %v1758 = vand.u32 %v1715, 4294901760
    %1759 = vmatpush1.msra.mxu0 %v1758
    %1760 = vmatprep.subr.mxu0 0.0
    %1761 = vmatpush2.msra.mxu0 0.0
    %1762 = vmatprep.subr.mxu0 0.0
    %1763 = vmatpush2.msra.mxu0 0.0
    %1764 = vmatprep.subr.mxu0 0.0
    %1765 = vmatpush2.msra.mxu0 0.0
    %1766 = vmatprep.subr.mxu0 0.0
    %1767 = vmatpush2.msra.mxu0 0.0
    %1768 = vmatprep.subr.mxu0 0.0
    %1769 = vmatpush2.msra.mxu0 0.0
    %1770 = vmatprep.subr.mxu0 0.0
    %1771 = vmatpush2.msra.mxu0 0.0
    %1772 = vmatprep.subr.mxu0 0.0
    %1773 = vmatpush2.msra.mxu0 0.0
    %1774 = vmatprep.subr.mxu0 0.0
    %1775 = vmatpush2.msra.mxu0 0.0
    %1776 = vmatprep.subr.mxu0 0.0
    %1777 = vmatpush2.msra.mxu0 0.0
    %1778 = vmatprep.subr.mxu0 0.0
    %1779 = vmatpush2.msra.mxu0 0.0
    %1780 = vmatprep.subr.mxu0 0.0
    %1781 = vmatpush2.msra.mxu0 0.0
    %1782 = vmatprep.subr.mxu0 0.0
    %1783 = vmatpush2.msra.mxu0 0.0
    %1784 = vmatprep.subr.mxu0 0.0
    %1785 = vmatpush2.msra.mxu0 0.0
    %1786 = vmatprep.subr.mxu0 0.0
    %1787 = vmatpush2.msra.mxu0 0.0
    %1788 = vmatprep.subr.mxu0 0.0
    %1789 = vmatpush2.msra.mxu0 0.0
    %1790 = vmatprep.subr.mxu0 0.0
    %1791 = vmatpush2.msra.mxu0 0.0
    %1792 = vmatprep.mubr.f32.mxu0 0.0
    %v1793 = vand.u32 %v1724, 4294901760
    %v1794 = vsub.f32 %v1724, %v1793
    %v1795 = vand.u32 %v1794, 4294901760
    %v1796 = vsub.f32 %v1794, %v1795
    %v1797 = vand.u32 %v1796, 4294901760
    %1798 = vmatmul.mubr.f32.gmra.mxu0 %v1797
    %v1799 = vpop.f32.mrf.mxu0
    %v1800 = vadd.f32 %v1722, %v1799
    %v1801 = vpop.f32.mrf.mxu0
    %1802 = vdwg.mxu0
    %1803 = vmatprep.subr.mxu0 0.0
    %1804 = vmatpush1.msra.mxu0 0.0
    %1805 = vmatprep.subr.mxu0 0.0
    %1806 = vmatpush1.msra.mxu0 0.0
    %1807 = vmatprep.subr.mxu0 0.0
    %1808 = vmatpush1.msra.mxu0 0.0
    %1809 = vmatprep.subr.mxu0 0.0
    %1810 = vmatpush1.msra.mxu0 0.0
    %1811 = vmatprep.subr.mxu0 0.0
    %1812 = vmatpush1.msra.mxu0 0.0
    %1813 = vmatprep.subr.mxu0 0.0
    %1814 = vmatpush1.msra.mxu0 0.0
    %1815 = vmatprep.subr.mxu0 0.0
    %1816 = vmatpush1.msra.mxu0 0.0
    %1817 = vmatprep.subr.mxu0 0.0
    %1818 = vmatpush1.msra.mxu0 0.0
    %1819 = vmatprep.subr.mxu0 0.0
    %1820 = vmatpush1.msra.mxu0 0.0
    %1821 = vmatprep.subr.mxu0 0.0
    %1822 = vmatpush1.msra.mxu0 0.0
    %1823 = vmatprep.subr.mxu0 0.0
    %1824 = vmatpush1.msra.mxu0 0.0
    %1825 = vmatprep.subr.mxu0 0.0
    %1826 = vmatpush1.msra.mxu0 0.0
    %1827 = vmatprep.subr.mxu0 0.0
    %1828 = vmatpush1.msra.mxu0 0.0
    %1829 = vmatprep.subr.mxu0 0.0
    %1830 = vmatpush1.msra.mxu0 0.0
    %1831 = vmatprep.subr.mxu0 0.0
    %v1832 = vand.u32 %v1716, 4294901760
    %v1833 = vsub.f32 %v1716, %v1832
    %v1834 = vand.u32 %v1833, 4294901760
    %v1835 = vsub.f32 %v1833, %v1834
    %v1836 = vand.u32 %v1835, 4294901760
    %1837 = vmatpush1.msra.mxu0 %v1836
    %1838 = vmatprep.subr.mxu0 0.0
    %v1839 = vand.u32 %v1715, 4294901760
    %v1840 = vsub.f32 %v1715, %v1839
    %v1841 = vand.u32 %v1840, 4294901760
    %v1842 = vsub.f32 %v1840, %v1841
    %v1843 = vand.u32 %v1842, 4294901760
    %1844 = vmatpush1.msra.mxu0 %v1843
    %1845 = vmatprep.subr.mxu0 0.0
    %1846 = vmatpush2.msra.mxu0 0.0
    %1847 = vmatprep.subr.mxu0 0.0
    %1848 = vmatpush2.msra.mxu0 0.0
    %1849 = vmatprep.subr.mxu0 0.0
    %1850 = vmatpush2.msra.mxu0 0.0
    %1851 = vmatprep.subr.mxu0 0.0
    %1852 = vmatpush2.msra.mxu0 0.0
    %1853 = vmatprep.subr.mxu0 0.0
    %1854 = vmatpush2.msra.mxu0 0.0
    %1855 = vmatprep.subr.mxu0 0.0
    %1856 = vmatpush2.msra.mxu0 0.0
    %1857 = vmatprep.subr.mxu0 0.0
    %1858 = vmatpush2.msra.mxu0 0.0
    %1859 = vmatprep.subr.mxu0 0.0
    %1860 = vmatpush2.msra.mxu0 0.0
    %1861 = vmatprep.subr.mxu0 0.0
    %1862 = vmatpush2.msra.mxu0 0.0
    %1863 = vmatprep.subr.mxu0 0.0
    %1864 = vmatpush2.msra.mxu0 0.0
    %1865 = vmatprep.subr.mxu0 0.0
    %1866 = vmatpush2.msra.mxu0 0.0
    %1867 = vmatprep.subr.mxu0 0.0
    %1868 = vmatpush2.msra.mxu0 0.0
    %1869 = vmatprep.subr.mxu0 0.0
    %1870 = vmatpush2.msra.mxu0 0.0
    %1871 = vmatprep.subr.mxu0 0.0
    %1872 = vmatpush2.msra.mxu0 0.0
    %1873 = vmatprep.subr.mxu0 0.0
    %1874 = vmatpush2.msra.mxu0 0.0
    %1875 = vmatprep.subr.mxu0 0.0
    %1876 = vmatpush2.msra.mxu0 0.0
    %1877 = vmatprep.mubr.f32.mxu0 0.0
    %v1878 = vand.u32 %v1724, 4294901760
    %1879 = vmatmul.mubr.f32.gmra.mxu0 %v1878
    %v1880 = vpop.f32.mrf.mxu0
    %v1881 = vadd.f32 %v1800, %v1880
    %v1882 = vpop.f32.mrf.mxu0
    %1883 = vdwg.mxu0
    %1884 = vmatprep.subr.mxu0 0.0
    %1885 = vmatpush1.msra.mxu0 0.0
    %1886 = vmatprep.subr.mxu0 0.0
    %1887 = vmatpush1.msra.mxu0 0.0
    %1888 = vmatprep.subr.mxu0 0.0
    %1889 = vmatpush1.msra.mxu0 0.0
    %1890 = vmatprep.subr.mxu0 0.0
    %1891 = vmatpush1.msra.mxu0 0.0
    %1892 = vmatprep.subr.mxu0 0.0
    %1893 = vmatpush1.msra.mxu0 0.0
    %1894 = vmatprep.subr.mxu0 0.0
    %1895 = vmatpush1.msra.mxu0 0.0
    %1896 = vmatprep.subr.mxu0 0.0
    %1897 = vmatpush1.msra.mxu0 0.0
    %1898 = vmatprep.subr.mxu0 0.0
    %1899 = vmatpush1.msra.mxu0 0.0
    %1900 = vmatprep.subr.mxu0 0.0
    %1901 = vmatpush1.msra.mxu0 0.0
    %1902 = vmatprep.subr.mxu0 0.0
    %1903 = vmatpush1.msra.mxu0 0.0
    %1904 = vmatprep.subr.mxu0 0.0
    %1905 = vmatpush1.msra.mxu0 0.0
    %1906 = vmatprep.subr.mxu0 0.0
    %1907 = vmatpush1.msra.mxu0 0.0
    %1908 = vmatprep.subr.mxu0 0.0
    %1909 = vmatpush1.msra.mxu0 0.0
    %1910 = vmatprep.subr.mxu0 0.0
    %1911 = vmatpush1.msra.mxu0 0.0
    %1912 = vmatprep.subr.mxu0 0.0
    %v1913 = vand.u32 %v1716, 4294901760
    %v1914 = vsub.f32 %v1716, %v1913
    %1915 = vmatpush1.msra.mxu0 %v1914
    %1916 = vmatprep.subr.mxu0 0.0
    %v1917 = vand.u32 %v1715, 4294901760
    %v1918 = vsub.f32 %v1715, %v1917
    %1919 = vmatpush1.msra.mxu0 %v1918
    %1920 = vmatprep.subr.mxu0 0.0
    %1921 = vmatpush2.msra.mxu0 0.0
    %1922 = vmatprep.subr.mxu0 0.0
    %1923 = vmatpush2.msra.mxu0 0.0
    %1924 = vmatprep.subr.mxu0 0.0
    %1925 = vmatpush2.msra.mxu0 0.0
    %1926 = vmatprep.subr.mxu0 0.0
    %1927 = vmatpush2.msra.mxu0 0.0
    %1928 = vmatprep.subr.mxu0 0.0
    %1929 = vmatpush2.msra.mxu0 0.0
    %1930 = vmatprep.subr.mxu0 0.0
    %1931 = vmatpush2.msra.mxu0 0.0
    %1932 = vmatprep.subr.mxu0 0.0
    %1933 = vmatpush2.msra.mxu0 0.0
    %1934 = vmatprep.subr.mxu0 0.0
    %1935 = vmatpush2.msra.mxu0 0.0
    %1936 = vmatprep.subr.mxu0 0.0
    %1937 = vmatpush2.msra.mxu0 0.0
    %1938 = vmatprep.subr.mxu0 0.0
    %1939 = vmatpush2.msra.mxu0 0.0
    %1940 = vmatprep.subr.mxu0 0.0
    %1941 = vmatpush2.msra.mxu0 0.0
    %1942 = vmatprep.subr.mxu0 0.0
    %1943 = vmatpush2.msra.mxu0 0.0
    %1944 = vmatprep.subr.mxu0 0.0
    %1945 = vmatpush2.msra.mxu0 0.0
    %1946 = vmatprep.subr.mxu0 0.0
    %1947 = vmatpush2.msra.mxu0 0.0
    %1948 = vmatprep.subr.mxu0 0.0
    %1949 = vmatpush2.msra.mxu0 0.0
    %1950 = vmatprep.subr.mxu0 0.0
    %1951 = vmatpush2.msra.mxu0 0.0
    %1952 = vmatprep.mubr.f32.mxu0 0.0
    %v1953 = vand.u32 %v1724, 4294901760
    %v1954 = vsub.f32 %v1724, %v1953
    %1955 = vmatmul.mubr.f32.gmra.mxu0 %v1954
    %v1956 = vpop.f32.mrf.mxu0
    %v1957 = vadd.f32 %v1881, %v1956
    %v1958 = vpop.f32.mrf.mxu0
    %1959 = vdwg.mxu0
    %1960 = vmatprep.subr.mxu0 0.0
    %1961 = vmatpush1.msra.mxu0 0.0
    %1962 = vmatprep.subr.mxu0 0.0
    %1963 = vmatpush1.msra.mxu0 0.0
    %1964 = vmatprep.subr.mxu0 0.0
    %1965 = vmatpush1.msra.mxu0 0.0
    %1966 = vmatprep.subr.mxu0 0.0
    %1967 = vmatpush1.msra.mxu0 0.0
    %1968 = vmatprep.subr.mxu0 0.0
    %1969 = vmatpush1.msra.mxu0 0.0
    %1970 = vmatprep.subr.mxu0 0.0
    %1971 = vmatpush1.msra.mxu0 0.0
    %1972 = vmatprep.subr.mxu0 0.0
    %1973 = vmatpush1.msra.mxu0 0.0
    %1974 = vmatprep.subr.mxu0 0.0
    %1975 = vmatpush1.msra.mxu0 0.0
    %1976 = vmatprep.subr.mxu0 0.0
    %1977 = vmatpush1.msra.mxu0 0.0
    %1978 = vmatprep.subr.mxu0 0.0
    %1979 = vmatpush1.msra.mxu0 0.0
    %1980 = vmatprep.subr.mxu0 0.0
    %1981 = vmatpush1.msra.mxu0 0.0
    %1982 = vmatprep.subr.mxu0 0.0
    %1983 = vmatpush1.msra.mxu0 0.0
    %1984 = vmatprep.subr.mxu0 0.0
    %1985 = vmatpush1.msra.mxu0 0.0
    %1986 = vmatprep.subr.mxu0 0.0
    %1987 = vmatpush1.msra.mxu0 0.0
    %1988 = vmatprep.subr.mxu0 0.0
    %v1989 = vand.u32 %v1716, 4294901760
    %1990 = vmatpush1.msra.mxu0 %v1989
    %1991 = vmatprep.subr.mxu0 0.0
    %v1992 = vand.u32 %v1715, 4294901760
    %1993 = vmatpush1.msra.mxu0 %v1992
    %1994 = vmatprep.subr.mxu0 0.0
    %1995 = vmatpush2.msra.mxu0 0.0
    %1996 = vmatprep.subr.mxu0 0.0
    %1997 = vmatpush2.msra.mxu0 0.0
    %1998 = vmatprep.subr.mxu0 0.0
    %1999 = vmatpush2.msra.mxu0 0.0
    %2000 = vmatprep.subr.mxu0 0.0
    %2001 = vmatpush2.msra.mxu0 0.0
    %2002 = vmatprep.subr.mxu0 0.0
    %2003 = vmatpush2.msra.mxu0 0.0
    %2004 = vmatprep.subr.mxu0 0.0
    %2005 = vmatpush2.msra.mxu0 0.0
    %2006 = vmatprep.subr.mxu0 0.0
    %2007 = vmatpush2.msra.mxu0 0.0
    %2008 = vmatprep.subr.mxu0 0.0
    %2009 = vmatpush2.msra.mxu0 0.0
    %2010 = vmatprep.subr.mxu0 0.0
    %2011 = vmatpush2.msra.mxu0 0.0
    %2012 = vmatprep.subr.mxu0 0.0
    %2013 = vmatpush2.msra.mxu0 0.0
    %2014 = vmatprep.subr.mxu0 0.0
    %2015 = vmatpush2.msra.mxu0 0.0
    %2016 = vmatprep.subr.mxu0 0.0
    %2017 = vmatpush2.msra.mxu0 0.0
    %2018 = vmatprep.subr.mxu0 0.0
    %2019 = vmatpush2.msra.mxu0 0.0
    %2020 = vmatprep.subr.mxu0 0.0
    %2021 = vmatpush2.msra.mxu0 0.0
    %2022 = vmatprep.subr.mxu0 0.0
    %2023 = vmatpush2.msra.mxu0 0.0
    %2024 = vmatprep.subr.mxu0 0.0
    %2025 = vmatpush2.msra.mxu0 0.0
    %2026 = vmatprep.mubr.f32.mxu0 0.0
    %v2027 = vand.u32 %v1724, 4294901760
    %v2028 = vsub.f32 %v1724, %v2027
    %v2029 = vand.u32 %v2028, 4294901760
    %2030 = vmatmul.mubr.f32.gmra.mxu0 %v2029
    %v2031 = vpop.f32.mrf.mxu0
    %v2032 = vadd.f32 %v1957, %v2031
    %v2033 = vpop.f32.mrf.mxu0
    %2034 = vdwg.mxu0
    %2035 = vmatprep.subr.mxu0 0.0
    %2036 = vmatpush1.msra.mxu0 0.0
    %2037 = vmatprep.subr.mxu0 0.0
    %2038 = vmatpush1.msra.mxu0 0.0
    %2039 = vmatprep.subr.mxu0 0.0
    %2040 = vmatpush1.msra.mxu0 0.0
    %2041 = vmatprep.subr.mxu0 0.0
    %2042 = vmatpush1.msra.mxu0 0.0
    %2043 = vmatprep.subr.mxu0 0.0
    %2044 = vmatpush1.msra.mxu0 0.0
    %2045 = vmatprep.subr.mxu0 0.0
    %2046 = vmatpush1.msra.mxu0 0.0
    %2047 = vmatprep.subr.mxu0 0.0
    %2048 = vmatpush1.msra.mxu0 0.0
    %2049 = vmatprep.subr.mxu0 0.0
    %2050 = vmatpush1.msra.mxu0 0.0
    %2051 = vmatprep.subr.mxu0 0.0
    %2052 = vmatpush1.msra.mxu0 0.0
    %2053 = vmatprep.subr.mxu0 0.0
    %2054 = vmatpush1.msra.mxu0 0.0
    %2055 = vmatprep.subr.mxu0 0.0
    %2056 = vmatpush1.msra.mxu0 0.0
    %2057 = vmatprep.subr.mxu0 0.0
    %2058 = vmatpush1.msra.mxu0 0.0
    %2059 = vmatprep.subr.mxu0 0.0
    %2060 = vmatpush1.msra.mxu0 0.0
    %2061 = vmatprep.subr.mxu0 0.0
    %2062 = vmatpush1.msra.mxu0 0.0
    %2063 = vmatprep.subr.mxu0 0.0
    %v2064 = vand.u32 %v1716, 4294901760
    %v2065 = vsub.f32 %v1716, %v2064
    %v2066 = vand.u32 %v2065, 4294901760
    %2067 = vmatpush1.msra.mxu0 %v2066
    %2068 = vmatprep.subr.mxu0 0.0
    %v2069 = vand.u32 %v1715, 4294901760
    %v2070 = vsub.f32 %v1715, %v2069
    %v2071 = vand.u32 %v2070, 4294901760
    %2072 = vmatpush1.msra.mxu0 %v2071
    %2073 = vmatprep.subr.mxu0 0.0
    %2074 = vmatpush2.msra.mxu0 0.0
    %2075 = vmatprep.subr.mxu0 0.0
    %2076 = vmatpush2.msra.mxu0 0.0
    %2077 = vmatprep.subr.mxu0 0.0
    %2078 = vmatpush2.msra.mxu0 0.0
    %2079 = vmatprep.subr.mxu0 0.0
    %2080 = vmatpush2.msra.mxu0 0.0
    %2081 = vmatprep.subr.mxu0 0.0
    %2082 = vmatpush2.msra.mxu0 0.0
    %2083 = vmatprep.subr.mxu0 0.0
    %2084 = vmatpush2.msra.mxu0 0.0
    %2085 = vmatprep.subr.mxu0 0.0
    %2086 = vmatpush2.msra.mxu0 0.0
    %2087 = vmatprep.subr.mxu0 0.0
    %2088 = vmatpush2.msra.mxu0 0.0
    %2089 = vmatprep.subr.mxu0 0.0
    %2090 = vmatpush2.msra.mxu0 0.0
    %2091 = vmatprep.subr.mxu0 0.0
    %2092 = vmatpush2.msra.mxu0 0.0
    %2093 = vmatprep.subr.mxu0 0.0
    %2094 = vmatpush2.msra.mxu0 0.0
    %2095 = vmatprep.subr.mxu0 0.0
    %2096 = vmatpush2.msra.mxu0 0.0
    %2097 = vmatprep.subr.mxu0 0.0
    %2098 = vmatpush2.msra.mxu0 0.0
    %2099 = vmatprep.subr.mxu0 0.0
    %2100 = vmatpush2.msra.mxu0 0.0
    %2101 = vmatprep.subr.mxu0 0.0
    %2102 = vmatpush2.msra.mxu0 0.0
    %2103 = vmatprep.subr.mxu0 0.0
    %2104 = vmatpush2.msra.mxu0 0.0
    %2105 = vmatprep.mubr.f32.mxu0 0.0
    %v2106 = vand.u32 %v1724, 4294901760
    %2107 = vmatmul.mubr.f32.gmra.mxu0 %v2106
    %v2108 = vpop.f32.mrf.mxu0
    %v2109 = vadd.f32 %v2032, %v2108
    %v2110 = vpop.f32.mrf.mxu0
    %2111 = vdwg.mxu0
    %2112 = vmatprep.subr.mxu0 0.0
    %2113 = vmatpush1.msra.mxu0 0.0
    %2114 = vmatprep.subr.mxu0 0.0
    %2115 = vmatpush1.msra.mxu0 0.0
    %2116 = vmatprep.subr.mxu0 0.0
    %2117 = vmatpush1.msra.mxu0 0.0
    %2118 = vmatprep.subr.mxu0 0.0
    %2119 = vmatpush1.msra.mxu0 0.0
    %2120 = vmatprep.subr.mxu0 0.0
    %2121 = vmatpush1.msra.mxu0 0.0
    %2122 = vmatprep.subr.mxu0 0.0
    %2123 = vmatpush1.msra.mxu0 0.0
    %2124 = vmatprep.subr.mxu0 0.0
    %2125 = vmatpush1.msra.mxu0 0.0
    %2126 = vmatprep.subr.mxu0 0.0
    %2127 = vmatpush1.msra.mxu0 0.0
    %2128 = vmatprep.subr.mxu0 0.0
    %2129 = vmatpush1.msra.mxu0 0.0
    %2130 = vmatprep.subr.mxu0 0.0
    %2131 = vmatpush1.msra.mxu0 0.0
    %2132 = vmatprep.subr.mxu0 0.0
    %2133 = vmatpush1.msra.mxu0 0.0
    %2134 = vmatprep.subr.mxu0 0.0
    %2135 = vmatpush1.msra.mxu0 0.0
    %2136 = vmatprep.subr.mxu0 0.0
    %2137 = vmatpush1.msra.mxu0 0.0
    %2138 = vmatprep.subr.mxu0 0.0
    %2139 = vmatpush1.msra.mxu0 0.0
    %2140 = vmatprep.subr.mxu0 0.0
    %v2141 = vand.u32 %v1716, 4294901760
    %2142 = vmatpush1.msra.mxu0 %v2141
    %2143 = vmatprep.subr.mxu0 0.0
    %v2144 = vand.u32 %v1715, 4294901760
    %2145 = vmatpush1.msra.mxu0 %v2144
    %2146 = vmatprep.subr.mxu0 0.0
    %2147 = vmatpush2.msra.mxu0 0.0
    %2148 = vmatprep.subr.mxu0 0.0
    %2149 = vmatpush2.msra.mxu0 0.0
    %2150 = vmatprep.subr.mxu0 0.0
    %2151 = vmatpush2.msra.mxu0 0.0
    %2152 = vmatprep.subr.mxu0 0.0
    %2153 = vmatpush2.msra.mxu0 0.0
    %2154 = vmatprep.subr.mxu0 0.0
    %2155 = vmatpush2.msra.mxu0 0.0
    %2156 = vmatprep.subr.mxu0 0.0
    %2157 = vmatpush2.msra.mxu0 0.0
    %2158 = vmatprep.subr.mxu0 0.0
    %2159 = vmatpush2.msra.mxu0 0.0
    %2160 = vmatprep.subr.mxu0 0.0
    %2161 = vmatpush2.msra.mxu0 0.0
    %2162 = vmatprep.subr.mxu0 0.0
    %2163 = vmatpush2.msra.mxu0 0.0
    %2164 = vmatprep.subr.mxu0 0.0
    %2165 = vmatpush2.msra.mxu0 0.0
    %2166 = vmatprep.subr.mxu0 0.0
    %2167 = vmatpush2.msra.mxu0 0.0
    %2168 = vmatprep.subr.mxu0 0.0
    %2169 = vmatpush2.msra.mxu0 0.0
    %2170 = vmatprep.subr.mxu0 0.0
    %2171 = vmatpush2.msra.mxu0 0.0
    %2172 = vmatprep.subr.mxu0 0.0
    %2173 = vmatpush2.msra.mxu0 0.0
    %2174 = vmatprep.subr.mxu0 0.0
    %2175 = vmatpush2.msra.mxu0 0.0
    %2176 = vmatprep.subr.mxu0 0.0
    %2177 = vmatpush2.msra.mxu0 0.0
    %2178 = vmatprep.mubr.f32.mxu0 0.0
    %v2179 = vand.u32 %v1724, 4294901760
    %2180 = vmatmul.mubr.f32.gmra.mxu0 %v2179
    %v2181 = vpop.f32.mrf.mxu0
    %v2182 = vadd.f32 %v2109, %v2181
    %v2183 = vpop.f32.mrf.mxu0
    %2184 = vdwg.mxu0
    %v2185 = vsel %vm584, %v2182, 0.0
    %v2186 = vrot.slane %v2185, 4
    %v2187 = vadd.f32 %v2185, %v2186
    %v2188 = vrot.slane %v2187, 2
    %v2189 = vadd.f32 %v2187, %v2188
    %v2190 = vrot.slane %v2189, 1
    %v2191 = vadd.f32 %v2189, %v2190
    %v2192 = vmul.f32 %v2191, %v592
    %v2193 = vsub.f32 %v2182, %v2192
    %v2194 = vmul.f32 %v2193, %v2193
    %v2195 = vsel %vm584, %v2194, 0.0
    %v2196 = vrot.slane %v2195, 4
    %v2197 = vadd.f32 %v2195, %v2196
    %v2198 = vrot.slane %v2197, 2
    %v2199 = vadd.f32 %v2197, %v2198
    %v2200 = vrot.slane %v2199, 1
    %v2201 = vadd.f32 %v2199, %v2200
    %v2202 = vmul.f32 %v2201, %v592
    %v2203 = vadd.f32 %v2202, 1e-05
    %v2204 = vrsqrt.pop %v2203
    %v2205 = vmul.f32 %v2193, %v2204
    %v2206 = vld [vmem:[%s1717 + $0x1] sm:$0x1]
    %v2207 = vlaneseq
    %v2208 = vshrl.u32 %v2207, 7
    %v2209 = vsub.s32 0, %v2208
    %v2210 = vrot.slane %v2206, %v2209
    %v2211 = vmul.f32 %v2205, %v2210
    %v2212 = vld [vmem:[%s1717 + $0x2] sm:$0x1]
    %v2213 = vlaneseq
    %v2214 = vshrl.u32 %v2213, 7
    %v2215 = vsub.s32 0, %v2214
    %v2216 = vrot.slane %v2212, %v2215
    %v2217 = vadd.f32 %v2211, %v2216
    %v2218 = vmax.f32 %v2217, 0.0
    %s2219 = scalar_lea.vmem %s6, 32
    %v2220 = vld [vmem:[%s2219] sm:$0xff]
    %v2221 = vld [vmem:[%s2219 + $0x8] sm:$0xff]
    %v2222 = vld [vmem:[%s2219 + $0x10] sm:$0xff]
    %v2223 = vld [vmem:[%s2219 + $0x18] sm:$0x3]
    %v2224 = vld [vmem:[%s1717 + $0x3] sm:$0x1]
    %v2225 = vlaneseq
    %v2226 = vshrl.u32 %v2225, 7
    %v2227 = vsub.s32 0, %v2226
    %v2228 = vrot.slane %v2224, %v2227
    %v2230 = vsel %vm584, %v2218, 0
    %v2233 = vsel %vm632, %v2223, 0
    %2235 = vmatprep.subr.mxu0 0.0
    %2236 = vmatpush1.msra.mxu0 0.0
    %2237 = vmatprep.subr.mxu0 0.0
    %2238 = vmatpush1.msra.mxu0 0.0
    %2239 = vmatprep.subr.mxu0 0.0
    %2240 = vmatpush1.msra.mxu0 0.0
    %2241 = vmatprep.subr.mxu0 0.0
    %2242 = vmatpush1.msra.mxu0 0.0
    %2243 = vmatprep.subr.mxu0 0.0
    %2244 = vmatpush1.msra.mxu0 0.0
    %2245 = vmatprep.subr.mxu0 0.0
    %2246 = vmatpush1.msra.mxu0 0.0
    %2247 = vmatprep.subr.mxu0 0.0
    %2248 = vmatpush1.msra.mxu0 0.0
    %2249 = vmatprep.subr.mxu0 0.0
    %2250 = vmatpush1.msra.mxu0 0.0
    %2251 = vmatprep.subr.mxu0 0.0
    %2252 = vmatpush1.msra.mxu0 0.0
    %2253 = vmatprep.subr.mxu0 0.0
    %2254 = vmatpush1.msra.mxu0 0.0
    %2255 = vmatprep.subr.mxu0 0.0
    %2256 = vmatpush1.msra.mxu0 0.0
    %2257 = vmatprep.subr.mxu0 0.0
    %2258 = vmatpush1.msra.mxu0 0.0
    %2259 = vmatprep.subr.mxu0 0.0
    %v2260 = vand.u32 %v2233, 4294901760
    %2261 = vmatpush1.msra.mxu0 %v2260
    %2262 = vmatprep.subr.mxu0 0.0
    %v2263 = vand.u32 %v2222, 4294901760
    %2264 = vmatpush1.msra.mxu0 %v2263
    %2265 = vmatprep.subr.mxu0 0.0
    %v2266 = vand.u32 %v2221, 4294901760
    %2267 = vmatpush1.msra.mxu0 %v2266
    %2268 = vmatprep.subr.mxu0 0.0
    %v2269 = vand.u32 %v2220, 4294901760
    %2270 = vmatpush1.msra.mxu0 %v2269
    %2271 = vmatprep.subr.mxu0 0.0
    %2272 = vmatpush2.msra.mxu0 0.0
    %2273 = vmatprep.subr.mxu0 0.0
    %2274 = vmatpush2.msra.mxu0 0.0
    %2275 = vmatprep.subr.mxu0 0.0
    %2276 = vmatpush2.msra.mxu0 0.0
    %2277 = vmatprep.subr.mxu0 0.0
    %2278 = vmatpush2.msra.mxu0 0.0
    %2279 = vmatprep.subr.mxu0 0.0
    %2280 = vmatpush2.msra.mxu0 0.0
    %2281 = vmatprep.subr.mxu0 0.0
    %2282 = vmatpush2.msra.mxu0 0.0
    %2283 = vmatprep.subr.mxu0 0.0
    %2284 = vmatpush2.msra.mxu0 0.0
    %2285 = vmatprep.subr.mxu0 0.0
    %2286 = vmatpush2.msra.mxu0 0.0
    %2287 = vmatprep.subr.mxu0 0.0
    %2288 = vmatpush2.msra.mxu0 0.0
    %2289 = vmatprep.subr.mxu0 0.0
    %2290 = vmatpush2.msra.mxu0 0.0
    %2291 = vmatprep.subr.mxu0 0.0
    %2292 = vmatpush2.msra.mxu0 0.0
    %2293 = vmatprep.subr.mxu0 0.0
    %2294 = vmatpush2.msra.mxu0 0.0
    %2295 = vmatprep.subr.mxu0 0.0
    %2296 = vmatpush2.msra.mxu0 0.0
    %2297 = vmatprep.subr.mxu0 0.0
    %2298 = vmatpush2.msra.mxu0 0.0
    %2299 = vmatprep.subr.mxu0 0.0
    %2300 = vmatpush2.msra.mxu0 0.0
    %2301 = vmatprep.subr.mxu0 0.0
    %2302 = vmatpush2.msra.mxu0 0.0
    %2303 = vmatprep.mubr.f32.mxu0 0.0
    %v2304 = vand.u32 %v2230, 4294901760
    %v2305 = vsub.f32 %v2230, %v2304
    %v2306 = vand.u32 %v2305, 4294901760
    %v2307 = vsub.f32 %v2305, %v2306
    %v2308 = vand.u32 %v2307, 4294901760
    %2309 = vmatmul.mubr.f32.gmra.mxu0 %v2308
    %v2310 = vpop.f32.mrf.mxu0
    %v2311 = vadd.f32 %v2228, %v2310
    %v2312 = vpop.f32.mrf.mxu0
    %2313 = vdwg.mxu0
    %2314 = vmatprep.subr.mxu0 0.0
    %2315 = vmatpush1.msra.mxu0 0.0
    %2316 = vmatprep.subr.mxu0 0.0
    %2317 = vmatpush1.msra.mxu0 0.0
    %2318 = vmatprep.subr.mxu0 0.0
    %2319 = vmatpush1.msra.mxu0 0.0
    %2320 = vmatprep.subr.mxu0 0.0
    %2321 = vmatpush1.msra.mxu0 0.0
    %2322 = vmatprep.subr.mxu0 0.0
    %2323 = vmatpush1.msra.mxu0 0.0
    %2324 = vmatprep.subr.mxu0 0.0
    %2325 = vmatpush1.msra.mxu0 0.0
    %2326 = vmatprep.subr.mxu0 0.0
    %2327 = vmatpush1.msra.mxu0 0.0
    %2328 = vmatprep.subr.mxu0 0.0
    %2329 = vmatpush1.msra.mxu0 0.0
    %2330 = vmatprep.subr.mxu0 0.0
    %2331 = vmatpush1.msra.mxu0 0.0
    %2332 = vmatprep.subr.mxu0 0.0
    %2333 = vmatpush1.msra.mxu0 0.0
    %2334 = vmatprep.subr.mxu0 0.0
    %2335 = vmatpush1.msra.mxu0 0.0
    %2336 = vmatprep.subr.mxu0 0.0
    %2337 = vmatpush1.msra.mxu0 0.0
    %2338 = vmatprep.subr.mxu0 0.0
    %v2339 = vand.u32 %v2233, 4294901760
    %v2340 = vsub.f32 %v2233, %v2339
    %v2341 = vand.u32 %v2340, 4294901760
    %v2342 = vsub.f32 %v2340, %v2341
    %v2343 = vand.u32 %v2342, 4294901760
    %2344 = vmatpush1.msra.mxu0 %v2343
    %2345 = vmatprep.subr.mxu0 0.0
    %v2346 = vand.u32 %v2222, 4294901760
    %v2347 = vsub.f32 %v2222, %v2346
    %v2348 = vand.u32 %v2347, 4294901760
    %v2349 = vsub.f32 %v2347, %v2348
    %v2350 = vand.u32 %v2349, 4294901760
    %2351 = vmatpush1.msra.mxu0 %v2350
    %2352 = vmatprep.subr.mxu0 0.0
    %v2353 = vand.u32 %v2221, 4294901760
    %v2354 = vsub.f32 %v2221, %v2353
    %v2355 = vand.u32 %v2354, 4294901760
    %v2356 = vsub.f32 %v2354, %v2355
    %v2357 = vand.u32 %v2356, 4294901760
    %2358 = vmatpush1.msra.mxu0 %v2357
    %2359 = vmatprep.subr.mxu0 0.0
    %v2360 = vand.u32 %v2220, 4294901760
    %v2361 = vsub.f32 %v2220, %v2360
    %v2362 = vand.u32 %v2361, 4294901760
    %v2363 = vsub.f32 %v2361, %v2362
    %v2364 = vand.u32 %v2363, 4294901760
    %2365 = vmatpush1.msra.mxu0 %v2364
    %2366 = vmatprep.subr.mxu0 0.0
    %2367 = vmatpush2.msra.mxu0 0.0
    %2368 = vmatprep.subr.mxu0 0.0
    %2369 = vmatpush2.msra.mxu0 0.0
    %2370 = vmatprep.subr.mxu0 0.0
    %2371 = vmatpush2.msra.mxu0 0.0
    %2372 = vmatprep.subr.mxu0 0.0
    %2373 = vmatpush2.msra.mxu0 0.0
    %2374 = vmatprep.subr.mxu0 0.0
    %2375 = vmatpush2.msra.mxu0 0.0
    %2376 = vmatprep.subr.mxu0 0.0
    %2377 = vmatpush2.msra.mxu0 0.0
    %2378 = vmatprep.subr.mxu0 0.0
    %2379 = vmatpush2.msra.mxu0 0.0
    %2380 = vmatprep.subr.mxu0 0.0
    %2381 = vmatpush2.msra.mxu0 0.0
    %2382 = vmatprep.subr.mxu0 0.0
    %2383 = vmatpush2.msra.mxu0 0.0
    %2384 = vmatprep.subr.mxu0 0.0
    %2385 = vmatpush2.msra.mxu0 0.0
    %2386 = vmatprep.subr.mxu0 0.0
    %2387 = vmatpush2.msra.mxu0 0.0
    %2388 = vmatprep.subr.mxu0 0.0
    %2389 = vmatpush2.msra.mxu0 0.0
    %2390 = vmatprep.subr.mxu0 0.0
    %2391 = vmatpush2.msra.mxu0 0.0
    %2392 = vmatprep.subr.mxu0 0.0
    %2393 = vmatpush2.msra.mxu0 0.0
    %2394 = vmatprep.subr.mxu0 0.0
    %2395 = vmatpush2.msra.mxu0 0.0
    %2396 = vmatprep.subr.mxu0 0.0
    %2397 = vmatpush2.msra.mxu0 0.0
    %2398 = vmatprep.mubr.f32.mxu0 0.0
    %v2399 = vand.u32 %v2230, 4294901760
    %2400 = vmatmul.mubr.f32.gmra.mxu0 %v2399
    %v2401 = vpop.f32.mrf.mxu0
    %v2402 = vadd.f32 %v2311, %v2401
    %v2403 = vpop.f32.mrf.mxu0
    %2404 = vdwg.mxu0
    %2405 = vmatprep.subr.mxu0 0.0
    %2406 = vmatpush1.msra.mxu0 0.0
    %2407 = vmatprep.subr.mxu0 0.0
    %2408 = vmatpush1.msra.mxu0 0.0
    %2409 = vmatprep.subr.mxu0 0.0
    %2410 = vmatpush1.msra.mxu0 0.0
    %2411 = vmatprep.subr.mxu0 0.0
    %2412 = vmatpush1.msra.mxu0 0.0
    %2413 = vmatprep.subr.mxu0 0.0
    %2414 = vmatpush1.msra.mxu0 0.0
    %2415 = vmatprep.subr.mxu0 0.0
    %2416 = vmatpush1.msra.mxu0 0.0
    %2417 = vmatprep.subr.mxu0 0.0
    %2418 = vmatpush1.msra.mxu0 0.0
    %2419 = vmatprep.subr.mxu0 0.0
    %2420 = vmatpush1.msra.mxu0 0.0
    %2421 = vmatprep.subr.mxu0 0.0
    %2422 = vmatpush1.msra.mxu0 0.0
    %2423 = vmatprep.subr.mxu0 0.0
    %2424 = vmatpush1.msra.mxu0 0.0
    %2425 = vmatprep.subr.mxu0 0.0
    %2426 = vmatpush1.msra.mxu0 0.0
    %2427 = vmatprep.subr.mxu0 0.0
    %2428 = vmatpush1.msra.mxu0 0.0
    %2429 = vmatprep.subr.mxu0 0.0
    %v2430 = vand.u32 %v2233, 4294901760
    %v2431 = vsub.f32 %v2233, %v2430
    %2432 = vmatpush1.msra.mxu0 %v2431
    %2433 = vmatprep.subr.mxu0 0.0
    %v2434 = vand.u32 %v2222, 4294901760
    %v2435 = vsub.f32 %v2222, %v2434
    %2436 = vmatpush1.msra.mxu0 %v2435
    %2437 = vmatprep.subr.mxu0 0.0
    %v2438 = vand.u32 %v2221, 4294901760
    %v2439 = vsub.f32 %v2221, %v2438
    %2440 = vmatpush1.msra.mxu0 %v2439
    %2441 = vmatprep.subr.mxu0 0.0
    %v2442 = vand.u32 %v2220, 4294901760
    %v2443 = vsub.f32 %v2220, %v2442
    %2444 = vmatpush1.msra.mxu0 %v2443
    %2445 = vmatprep.subr.mxu0 0.0
    %2446 = vmatpush2.msra.mxu0 0.0
    %2447 = vmatprep.subr.mxu0 0.0
    %2448 = vmatpush2.msra.mxu0 0.0
    %2449 = vmatprep.subr.mxu0 0.0
    %2450 = vmatpush2.msra.mxu0 0.0
    %2451 = vmatprep.subr.mxu0 0.0
    %2452 = vmatpush2.msra.mxu0 0.0
    %2453 = vmatprep.subr.mxu0 0.0
    %2454 = vmatpush2.msra.mxu0 0.0
    %2455 = vmatprep.subr.mxu0 0.0
    %2456 = vmatpush2.msra.mxu0 0.0
    %2457 = vmatprep.subr.mxu0 0.0
    %2458 = vmatpush2.msra.mxu0 0.0
    %2459 = vmatprep.subr.mxu0 0.0
    %2460 = vmatpush2.msra.mxu0 0.0
    %2461 = vmatprep.subr.mxu0 0.0
    %2462 = vmatpush2.msra.mxu0 0.0
    %2463 = vmatprep.subr.mxu0 0.0
    %2464 = vmatpush2.msra.mxu0 0.0
    %2465 = vmatprep.subr.mxu0 0.0
    %2466 = vmatpush2.msra.mxu0 0.0
    %2467 = vmatprep.subr.mxu0 0.0
    %2468 = vmatpush2.msra.mxu0 0.0
    %2469 = vmatprep.subr.mxu0 0.0
    %2470 = vmatpush2.msra.mxu0 0.0
    %2471 = vmatprep.subr.mxu0 0.0
    %2472 = vmatpush2.msra.mxu0 0.0
    %2473 = vmatprep.subr.mxu0 0.0
    %2474 = vmatpush2.msra.mxu0 0.0
    %2475 = vmatprep.subr.mxu0 0.0
    %2476 = vmatpush2.msra.mxu0 0.0
    %2477 = vmatprep.mubr.f32.mxu0 0.0
    %v2478 = vand.u32 %v2230, 4294901760
    %v2479 = vsub.f32 %v2230, %v2478
    %2480 = vmatmul.mubr.f32.gmra.mxu0 %v2479
    %v2481 = vpop.f32.mrf.mxu0
    %v2482 = vadd.f32 %v2402, %v2481
    %v2483 = vpop.f32.mrf.mxu0
    %2484 = vdwg.mxu0
    %2485 = vmatprep.subr.mxu0 0.0
    %2486 = vmatpush1.msra.mxu0 0.0
    %2487 = vmatprep.subr.mxu0 0.0
    %2488 = vmatpush1.msra.mxu0 0.0
    %2489 = vmatprep.subr.mxu0 0.0
    %2490 = vmatpush1.msra.mxu0 0.0
    %2491 = vmatprep.subr.mxu0 0.0
    %2492 = vmatpush1.msra.mxu0 0.0
    %2493 = vmatprep.subr.mxu0 0.0
    %2494 = vmatpush1.msra.mxu0 0.0
    %2495 = vmatprep.subr.mxu0 0.0
    %2496 = vmatpush1.msra.mxu0 0.0
    %2497 = vmatprep.subr.mxu0 0.0
    %2498 = vmatpush1.msra.mxu0 0.0
    %2499 = vmatprep.subr.mxu0 0.0
    %2500 = vmatpush1.msra.mxu0 0.0
    %2501 = vmatprep.subr.mxu0 0.0
    %2502 = vmatpush1.msra.mxu0 0.0
    %2503 = vmatprep.subr.mxu0 0.0
    %2504 = vmatpush1.msra.mxu0 0.0
    %2505 = vmatprep.subr.mxu0 0.0
    %2506 = vmatpush1.msra.mxu0 0.0
    %2507 = vmatprep.subr.mxu0 0.0
    %2508 = vmatpush1.msra.mxu0 0.0
    %2509 = vmatprep.subr.mxu0 0.0
    %v2510 = vand.u32 %v2233, 4294901760
    %2511 = vmatpush1.msra.mxu0 %v2510
    %2512 = vmatprep.subr.mxu0 0.0
    %v2513 = vand.u32 %v2222, 4294901760
    %2514 = vmatpush1.msra.mxu0 %v2513
    %2515 = vmatprep.subr.mxu0 0.0
    %v2516 = vand.u32 %v2221, 4294901760
    %2517 = vmatpush1.msra.mxu0 %v2516
    %2518 = vmatprep.subr.mxu0 0.0
    %v2519 = vand.u32 %v2220, 4294901760
    %2520 = vmatpush1.msra.mxu0 %v2519
    %2521 = vmatprep.subr.mxu0 0.0
    %2522 = vmatpush2.msra.mxu0 0.0
    %2523 = vmatprep.subr.mxu0 0.0
    %2524 = vmatpush2.msra.mxu0 0.0
    %2525 = vmatprep.subr.mxu0 0.0
    %2526 = vmatpush2.msra.mxu0 0.0
    %2527 = vmatprep.subr.mxu0 0.0
    %2528 = vmatpush2.msra.mxu0 0.0
    %2529 = vmatprep.subr.mxu0 0.0
    %2530 = vmatpush2.msra.mxu0 0.0
    %2531 = vmatprep.subr.mxu0 0.0
    %2532 = vmatpush2.msra.mxu0 0.0
    %2533 = vmatprep.subr.mxu0 0.0
    %2534 = vmatpush2.msra.mxu0 0.0
    %2535 = vmatprep.subr.mxu0 0.0
    %2536 = vmatpush2.msra.mxu0 0.0
    %2537 = vmatprep.subr.mxu0 0.0
    %2538 = vmatpush2.msra.mxu0 0.0
    %2539 = vmatprep.subr.mxu0 0.0
    %2540 = vmatpush2.msra.mxu0 0.0
    %2541 = vmatprep.subr.mxu0 0.0
    %2542 = vmatpush2.msra.mxu0 0.0
    %2543 = vmatprep.subr.mxu0 0.0
    %2544 = vmatpush2.msra.mxu0 0.0
    %2545 = vmatprep.subr.mxu0 0.0
    %2546 = vmatpush2.msra.mxu0 0.0
    %2547 = vmatprep.subr.mxu0 0.0
    %2548 = vmatpush2.msra.mxu0 0.0
    %2549 = vmatprep.subr.mxu0 0.0
    %2550 = vmatpush2.msra.mxu0 0.0
    %2551 = vmatprep.subr.mxu0 0.0
    %2552 = vmatpush2.msra.mxu0 0.0
    %2553 = vmatprep.mubr.f32.mxu0 0.0
    %v2554 = vand.u32 %v2230, 4294901760
    %v2555 = vsub.f32 %v2230, %v2554
    %v2556 = vand.u32 %v2555, 4294901760
    %2557 = vmatmul.mubr.f32.gmra.mxu0 %v2556
    %v2558 = vpop.f32.mrf.mxu0
    %v2559 = vadd.f32 %v2482, %v2558
    %v2560 = vpop.f32.mrf.mxu0
    %2561 = vdwg.mxu0
    %2562 = vmatprep.subr.mxu0 0.0
    %2563 = vmatpush1.msra.mxu0 0.0
    %2564 = vmatprep.subr.mxu0 0.0
    %2565 = vmatpush1.msra.mxu0 0.0
    %2566 = vmatprep.subr.mxu0 0.0
    %2567 = vmatpush1.msra.mxu0 0.0
    %2568 = vmatprep.subr.mxu0 0.0
    %2569 = vmatpush1.msra.mxu0 0.0
    %2570 = vmatprep.subr.mxu0 0.0
    %2571 = vmatpush1.msra.mxu0 0.0
    %2572 = vmatprep.subr.mxu0 0.0
    %2573 = vmatpush1.msra.mxu0 0.0
    %2574 = vmatprep.subr.mxu0 0.0
    %2575 = vmatpush1.msra.mxu0 0.0
    %2576 = vmatprep.subr.mxu0 0.0
    %2577 = vmatpush1.msra.mxu0 0.0
    %2578 = vmatprep.subr.mxu0 0.0
    %2579 = vmatpush1.msra.mxu0 0.0
    %2580 = vmatprep.subr.mxu0 0.0
    %2581 = vmatpush1.msra.mxu0 0.0
    %2582 = vmatprep.subr.mxu0 0.0
    %2583 = vmatpush1.msra.mxu0 0.0
    %2584 = vmatprep.subr.mxu0 0.0
    %2585 = vmatpush1.msra.mxu0 0.0
    %2586 = vmatprep.subr.mxu0 0.0
    %v2587 = vand.u32 %v2233, 4294901760
    %v2588 = vsub.f32 %v2233, %v2587
    %v2589 = vand.u32 %v2588, 4294901760
    %2590 = vmatpush1.msra.mxu0 %v2589
    %2591 = vmatprep.subr.mxu0 0.0
    %v2592 = vand.u32 %v2222, 4294901760
    %v2593 = vsub.f32 %v2222, %v2592
    %v2594 = vand.u32 %v2593, 4294901760
    %2595 = vmatpush1.msra.mxu0 %v2594
    %2596 = vmatprep.subr.mxu0 0.0
    %v2597 = vand.u32 %v2221, 4294901760
    %v2598 = vsub.f32 %v2221, %v2597
    %v2599 = vand.u32 %v2598, 4294901760
    %2600 = vmatpush1.msra.mxu0 %v2599
    %2601 = vmatprep.subr.mxu0 0.0
    %v2602 = vand.u32 %v2220, 4294901760
    %v2603 = vsub.f32 %v2220, %v2602
    %v2604 = vand.u32 %v2603, 4294901760
    %2605 = vmatpush1.msra.mxu0 %v2604
    %2606 = vmatprep.subr.mxu0 0.0
    %2607 = vmatpush2.msra.mxu0 0.0
    %2608 = vmatprep.subr.mxu0 0.0
    %2609 = vmatpush2.msra.mxu0 0.0
    %2610 = vmatprep.subr.mxu0 0.0
    %2611 = vmatpush2.msra.mxu0 0.0
    %2612 = vmatprep.subr.mxu0 0.0
    %2613 = vmatpush2.msra.mxu0 0.0
    %2614 = vmatprep.subr.mxu0 0.0
    %2615 = vmatpush2.msra.mxu0 0.0
    %2616 = vmatprep.subr.mxu0 0.0
    %2617 = vmatpush2.msra.mxu0 0.0
    %2618 = vmatprep.subr.mxu0 0.0
    %2619 = vmatpush2.msra.mxu0 0.0
    %2620 = vmatprep.subr.mxu0 0.0
    %2621 = vmatpush2.msra.mxu0 0.0
    %2622 = vmatprep.subr.mxu0 0.0
    %2623 = vmatpush2.msra.mxu0 0.0
    %2624 = vmatprep.subr.mxu0 0.0
    %2625 = vmatpush2.msra.mxu0 0.0
    %2626 = vmatprep.subr.mxu0 0.0
    %2627 = vmatpush2.msra.mxu0 0.0
    %2628 = vmatprep.subr.mxu0 0.0
    %2629 = vmatpush2.msra.mxu0 0.0
    %2630 = vmatprep.subr.mxu0 0.0
    %2631 = vmatpush2.msra.mxu0 0.0
    %2632 = vmatprep.subr.mxu0 0.0
    %2633 = vmatpush2.msra.mxu0 0.0
    %2634 = vmatprep.subr.mxu0 0.0
    %2635 = vmatpush2.msra.mxu0 0.0
    %2636 = vmatprep.subr.mxu0 0.0
    %2637 = vmatpush2.msra.mxu0 0.0
    %2638 = vmatprep.mubr.f32.mxu0 0.0
    %v2639 = vand.u32 %v2230, 4294901760
    %2640 = vmatmul.mubr.f32.gmra.mxu0 %v2639
    %v2641 = vpop.f32.mrf.mxu0
    %v2642 = vadd.f32 %v2559, %v2641
    %v2643 = vpop.f32.mrf.mxu0
    %2644 = vdwg.mxu0
    %2645 = vmatprep.subr.mxu0 0.0
    %2646 = vmatpush1.msra.mxu0 0.0
    %2647 = vmatprep.subr.mxu0 0.0
    %2648 = vmatpush1.msra.mxu0 0.0
    %2649 = vmatprep.subr.mxu0 0.0
    %2650 = vmatpush1.msra.mxu0 0.0
    %2651 = vmatprep.subr.mxu0 0.0
    %2652 = vmatpush1.msra.mxu0 0.0
    %2653 = vmatprep.subr.mxu0 0.0
    %2654 = vmatpush1.msra.mxu0 0.0
    %2655 = vmatprep.subr.mxu0 0.0
    %2656 = vmatpush1.msra.mxu0 0.0
    %2657 = vmatprep.subr.mxu0 0.0
    %2658 = vmatpush1.msra.mxu0 0.0
    %2659 = vmatprep.subr.mxu0 0.0
    %2660 = vmatpush1.msra.mxu0 0.0
    %2661 = vmatprep.subr.mxu0 0.0
    %2662 = vmatpush1.msra.mxu0 0.0
    %2663 = vmatprep.subr.mxu0 0.0
    %2664 = vmatpush1.msra.mxu0 0.0
    %2665 = vmatprep.subr.mxu0 0.0
    %2666 = vmatpush1.msra.mxu0 0.0
    %2667 = vmatprep.subr.mxu0 0.0
    %2668 = vmatpush1.msra.mxu0 0.0
    %2669 = vmatprep.subr.mxu0 0.0
    %v2670 = vand.u32 %v2233, 4294901760
    %2671 = vmatpush1.msra.mxu0 %v2670
    %2672 = vmatprep.subr.mxu0 0.0
    %v2673 = vand.u32 %v2222, 4294901760
    %2674 = vmatpush1.msra.mxu0 %v2673
    %2675 = vmatprep.subr.mxu0 0.0
    %v2676 = vand.u32 %v2221, 4294901760
    %2677 = vmatpush1.msra.mxu0 %v2676
    %2678 = vmatprep.subr.mxu0 0.0
    %v2679 = vand.u32 %v2220, 4294901760
    %2680 = vmatpush1.msra.mxu0 %v2679
    %2681 = vmatprep.subr.mxu0 0.0
    %2682 = vmatpush2.msra.mxu0 0.0
    %2683 = vmatprep.subr.mxu0 0.0
    %2684 = vmatpush2.msra.mxu0 0.0
    %2685 = vmatprep.subr.mxu0 0.0
    %2686 = vmatpush2.msra.mxu0 0.0
    %2687 = vmatprep.subr.mxu0 0.0
    %2688 = vmatpush2.msra.mxu0 0.0
    %2689 = vmatprep.subr.mxu0 0.0
    %2690 = vmatpush2.msra.mxu0 0.0
    %2691 = vmatprep.subr.mxu0 0.0
    %2692 = vmatpush2.msra.mxu0 0.0
    %2693 = vmatprep.subr.mxu0 0.0
    %2694 = vmatpush2.msra.mxu0 0.0
    %2695 = vmatprep.subr.mxu0 0.0
    %2696 = vmatpush2.msra.mxu0 0.0
    %2697 = vmatprep.subr.mxu0 0.0
    %2698 = vmatpush2.msra.mxu0 0.0
    %2699 = vmatprep.subr.mxu0 0.0
    %2700 = vmatpush2.msra.mxu0 0.0
    %2701 = vmatprep.subr.mxu0 0.0
    %2702 = vmatpush2.msra.mxu0 0.0
    %2703 = vmatprep.subr.mxu0 0.0
    %2704 = vmatpush2.msra.mxu0 0.0
    %2705 = vmatprep.subr.mxu0 0.0
    %2706 = vmatpush2.msra.mxu0 0.0
    %2707 = vmatprep.subr.mxu0 0.0
    %2708 = vmatpush2.msra.mxu0 0.0
    %2709 = vmatprep.subr.mxu0 0.0
    %2710 = vmatpush2.msra.mxu0 0.0
    %2711 = vmatprep.subr.mxu0 0.0
    %2712 = vmatpush2.msra.mxu0 0.0
    %2713 = vmatprep.mubr.f32.mxu0 0.0
    %v2714 = vand.u32 %v2230, 4294901760
    %2715 = vmatmul.mubr.f32.gmra.mxu0 %v2714
    %v2716 = vpop.f32.mrf.mxu0
    %v2717 = vadd.f32 %v2642, %v2716
    %v2718 = vpop.f32.mrf.mxu0
    %2719 = vdwg.mxu0
    %v2720 = vsel %vm584, %v2717, 0.0
    %v2721 = vrot.slane %v2720, 4
    %v2722 = vadd.f32 %v2720, %v2721
    %v2723 = vrot.slane %v2722, 2
    %v2724 = vadd.f32 %v2722, %v2723
    %v2725 = vrot.slane %v2724, 1
    %v2726 = vadd.f32 %v2724, %v2725
    %v2727 = vmul.f32 %v2726, %v592
    %v2728 = vsub.f32 %v2717, %v2727
    %v2729 = vmul.f32 %v2728, %v2728
    %v2730 = vsel %vm584, %v2729, 0.0
    %v2731 = vrot.slane %v2730, 4
    %v2732 = vadd.f32 %v2730, %v2731
    %v2733 = vrot.slane %v2732, 2
    %v2734 = vadd.f32 %v2732, %v2733
    %v2735 = vrot.slane %v2734, 1
    %v2736 = vadd.f32 %v2734, %v2735
    %v2737 = vmul.f32 %v2736, %v592
    %v2738 = vadd.f32 %v2737, 1e-05
    %v2739 = vrsqrt.pop %v2738
    %v2740 = vmul.f32 %v2728, %v2739
    %v2741 = vld [vmem:[%s1717 + $0x4] sm:$0x1]
    %v2742 = vlaneseq
    %v2743 = vshrl.u32 %v2742, 7
    %v2744 = vsub.s32 0, %v2743
    %v2745 = vrot.slane %v2741, %v2744
    %v2746 = vmul.f32 %v2740, %v2745
    %v2747 = vld [vmem:[%s1717 + $0x5] sm:$0x1]
    %v2748 = vlaneseq
    %v2749 = vshrl.u32 %v2748, 7
    %v2750 = vsub.s32 0, %v2749
    %v2751 = vrot.slane %v2747, %v2750
    %v2752 = vadd.f32 %v2746, %v2751
    %v2753 = vmax.f32 %v2752, 0.0
    %v2754 = vld [vmem:[%s1717 + $0x6] sm:$0x1]
    %s2755 = scalar_lea.vmem %s7, 32
    %v2756 = vld [vmem:[%s2755] sm:$0xff]
    %v2757 = vld [vmem:[%s2755 + $0x8] sm:$0xff]
    %v2758 = vld [vmem:[%s2755 + $0x10] sm:$0xff]
    %v2759 = vld [vmem:[%s2755 + $0x18] sm:$0x3]
    %v2760 = vlaneseq
    %v2761 = vshrl.u32 %v2760, 7
    %v2762 = vsub.s32 0, %v2761
    %v2763 = vrot.slane %v2754, %v2762
    %v2765 = vsel %vm584, %v2753, 0
    %v2768 = vsel %vm632, %v2759, 0
    %2770 = vmatprep.subr.mxu0 0.0
    %2771 = vmatpush1.msra.mxu0 0.0
    %2772 = vmatprep.subr.mxu0 0.0
    %2773 = vmatpush1.msra.mxu0 0.0
    %2774 = vmatprep.subr.mxu0 0.0
    %2775 = vmatpush1.msra.mxu0 0.0
    %2776 = vmatprep.subr.mxu0 0.0
    %2777 = vmatpush1.msra.mxu0 0.0
    %2778 = vmatprep.subr.mxu0 0.0
    %2779 = vmatpush1.msra.mxu0 0.0
    %2780 = vmatprep.subr.mxu0 0.0
    %2781 = vmatpush1.msra.mxu0 0.0
    %2782 = vmatprep.subr.mxu0 0.0
    %2783 = vmatpush1.msra.mxu0 0.0
    %2784 = vmatprep.subr.mxu0 0.0
    %2785 = vmatpush1.msra.mxu0 0.0
    %2786 = vmatprep.subr.mxu0 0.0
    %2787 = vmatpush1.msra.mxu0 0.0
    %2788 = vmatprep.subr.mxu0 0.0
    %2789 = vmatpush1.msra.mxu0 0.0
    %2790 = vmatprep.subr.mxu0 0.0
    %2791 = vmatpush1.msra.mxu0 0.0
    %2792 = vmatprep.subr.mxu0 0.0
    %2793 = vmatpush1.msra.mxu0 0.0
    %2794 = vmatprep.subr.mxu0 0.0
    %v2795 = vand.u32 %v2768, 4294901760
    %2796 = vmatpush1.msra.mxu0 %v2795
    %2797 = vmatprep.subr.mxu0 0.0
    %v2798 = vand.u32 %v2758, 4294901760
    %2799 = vmatpush1.msra.mxu0 %v2798
    %2800 = vmatprep.subr.mxu0 0.0
    %v2801 = vand.u32 %v2757, 4294901760
    %2802 = vmatpush1.msra.mxu0 %v2801
    %2803 = vmatprep.subr.mxu0 0.0
    %v2804 = vand.u32 %v2756, 4294901760
    %2805 = vmatpush1.msra.mxu0 %v2804
    %2806 = vmatprep.subr.mxu0 0.0
    %2807 = vmatpush2.msra.mxu0 0.0
    %2808 = vmatprep.subr.mxu0 0.0
    %2809 = vmatpush2.msra.mxu0 0.0
    %2810 = vmatprep.subr.mxu0 0.0
    %2811 = vmatpush2.msra.mxu0 0.0
    %2812 = vmatprep.subr.mxu0 0.0
    %2813 = vmatpush2.msra.mxu0 0.0
    %2814 = vmatprep.subr.mxu0 0.0
    %2815 = vmatpush2.msra.mxu0 0.0
    %2816 = vmatprep.subr.mxu0 0.0
    %2817 = vmatpush2.msra.mxu0 0.0
    %2818 = vmatprep.subr.mxu0 0.0
    %2819 = vmatpush2.msra.mxu0 0.0
    %2820 = vmatprep.subr.mxu0 0.0
    %2821 = vmatpush2.msra.mxu0 0.0
    %2822 = vmatprep.subr.mxu0 0.0
    %2823 = vmatpush2.msra.mxu0 0.0
    %2824 = vmatprep.subr.mxu0 0.0
    %2825 = vmatpush2.msra.mxu0 0.0
    %2826 = vmatprep.subr.mxu0 0.0
    %2827 = vmatpush2.msra.mxu0 0.0
    %2828 = vmatprep.subr.mxu0 0.0
    %2829 = vmatpush2.msra.mxu0 0.0
    %2830 = vmatprep.subr.mxu0 0.0
    %2831 = vmatpush2.msra.mxu0 0.0
    %2832 = vmatprep.subr.mxu0 0.0
    %2833 = vmatpush2.msra.mxu0 0.0
    %2834 = vmatprep.subr.mxu0 0.0
    %2835 = vmatpush2.msra.mxu0 0.0
    %2836 = vmatprep.subr.mxu0 0.0
    %2837 = vmatpush2.msra.mxu0 0.0
    %2838 = vmatprep.mubr.f32.mxu0 0.0
    %v2839 = vand.u32 %v2765, 4294901760
    %v2840 = vsub.f32 %v2765, %v2839
    %v2841 = vand.u32 %v2840, 4294901760
    %v2842 = vsub.f32 %v2840, %v2841
    %v2843 = vand.u32 %v2842, 4294901760
    %2844 = vmatmul.mubr.f32.gmra.mxu0 %v2843
    %v2845 = vpop.f32.mrf.mxu0
    %v2846 = vadd.f32 %v2763, %v2845
    %v2847 = vpop.f32.mrf.mxu0
    %2848 = vdwg.mxu0
    %2849 = vmatprep.subr.mxu0 0.0
    %2850 = vmatpush1.msra.mxu0 0.0
    %2851 = vmatprep.subr.mxu0 0.0
    %2852 = vmatpush1.msra.mxu0 0.0
    %2853 = vmatprep.subr.mxu0 0.0
    %2854 = vmatpush1.msra.mxu0 0.0
    %2855 = vmatprep.subr.mxu0 0.0
    %2856 = vmatpush1.msra.mxu0 0.0
    %2857 = vmatprep.subr.mxu0 0.0
    %2858 = vmatpush1.msra.mxu0 0.0
    %2859 = vmatprep.subr.mxu0 0.0
    %2860 = vmatpush1.msra.mxu0 0.0
    %2861 = vmatprep.subr.mxu0 0.0
    %2862 = vmatpush1.msra.mxu0 0.0
    %2863 = vmatprep.subr.mxu0 0.0
    %2864 = vmatpush1.msra.mxu0 0.0
    %2865 = vmatprep.subr.mxu0 0.0
    %2866 = vmatpush1.msra.mxu0 0.0
    %2867 = vmatprep.subr.mxu0 0.0
    %2868 = vmatpush1.msra.mxu0 0.0
    %2869 = vmatprep.subr.mxu0 0.0
    %2870 = vmatpush1.msra.mxu0 0.0
    %2871 = vmatprep.subr.mxu0 0.0
    %2872 = vmatpush1.msra.mxu0 0.0
    %2873 = vmatprep.subr.mxu0 0.0
    %v2874 = vand.u32 %v2768, 4294901760
    %v2875 = vsub.f32 %v2768, %v2874
    %v2876 = vand.u32 %v2875, 4294901760
    %v2877 = vsub.f32 %v2875, %v2876
    %v2878 = vand.u32 %v2877, 4294901760
    %2879 = vmatpush1.msra.mxu0 %v2878
    %2880 = vmatprep.subr.mxu0 0.0
    %v2881 = vand.u32 %v2758, 4294901760
    %v2882 = vsub.f32 %v2758, %v2881
    %v2883 = vand.u32 %v2882, 4294901760
    %v2884 = vsub.f32 %v2882, %v2883
    %v2885 = vand.u32 %v2884, 4294901760
    %2886 = vmatpush1.msra.mxu0 %v2885
    %2887 = vmatprep.subr.mxu0 0.0
    %v2888 = vand.u32 %v2757, 4294901760
    %v2889 = vsub.f32 %v2757, %v2888
    %v2890 = vand.u32 %v2889, 4294901760
    %v2891 = vsub.f32 %v2889, %v2890
    %v2892 = vand.u32 %v2891, 4294901760
    %2893 = vmatpush1.msra.mxu0 %v2892
    %2894 = vmatprep.subr.mxu0 0.0
    %v2895 = vand.u32 %v2756, 4294901760
    %v2896 = vsub.f32 %v2756, %v2895
    %v2897 = vand.u32 %v2896, 4294901760
    %v2898 = vsub.f32 %v2896, %v2897
    %v2899 = vand.u32 %v2898, 4294901760
    %2900 = vmatpush1.msra.mxu0 %v2899
    %2901 = vmatprep.subr.mxu0 0.0
    %2902 = vmatpush2.msra.mxu0 0.0
    %2903 = vmatprep.subr.mxu0 0.0
    %2904 = vmatpush2.msra.mxu0 0.0
    %2905 = vmatprep.subr.mxu0 0.0
    %2906 = vmatpush2.msra.mxu0 0.0
    %2907 = vmatprep.subr.mxu0 0.0
    %2908 = vmatpush2.msra.mxu0 0.0
    %2909 = vmatprep.subr.mxu0 0.0
    %2910 = vmatpush2.msra.mxu0 0.0
    %2911 = vmatprep.subr.mxu0 0.0
    %2912 = vmatpush2.msra.mxu0 0.0
    %2913 = vmatprep.subr.mxu0 0.0
    %2914 = vmatpush2.msra.mxu0 0.0
    %2915 = vmatprep.subr.mxu0 0.0
    %2916 = vmatpush2.msra.mxu0 0.0
    %2917 = vmatprep.subr.mxu0 0.0
    %2918 = vmatpush2.msra.mxu0 0.0
    %2919 = vmatprep.subr.mxu0 0.0
    %2920 = vmatpush2.msra.mxu0 0.0
    %2921 = vmatprep.subr.mxu0 0.0
    %2922 = vmatpush2.msra.mxu0 0.0
    %2923 = vmatprep.subr.mxu0 0.0
    %2924 = vmatpush2.msra.mxu0 0.0
    %2925 = vmatprep.subr.mxu0 0.0
    %2926 = vmatpush2.msra.mxu0 0.0
    %2927 = vmatprep.subr.mxu0 0.0
    %2928 = vmatpush2.msra.mxu0 0.0
    %2929 = vmatprep.subr.mxu0 0.0
    %2930 = vmatpush2.msra.mxu0 0.0
    %2931 = vmatprep.subr.mxu0 0.0
    %2932 = vmatpush2.msra.mxu0 0.0
    %2933 = vmatprep.mubr.f32.mxu0 0.0
    %v2934 = vand.u32 %v2765, 4294901760
    %2935 = vmatmul.mubr.f32.gmra.mxu0 %v2934
    %v2936 = vpop.f32.mrf.mxu0
    %v2937 = vadd.f32 %v2846, %v2936
    %v2938 = vpop.f32.mrf.mxu0
    %2939 = vdwg.mxu0
    %2940 = vmatprep.subr.mxu0 0.0
    %2941 = vmatpush1.msra.mxu0 0.0
    %2942 = vmatprep.subr.mxu0 0.0
    %2943 = vmatpush1.msra.mxu0 0.0
    %2944 = vmatprep.subr.mxu0 0.0
    %2945 = vmatpush1.msra.mxu0 0.0
    %2946 = vmatprep.subr.mxu0 0.0
    %2947 = vmatpush1.msra.mxu0 0.0
    %2948 = vmatprep.subr.mxu0 0.0
    %2949 = vmatpush1.msra.mxu0 0.0
    %2950 = vmatprep.subr.mxu0 0.0
    %2951 = vmatpush1.msra.mxu0 0.0
    %2952 = vmatprep.subr.mxu0 0.0
    %2953 = vmatpush1.msra.mxu0 0.0
    %2954 = vmatprep.subr.mxu0 0.0
    %2955 = vmatpush1.msra.mxu0 0.0
    %2956 = vmatprep.subr.mxu0 0.0
    %2957 = vmatpush1.msra.mxu0 0.0
    %2958 = vmatprep.subr.mxu0 0.0
    %2959 = vmatpush1.msra.mxu0 0.0
    %2960 = vmatprep.subr.mxu0 0.0
    %2961 = vmatpush1.msra.mxu0 0.0
    %2962 = vmatprep.subr.mxu0 0.0
    %2963 = vmatpush1.msra.mxu0 0.0
    %2964 = vmatprep.subr.mxu0 0.0
    %v2965 = vand.u32 %v2768, 4294901760
    %v2966 = vsub.f32 %v2768, %v2965
    %2967 = vmatpush1.msra.mxu0 %v2966
    %2968 = vmatprep.subr.mxu0 0.0
    %v2969 = vand.u32 %v2758, 4294901760
    %v2970 = vsub.f32 %v2758, %v2969
    %2971 = vmatpush1.msra.mxu0 %v2970
    %2972 = vmatprep.subr.mxu0 0.0
    %v2973 = vand.u32 %v2757, 4294901760
    %v2974 = vsub.f32 %v2757, %v2973
    %2975 = vmatpush1.msra.mxu0 %v2974
    %2976 = vmatprep.subr.mxu0 0.0
    %v2977 = vand.u32 %v2756, 4294901760
    %v2978 = vsub.f32 %v2756, %v2977
    %2979 = vmatpush1.msra.mxu0 %v2978
    %2980 = vmatprep.subr.mxu0 0.0
    %2981 = vmatpush2.msra.mxu0 0.0
    %2982 = vmatprep.subr.mxu0 0.0
    %2983 = vmatpush2.msra.mxu0 0.0
    %2984 = vmatprep.subr.mxu0 0.0
    %2985 = vmatpush2.msra.mxu0 0.0
    %2986 = vmatprep.subr.mxu0 0.0
    %2987 = vmatpush2.msra.mxu0 0.0
    %2988 = vmatprep.subr.mxu0 0.0
    %2989 = vmatpush2.msra.mxu0 0.0
    %2990 = vmatprep.subr.mxu0 0.0
    %2991 = vmatpush2.msra.mxu0 0.0
    %2992 = vmatprep.subr.mxu0 0.0
    %2993 = vmatpush2.msra.mxu0 0.0
    %2994 = vmatprep.subr.mxu0 0.0
    %2995 = vmatpush2.msra.mxu0 0.0
    %2996 = vmatprep.subr.mxu0 0.0
    %2997 = vmatpush2.msra.mxu0 0.0
    %2998 = vmatprep.subr.mxu0 0.0
    %2999 = vmatpush2.msra.mxu0 0.0
    %3000 = vmatprep.subr.mxu0 0.0
    %3001 = vmatpush2.msra.mxu0 0.0
    %3002 = vmatprep.subr.mxu0 0.0
    %3003 = vmatpush2.msra.mxu0 0.0
    %3004 = vmatprep.subr.mxu0 0.0
    %3005 = vmatpush2.msra.mxu0 0.0
    %3006 = vmatprep.subr.mxu0 0.0
    %3007 = vmatpush2.msra.mxu0 0.0
    %3008 = vmatprep.subr.mxu0 0.0
    %3009 = vmatpush2.msra.mxu0 0.0
    %3010 = vmatprep.subr.mxu0 0.0
    %3011 = vmatpush2.msra.mxu0 0.0
    %3012 = vmatprep.mubr.f32.mxu0 0.0
    %v3013 = vand.u32 %v2765, 4294901760
    %v3014 = vsub.f32 %v2765, %v3013
    %3015 = vmatmul.mubr.f32.gmra.mxu0 %v3014
    %v3016 = vpop.f32.mrf.mxu0
    %v3017 = vadd.f32 %v2937, %v3016
    %v3018 = vpop.f32.mrf.mxu0
    %3019 = vdwg.mxu0
    %3020 = vmatprep.subr.mxu0 0.0
    %3021 = vmatpush1.msra.mxu0 0.0
    %3022 = vmatprep.subr.mxu0 0.0
    %3023 = vmatpush1.msra.mxu0 0.0
    %3024 = vmatprep.subr.mxu0 0.0
    %3025 = vmatpush1.msra.mxu0 0.0
    %3026 = vmatprep.subr.mxu0 0.0
    %3027 = vmatpush1.msra.mxu0 0.0
    %3028 = vmatprep.subr.mxu0 0.0
    %3029 = vmatpush1.msra.mxu0 0.0
    %3030 = vmatprep.subr.mxu0 0.0
    %3031 = vmatpush1.msra.mxu0 0.0
    %3032 = vmatprep.subr.mxu0 0.0
    %3033 = vmatpush1.msra.mxu0 0.0
    %3034 = vmatprep.subr.mxu0 0.0
    %3035 = vmatpush1.msra.mxu0 0.0
    %3036 = vmatprep.subr.mxu0 0.0
    %3037 = vmatpush1.msra.mxu0 0.0
    %3038 = vmatprep.subr.mxu0 0.0
    %3039 = vmatpush1.msra.mxu0 0.0
    %3040 = vmatprep.subr.mxu0 0.0
    %3041 = vmatpush1.msra.mxu0 0.0
    %3042 = vmatprep.subr.mxu0 0.0
    %3043 = vmatpush1.msra.mxu0 0.0
    %3044 = vmatprep.subr.mxu0 0.0
    %v3045 = vand.u32 %v2768, 4294901760
    %3046 = vmatpush1.msra.mxu0 %v3045
    %3047 = vmatprep.subr.mxu0 0.0
    %v3048 = vand.u32 %v2758, 4294901760
    %3049 = vmatpush1.msra.mxu0 %v3048
    %3050 = vmatprep.subr.mxu0 0.0
    %v3051 = vand.u32 %v2757, 4294901760
    %3052 = vmatpush1.msra.mxu0 %v3051
    %3053 = vmatprep.subr.mxu0 0.0
    %v3054 = vand.u32 %v2756, 4294901760
    %3055 = vmatpush1.msra.mxu0 %v3054
    %3056 = vmatprep.subr.mxu0 0.0
    %3057 = vmatpush2.msra.mxu0 0.0
    %3058 = vmatprep.subr.mxu0 0.0
    %3059 = vmatpush2.msra.mxu0 0.0
    %3060 = vmatprep.subr.mxu0 0.0
    %3061 = vmatpush2.msra.mxu0 0.0
    %3062 = vmatprep.subr.mxu0 0.0
    %3063 = vmatpush2.msra.mxu0 0.0
    %3064 = vmatprep.subr.mxu0 0.0
    %3065 = vmatpush2.msra.mxu0 0.0
    %3066 = vmatprep.subr.mxu0 0.0
    %3067 = vmatpush2.msra.mxu0 0.0
    %3068 = vmatprep.subr.mxu0 0.0
    %3069 = vmatpush2.msra.mxu0 0.0
    %3070 = vmatprep.subr.mxu0 0.0
    %3071 = vmatpush2.msra.mxu0 0.0
    %3072 = vmatprep.subr.mxu0 0.0
    %3073 = vmatpush2.msra.mxu0 0.0
    %3074 = vmatprep.subr.mxu0 0.0
    %3075 = vmatpush2.msra.mxu0 0.0
    %3076 = vmatprep.subr.mxu0 0.0
    %3077 = vmatpush2.msra.mxu0 0.0
    %3078 = vmatprep.subr.mxu0 0.0
    %3079 = vmatpush2.msra.mxu0 0.0
    %3080 = vmatprep.subr.mxu0 0.0
    %3081 = vmatpush2.msra.mxu0 0.0
    %3082 = vmatprep.subr.mxu0 0.0
    %3083 = vmatpush2.msra.mxu0 0.0
    %3084 = vmatprep.subr.mxu0 0.0
    %3085 = vmatpush2.msra.mxu0 0.0
    %3086 = vmatprep.subr.mxu0 0.0
    %3087 = vmatpush2.msra.mxu0 0.0
    %3088 = vmatprep.mubr.f32.mxu0 0.0
    %v3089 = vand.u32 %v2765, 4294901760
    %v3090 = vsub.f32 %v2765, %v3089
    %v3091 = vand.u32 %v3090, 4294901760
    %3092 = vmatmul.mubr.f32.gmra.mxu0 %v3091
    %v3093 = vpop.f32.mrf.mxu0
    %v3094 = vadd.f32 %v3017, %v3093
    %v3095 = vpop.f32.mrf.mxu0
    %3096 = vdwg.mxu0
    %3097 = vmatprep.subr.mxu0 0.0
    %3098 = vmatpush1.msra.mxu0 0.0
    %3099 = vmatprep.subr.mxu0 0.0
    %3100 = vmatpush1.msra.mxu0 0.0
    %3101 = vmatprep.subr.mxu0 0.0
    %3102 = vmatpush1.msra.mxu0 0.0
    %3103 = vmatprep.subr.mxu0 0.0
    %3104 = vmatpush1.msra.mxu0 0.0
    %3105 = vmatprep.subr.mxu0 0.0
    %3106 = vmatpush1.msra.mxu0 0.0
    %3107 = vmatprep.subr.mxu0 0.0
    %3108 = vmatpush1.msra.mxu0 0.0
    %3109 = vmatprep.subr.mxu0 0.0
    %3110 = vmatpush1.msra.mxu0 0.0
    %3111 = vmatprep.subr.mxu0 0.0
    %3112 = vmatpush1.msra.mxu0 0.0
    %3113 = vmatprep.subr.mxu0 0.0
    %3114 = vmatpush1.msra.mxu0 0.0
    %3115 = vmatprep.subr.mxu0 0.0
    %3116 = vmatpush1.msra.mxu0 0.0
    %3117 = vmatprep.subr.mxu0 0.0
    %3118 = vmatpush1.msra.mxu0 0.0
    %3119 = vmatprep.subr.mxu0 0.0
    %3120 = vmatpush1.msra.mxu0 0.0
    %3121 = vmatprep.subr.mxu0 0.0
    %v3122 = vand.u32 %v2768, 4294901760
    %v3123 = vsub.f32 %v2768, %v3122
    %v3124 = vand.u32 %v3123, 4294901760
    %3125 = vmatpush1.msra.mxu0 %v3124
    %3126 = vmatprep.subr.mxu0 0.0
    %v3127 = vand.u32 %v2758, 4294901760
    %v3128 = vsub.f32 %v2758, %v3127
    %v3129 = vand.u32 %v3128, 4294901760
    %3130 = vmatpush1.msra.mxu0 %v3129
    %3131 = vmatprep.subr.mxu0 0.0
    %v3132 = vand.u32 %v2757, 4294901760
    %v3133 = vsub.f32 %v2757, %v3132
    %v3134 = vand.u32 %v3133, 4294901760
    %3135 = vmatpush1.msra.mxu0 %v3134
    %3136 = vmatprep.subr.mxu0 0.0
    %v3137 = vand.u32 %v2756, 4294901760
    %v3138 = vsub.f32 %v2756, %v3137
    %v3139 = vand.u32 %v3138, 4294901760
    %3140 = vmatpush1.msra.mxu0 %v3139
    %3141 = vmatprep.subr.mxu0 0.0
    %3142 = vmatpush2.msra.mxu0 0.0
    %3143 = vmatprep.subr.mxu0 0.0
    %3144 = vmatpush2.msra.mxu0 0.0
    %3145 = vmatprep.subr.mxu0 0.0
    %3146 = vmatpush2.msra.mxu0 0.0
    %3147 = vmatprep.subr.mxu0 0.0
    %3148 = vmatpush2.msra.mxu0 0.0
    %3149 = vmatprep.subr.mxu0 0.0
    %3150 = vmatpush2.msra.mxu0 0.0
    %3151 = vmatprep.subr.mxu0 0.0
    %3152 = vmatpush2.msra.mxu0 0.0
    %3153 = vmatprep.subr.mxu0 0.0
    %3154 = vmatpush2.msra.mxu0 0.0
    %3155 = vmatprep.subr.mxu0 0.0
    %3156 = vmatpush2.msra.mxu0 0.0
    %3157 = vmatprep.subr.mxu0 0.0
    %3158 = vmatpush2.msra.mxu0 0.0
    %3159 = vmatprep.subr.mxu0 0.0
    %3160 = vmatpush2.msra.mxu0 0.0
    %3161 = vmatprep.subr.mxu0 0.0
    %3162 = vmatpush2.msra.mxu0 0.0
    %3163 = vmatprep.subr.mxu0 0.0
    %3164 = vmatpush2.msra.mxu0 0.0
    %3165 = vmatprep.subr.mxu0 0.0
    %3166 = vmatpush2.msra.mxu0 0.0
    %3167 = vmatprep.subr.mxu0 0.0
    %3168 = vmatpush2.msra.mxu0 0.0
    %3169 = vmatprep.subr.mxu0 0.0
    %3170 = vmatpush2.msra.mxu0 0.0
    %3171 = vmatprep.subr.mxu0 0.0
    %3172 = vmatpush2.msra.mxu0 0.0
    %3173 = vmatprep.mubr.f32.mxu0 0.0
    %v3174 = vand.u32 %v2765, 4294901760
    %3175 = vmatmul.mubr.f32.gmra.mxu0 %v3174
    %v3176 = vpop.f32.mrf.mxu0
    %v3177 = vadd.f32 %v3094, %v3176
    %v3178 = vpop.f32.mrf.mxu0
    %3179 = vdwg.mxu0
    %3180 = vmatprep.subr.mxu0 0.0
    %3181 = vmatpush1.msra.mxu0 0.0
    %3182 = vmatprep.subr.mxu0 0.0
    %3183 = vmatpush1.msra.mxu0 0.0
    %3184 = vmatprep.subr.mxu0 0.0
    %3185 = vmatpush1.msra.mxu0 0.0
    %3186 = vmatprep.subr.mxu0 0.0
    %3187 = vmatpush1.msra.mxu0 0.0
    %3188 = vmatprep.subr.mxu0 0.0
    %3189 = vmatpush1.msra.mxu0 0.0
    %3190 = vmatprep.subr.mxu0 0.0
    %3191 = vmatpush1.msra.mxu0 0.0
    %3192 = vmatprep.subr.mxu0 0.0
    %3193 = vmatpush1.msra.mxu0 0.0
    %3194 = vmatprep.subr.mxu0 0.0
    %3195 = vmatpush1.msra.mxu0 0.0
    %3196 = vmatprep.subr.mxu0 0.0
    %3197 = vmatpush1.msra.mxu0 0.0
    %3198 = vmatprep.subr.mxu0 0.0
    %3199 = vmatpush1.msra.mxu0 0.0
    %3200 = vmatprep.subr.mxu0 0.0
    %3201 = vmatpush1.msra.mxu0 0.0
    %3202 = vmatprep.subr.mxu0 0.0
    %3203 = vmatpush1.msra.mxu0 0.0
    %3204 = vmatprep.subr.mxu0 0.0
    %v3205 = vand.u32 %v2768, 4294901760
    %3206 = vmatpush1.msra.mxu0 %v3205
    %3207 = vmatprep.subr.mxu0 0.0
    %v3208 = vand.u32 %v2758, 4294901760
    %3209 = vmatpush1.msra.mxu0 %v3208
    %3210 = vmatprep.subr.mxu0 0.0
    %v3211 = vand.u32 %v2757, 4294901760
    %3212 = vmatpush1.msra.mxu0 %v3211
    %3213 = vmatprep.subr.mxu0 0.0
    %v3214 = vand.u32 %v2756, 4294901760
    %3215 = vmatpush1.msra.mxu0 %v3214
    %3216 = vmatprep.subr.mxu0 0.0
    %3217 = vmatpush2.msra.mxu0 0.0
    %3218 = vmatprep.subr.mxu0 0.0
    %3219 = vmatpush2.msra.mxu0 0.0
    %3220 = vmatprep.subr.mxu0 0.0
    %3221 = vmatpush2.msra.mxu0 0.0
    %3222 = vmatprep.subr.mxu0 0.0
    %3223 = vmatpush2.msra.mxu0 0.0
    %3224 = vmatprep.subr.mxu0 0.0
    %3225 = vmatpush2.msra.mxu0 0.0
    %3226 = vmatprep.subr.mxu0 0.0
    %3227 = vmatpush2.msra.mxu0 0.0
    %3228 = vmatprep.subr.mxu0 0.0
    %3229 = vmatpush2.msra.mxu0 0.0
    %3230 = vmatprep.subr.mxu0 0.0
    %3231 = vmatpush2.msra.mxu0 0.0
    %3232 = vmatprep.subr.mxu0 0.0
    %3233 = vmatpush2.msra.mxu0 0.0
    %3234 = vmatprep.subr.mxu0 0.0
    %3235 = vmatpush2.msra.mxu0 0.0
    %3236 = vmatprep.subr.mxu0 0.0
    %3237 = vmatpush2.msra.mxu0 0.0
    %3238 = vmatprep.subr.mxu0 0.0
    %3239 = vmatpush2.msra.mxu0 0.0
    %3240 = vmatprep.subr.mxu0 0.0
    %3241 = vmatpush2.msra.mxu0 0.0
    %3242 = vmatprep.subr.mxu0 0.0
    %3243 = vmatpush2.msra.mxu0 0.0
    %3244 = vmatprep.subr.mxu0 0.0
    %3245 = vmatpush2.msra.mxu0 0.0
    %3246 = vmatprep.subr.mxu0 0.0
    %3247 = vmatpush2.msra.mxu0 0.0
    %3248 = vmatprep.mubr.f32.mxu0 0.0
    %v3249 = vand.u32 %v2765, 4294901760
    %3250 = vmatmul.mubr.f32.gmra.mxu0 %v3249
    %v3251 = vpop.f32.mrf.mxu0
    %v3252 = vadd.f32 %v3177, %v3251
    %v3253 = vpop.f32.mrf.mxu0
    %3254 = vdwg.mxu0
    %v3255 = vmul.f32 %v3252, -0.8888889
    %v3256 = vmul.f32 %v1691, 0.6
    %s3257 = smul.f32 %s1703, 0.2
    %v3258 = vstv %s3257
    %v3259 = vsub.f32 %v3256, %v3258
    %v3260 = vstv %s1711
    %v3261 = vsub.f32 %v3259, %v3260
    %v3262 = vmul.f32 %v3261, %v3261
    %v3263 = vmul.f32 %v3262, 0.5
    %v3264 = vmul.f32 %v3255, 0.45
    %v3265 = vmul.f32 %v3264, %v3255
    %v3266 = vadd.f32 %v3263, %v3265
    %v3267 = vstv %s1695
    %v3268 = vmul.f32 %v3266, %v3267
    %v3269 = vsub.f32 %v1682, %v3268
    %v3270 = vmul.f32 %v3252, %v1713
    %v3271 = vadd.f32 %v3269, %v3270
    %v3272 = vmul.f32 %v1691, 0.5
    %s3273 = smul.f32 %s1707, 0.3
    %v3274 = vstv %s3273
    %v3275 = vadd.f32 %v3272, %v3274
    %v3276 = vmul.f32 %v3255, 0.8
    %v3277 = vadd.f32 %v3275, %v3276
    %v3278 = vmul.f32 %v3277, %v3267
    %v3279 = vadd.f32 %v1691, %v3278
    %v3280 = vadd.f32 %v3279, %v1713
    %s3281 = scalar_lea.vmem [#allocation12], 8
    %3282 = vst.msk [vmem:[%s3281] sm:$0xff] %vm121, %v3280
    %s3283 = scalar_lea.vmem [#allocation13], 8
    %3284 = vst.msk [vmem:[%s3283] sm:$0xff] %vm121, %v3252
    %s3285 = sadd.s32 %s95, 2
    %s3286 = sld [smem:[#allocation2 + %s3285]]
    %s3287 = sshra.s32 %s3285, 7
    %s3288 = sand.u32 %s3285, 127
    %s3289 = sadd.s32 %s3287, 1
    %s3290 = smul.u32 %s3289, 128
    %s3291 = sshra.s32 %s3285, 7
    %s3292 = sand.u32 %s3285, 127
    %s3293 = sadd.s32 %s3290, %s3292
    %s3294 = sld [smem:[#allocation2 + %s3293]]
    %s3295 = sadd.s32 %s3287, 2
    %s3296 = smul.u32 %s3295, 128
    %s3297 = sadd.s32 %s3296, %s3292
    %s3298 = sld [smem:[#allocation2 + %s3297]]
    %s3299 = sadd.s32 %s3287, 3
    %s3300 = smul.u32 %s3299, 128
    %s3301 = sadd.s32 %s3300, %s3292
    %s3302 = sld [smem:[#allocation2 + %s3301]]
    %s3303 = scalar_lea.vmem [#allocation6], 16
    %v3304 = vld [vmem:[%s3303] sm:$0xff]
    %s3305 = scalar_lea.vmem %s5, 32
    %v3306 = vld [vmem:[%s3305] sm:$0xff]
    %v3307 = vld [vmem:[%s3305 + $0x8] sm:$0xff]
    %s3308 = scalar_lea.vmem [#allocation7], 16
    %v3309 = vld [vmem:[%s3308] sm:$0x1]
    %v3310 = vlaneseq
    %v3311 = vshrl.u32 %v3310, 7
    %v3312 = vsub.s32 0, %v3311
    %v3313 = vrot.slane %v3309, %v3312
    %v3315 = vsel %vm121, %v3280, 0
    %3317 = vmatprep.subr.mxu0 0.0
    %3318 = vmatpush1.msra.mxu0 0.0
    %3319 = vmatprep.subr.mxu0 0.0
    %3320 = vmatpush1.msra.mxu0 0.0
    %3321 = vmatprep.subr.mxu0 0.0
    %3322 = vmatpush1.msra.mxu0 0.0
    %3323 = vmatprep.subr.mxu0 0.0
    %3324 = vmatpush1.msra.mxu0 0.0
    %3325 = vmatprep.subr.mxu0 0.0
    %3326 = vmatpush1.msra.mxu0 0.0
    %3327 = vmatprep.subr.mxu0 0.0
    %3328 = vmatpush1.msra.mxu0 0.0
    %3329 = vmatprep.subr.mxu0 0.0
    %3330 = vmatpush1.msra.mxu0 0.0
    %3331 = vmatprep.subr.mxu0 0.0
    %3332 = vmatpush1.msra.mxu0 0.0
    %3333 = vmatprep.subr.mxu0 0.0
    %3334 = vmatpush1.msra.mxu0 0.0
    %3335 = vmatprep.subr.mxu0 0.0
    %3336 = vmatpush1.msra.mxu0 0.0
    %3337 = vmatprep.subr.mxu0 0.0
    %3338 = vmatpush1.msra.mxu0 0.0
    %3339 = vmatprep.subr.mxu0 0.0
    %3340 = vmatpush1.msra.mxu0 0.0
    %3341 = vmatprep.subr.mxu0 0.0
    %3342 = vmatpush1.msra.mxu0 0.0
    %3343 = vmatprep.subr.mxu0 0.0
    %3344 = vmatpush1.msra.mxu0 0.0
    %3345 = vmatprep.subr.mxu0 0.0
    %v3346 = vand.u32 %v3307, 4294901760
    %3347 = vmatpush1.msra.mxu0 %v3346
    %3348 = vmatprep.subr.mxu0 0.0
    %v3349 = vand.u32 %v3306, 4294901760
    %3350 = vmatpush1.msra.mxu0 %v3349
    %3351 = vmatprep.subr.mxu0 0.0
    %3352 = vmatpush2.msra.mxu0 0.0
    %3353 = vmatprep.subr.mxu0 0.0
    %3354 = vmatpush2.msra.mxu0 0.0
    %3355 = vmatprep.subr.mxu0 0.0
    %3356 = vmatpush2.msra.mxu0 0.0
    %3357 = vmatprep.subr.mxu0 0.0
    %3358 = vmatpush2.msra.mxu0 0.0
    %3359 = vmatprep.subr.mxu0 0.0
    %3360 = vmatpush2.msra.mxu0 0.0
    %3361 = vmatprep.subr.mxu0 0.0
    %3362 = vmatpush2.msra.mxu0 0.0
    %3363 = vmatprep.subr.mxu0 0.0
    %3364 = vmatpush2.msra.mxu0 0.0
    %3365 = vmatprep.subr.mxu0 0.0
    %3366 = vmatpush2.msra.mxu0 0.0
    %3367 = vmatprep.subr.mxu0 0.0
    %3368 = vmatpush2.msra.mxu0 0.0
    %3369 = vmatprep.subr.mxu0 0.0
    %3370 = vmatpush2.msra.mxu0 0.0
    %3371 = vmatprep.subr.mxu0 0.0
    %3372 = vmatpush2.msra.mxu0 0.0
    %3373 = vmatprep.subr.mxu0 0.0
    %3374 = vmatpush2.msra.mxu0 0.0
    %3375 = vmatprep.subr.mxu0 0.0
    %3376 = vmatpush2.msra.mxu0 0.0
    %3377 = vmatprep.subr.mxu0 0.0
    %3378 = vmatpush2.msra.mxu0 0.0
    %3379 = vmatprep.subr.mxu0 0.0
    %3380 = vmatpush2.msra.mxu0 0.0
    %3381 = vmatprep.subr.mxu0 0.0
    %3382 = vmatpush2.msra.mxu0 0.0
    %3383 = vmatprep.mubr.f32.mxu0 0.0
    %v3384 = vand.u32 %v3315, 4294901760
    %v3385 = vsub.f32 %v3315, %v3384
    %v3386 = vand.u32 %v3385, 4294901760
    %v3387 = vsub.f32 %v3385, %v3386
    %v3388 = vand.u32 %v3387, 4294901760
    %3389 = vmatmul.mubr.f32.gmra.mxu0 %v3388
    %v3390 = vpop.f32.mrf.mxu0
    %v3391 = vadd.f32 %v3313, %v3390
    %v3392 = vpop.f32.mrf.mxu0
    %3393 = vdwg.mxu0
    %3394 = vmatprep.subr.mxu0 0.0
    %3395 = vmatpush1.msra.mxu0 0.0
    %3396 = vmatprep.subr.mxu0 0.0
    %3397 = vmatpush1.msra.mxu0 0.0
    %3398 = vmatprep.subr.mxu0 0.0
    %3399 = vmatpush1.msra.mxu0 0.0
    %3400 = vmatprep.subr.mxu0 0.0
    %3401 = vmatpush1.msra.mxu0 0.0
    %3402 = vmatprep.subr.mxu0 0.0
    %3403 = vmatpush1.msra.mxu0 0.0
    %3404 = vmatprep.subr.mxu0 0.0
    %3405 = vmatpush1.msra.mxu0 0.0
    %3406 = vmatprep.subr.mxu0 0.0
    %3407 = vmatpush1.msra.mxu0 0.0
    %3408 = vmatprep.subr.mxu0 0.0
    %3409 = vmatpush1.msra.mxu0 0.0
    %3410 = vmatprep.subr.mxu0 0.0
    %3411 = vmatpush1.msra.mxu0 0.0
    %3412 = vmatprep.subr.mxu0 0.0
    %3413 = vmatpush1.msra.mxu0 0.0
    %3414 = vmatprep.subr.mxu0 0.0
    %3415 = vmatpush1.msra.mxu0 0.0
    %3416 = vmatprep.subr.mxu0 0.0
    %3417 = vmatpush1.msra.mxu0 0.0
    %3418 = vmatprep.subr.mxu0 0.0
    %3419 = vmatpush1.msra.mxu0 0.0
    %3420 = vmatprep.subr.mxu0 0.0
    %3421 = vmatpush1.msra.mxu0 0.0
    %3422 = vmatprep.subr.mxu0 0.0
    %v3423 = vand.u32 %v3307, 4294901760
    %v3424 = vsub.f32 %v3307, %v3423
    %v3425 = vand.u32 %v3424, 4294901760
    %v3426 = vsub.f32 %v3424, %v3425
    %v3427 = vand.u32 %v3426, 4294901760
    %3428 = vmatpush1.msra.mxu0 %v3427
    %3429 = vmatprep.subr.mxu0 0.0
    %v3430 = vand.u32 %v3306, 4294901760
    %v3431 = vsub.f32 %v3306, %v3430
    %v3432 = vand.u32 %v3431, 4294901760
    %v3433 = vsub.f32 %v3431, %v3432
    %v3434 = vand.u32 %v3433, 4294901760
    %3435 = vmatpush1.msra.mxu0 %v3434
    %3436 = vmatprep.subr.mxu0 0.0
    %3437 = vmatpush2.msra.mxu0 0.0
    %3438 = vmatprep.subr.mxu0 0.0
    %3439 = vmatpush2.msra.mxu0 0.0
    %3440 = vmatprep.subr.mxu0 0.0
    %3441 = vmatpush2.msra.mxu0 0.0
    %3442 = vmatprep.subr.mxu0 0.0
    %3443 = vmatpush2.msra.mxu0 0.0
    %3444 = vmatprep.subr.mxu0 0.0
    %3445 = vmatpush2.msra.mxu0 0.0
    %3446 = vmatprep.subr.mxu0 0.0
    %3447 = vmatpush2.msra.mxu0 0.0
    %3448 = vmatprep.subr.mxu0 0.0
    %3449 = vmatpush2.msra.mxu0 0.0
    %3450 = vmatprep.subr.mxu0 0.0
    %3451 = vmatpush2.msra.mxu0 0.0
    %3452 = vmatprep.subr.mxu0 0.0
    %3453 = vmatpush2.msra.mxu0 0.0
    %3454 = vmatprep.subr.mxu0 0.0
    %3455 = vmatpush2.msra.mxu0 0.0
    %3456 = vmatprep.subr.mxu0 0.0
    %3457 = vmatpush2.msra.mxu0 0.0
    %3458 = vmatprep.subr.mxu0 0.0
    %3459 = vmatpush2.msra.mxu0 0.0
    %3460 = vmatprep.subr.mxu0 0.0
    %3461 = vmatpush2.msra.mxu0 0.0
    %3462 = vmatprep.subr.mxu0 0.0
    %3463 = vmatpush2.msra.mxu0 0.0
    %3464 = vmatprep.subr.mxu0 0.0
    %3465 = vmatpush2.msra.mxu0 0.0
    %3466 = vmatprep.subr.mxu0 0.0
    %3467 = vmatpush2.msra.mxu0 0.0
    %3468 = vmatprep.mubr.f32.mxu0 0.0
    %v3469 = vand.u32 %v3315, 4294901760
    %3470 = vmatmul.mubr.f32.gmra.mxu0 %v3469
    %v3471 = vpop.f32.mrf.mxu0
    %v3472 = vadd.f32 %v3391, %v3471
    %v3473 = vpop.f32.mrf.mxu0
    %3474 = vdwg.mxu0
    %3475 = vmatprep.subr.mxu0 0.0
    %3476 = vmatpush1.msra.mxu0 0.0
    %3477 = vmatprep.subr.mxu0 0.0
    %3478 = vmatpush1.msra.mxu0 0.0
    %3479 = vmatprep.subr.mxu0 0.0
    %3480 = vmatpush1.msra.mxu0 0.0
    %3481 = vmatprep.subr.mxu0 0.0
    %3482 = vmatpush1.msra.mxu0 0.0
    %3483 = vmatprep.subr.mxu0 0.0
    %3484 = vmatpush1.msra.mxu0 0.0
    %3485 = vmatprep.subr.mxu0 0.0
    %3486 = vmatpush1.msra.mxu0 0.0
    %3487 = vmatprep.subr.mxu0 0.0
    %3488 = vmatpush1.msra.mxu0 0.0
    %3489 = vmatprep.subr.mxu0 0.0
    %3490 = vmatpush1.msra.mxu0 0.0
    %3491 = vmatprep.subr.mxu0 0.0
    %3492 = vmatpush1.msra.mxu0 0.0
    %3493 = vmatprep.subr.mxu0 0.0
    %3494 = vmatpush1.msra.mxu0 0.0
    %3495 = vmatprep.subr.mxu0 0.0
    %3496 = vmatpush1.msra.mxu0 0.0
    %3497 = vmatprep.subr.mxu0 0.0
    %3498 = vmatpush1.msra.mxu0 0.0
    %3499 = vmatprep.subr.mxu0 0.0
    %3500 = vmatpush1.msra.mxu0 0.0
    %3501 = vmatprep.subr.mxu0 0.0
    %3502 = vmatpush1.msra.mxu0 0.0
    %3503 = vmatprep.subr.mxu0 0.0
    %v3504 = vand.u32 %v3307, 4294901760
    %v3505 = vsub.f32 %v3307, %v3504
    %3506 = vmatpush1.msra.mxu0 %v3505
    %3507 = vmatprep.subr.mxu0 0.0
    %v3508 = vand.u32 %v3306, 4294901760
    %v3509 = vsub.f32 %v3306, %v3508
    %3510 = vmatpush1.msra.mxu0 %v3509
    %3511 = vmatprep.subr.mxu0 0.0
    %3512 = vmatpush2.msra.mxu0 0.0
    %3513 = vmatprep.subr.mxu0 0.0
    %3514 = vmatpush2.msra.mxu0 0.0
    %3515 = vmatprep.subr.mxu0 0.0
    %3516 = vmatpush2.msra.mxu0 0.0
    %3517 = vmatprep.subr.mxu0 0.0
    %3518 = vmatpush2.msra.mxu0 0.0
    %3519 = vmatprep.subr.mxu0 0.0
    %3520 = vmatpush2.msra.mxu0 0.0
    %3521 = vmatprep.subr.mxu0 0.0
    %3522 = vmatpush2.msra.mxu0 0.0
    %3523 = vmatprep.subr.mxu0 0.0
    %3524 = vmatpush2.msra.mxu0 0.0
    %3525 = vmatprep.subr.mxu0 0.0
    %3526 = vmatpush2.msra.mxu0 0.0
    %3527 = vmatprep.subr.mxu0 0.0
    %3528 = vmatpush2.msra.mxu0 0.0
    %3529 = vmatprep.subr.mxu0 0.0
    %3530 = vmatpush2.msra.mxu0 0.0
    %3531 = vmatprep.subr.mxu0 0.0
    %3532 = vmatpush2.msra.mxu0 0.0
    %3533 = vmatprep.subr.mxu0 0.0
    %3534 = vmatpush2.msra.mxu0 0.0
    %3535 = vmatprep.subr.mxu0 0.0
    %3536 = vmatpush2.msra.mxu0 0.0
    %3537 = vmatprep.subr.mxu0 0.0
    %3538 = vmatpush2.msra.mxu0 0.0
    %3539 = vmatprep.subr.mxu0 0.0
    %3540 = vmatpush2.msra.mxu0 0.0
    %3541 = vmatprep.subr.mxu0 0.0
    %3542 = vmatpush2.msra.mxu0 0.0
    %3543 = vmatprep.mubr.f32.mxu0 0.0
    %v3544 = vand.u32 %v3315, 4294901760
    %v3545 = vsub.f32 %v3315, %v3544
    %3546 = vmatmul.mubr.f32.gmra.mxu0 %v3545
    %v3547 = vpop.f32.mrf.mxu0
    %v3548 = vadd.f32 %v3472, %v3547
    %v3549 = vpop.f32.mrf.mxu0
    %3550 = vdwg.mxu0
    %3551 = vmatprep.subr.mxu0 0.0
    %3552 = vmatpush1.msra.mxu0 0.0
    %3553 = vmatprep.subr.mxu0 0.0
    %3554 = vmatpush1.msra.mxu0 0.0
    %3555 = vmatprep.subr.mxu0 0.0
    %3556 = vmatpush1.msra.mxu0 0.0
    %3557 = vmatprep.subr.mxu0 0.0
    %3558 = vmatpush1.msra.mxu0 0.0
    %3559 = vmatprep.subr.mxu0 0.0
    %3560 = vmatpush1.msra.mxu0 0.0
    %3561 = vmatprep.subr.mxu0 0.0
    %3562 = vmatpush1.msra.mxu0 0.0
    %3563 = vmatprep.subr.mxu0 0.0
    %3564 = vmatpush1.msra.mxu0 0.0
    %3565 = vmatprep.subr.mxu0 0.0
    %3566 = vmatpush1.msra.mxu0 0.0
    %3567 = vmatprep.subr.mxu0 0.0
    %3568 = vmatpush1.msra.mxu0 0.0
    %3569 = vmatprep.subr.mxu0 0.0
    %3570 = vmatpush1.msra.mxu0 0.0
    %3571 = vmatprep.subr.mxu0 0.0
    %3572 = vmatpush1.msra.mxu0 0.0
    %3573 = vmatprep.subr.mxu0 0.0
    %3574 = vmatpush1.msra.mxu0 0.0
    %3575 = vmatprep.subr.mxu0 0.0
    %3576 = vmatpush1.msra.mxu0 0.0
    %3577 = vmatprep.subr.mxu0 0.0
    %3578 = vmatpush1.msra.mxu0 0.0
    %3579 = vmatprep.subr.mxu0 0.0
    %v3580 = vand.u32 %v3307, 4294901760
    %3581 = vmatpush1.msra.mxu0 %v3580
    %3582 = vmatprep.subr.mxu0 0.0
    %v3583 = vand.u32 %v3306, 4294901760
    %3584 = vmatpush1.msra.mxu0 %v3583
    %3585 = vmatprep.subr.mxu0 0.0
    %3586 = vmatpush2.msra.mxu0 0.0
    %3587 = vmatprep.subr.mxu0 0.0
    %3588 = vmatpush2.msra.mxu0 0.0
    %3589 = vmatprep.subr.mxu0 0.0
    %3590 = vmatpush2.msra.mxu0 0.0
    %3591 = vmatprep.subr.mxu0 0.0
    %3592 = vmatpush2.msra.mxu0 0.0
    %3593 = vmatprep.subr.mxu0 0.0
    %3594 = vmatpush2.msra.mxu0 0.0
    %3595 = vmatprep.subr.mxu0 0.0
    %3596 = vmatpush2.msra.mxu0 0.0
    %3597 = vmatprep.subr.mxu0 0.0
    %3598 = vmatpush2.msra.mxu0 0.0
    %3599 = vmatprep.subr.mxu0 0.0
    %3600 = vmatpush2.msra.mxu0 0.0
    %3601 = vmatprep.subr.mxu0 0.0
    %3602 = vmatpush2.msra.mxu0 0.0
    %3603 = vmatprep.subr.mxu0 0.0
    %3604 = vmatpush2.msra.mxu0 0.0
    %3605 = vmatprep.subr.mxu0 0.0
    %3606 = vmatpush2.msra.mxu0 0.0
    %3607 = vmatprep.subr.mxu0 0.0
    %3608 = vmatpush2.msra.mxu0 0.0
    %3609 = vmatprep.subr.mxu0 0.0
    %3610 = vmatpush2.msra.mxu0 0.0
    %3611 = vmatprep.subr.mxu0 0.0
    %3612 = vmatpush2.msra.mxu0 0.0
    %3613 = vmatprep.subr.mxu0 0.0
    %3614 = vmatpush2.msra.mxu0 0.0
    %3615 = vmatprep.subr.mxu0 0.0
    %3616 = vmatpush2.msra.mxu0 0.0
    %3617 = vmatprep.mubr.f32.mxu0 0.0
    %v3618 = vand.u32 %v3315, 4294901760
    %v3619 = vsub.f32 %v3315, %v3618
    %v3620 = vand.u32 %v3619, 4294901760
    %3621 = vmatmul.mubr.f32.gmra.mxu0 %v3620
    %v3622 = vpop.f32.mrf.mxu0
    %v3623 = vadd.f32 %v3548, %v3622
    %v3624 = vpop.f32.mrf.mxu0
    %3625 = vdwg.mxu0
    %3626 = vmatprep.subr.mxu0 0.0
    %3627 = vmatpush1.msra.mxu0 0.0
    %3628 = vmatprep.subr.mxu0 0.0
    %3629 = vmatpush1.msra.mxu0 0.0
    %3630 = vmatprep.subr.mxu0 0.0
    %3631 = vmatpush1.msra.mxu0 0.0
    %3632 = vmatprep.subr.mxu0 0.0
    %3633 = vmatpush1.msra.mxu0 0.0
    %3634 = vmatprep.subr.mxu0 0.0
    %3635 = vmatpush1.msra.mxu0 0.0
    %3636 = vmatprep.subr.mxu0 0.0
    %3637 = vmatpush1.msra.mxu0 0.0
    %3638 = vmatprep.subr.mxu0 0.0
    %3639 = vmatpush1.msra.mxu0 0.0
    %3640 = vmatprep.subr.mxu0 0.0
    %3641 = vmatpush1.msra.mxu0 0.0
    %3642 = vmatprep.subr.mxu0 0.0
    %3643 = vmatpush1.msra.mxu0 0.0
    %3644 = vmatprep.subr.mxu0 0.0
    %3645 = vmatpush1.msra.mxu0 0.0
    %3646 = vmatprep.subr.mxu0 0.0
    %3647 = vmatpush1.msra.mxu0 0.0
    %3648 = vmatprep.subr.mxu0 0.0
    %3649 = vmatpush1.msra.mxu0 0.0
    %3650 = vmatprep.subr.mxu0 0.0
    %3651 = vmatpush1.msra.mxu0 0.0
    %3652 = vmatprep.subr.mxu0 0.0
    %3653 = vmatpush1.msra.mxu0 0.0
    %3654 = vmatprep.subr.mxu0 0.0
    %v3655 = vand.u32 %v3307, 4294901760
    %v3656 = vsub.f32 %v3307, %v3655
    %v3657 = vand.u32 %v3656, 4294901760
    %3658 = vmatpush1.msra.mxu0 %v3657
    %3659 = vmatprep.subr.mxu0 0.0
    %v3660 = vand.u32 %v3306, 4294901760
    %v3661 = vsub.f32 %v3306, %v3660
    %v3662 = vand.u32 %v3661, 4294901760
    %3663 = vmatpush1.msra.mxu0 %v3662
    %3664 = vmatprep.subr.mxu0 0.0
    %3665 = vmatpush2.msra.mxu0 0.0
    %3666 = vmatprep.subr.mxu0 0.0
    %3667 = vmatpush2.msra.mxu0 0.0
    %3668 = vmatprep.subr.mxu0 0.0
    %3669 = vmatpush2.msra.mxu0 0.0
    %3670 = vmatprep.subr.mxu0 0.0
    %3671 = vmatpush2.msra.mxu0 0.0
    %3672 = vmatprep.subr.mxu0 0.0
    %3673 = vmatpush2.msra.mxu0 0.0
    %3674 = vmatprep.subr.mxu0 0.0
    %3675 = vmatpush2.msra.mxu0 0.0
    %3676 = vmatprep.subr.mxu0 0.0
    %3677 = vmatpush2.msra.mxu0 0.0
    %3678 = vmatprep.subr.mxu0 0.0
    %3679 = vmatpush2.msra.mxu0 0.0
    %3680 = vmatprep.subr.mxu0 0.0
    %3681 = vmatpush2.msra.mxu0 0.0
    %3682 = vmatprep.subr.mxu0 0.0
    %3683 = vmatpush2.msra.mxu0 0.0
    %3684 = vmatprep.subr.mxu0 0.0
    %3685 = vmatpush2.msra.mxu0 0.0
    %3686 = vmatprep.subr.mxu0 0.0
    %3687 = vmatpush2.msra.mxu0 0.0
    %3688 = vmatprep.subr.mxu0 0.0
    %3689 = vmatpush2.msra.mxu0 0.0
    %3690 = vmatprep.subr.mxu0 0.0
    %3691 = vmatpush2.msra.mxu0 0.0
    %3692 = vmatprep.subr.mxu0 0.0
    %3693 = vmatpush2.msra.mxu0 0.0
    %3694 = vmatprep.subr.mxu0 0.0
    %3695 = vmatpush2.msra.mxu0 0.0
    %3696 = vmatprep.mubr.f32.mxu0 0.0
    %v3697 = vand.u32 %v3315, 4294901760
    %3698 = vmatmul.mubr.f32.gmra.mxu0 %v3697
    %v3699 = vpop.f32.mrf.mxu0
    %v3700 = vadd.f32 %v3623, %v3699
    %v3701 = vpop.f32.mrf.mxu0
    %3702 = vdwg.mxu0
    %3703 = vmatprep.subr.mxu0 0.0
    %3704 = vmatpush1.msra.mxu0 0.0
    %3705 = vmatprep.subr.mxu0 0.0
    %3706 = vmatpush1.msra.mxu0 0.0
    %3707 = vmatprep.subr.mxu0 0.0
    %3708 = vmatpush1.msra.mxu0 0.0
    %3709 = vmatprep.subr.mxu0 0.0
    %3710 = vmatpush1.msra.mxu0 0.0
    %3711 = vmatprep.subr.mxu0 0.0
    %3712 = vmatpush1.msra.mxu0 0.0
    %3713 = vmatprep.subr.mxu0 0.0
    %3714 = vmatpush1.msra.mxu0 0.0
    %3715 = vmatprep.subr.mxu0 0.0
    %3716 = vmatpush1.msra.mxu0 0.0
    %3717 = vmatprep.subr.mxu0 0.0
    %3718 = vmatpush1.msra.mxu0 0.0
    %3719 = vmatprep.subr.mxu0 0.0
    %3720 = vmatpush1.msra.mxu0 0.0
    %3721 = vmatprep.subr.mxu0 0.0
    %3722 = vmatpush1.msra.mxu0 0.0
    %3723 = vmatprep.subr.mxu0 0.0
    %3724 = vmatpush1.msra.mxu0 0.0
    %3725 = vmatprep.subr.mxu0 0.0
    %3726 = vmatpush1.msra.mxu0 0.0
    %3727 = vmatprep.subr.mxu0 0.0
    %3728 = vmatpush1.msra.mxu0 0.0
    %3729 = vmatprep.subr.mxu0 0.0
    %3730 = vmatpush1.msra.mxu0 0.0
    %3731 = vmatprep.subr.mxu0 0.0
    %v3732 = vand.u32 %v3307, 4294901760
    %3733 = vmatpush1.msra.mxu0 %v3732
    %3734 = vmatprep.subr.mxu0 0.0
    %v3735 = vand.u32 %v3306, 4294901760
    %3736 = vmatpush1.msra.mxu0 %v3735
    %3737 = vmatprep.subr.mxu0 0.0
    %3738 = vmatpush2.msra.mxu0 0.0
    %3739 = vmatprep.subr.mxu0 0.0
    %3740 = vmatpush2.msra.mxu0 0.0
    %3741 = vmatprep.subr.mxu0 0.0
    %3742 = vmatpush2.msra.mxu0 0.0
    %3743 = vmatprep.subr.mxu0 0.0
    %3744 = vmatpush2.msra.mxu0 0.0
    %3745 = vmatprep.subr.mxu0 0.0
    %3746 = vmatpush2.msra.mxu0 0.0
    %3747 = vmatprep.subr.mxu0 0.0
    %3748 = vmatpush2.msra.mxu0 0.0
    %3749 = vmatprep.subr.mxu0 0.0
    %3750 = vmatpush2.msra.mxu0 0.0
    %3751 = vmatprep.subr.mxu0 0.0
    %3752 = vmatpush2.msra.mxu0 0.0
    %3753 = vmatprep.subr.mxu0 0.0
    %3754 = vmatpush2.msra.mxu0 0.0
    %3755 = vmatprep.subr.mxu0 0.0
    %3756 = vmatpush2.msra.mxu0 0.0
    %3757 = vmatprep.subr.mxu0 0.0
    %3758 = vmatpush2.msra.mxu0 0.0
    %3759 = vmatprep.subr.mxu0 0.0
    %3760 = vmatpush2.msra.mxu0 0.0
    %3761 = vmatprep.subr.mxu0 0.0
    %3762 = vmatpush2.msra.mxu0 0.0
    %3763 = vmatprep.subr.mxu0 0.0
    %3764 = vmatpush2.msra.mxu0 0.0
    %3765 = vmatprep.subr.mxu0 0.0
    %3766 = vmatpush2.msra.mxu0 0.0
    %3767 = vmatprep.subr.mxu0 0.0
    %3768 = vmatpush2.msra.mxu0 0.0
    %3769 = vmatprep.mubr.f32.mxu0 0.0
    %v3770 = vand.u32 %v3315, 4294901760
    %3771 = vmatmul.mubr.f32.gmra.mxu0 %v3770
    %v3772 = vpop.f32.mrf.mxu0
    %v3773 = vadd.f32 %v3700, %v3772
    %v3774 = vpop.f32.mrf.mxu0
    %3775 = vdwg.mxu0
    %v3776 = vsel %vm584, %v3773, 0.0
    %v3777 = vrot.slane %v3776, 4
    %v3778 = vadd.f32 %v3776, %v3777
    %v3779 = vrot.slane %v3778, 2
    %v3780 = vadd.f32 %v3778, %v3779
    %v3781 = vrot.slane %v3780, 1
    %v3782 = vadd.f32 %v3780, %v3781
    %v3783 = vmul.f32 %v3782, %v592
    %v3784 = vsub.f32 %v3773, %v3783
    %v3785 = vmul.f32 %v3784, %v3784
    %v3786 = vsel %vm584, %v3785, 0.0
    %v3787 = vrot.slane %v3786, 4
    %v3788 = vadd.f32 %v3786, %v3787
    %v3789 = vrot.slane %v3788, 2
    %v3790 = vadd.f32 %v3788, %v3789
    %v3791 = vrot.slane %v3790, 1
    %v3792 = vadd.f32 %v3790, %v3791
    %v3793 = vmul.f32 %v3792, %v592
    %v3794 = vadd.f32 %v3793, 1e-05
    %v3795 = vrsqrt.pop %v3794
    %v3796 = vmul.f32 %v3784, %v3795
    %v3797 = vld [vmem:[%s3308 + $0x1] sm:$0x1]
    %v3798 = vlaneseq
    %v3799 = vshrl.u32 %v3798, 7
    %v3800 = vsub.s32 0, %v3799
    %v3801 = vrot.slane %v3797, %v3800
    %v3802 = vmul.f32 %v3796, %v3801
    %v3803 = vld [vmem:[%s3308 + $0x2] sm:$0x1]
    %v3804 = vlaneseq
    %v3805 = vshrl.u32 %v3804, 7
    %v3806 = vsub.s32 0, %v3805
    %v3807 = vrot.slane %v3803, %v3806
    %v3808 = vadd.f32 %v3802, %v3807
    %v3809 = vmax.f32 %v3808, 0.0
    %s3810 = scalar_lea.vmem %s6, 64
    %v3811 = vld [vmem:[%s3810] sm:$0xff]
    %v3812 = vld [vmem:[%s3810 + $0x8] sm:$0xff]
    %v3813 = vld [vmem:[%s3810 + $0x10] sm:$0xff]
    %v3814 = vld [vmem:[%s3810 + $0x18] sm:$0x3]
    %v3815 = vld [vmem:[%s3308 + $0x3] sm:$0x1]
    %v3816 = vlaneseq
    %v3817 = vshrl.u32 %v3816, 7
    %v3818 = vsub.s32 0, %v3817
    %v3819 = vrot.slane %v3815, %v3818
    %v3821 = vsel %vm584, %v3809, 0
    %v3824 = vsel %vm632, %v3814, 0
    %3826 = vmatprep.subr.mxu0 0.0
    %3827 = vmatpush1.msra.mxu0 0.0
    %3828 = vmatprep.subr.mxu0 0.0
    %3829 = vmatpush1.msra.mxu0 0.0
    %3830 = vmatprep.subr.mxu0 0.0
    %3831 = vmatpush1.msra.mxu0 0.0
    %3832 = vmatprep.subr.mxu0 0.0
    %3833 = vmatpush1.msra.mxu0 0.0
    %3834 = vmatprep.subr.mxu0 0.0
    %3835 = vmatpush1.msra.mxu0 0.0
    %3836 = vmatprep.subr.mxu0 0.0
    %3837 = vmatpush1.msra.mxu0 0.0
    %3838 = vmatprep.subr.mxu0 0.0
    %3839 = vmatpush1.msra.mxu0 0.0
    %3840 = vmatprep.subr.mxu0 0.0
    %3841 = vmatpush1.msra.mxu0 0.0
    %3842 = vmatprep.subr.mxu0 0.0
    %3843 = vmatpush1.msra.mxu0 0.0
    %3844 = vmatprep.subr.mxu0 0.0
    %3845 = vmatpush1.msra.mxu0 0.0
    %3846 = vmatprep.subr.mxu0 0.0
    %3847 = vmatpush1.msra.mxu0 0.0
    %3848 = vmatprep.subr.mxu0 0.0
    %3849 = vmatpush1.msra.mxu0 0.0
    %3850 = vmatprep.subr.mxu0 0.0
    %v3851 = vand.u32 %v3824, 4294901760
    %3852 = vmatpush1.msra.mxu0 %v3851
    %3853 = vmatprep.subr.mxu0 0.0
    %v3854 = vand.u32 %v3813, 4294901760
    %3855 = vmatpush1.msra.mxu0 %v3854
    %3856 = vmatprep.subr.mxu0 0.0
    %v3857 = vand.u32 %v3812, 4294901760
    %3858 = vmatpush1.msra.mxu0 %v3857
    %3859 = vmatprep.subr.mxu0 0.0
    %v3860 = vand.u32 %v3811, 4294901760
    %3861 = vmatpush1.msra.mxu0 %v3860
    %3862 = vmatprep.subr.mxu0 0.0
    %3863 = vmatpush2.msra.mxu0 0.0
    %3864 = vmatprep.subr.mxu0 0.0
    %3865 = vmatpush2.msra.mxu0 0.0
    %3866 = vmatprep.subr.mxu0 0.0
    %3867 = vmatpush2.msra.mxu0 0.0
    %3868 = vmatprep.subr.mxu0 0.0
    %3869 = vmatpush2.msra.mxu0 0.0
    %3870 = vmatprep.subr.mxu0 0.0
    %3871 = vmatpush2.msra.mxu0 0.0
    %3872 = vmatprep.subr.mxu0 0.0
    %3873 = vmatpush2.msra.mxu0 0.0
    %3874 = vmatprep.subr.mxu0 0.0
    %3875 = vmatpush2.msra.mxu0 0.0
    %3876 = vmatprep.subr.mxu0 0.0
    %3877 = vmatpush2.msra.mxu0 0.0
    %3878 = vmatprep.subr.mxu0 0.0
    %3879 = vmatpush2.msra.mxu0 0.0
    %3880 = vmatprep.subr.mxu0 0.0
    %3881 = vmatpush2.msra.mxu0 0.0
    %3882 = vmatprep.subr.mxu0 0.0
    %3883 = vmatpush2.msra.mxu0 0.0
    %3884 = vmatprep.subr.mxu0 0.0
    %3885 = vmatpush2.msra.mxu0 0.0
    %3886 = vmatprep.subr.mxu0 0.0
    %3887 = vmatpush2.msra.mxu0 0.0
    %3888 = vmatprep.subr.mxu0 0.0
    %3889 = vmatpush2.msra.mxu0 0.0
    %3890 = vmatprep.subr.mxu0 0.0
    %3891 = vmatpush2.msra.mxu0 0.0
    %3892 = vmatprep.subr.mxu0 0.0
    %3893 = vmatpush2.msra.mxu0 0.0
    %3894 = vmatprep.mubr.f32.mxu0 0.0
    %v3895 = vand.u32 %v3821, 4294901760
    %v3896 = vsub.f32 %v3821, %v3895
    %v3897 = vand.u32 %v3896, 4294901760
    %v3898 = vsub.f32 %v3896, %v3897
    %v3899 = vand.u32 %v3898, 4294901760
    %3900 = vmatmul.mubr.f32.gmra.mxu0 %v3899
    %v3901 = vpop.f32.mrf.mxu0
    %v3902 = vadd.f32 %v3819, %v3901
    %v3903 = vpop.f32.mrf.mxu0
    %3904 = vdwg.mxu0
    %3905 = vmatprep.subr.mxu0 0.0
    %3906 = vmatpush1.msra.mxu0 0.0
    %3907 = vmatprep.subr.mxu0 0.0
    %3908 = vmatpush1.msra.mxu0 0.0
    %3909 = vmatprep.subr.mxu0 0.0
    %3910 = vmatpush1.msra.mxu0 0.0
    %3911 = vmatprep.subr.mxu0 0.0
    %3912 = vmatpush1.msra.mxu0 0.0
    %3913 = vmatprep.subr.mxu0 0.0
    %3914 = vmatpush1.msra.mxu0 0.0
    %3915 = vmatprep.subr.mxu0 0.0
    %3916 = vmatpush1.msra.mxu0 0.0
    %3917 = vmatprep.subr.mxu0 0.0
    %3918 = vmatpush1.msra.mxu0 0.0
    %3919 = vmatprep.subr.mxu0 0.0
    %3920 = vmatpush1.msra.mxu0 0.0
    %3921 = vmatprep.subr.mxu0 0.0
    %3922 = vmatpush1.msra.mxu0 0.0
    %3923 = vmatprep.subr.mxu0 0.0
    %3924 = vmatpush1.msra.mxu0 0.0
    %3925 = vmatprep.subr.mxu0 0.0
    %3926 = vmatpush1.msra.mxu0 0.0
    %3927 = vmatprep.subr.mxu0 0.0
    %3928 = vmatpush1.msra.mxu0 0.0
    %3929 = vmatprep.subr.mxu0 0.0
    %v3930 = vand.u32 %v3824, 4294901760
    %v3931 = vsub.f32 %v3824, %v3930
    %v3932 = vand.u32 %v3931, 4294901760
    %v3933 = vsub.f32 %v3931, %v3932
    %v3934 = vand.u32 %v3933, 4294901760
    %3935 = vmatpush1.msra.mxu0 %v3934
    %3936 = vmatprep.subr.mxu0 0.0
    %v3937 = vand.u32 %v3813, 4294901760
    %v3938 = vsub.f32 %v3813, %v3937
    %v3939 = vand.u32 %v3938, 4294901760
    %v3940 = vsub.f32 %v3938, %v3939
    %v3941 = vand.u32 %v3940, 4294901760
    %3942 = vmatpush1.msra.mxu0 %v3941
    %3943 = vmatprep.subr.mxu0 0.0
    %v3944 = vand.u32 %v3812, 4294901760
    %v3945 = vsub.f32 %v3812, %v3944
    %v3946 = vand.u32 %v3945, 4294901760
    %v3947 = vsub.f32 %v3945, %v3946
    %v3948 = vand.u32 %v3947, 4294901760
    %3949 = vmatpush1.msra.mxu0 %v3948
    %3950 = vmatprep.subr.mxu0 0.0
    %v3951 = vand.u32 %v3811, 4294901760
    %v3952 = vsub.f32 %v3811, %v3951
    %v3953 = vand.u32 %v3952, 4294901760
    %v3954 = vsub.f32 %v3952, %v3953
    %v3955 = vand.u32 %v3954, 4294901760
    %3956 = vmatpush1.msra.mxu0 %v3955
    %3957 = vmatprep.subr.mxu0 0.0
    %3958 = vmatpush2.msra.mxu0 0.0
    %3959 = vmatprep.subr.mxu0 0.0
    %3960 = vmatpush2.msra.mxu0 0.0
    %3961 = vmatprep.subr.mxu0 0.0
    %3962 = vmatpush2.msra.mxu0 0.0
    %3963 = vmatprep.subr.mxu0 0.0
    %3964 = vmatpush2.msra.mxu0 0.0
    %3965 = vmatprep.subr.mxu0 0.0
    %3966 = vmatpush2.msra.mxu0 0.0
    %3967 = vmatprep.subr.mxu0 0.0
    %3968 = vmatpush2.msra.mxu0 0.0
    %3969 = vmatprep.subr.mxu0 0.0
    %3970 = vmatpush2.msra.mxu0 0.0
    %3971 = vmatprep.subr.mxu0 0.0
    %3972 = vmatpush2.msra.mxu0 0.0
    %3973 = vmatprep.subr.mxu0 0.0
    %3974 = vmatpush2.msra.mxu0 0.0
    %3975 = vmatprep.subr.mxu0 0.0
    %3976 = vmatpush2.msra.mxu0 0.0
    %3977 = vmatprep.subr.mxu0 0.0
    %3978 = vmatpush2.msra.mxu0 0.0
    %3979 = vmatprep.subr.mxu0 0.0
    %3980 = vmatpush2.msra.mxu0 0.0
    %3981 = vmatprep.subr.mxu0 0.0
    %3982 = vmatpush2.msra.mxu0 0.0
    %3983 = vmatprep.subr.mxu0 0.0
    %3984 = vmatpush2.msra.mxu0 0.0
    %3985 = vmatprep.subr.mxu0 0.0
    %3986 = vmatpush2.msra.mxu0 0.0
    %3987 = vmatprep.subr.mxu0 0.0
    %3988 = vmatpush2.msra.mxu0 0.0
    %3989 = vmatprep.mubr.f32.mxu0 0.0
    %v3990 = vand.u32 %v3821, 4294901760
    %3991 = vmatmul.mubr.f32.gmra.mxu0 %v3990
    %v3992 = vpop.f32.mrf.mxu0
    %v3993 = vadd.f32 %v3902, %v3992
    %v3994 = vpop.f32.mrf.mxu0
    %3995 = vdwg.mxu0
    %3996 = vmatprep.subr.mxu0 0.0
    %3997 = vmatpush1.msra.mxu0 0.0
    %3998 = vmatprep.subr.mxu0 0.0
    %3999 = vmatpush1.msra.mxu0 0.0
    %4000 = vmatprep.subr.mxu0 0.0
    %4001 = vmatpush1.msra.mxu0 0.0
    %4002 = vmatprep.subr.mxu0 0.0
    %4003 = vmatpush1.msra.mxu0 0.0
    %4004 = vmatprep.subr.mxu0 0.0
    %4005 = vmatpush1.msra.mxu0 0.0
    %4006 = vmatprep.subr.mxu0 0.0
    %4007 = vmatpush1.msra.mxu0 0.0
    %4008 = vmatprep.subr.mxu0 0.0
    %4009 = vmatpush1.msra.mxu0 0.0
    %4010 = vmatprep.subr.mxu0 0.0
    %4011 = vmatpush1.msra.mxu0 0.0
    %4012 = vmatprep.subr.mxu0 0.0
    %4013 = vmatpush1.msra.mxu0 0.0
    %4014 = vmatprep.subr.mxu0 0.0
    %4015 = vmatpush1.msra.mxu0 0.0
    %4016 = vmatprep.subr.mxu0 0.0
    %4017 = vmatpush1.msra.mxu0 0.0
    %4018 = vmatprep.subr.mxu0 0.0
    %4019 = vmatpush1.msra.mxu0 0.0
    %4020 = vmatprep.subr.mxu0 0.0
    %v4021 = vand.u32 %v3824, 4294901760
    %v4022 = vsub.f32 %v3824, %v4021
    %4023 = vmatpush1.msra.mxu0 %v4022
    %4024 = vmatprep.subr.mxu0 0.0
    %v4025 = vand.u32 %v3813, 4294901760
    %v4026 = vsub.f32 %v3813, %v4025
    %4027 = vmatpush1.msra.mxu0 %v4026
    %4028 = vmatprep.subr.mxu0 0.0
    %v4029 = vand.u32 %v3812, 4294901760
    %v4030 = vsub.f32 %v3812, %v4029
    %4031 = vmatpush1.msra.mxu0 %v4030
    %4032 = vmatprep.subr.mxu0 0.0
    %v4033 = vand.u32 %v3811, 4294901760
    %v4034 = vsub.f32 %v3811, %v4033
    %4035 = vmatpush1.msra.mxu0 %v4034
    %4036 = vmatprep.subr.mxu0 0.0
    %4037 = vmatpush2.msra.mxu0 0.0
    %4038 = vmatprep.subr.mxu0 0.0
    %4039 = vmatpush2.msra.mxu0 0.0
    %4040 = vmatprep.subr.mxu0 0.0
    %4041 = vmatpush2.msra.mxu0 0.0
    %4042 = vmatprep.subr.mxu0 0.0
    %4043 = vmatpush2.msra.mxu0 0.0
    %4044 = vmatprep.subr.mxu0 0.0
    %4045 = vmatpush2.msra.mxu0 0.0
    %4046 = vmatprep.subr.mxu0 0.0
    %4047 = vmatpush2.msra.mxu0 0.0
    %4048 = vmatprep.subr.mxu0 0.0
    %4049 = vmatpush2.msra.mxu0 0.0
    %4050 = vmatprep.subr.mxu0 0.0
    %4051 = vmatpush2.msra.mxu0 0.0
    %4052 = vmatprep.subr.mxu0 0.0
    %4053 = vmatpush2.msra.mxu0 0.0
    %4054 = vmatprep.subr.mxu0 0.0
    %4055 = vmatpush2.msra.mxu0 0.0
    %4056 = vmatprep.subr.mxu0 0.0
    %4057 = vmatpush2.msra.mxu0 0.0
    %4058 = vmatprep.subr.mxu0 0.0
    %4059 = vmatpush2.msra.mxu0 0.0
    %4060 = vmatprep.subr.mxu0 0.0
    %4061 = vmatpush2.msra.mxu0 0.0
    %4062 = vmatprep.subr.mxu0 0.0
    %4063 = vmatpush2.msra.mxu0 0.0
    %4064 = vmatprep.subr.mxu0 0.0
    %4065 = vmatpush2.msra.mxu0 0.0
    %4066 = vmatprep.subr.mxu0 0.0
    %4067 = vmatpush2.msra.mxu0 0.0
    %4068 = vmatprep.mubr.f32.mxu0 0.0
    %v4069 = vand.u32 %v3821, 4294901760
    %v4070 = vsub.f32 %v3821, %v4069
    %4071 = vmatmul.mubr.f32.gmra.mxu0 %v4070
    %v4072 = vpop.f32.mrf.mxu0
    %v4073 = vadd.f32 %v3993, %v4072
    %v4074 = vpop.f32.mrf.mxu0
    %4075 = vdwg.mxu0
    %4076 = vmatprep.subr.mxu0 0.0
    %4077 = vmatpush1.msra.mxu0 0.0
    %4078 = vmatprep.subr.mxu0 0.0
    %4079 = vmatpush1.msra.mxu0 0.0
    %4080 = vmatprep.subr.mxu0 0.0
    %4081 = vmatpush1.msra.mxu0 0.0
    %4082 = vmatprep.subr.mxu0 0.0
    %4083 = vmatpush1.msra.mxu0 0.0
    %4084 = vmatprep.subr.mxu0 0.0
    %4085 = vmatpush1.msra.mxu0 0.0
    %4086 = vmatprep.subr.mxu0 0.0
    %4087 = vmatpush1.msra.mxu0 0.0
    %4088 = vmatprep.subr.mxu0 0.0
    %4089 = vmatpush1.msra.mxu0 0.0
    %4090 = vmatprep.subr.mxu0 0.0
    %4091 = vmatpush1.msra.mxu0 0.0
    %4092 = vmatprep.subr.mxu0 0.0
    %4093 = vmatpush1.msra.mxu0 0.0
    %4094 = vmatprep.subr.mxu0 0.0
    %4095 = vmatpush1.msra.mxu0 0.0
    %4096 = vmatprep.subr.mxu0 0.0
    %4097 = vmatpush1.msra.mxu0 0.0
    %4098 = vmatprep.subr.mxu0 0.0
    %4099 = vmatpush1.msra.mxu0 0.0
    %4100 = vmatprep.subr.mxu0 0.0
    %v4101 = vand.u32 %v3824, 4294901760
    %4102 = vmatpush1.msra.mxu0 %v4101
    %4103 = vmatprep.subr.mxu0 0.0
    %v4104 = vand.u32 %v3813, 4294901760
    %4105 = vmatpush1.msra.mxu0 %v4104
    %4106 = vmatprep.subr.mxu0 0.0
    %v4107 = vand.u32 %v3812, 4294901760
    %4108 = vmatpush1.msra.mxu0 %v4107
    %4109 = vmatprep.subr.mxu0 0.0
    %v4110 = vand.u32 %v3811, 4294901760
    %4111 = vmatpush1.msra.mxu0 %v4110
    %4112 = vmatprep.subr.mxu0 0.0
    %4113 = vmatpush2.msra.mxu0 0.0
    %4114 = vmatprep.subr.mxu0 0.0
    %4115 = vmatpush2.msra.mxu0 0.0
    %4116 = vmatprep.subr.mxu0 0.0
    %4117 = vmatpush2.msra.mxu0 0.0
    %4118 = vmatprep.subr.mxu0 0.0
    %4119 = vmatpush2.msra.mxu0 0.0
    %4120 = vmatprep.subr.mxu0 0.0
    %4121 = vmatpush2.msra.mxu0 0.0
    %4122 = vmatprep.subr.mxu0 0.0
    %4123 = vmatpush2.msra.mxu0 0.0
    %4124 = vmatprep.subr.mxu0 0.0
    %4125 = vmatpush2.msra.mxu0 0.0
    %4126 = vmatprep.subr.mxu0 0.0
    %4127 = vmatpush2.msra.mxu0 0.0
    %4128 = vmatprep.subr.mxu0 0.0
    %4129 = vmatpush2.msra.mxu0 0.0
    %4130 = vmatprep.subr.mxu0 0.0
    %4131 = vmatpush2.msra.mxu0 0.0
    %4132 = vmatprep.subr.mxu0 0.0
    %4133 = vmatpush2.msra.mxu0 0.0
    %4134 = vmatprep.subr.mxu0 0.0
    %4135 = vmatpush2.msra.mxu0 0.0
    %4136 = vmatprep.subr.mxu0 0.0
    %4137 = vmatpush2.msra.mxu0 0.0
    %4138 = vmatprep.subr.mxu0 0.0
    %4139 = vmatpush2.msra.mxu0 0.0
    %4140 = vmatprep.subr.mxu0 0.0
    %4141 = vmatpush2.msra.mxu0 0.0
    %4142 = vmatprep.subr.mxu0 0.0
    %4143 = vmatpush2.msra.mxu0 0.0
    %4144 = vmatprep.mubr.f32.mxu0 0.0
    %v4145 = vand.u32 %v3821, 4294901760
    %v4146 = vsub.f32 %v3821, %v4145
    %v4147 = vand.u32 %v4146, 4294901760
    %4148 = vmatmul.mubr.f32.gmra.mxu0 %v4147
    %v4149 = vpop.f32.mrf.mxu0
    %v4150 = vadd.f32 %v4073, %v4149
    %v4151 = vpop.f32.mrf.mxu0
    %4152 = vdwg.mxu0
    %4153 = vmatprep.subr.mxu0 0.0
    %4154 = vmatpush1.msra.mxu0 0.0
    %4155 = vmatprep.subr.mxu0 0.0
    %4156 = vmatpush1.msra.mxu0 0.0
    %4157 = vmatprep.subr.mxu0 0.0
    %4158 = vmatpush1.msra.mxu0 0.0
    %4159 = vmatprep.subr.mxu0 0.0
    %4160 = vmatpush1.msra.mxu0 0.0
    %4161 = vmatprep.subr.mxu0 0.0
    %4162 = vmatpush1.msra.mxu0 0.0
    %4163 = vmatprep.subr.mxu0 0.0
    %4164 = vmatpush1.msra.mxu0 0.0
    %4165 = vmatprep.subr.mxu0 0.0
    %4166 = vmatpush1.msra.mxu0 0.0
    %4167 = vmatprep.subr.mxu0 0.0
    %4168 = vmatpush1.msra.mxu0 0.0
    %4169 = vmatprep.subr.mxu0 0.0
    %4170 = vmatpush1.msra.mxu0 0.0
    %4171 = vmatprep.subr.mxu0 0.0
    %4172 = vmatpush1.msra.mxu0 0.0
    %4173 = vmatprep.subr.mxu0 0.0
    %4174 = vmatpush1.msra.mxu0 0.0
    %4175 = vmatprep.subr.mxu0 0.0
    %4176 = vmatpush1.msra.mxu0 0.0
    %4177 = vmatprep.subr.mxu0 0.0
    %v4178 = vand.u32 %v3824, 4294901760
    %v4179 = vsub.f32 %v3824, %v4178
    %v4180 = vand.u32 %v4179, 4294901760
    %4181 = vmatpush1.msra.mxu0 %v4180
    %4182 = vmatprep.subr.mxu0 0.0
    %v4183 = vand.u32 %v3813, 4294901760
    %v4184 = vsub.f32 %v3813, %v4183
    %v4185 = vand.u32 %v4184, 4294901760
    %4186 = vmatpush1.msra.mxu0 %v4185
    %4187 = vmatprep.subr.mxu0 0.0
    %v4188 = vand.u32 %v3812, 4294901760
    %v4189 = vsub.f32 %v3812, %v4188
    %v4190 = vand.u32 %v4189, 4294901760
    %4191 = vmatpush1.msra.mxu0 %v4190
    %4192 = vmatprep.subr.mxu0 0.0
    %v4193 = vand.u32 %v3811, 4294901760
    %v4194 = vsub.f32 %v3811, %v4193
    %v4195 = vand.u32 %v4194, 4294901760
    %4196 = vmatpush1.msra.mxu0 %v4195
    %4197 = vmatprep.subr.mxu0 0.0
    %4198 = vmatpush2.msra.mxu0 0.0
    %4199 = vmatprep.subr.mxu0 0.0
    %4200 = vmatpush2.msra.mxu0 0.0
    %4201 = vmatprep.subr.mxu0 0.0
    %4202 = vmatpush2.msra.mxu0 0.0
    %4203 = vmatprep.subr.mxu0 0.0
    %4204 = vmatpush2.msra.mxu0 0.0
    %4205 = vmatprep.subr.mxu0 0.0
    %4206 = vmatpush2.msra.mxu0 0.0
    %4207 = vmatprep.subr.mxu0 0.0
    %4208 = vmatpush2.msra.mxu0 0.0
    %4209 = vmatprep.subr.mxu0 0.0
    %4210 = vmatpush2.msra.mxu0 0.0
    %4211 = vmatprep.subr.mxu0 0.0
    %4212 = vmatpush2.msra.mxu0 0.0
    %4213 = vmatprep.subr.mxu0 0.0
    %4214 = vmatpush2.msra.mxu0 0.0
    %4215 = vmatprep.subr.mxu0 0.0
    %4216 = vmatpush2.msra.mxu0 0.0
    %4217 = vmatprep.subr.mxu0 0.0
    %4218 = vmatpush2.msra.mxu0 0.0
    %4219 = vmatprep.subr.mxu0 0.0
    %4220 = vmatpush2.msra.mxu0 0.0
    %4221 = vmatprep.subr.mxu0 0.0
    %4222 = vmatpush2.msra.mxu0 0.0
    %4223 = vmatprep.subr.mxu0 0.0
    %4224 = vmatpush2.msra.mxu0 0.0
    %4225 = vmatprep.subr.mxu0 0.0
    %4226 = vmatpush2.msra.mxu0 0.0
    %4227 = vmatprep.subr.mxu0 0.0
    %4228 = vmatpush2.msra.mxu0 0.0
    %4229 = vmatprep.mubr.f32.mxu0 0.0
    %v4230 = vand.u32 %v3821, 4294901760
    %4231 = vmatmul.mubr.f32.gmra.mxu0 %v4230
    %v4232 = vpop.f32.mrf.mxu0
    %v4233 = vadd.f32 %v4150, %v4232
    %v4234 = vpop.f32.mrf.mxu0
    %4235 = vdwg.mxu0
    %4236 = vmatprep.subr.mxu0 0.0
    %4237 = vmatpush1.msra.mxu0 0.0
    %4238 = vmatprep.subr.mxu0 0.0
    %4239 = vmatpush1.msra.mxu0 0.0
    %4240 = vmatprep.subr.mxu0 0.0
    %4241 = vmatpush1.msra.mxu0 0.0
    %4242 = vmatprep.subr.mxu0 0.0
    %4243 = vmatpush1.msra.mxu0 0.0
    %4244 = vmatprep.subr.mxu0 0.0
    %4245 = vmatpush1.msra.mxu0 0.0
    %4246 = vmatprep.subr.mxu0 0.0
    %4247 = vmatpush1.msra.mxu0 0.0
    %4248 = vmatprep.subr.mxu0 0.0
    %4249 = vmatpush1.msra.mxu0 0.0
    %4250 = vmatprep.subr.mxu0 0.0
    %4251 = vmatpush1.msra.mxu0 0.0
    %4252 = vmatprep.subr.mxu0 0.0
    %4253 = vmatpush1.msra.mxu0 0.0
    %4254 = vmatprep.subr.mxu0 0.0
    %4255 = vmatpush1.msra.mxu0 0.0
    %4256 = vmatprep.subr.mxu0 0.0
    %4257 = vmatpush1.msra.mxu0 0.0
    %4258 = vmatprep.subr.mxu0 0.0
    %4259 = vmatpush1.msra.mxu0 0.0
    %4260 = vmatprep.subr.mxu0 0.0
    %v4261 = vand.u32 %v3824, 4294901760
    %4262 = vmatpush1.msra.mxu0 %v4261
    %4263 = vmatprep.subr.mxu0 0.0
    %v4264 = vand.u32 %v3813, 4294901760
    %4265 = vmatpush1.msra.mxu0 %v4264
    %4266 = vmatprep.subr.mxu0 0.0
    %v4267 = vand.u32 %v3812, 4294901760
    %4268 = vmatpush1.msra.mxu0 %v4267
    %4269 = vmatprep.subr.mxu0 0.0
    %v4270 = vand.u32 %v3811, 4294901760
    %4271 = vmatpush1.msra.mxu0 %v4270
    %4272 = vmatprep.subr.mxu0 0.0
    %4273 = vmatpush2.msra.mxu0 0.0
    %4274 = vmatprep.subr.mxu0 0.0
    %4275 = vmatpush2.msra.mxu0 0.0
    %4276 = vmatprep.subr.mxu0 0.0
    %4277 = vmatpush2.msra.mxu0 0.0
    %4278 = vmatprep.subr.mxu0 0.0
    %4279 = vmatpush2.msra.mxu0 0.0
    %4280 = vmatprep.subr.mxu0 0.0
    %4281 = vmatpush2.msra.mxu0 0.0
    %4282 = vmatprep.subr.mxu0 0.0
    %4283 = vmatpush2.msra.mxu0 0.0
    %4284 = vmatprep.subr.mxu0 0.0
    %4285 = vmatpush2.msra.mxu0 0.0
    %4286 = vmatprep.subr.mxu0 0.0
    %4287 = vmatpush2.msra.mxu0 0.0
    %4288 = vmatprep.subr.mxu0 0.0
    %4289 = vmatpush2.msra.mxu0 0.0
    %4290 = vmatprep.subr.mxu0 0.0
    %4291 = vmatpush2.msra.mxu0 0.0
    %4292 = vmatprep.subr.mxu0 0.0
    %4293 = vmatpush2.msra.mxu0 0.0
    %4294 = vmatprep.subr.mxu0 0.0
    %4295 = vmatpush2.msra.mxu0 0.0
    %4296 = vmatprep.subr.mxu0 0.0
    %4297 = vmatpush2.msra.mxu0 0.0
    %4298 = vmatprep.subr.mxu0 0.0
    %4299 = vmatpush2.msra.mxu0 0.0
    %4300 = vmatprep.subr.mxu0 0.0
    %4301 = vmatpush2.msra.mxu0 0.0
    %4302 = vmatprep.subr.mxu0 0.0
    %4303 = vmatpush2.msra.mxu0 0.0
    %4304 = vmatprep.mubr.f32.mxu0 0.0
    %v4305 = vand.u32 %v3821, 4294901760
    %4306 = vmatmul.mubr.f32.gmra.mxu0 %v4305
    %v4307 = vpop.f32.mrf.mxu0
    %v4308 = vadd.f32 %v4233, %v4307
    %v4309 = vpop.f32.mrf.mxu0
    %4310 = vdwg.mxu0
    %v4311 = vsel %vm584, %v4308, 0.0
    %v4312 = vrot.slane %v4311, 4
    %v4313 = vadd.f32 %v4311, %v4312
    %v4314 = vrot.slane %v4313, 2
    %v4315 = vadd.f32 %v4313, %v4314
    %v4316 = vrot.slane %v4315, 1
    %v4317 = vadd.f32 %v4315, %v4316
    %v4318 = vmul.f32 %v4317, %v592
    %v4319 = vsub.f32 %v4308, %v4318
    %v4320 = vmul.f32 %v4319, %v4319
    %v4321 = vsel %vm584, %v4320, 0.0
    %v4322 = vrot.slane %v4321, 4
    %v4323 = vadd.f32 %v4321, %v4322
    %v4324 = vrot.slane %v4323, 2
    %v4325 = vadd.f32 %v4323, %v4324
    %v4326 = vrot.slane %v4325, 1
    %v4327 = vadd.f32 %v4325, %v4326
    %v4328 = vmul.f32 %v4327, %v592
    %v4329 = vadd.f32 %v4328, 1e-05
    %v4330 = vrsqrt.pop %v4329
    %v4331 = vmul.f32 %v4319, %v4330
    %v4332 = vld [vmem:[%s3308 + $0x4] sm:$0x1]
    %v4333 = vlaneseq
    %v4334 = vshrl.u32 %v4333, 7
    %v4335 = vsub.s32 0, %v4334
    %v4336 = vrot.slane %v4332, %v4335
    %v4337 = vmul.f32 %v4331, %v4336
    %v4338 = vld [vmem:[%s3308 + $0x5] sm:$0x1]
    %v4339 = vlaneseq
    %v4340 = vshrl.u32 %v4339, 7
    %v4341 = vsub.s32 0, %v4340
    %v4342 = vrot.slane %v4338, %v4341
    %v4343 = vadd.f32 %v4337, %v4342
    %v4344 = vmax.f32 %v4343, 0.0
    %v4345 = vld [vmem:[%s3308 + $0x6] sm:$0x1]
    %s4346 = scalar_lea.vmem %s7, 64
    %v4347 = vld [vmem:[%s4346] sm:$0xff]
    %v4348 = vld [vmem:[%s4346 + $0x8] sm:$0xff]
    %v4349 = vld [vmem:[%s4346 + $0x10] sm:$0xff]
    %v4350 = vld [vmem:[%s4346 + $0x18] sm:$0x3]
    %v4351 = vlaneseq
    %v4352 = vshrl.u32 %v4351, 7
    %v4353 = vsub.s32 0, %v4352
    %v4354 = vrot.slane %v4345, %v4353
    %v4356 = vsel %vm584, %v4344, 0
    %v4359 = vsel %vm632, %v4350, 0
    %4361 = vmatprep.subr.mxu0 0.0
    %4362 = vmatpush1.msra.mxu0 0.0
    %4363 = vmatprep.subr.mxu0 0.0
    %4364 = vmatpush1.msra.mxu0 0.0
    %4365 = vmatprep.subr.mxu0 0.0
    %4366 = vmatpush1.msra.mxu0 0.0
    %4367 = vmatprep.subr.mxu0 0.0
    %4368 = vmatpush1.msra.mxu0 0.0
    %4369 = vmatprep.subr.mxu0 0.0
    %4370 = vmatpush1.msra.mxu0 0.0
    %4371 = vmatprep.subr.mxu0 0.0
    %4372 = vmatpush1.msra.mxu0 0.0
    %4373 = vmatprep.subr.mxu0 0.0
    %4374 = vmatpush1.msra.mxu0 0.0
    %4375 = vmatprep.subr.mxu0 0.0
    %4376 = vmatpush1.msra.mxu0 0.0
    %4377 = vmatprep.subr.mxu0 0.0
    %4378 = vmatpush1.msra.mxu0 0.0
    %4379 = vmatprep.subr.mxu0 0.0
    %4380 = vmatpush1.msra.mxu0 0.0
    %4381 = vmatprep.subr.mxu0 0.0
    %4382 = vmatpush1.msra.mxu0 0.0
    %4383 = vmatprep.subr.mxu0 0.0
    %4384 = vmatpush1.msra.mxu0 0.0
    %4385 = vmatprep.subr.mxu0 0.0
    %v4386 = vand.u32 %v4359, 4294901760
    %4387 = vmatpush1.msra.mxu0 %v4386
    %4388 = vmatprep.subr.mxu0 0.0
    %v4389 = vand.u32 %v4349, 4294901760
    %4390 = vmatpush1.msra.mxu0 %v4389
    %4391 = vmatprep.subr.mxu0 0.0
    %v4392 = vand.u32 %v4348, 4294901760
    %4393 = vmatpush1.msra.mxu0 %v4392
    %4394 = vmatprep.subr.mxu0 0.0
    %v4395 = vand.u32 %v4347, 4294901760
    %4396 = vmatpush1.msra.mxu0 %v4395
    %4397 = vmatprep.subr.mxu0 0.0
    %4398 = vmatpush2.msra.mxu0 0.0
    %4399 = vmatprep.subr.mxu0 0.0
    %4400 = vmatpush2.msra.mxu0 0.0
    %4401 = vmatprep.subr.mxu0 0.0
    %4402 = vmatpush2.msra.mxu0 0.0
    %4403 = vmatprep.subr.mxu0 0.0
    %4404 = vmatpush2.msra.mxu0 0.0
    %4405 = vmatprep.subr.mxu0 0.0
    %4406 = vmatpush2.msra.mxu0 0.0
    %4407 = vmatprep.subr.mxu0 0.0
    %4408 = vmatpush2.msra.mxu0 0.0
    %4409 = vmatprep.subr.mxu0 0.0
    %4410 = vmatpush2.msra.mxu0 0.0
    %4411 = vmatprep.subr.mxu0 0.0
    %4412 = vmatpush2.msra.mxu0 0.0
    %4413 = vmatprep.subr.mxu0 0.0
    %4414 = vmatpush2.msra.mxu0 0.0
    %4415 = vmatprep.subr.mxu0 0.0
    %4416 = vmatpush2.msra.mxu0 0.0
    %4417 = vmatprep.subr.mxu0 0.0
    %4418 = vmatpush2.msra.mxu0 0.0
    %4419 = vmatprep.subr.mxu0 0.0
    %4420 = vmatpush2.msra.mxu0 0.0
    %4421 = vmatprep.subr.mxu0 0.0
    %4422 = vmatpush2.msra.mxu0 0.0
    %4423 = vmatprep.subr.mxu0 0.0
    %4424 = vmatpush2.msra.mxu0 0.0
    %4425 = vmatprep.subr.mxu0 0.0
    %4426 = vmatpush2.msra.mxu0 0.0
    %4427 = vmatprep.subr.mxu0 0.0
    %4428 = vmatpush2.msra.mxu0 0.0
    %4429 = vmatprep.mubr.f32.mxu0 0.0
    %v4430 = vand.u32 %v4356, 4294901760
    %v4431 = vsub.f32 %v4356, %v4430
    %v4432 = vand.u32 %v4431, 4294901760
    %v4433 = vsub.f32 %v4431, %v4432
    %v4434 = vand.u32 %v4433, 4294901760
    %4435 = vmatmul.mubr.f32.gmra.mxu0 %v4434
    %v4436 = vpop.f32.mrf.mxu0
    %v4437 = vadd.f32 %v4354, %v4436
    %v4438 = vpop.f32.mrf.mxu0
    %4439 = vdwg.mxu0
    %4440 = vmatprep.subr.mxu0 0.0
    %4441 = vmatpush1.msra.mxu0 0.0
    %4442 = vmatprep.subr.mxu0 0.0
    %4443 = vmatpush1.msra.mxu0 0.0
    %4444 = vmatprep.subr.mxu0 0.0
    %4445 = vmatpush1.msra.mxu0 0.0
    %4446 = vmatprep.subr.mxu0 0.0
    %4447 = vmatpush1.msra.mxu0 0.0
    %4448 = vmatprep.subr.mxu0 0.0
    %4449 = vmatpush1.msra.mxu0 0.0
    %4450 = vmatprep.subr.mxu0 0.0
    %4451 = vmatpush1.msra.mxu0 0.0
    %4452 = vmatprep.subr.mxu0 0.0
    %4453 = vmatpush1.msra.mxu0 0.0
    %4454 = vmatprep.subr.mxu0 0.0
    %4455 = vmatpush1.msra.mxu0 0.0
    %4456 = vmatprep.subr.mxu0 0.0
    %4457 = vmatpush1.msra.mxu0 0.0
    %4458 = vmatprep.subr.mxu0 0.0
    %4459 = vmatpush1.msra.mxu0 0.0
    %4460 = vmatprep.subr.mxu0 0.0
    %4461 = vmatpush1.msra.mxu0 0.0
    %4462 = vmatprep.subr.mxu0 0.0
    %4463 = vmatpush1.msra.mxu0 0.0
    %4464 = vmatprep.subr.mxu0 0.0
    %v4465 = vand.u32 %v4359, 4294901760
    %v4466 = vsub.f32 %v4359, %v4465
    %v4467 = vand.u32 %v4466, 4294901760
    %v4468 = vsub.f32 %v4466, %v4467
    %v4469 = vand.u32 %v4468, 4294901760
    %4470 = vmatpush1.msra.mxu0 %v4469
    %4471 = vmatprep.subr.mxu0 0.0
    %v4472 = vand.u32 %v4349, 4294901760
    %v4473 = vsub.f32 %v4349, %v4472
    %v4474 = vand.u32 %v4473, 4294901760
    %v4475 = vsub.f32 %v4473, %v4474
    %v4476 = vand.u32 %v4475, 4294901760
    %4477 = vmatpush1.msra.mxu0 %v4476
    %4478 = vmatprep.subr.mxu0 0.0
    %v4479 = vand.u32 %v4348, 4294901760
    %v4480 = vsub.f32 %v4348, %v4479
    %v4481 = vand.u32 %v4480, 4294901760
    %v4482 = vsub.f32 %v4480, %v4481
    %v4483 = vand.u32 %v4482, 4294901760
    %4484 = vmatpush1.msra.mxu0 %v4483
    %4485 = vmatprep.subr.mxu0 0.0
    %v4486 = vand.u32 %v4347, 4294901760
    %v4487 = vsub.f32 %v4347, %v4486
    %v4488 = vand.u32 %v4487, 4294901760
    %v4489 = vsub.f32 %v4487, %v4488
    %v4490 = vand.u32 %v4489, 4294901760
    %4491 = vmatpush1.msra.mxu0 %v4490
    %4492 = vmatprep.subr.mxu0 0.0
    %4493 = vmatpush2.msra.mxu0 0.0
    %4494 = vmatprep.subr.mxu0 0.0
    %4495 = vmatpush2.msra.mxu0 0.0
    %4496 = vmatprep.subr.mxu0 0.0
    %4497 = vmatpush2.msra.mxu0 0.0
    %4498 = vmatprep.subr.mxu0 0.0
    %4499 = vmatpush2.msra.mxu0 0.0
    %4500 = vmatprep.subr.mxu0 0.0
    %4501 = vmatpush2.msra.mxu0 0.0
    %4502 = vmatprep.subr.mxu0 0.0
    %4503 = vmatpush2.msra.mxu0 0.0
    %4504 = vmatprep.subr.mxu0 0.0
    %4505 = vmatpush2.msra.mxu0 0.0
    %4506 = vmatprep.subr.mxu0 0.0
    %4507 = vmatpush2.msra.mxu0 0.0
    %4508 = vmatprep.subr.mxu0 0.0
    %4509 = vmatpush2.msra.mxu0 0.0
    %4510 = vmatprep.subr.mxu0 0.0
    %4511 = vmatpush2.msra.mxu0 0.0
    %4512 = vmatprep.subr.mxu0 0.0
    %4513 = vmatpush2.msra.mxu0 0.0
    %4514 = vmatprep.subr.mxu0 0.0
    %4515 = vmatpush2.msra.mxu0 0.0
    %4516 = vmatprep.subr.mxu0 0.0
    %4517 = vmatpush2.msra.mxu0 0.0
    %4518 = vmatprep.subr.mxu0 0.0
    %4519 = vmatpush2.msra.mxu0 0.0
    %4520 = vmatprep.subr.mxu0 0.0
    %4521 = vmatpush2.msra.mxu0 0.0
    %4522 = vmatprep.subr.mxu0 0.0
    %4523 = vmatpush2.msra.mxu0 0.0
    %4524 = vmatprep.mubr.f32.mxu0 0.0
    %v4525 = vand.u32 %v4356, 4294901760
    %4526 = vmatmul.mubr.f32.gmra.mxu0 %v4525
    %v4527 = vpop.f32.mrf.mxu0
    %v4528 = vadd.f32 %v4437, %v4527
    %v4529 = vpop.f32.mrf.mxu0
    %4530 = vdwg.mxu0
    %4531 = vmatprep.subr.mxu0 0.0
    %4532 = vmatpush1.msra.mxu0 0.0
    %4533 = vmatprep.subr.mxu0 0.0
    %4534 = vmatpush1.msra.mxu0 0.0
    %4535 = vmatprep.subr.mxu0 0.0
    %4536 = vmatpush1.msra.mxu0 0.0
    %4537 = vmatprep.subr.mxu0 0.0
    %4538 = vmatpush1.msra.mxu0 0.0
    %4539 = vmatprep.subr.mxu0 0.0
    %4540 = vmatpush1.msra.mxu0 0.0
    %4541 = vmatprep.subr.mxu0 0.0
    %4542 = vmatpush1.msra.mxu0 0.0
    %4543 = vmatprep.subr.mxu0 0.0
    %4544 = vmatpush1.msra.mxu0 0.0
    %4545 = vmatprep.subr.mxu0 0.0
    %4546 = vmatpush1.msra.mxu0 0.0
    %4547 = vmatprep.subr.mxu0 0.0
    %4548 = vmatpush1.msra.mxu0 0.0
    %4549 = vmatprep.subr.mxu0 0.0
    %4550 = vmatpush1.msra.mxu0 0.0
    %4551 = vmatprep.subr.mxu0 0.0
    %4552 = vmatpush1.msra.mxu0 0.0
    %4553 = vmatprep.subr.mxu0 0.0
    %4554 = vmatpush1.msra.mxu0 0.0
    %4555 = vmatprep.subr.mxu0 0.0
    %v4556 = vand.u32 %v4359, 4294901760
    %v4557 = vsub.f32 %v4359, %v4556
    %4558 = vmatpush1.msra.mxu0 %v4557
    %4559 = vmatprep.subr.mxu0 0.0
    %v4560 = vand.u32 %v4349, 4294901760
    %v4561 = vsub.f32 %v4349, %v4560
    %4562 = vmatpush1.msra.mxu0 %v4561
    %4563 = vmatprep.subr.mxu0 0.0
    %v4564 = vand.u32 %v4348, 4294901760
    %v4565 = vsub.f32 %v4348, %v4564
    %4566 = vmatpush1.msra.mxu0 %v4565
    %4567 = vmatprep.subr.mxu0 0.0
    %v4568 = vand.u32 %v4347, 4294901760
    %v4569 = vsub.f32 %v4347, %v4568
    %4570 = vmatpush1.msra.mxu0 %v4569
    %4571 = vmatprep.subr.mxu0 0.0
    %4572 = vmatpush2.msra.mxu0 0.0
    %4573 = vmatprep.subr.mxu0 0.0
    %4574 = vmatpush2.msra.mxu0 0.0
    %4575 = vmatprep.subr.mxu0 0.0
    %4576 = vmatpush2.msra.mxu0 0.0
    %4577 = vmatprep.subr.mxu0 0.0
    %4578 = vmatpush2.msra.mxu0 0.0
    %4579 = vmatprep.subr.mxu0 0.0
    %4580 = vmatpush2.msra.mxu0 0.0
    %4581 = vmatprep.subr.mxu0 0.0
    %4582 = vmatpush2.msra.mxu0 0.0
    %4583 = vmatprep.subr.mxu0 0.0
    %4584 = vmatpush2.msra.mxu0 0.0
    %4585 = vmatprep.subr.mxu0 0.0
    %4586 = vmatpush2.msra.mxu0 0.0
    %4587 = vmatprep.subr.mxu0 0.0
    %4588 = vmatpush2.msra.mxu0 0.0
    %4589 = vmatprep.subr.mxu0 0.0
    %4590 = vmatpush2.msra.mxu0 0.0
    %4591 = vmatprep.subr.mxu0 0.0
    %4592 = vmatpush2.msra.mxu0 0.0
    %4593 = vmatprep.subr.mxu0 0.0
    %4594 = vmatpush2.msra.mxu0 0.0
    %4595 = vmatprep.subr.mxu0 0.0
    %4596 = vmatpush2.msra.mxu0 0.0
    %4597 = vmatprep.subr.mxu0 0.0
    %4598 = vmatpush2.msra.mxu0 0.0
    %4599 = vmatprep.subr.mxu0 0.0
    %4600 = vmatpush2.msra.mxu0 0.0
    %4601 = vmatprep.subr.mxu0 0.0
    %4602 = vmatpush2.msra.mxu0 0.0
    %4603 = vmatprep.mubr.f32.mxu0 0.0
    %v4604 = vand.u32 %v4356, 4294901760
    %v4605 = vsub.f32 %v4356, %v4604
    %4606 = vmatmul.mubr.f32.gmra.mxu0 %v4605
    %v4607 = vpop.f32.mrf.mxu0
    %v4608 = vadd.f32 %v4528, %v4607
    %v4609 = vpop.f32.mrf.mxu0
    %4610 = vdwg.mxu0
    %4611 = vmatprep.subr.mxu0 0.0
    %4612 = vmatpush1.msra.mxu0 0.0
    %4613 = vmatprep.subr.mxu0 0.0
    %4614 = vmatpush1.msra.mxu0 0.0
    %4615 = vmatprep.subr.mxu0 0.0
    %4616 = vmatpush1.msra.mxu0 0.0
    %4617 = vmatprep.subr.mxu0 0.0
    %4618 = vmatpush1.msra.mxu0 0.0
    %4619 = vmatprep.subr.mxu0 0.0
    %4620 = vmatpush1.msra.mxu0 0.0
    %4621 = vmatprep.subr.mxu0 0.0
    %4622 = vmatpush1.msra.mxu0 0.0
    %4623 = vmatprep.subr.mxu0 0.0
    %4624 = vmatpush1.msra.mxu0 0.0
    %4625 = vmatprep.subr.mxu0 0.0
    %4626 = vmatpush1.msra.mxu0 0.0
    %4627 = vmatprep.subr.mxu0 0.0
    %4628 = vmatpush1.msra.mxu0 0.0
    %4629 = vmatprep.subr.mxu0 0.0
    %4630 = vmatpush1.msra.mxu0 0.0
    %4631 = vmatprep.subr.mxu0 0.0
    %4632 = vmatpush1.msra.mxu0 0.0
    %4633 = vmatprep.subr.mxu0 0.0
    %4634 = vmatpush1.msra.mxu0 0.0
    %4635 = vmatprep.subr.mxu0 0.0
    %v4636 = vand.u32 %v4359, 4294901760
    %4637 = vmatpush1.msra.mxu0 %v4636
    %4638 = vmatprep.subr.mxu0 0.0
    %v4639 = vand.u32 %v4349, 4294901760
    %4640 = vmatpush1.msra.mxu0 %v4639
    %4641 = vmatprep.subr.mxu0 0.0
    %v4642 = vand.u32 %v4348, 4294901760
    %4643 = vmatpush1.msra.mxu0 %v4642
    %4644 = vmatprep.subr.mxu0 0.0
    %v4645 = vand.u32 %v4347, 4294901760
    %4646 = vmatpush1.msra.mxu0 %v4645
    %4647 = vmatprep.subr.mxu0 0.0
    %4648 = vmatpush2.msra.mxu0 0.0
    %4649 = vmatprep.subr.mxu0 0.0
    %4650 = vmatpush2.msra.mxu0 0.0
    %4651 = vmatprep.subr.mxu0 0.0
    %4652 = vmatpush2.msra.mxu0 0.0
    %4653 = vmatprep.subr.mxu0 0.0
    %4654 = vmatpush2.msra.mxu0 0.0
    %4655 = vmatprep.subr.mxu0 0.0
    %4656 = vmatpush2.msra.mxu0 0.0
    %4657 = vmatprep.subr.mxu0 0.0
    %4658 = vmatpush2.msra.mxu0 0.0
    %4659 = vmatprep.subr.mxu0 0.0
    %4660 = vmatpush2.msra.mxu0 0.0
    %4661 = vmatprep.subr.mxu0 0.0
    %4662 = vmatpush2.msra.mxu0 0.0
    %4663 = vmatprep.subr.mxu0 0.0
    %4664 = vmatpush2.msra.mxu0 0.0
    %4665 = vmatprep.subr.mxu0 0.0
    %4666 = vmatpush2.msra.mxu0 0.0
    %4667 = vmatprep.subr.mxu0 0.0
    %4668 = vmatpush2.msra.mxu0 0.0
    %4669 = vmatprep.subr.mxu0 0.0
    %4670 = vmatpush2.msra.mxu0 0.0
    %4671 = vmatprep.subr.mxu0 0.0
    %4672 = vmatpush2.msra.mxu0 0.0
    %4673 = vmatprep.subr.mxu0 0.0
    %4674 = vmatpush2.msra.mxu0 0.0
    %4675 = vmatprep.subr.mxu0 0.0
    %4676 = vmatpush2.msra.mxu0 0.0
    %4677 = vmatprep.subr.mxu0 0.0
    %4678 = vmatpush2.msra.mxu0 0.0
    %4679 = vmatprep.mubr.f32.mxu0 0.0
    %v4680 = vand.u32 %v4356, 4294901760
    %v4681 = vsub.f32 %v4356, %v4680
    %v4682 = vand.u32 %v4681, 4294901760
    %4683 = vmatmul.mubr.f32.gmra.mxu0 %v4682
    %v4684 = vpop.f32.mrf.mxu0
    %v4685 = vadd.f32 %v4608, %v4684
    %v4686 = vpop.f32.mrf.mxu0
    %4687 = vdwg.mxu0
    %4688 = vmatprep.subr.mxu0 0.0
    %4689 = vmatpush1.msra.mxu0 0.0
    %4690 = vmatprep.subr.mxu0 0.0
    %4691 = vmatpush1.msra.mxu0 0.0
    %4692 = vmatprep.subr.mxu0 0.0
    %4693 = vmatpush1.msra.mxu0 0.0
    %4694 = vmatprep.subr.mxu0 0.0
    %4695 = vmatpush1.msra.mxu0 0.0
    %4696 = vmatprep.subr.mxu0 0.0
    %4697 = vmatpush1.msra.mxu0 0.0
    %4698 = vmatprep.subr.mxu0 0.0
    %4699 = vmatpush1.msra.mxu0 0.0
    %4700 = vmatprep.subr.mxu0 0.0
    %4701 = vmatpush1.msra.mxu0 0.0
    %4702 = vmatprep.subr.mxu0 0.0
    %4703 = vmatpush1.msra.mxu0 0.0
    %4704 = vmatprep.subr.mxu0 0.0
    %4705 = vmatpush1.msra.mxu0 0.0
    %4706 = vmatprep.subr.mxu0 0.0
    %4707 = vmatpush1.msra.mxu0 0.0
    %4708 = vmatprep.subr.mxu0 0.0
    %4709 = vmatpush1.msra.mxu0 0.0
    %4710 = vmatprep.subr.mxu0 0.0
    %4711 = vmatpush1.msra.mxu0 0.0
    %4712 = vmatprep.subr.mxu0 0.0
    %v4713 = vand.u32 %v4359, 4294901760
    %v4714 = vsub.f32 %v4359, %v4713
    %v4715 = vand.u32 %v4714, 4294901760
    %4716 = vmatpush1.msra.mxu0 %v4715
    %4717 = vmatprep.subr.mxu0 0.0
    %v4718 = vand.u32 %v4349, 4294901760
    %v4719 = vsub.f32 %v4349, %v4718
    %v4720 = vand.u32 %v4719, 4294901760
    %4721 = vmatpush1.msra.mxu0 %v4720
    %4722 = vmatprep.subr.mxu0 0.0
    %v4723 = vand.u32 %v4348, 4294901760
    %v4724 = vsub.f32 %v4348, %v4723
    %v4725 = vand.u32 %v4724, 4294901760
    %4726 = vmatpush1.msra.mxu0 %v4725
    %4727 = vmatprep.subr.mxu0 0.0
    %v4728 = vand.u32 %v4347, 4294901760
    %v4729 = vsub.f32 %v4347, %v4728
    %v4730 = vand.u32 %v4729, 4294901760
    %4731 = vmatpush1.msra.mxu0 %v4730
    %4732 = vmatprep.subr.mxu0 0.0
    %4733 = vmatpush2.msra.mxu0 0.0
    %4734 = vmatprep.subr.mxu0 0.0
    %4735 = vmatpush2.msra.mxu0 0.0
    %4736 = vmatprep.subr.mxu0 0.0
    %4737 = vmatpush2.msra.mxu0 0.0
    %4738 = vmatprep.subr.mxu0 0.0
    %4739 = vmatpush2.msra.mxu0 0.0
    %4740 = vmatprep.subr.mxu0 0.0
    %4741 = vmatpush2.msra.mxu0 0.0
    %4742 = vmatprep.subr.mxu0 0.0
    %4743 = vmatpush2.msra.mxu0 0.0
    %4744 = vmatprep.subr.mxu0 0.0
    %4745 = vmatpush2.msra.mxu0 0.0
    %4746 = vmatprep.subr.mxu0 0.0
    %4747 = vmatpush2.msra.mxu0 0.0
    %4748 = vmatprep.subr.mxu0 0.0
    %4749 = vmatpush2.msra.mxu0 0.0
    %4750 = vmatprep.subr.mxu0 0.0
    %4751 = vmatpush2.msra.mxu0 0.0
    %4752 = vmatprep.subr.mxu0 0.0
    %4753 = vmatpush2.msra.mxu0 0.0
    %4754 = vmatprep.subr.mxu0 0.0
    %4755 = vmatpush2.msra.mxu0 0.0
    %4756 = vmatprep.subr.mxu0 0.0
    %4757 = vmatpush2.msra.mxu0 0.0
    %4758 = vmatprep.subr.mxu0 0.0
    %4759 = vmatpush2.msra.mxu0 0.0
    %4760 = vmatprep.subr.mxu0 0.0
    %4761 = vmatpush2.msra.mxu0 0.0
    %4762 = vmatprep.subr.mxu0 0.0
    %4763 = vmatpush2.msra.mxu0 0.0
    %4764 = vmatprep.mubr.f32.mxu0 0.0
    %v4765 = vand.u32 %v4356, 4294901760
    %4766 = vmatmul.mubr.f32.gmra.mxu0 %v4765
    %v4767 = vpop.f32.mrf.mxu0
    %v4768 = vadd.f32 %v4685, %v4767
    %v4769 = vpop.f32.mrf.mxu0
    %4770 = vdwg.mxu0
    %4771 = vmatprep.subr.mxu0 0.0
    %4772 = vmatpush1.msra.mxu0 0.0
    %4773 = vmatprep.subr.mxu0 0.0
    %4774 = vmatpush1.msra.mxu0 0.0
    %4775 = vmatprep.subr.mxu0 0.0
    %4776 = vmatpush1.msra.mxu0 0.0
    %4777 = vmatprep.subr.mxu0 0.0
    %4778 = vmatpush1.msra.mxu0 0.0
    %4779 = vmatprep.subr.mxu0 0.0
    %4780 = vmatpush1.msra.mxu0 0.0
    %4781 = vmatprep.subr.mxu0 0.0
    %4782 = vmatpush1.msra.mxu0 0.0
    %4783 = vmatprep.subr.mxu0 0.0
    %4784 = vmatpush1.msra.mxu0 0.0
    %4785 = vmatprep.subr.mxu0 0.0
    %4786 = vmatpush1.msra.mxu0 0.0
    %4787 = vmatprep.subr.mxu0 0.0
    %4788 = vmatpush1.msra.mxu0 0.0
    %4789 = vmatprep.subr.mxu0 0.0
    %4790 = vmatpush1.msra.mxu0 0.0
    %4791 = vmatprep.subr.mxu0 0.0
    %4792 = vmatpush1.msra.mxu0 0.0
    %4793 = vmatprep.subr.mxu0 0.0
    %4794 = vmatpush1.msra.mxu0 0.0
    %4795 = vmatprep.subr.mxu0 0.0
    %v4796 = vand.u32 %v4359, 4294901760
    %4797 = vmatpush1.msra.mxu0 %v4796
    %4798 = vmatprep.subr.mxu0 0.0
    %v4799 = vand.u32 %v4349, 4294901760
    %4800 = vmatpush1.msra.mxu0 %v4799
    %4801 = vmatprep.subr.mxu0 0.0
    %v4802 = vand.u32 %v4348, 4294901760
    %4803 = vmatpush1.msra.mxu0 %v4802
    %4804 = vmatprep.subr.mxu0 0.0
    %v4805 = vand.u32 %v4347, 4294901760
    %4806 = vmatpush1.msra.mxu0 %v4805
    %4807 = vmatprep.subr.mxu0 0.0
    %4808 = vmatpush2.msra.mxu0 0.0
    %4809 = vmatprep.subr.mxu0 0.0
    %4810 = vmatpush2.msra.mxu0 0.0
    %4811 = vmatprep.subr.mxu0 0.0
    %4812 = vmatpush2.msra.mxu0 0.0
    %4813 = vmatprep.subr.mxu0 0.0
    %4814 = vmatpush2.msra.mxu0 0.0
    %4815 = vmatprep.subr.mxu0 0.0
    %4816 = vmatpush2.msra.mxu0 0.0
    %4817 = vmatprep.subr.mxu0 0.0
    %4818 = vmatpush2.msra.mxu0 0.0
    %4819 = vmatprep.subr.mxu0 0.0
    %4820 = vmatpush2.msra.mxu0 0.0
    %4821 = vmatprep.subr.mxu0 0.0
    %4822 = vmatpush2.msra.mxu0 0.0
    %4823 = vmatprep.subr.mxu0 0.0
    %4824 = vmatpush2.msra.mxu0 0.0
    %4825 = vmatprep.subr.mxu0 0.0
    %4826 = vmatpush2.msra.mxu0 0.0
    %4827 = vmatprep.subr.mxu0 0.0
    %4828 = vmatpush2.msra.mxu0 0.0
    %4829 = vmatprep.subr.mxu0 0.0
    %4830 = vmatpush2.msra.mxu0 0.0
    %4831 = vmatprep.subr.mxu0 0.0
    %4832 = vmatpush2.msra.mxu0 0.0
    %4833 = vmatprep.subr.mxu0 0.0
    %4834 = vmatpush2.msra.mxu0 0.0
    %4835 = vmatprep.subr.mxu0 0.0
    %4836 = vmatpush2.msra.mxu0 0.0
    %4837 = vmatprep.subr.mxu0 0.0
    %4838 = vmatpush2.msra.mxu0 0.0
    %4839 = vmatprep.mubr.f32.mxu0 0.0
    %v4840 = vand.u32 %v4356, 4294901760
    %4841 = vmatmul.mubr.f32.gmra.mxu0 %v4840
    %v4842 = vpop.f32.mrf.mxu0
    %v4843 = vadd.f32 %v4768, %v4842
    %v4844 = vpop.f32.mrf.mxu0
    %4845 = vdwg.mxu0
    %v4846 = vmul.f32 %v4843, -0.8888889
    %v4847 = vmul.f32 %v3280, 0.6
    %s4848 = smul.f32 %s3294, 0.2
    %v4849 = vstv %s4848
    %v4850 = vsub.f32 %v4847, %v4849
    %v4851 = vstv %s3302
    %v4852 = vsub.f32 %v4850, %v4851
    %v4853 = vmul.f32 %v4852, %v4852
    %v4854 = vmul.f32 %v4853, 0.5
    %v4855 = vmul.f32 %v4846, 0.45
    %v4856 = vmul.f32 %v4855, %v4846
    %v4857 = vadd.f32 %v4854, %v4856
    %v4858 = vstv %s3286
    %v4859 = vmul.f32 %v4857, %v4858
    %v4860 = vsub.f32 %v3271, %v4859
    %v4861 = vmul.f32 %v4843, %v3304
    %v4862 = vadd.f32 %v4860, %v4861
    %v4863 = vmul.f32 %v3280, 0.5
    %s4864 = smul.f32 %s3298, 0.3
    %v4865 = vstv %s4864
    %v4866 = vadd.f32 %v4863, %v4865
    %v4867 = vmul.f32 %v4846, 0.8
    %v4868 = vadd.f32 %v4866, %v4867
    %v4869 = vmul.f32 %v4868, %v4858
    %v4870 = vadd.f32 %v3280, %v4869
    %v4871 = vadd.f32 %v4870, %v3304
    %s4872 = scalar_lea.vmem [#allocation12], 16
    %4873 = vst.msk [vmem:[%s4872] sm:$0xff] %vm121, %v4871
    %s4874 = scalar_lea.vmem [#allocation13], 16
    %4875 = vst.msk [vmem:[%s4874] sm:$0xff] %vm121, %v4843
    %s4876 = sadd.s32 %s95, 3
    %s4877 = sld [smem:[#allocation2 + %s4876]]
    %s4878 = sshra.s32 %s4876, 7
    %s4879 = sand.u32 %s4876, 127
    %s4880 = sadd.s32 %s4878, 1
    %s4881 = smul.u32 %s4880, 128
    %s4882 = sshra.s32 %s4876, 7
    %s4883 = sand.u32 %s4876, 127
    %s4884 = sadd.s32 %s4881, %s4883
    %s4885 = sld [smem:[#allocation2 + %s4884]]
    %s4886 = sadd.s32 %s4878, 2
    %s4887 = smul.u32 %s4886, 128
    %s4888 = sadd.s32 %s4887, %s4883
    %s4889 = sld [smem:[#allocation2 + %s4888]]
    %s4890 = sadd.s32 %s4878, 3
    %s4891 = smul.u32 %s4890, 128
    %s4892 = sadd.s32 %s4891, %s4883
    %s4893 = sld [smem:[#allocation2 + %s4892]]
    %s4894 = scalar_lea.vmem [#allocation6], 24
    %v4895 = vld [vmem:[%s4894] sm:$0xff]
    %s4896 = scalar_lea.vmem %s5, 48
    %v4897 = vld [vmem:[%s4896] sm:$0xff]
    %v4898 = vld [vmem:[%s4896 + $0x8] sm:$0xff]
    %s4899 = scalar_lea.vmem [#allocation7], 24
    %v4900 = vld [vmem:[%s4899] sm:$0x1]
    %v4901 = vlaneseq
    %v4902 = vshrl.u32 %v4901, 7
    %v4903 = vsub.s32 0, %v4902
    %v4904 = vrot.slane %v4900, %v4903
    %v4906 = vsel %vm121, %v4871, 0
    %4908 = vmatprep.subr.mxu0 0.0
    %4909 = vmatpush1.msra.mxu0 0.0
    %4910 = vmatprep.subr.mxu0 0.0
    %4911 = vmatpush1.msra.mxu0 0.0
    %4912 = vmatprep.subr.mxu0 0.0
    %4913 = vmatpush1.msra.mxu0 0.0
    %4914 = vmatprep.subr.mxu0 0.0
    %4915 = vmatpush1.msra.mxu0 0.0
    %4916 = vmatprep.subr.mxu0 0.0
    %4917 = vmatpush1.msra.mxu0 0.0
    %4918 = vmatprep.subr.mxu0 0.0
    %4919 = vmatpush1.msra.mxu0 0.0
    %4920 = vmatprep.subr.mxu0 0.0
    %4921 = vmatpush1.msra.mxu0 0.0
    %4922 = vmatprep.subr.mxu0 0.0
    %4923 = vmatpush1.msra.mxu0 0.0
    %4924 = vmatprep.subr.mxu0 0.0
    %4925 = vmatpush1.msra.mxu0 0.0
    %4926 = vmatprep.subr.mxu0 0.0
    %4927 = vmatpush1.msra.mxu0 0.0
    %4928 = vmatprep.subr.mxu0 0.0
    %4929 = vmatpush1.msra.mxu0 0.0
    %4930 = vmatprep.subr.mxu0 0.0
    %4931 = vmatpush1.msra.mxu0 0.0
    %4932 = vmatprep.subr.mxu0 0.0
    %4933 = vmatpush1.msra.mxu0 0.0
    %4934 = vmatprep.subr.mxu0 0.0
    %4935 = vmatpush1.msra.mxu0 0.0
    %4936 = vmatprep.subr.mxu0 0.0
    %v4937 = vand.u32 %v4898, 4294901760
    %4938 = vmatpush1.msra.mxu0 %v4937
    %4939 = vmatprep.subr.mxu0 0.0
    %v4940 = vand.u32 %v4897, 4294901760
    %4941 = vmatpush1.msra.mxu0 %v4940
    %4942 = vmatprep.subr.mxu0 0.0
    %4943 = vmatpush2.msra.mxu0 0.0
    %4944 = vmatprep.subr.mxu0 0.0
    %4945 = vmatpush2.msra.mxu0 0.0
    %4946 = vmatprep.subr.mxu0 0.0
    %4947 = vmatpush2.msra.mxu0 0.0
    %4948 = vmatprep.subr.mxu0 0.0
    %4949 = vmatpush2.msra.mxu0 0.0
    %4950 = vmatprep.subr.mxu0 0.0
    %4951 = vmatpush2.msra.mxu0 0.0
    %4952 = vmatprep.subr.mxu0 0.0
    %4953 = vmatpush2.msra.mxu0 0.0
    %4954 = vmatprep.subr.mxu0 0.0
    %4955 = vmatpush2.msra.mxu0 0.0
    %4956 = vmatprep.subr.mxu0 0.0
    %4957 = vmatpush2.msra.mxu0 0.0
    %4958 = vmatprep.subr.mxu0 0.0
    %4959 = vmatpush2.msra.mxu0 0.0
    %4960 = vmatprep.subr.mxu0 0.0
    %4961 = vmatpush2.msra.mxu0 0.0
    %4962 = vmatprep.subr.mxu0 0.0
    %4963 = vmatpush2.msra.mxu0 0.0
    %4964 = vmatprep.subr.mxu0 0.0
    %4965 = vmatpush2.msra.mxu0 0.0
    %4966 = vmatprep.subr.mxu0 0.0
    %4967 = vmatpush2.msra.mxu0 0.0
    %4968 = vmatprep.subr.mxu0 0.0
    %4969 = vmatpush2.msra.mxu0 0.0
    %4970 = vmatprep.subr.mxu0 0.0
    %4971 = vmatpush2.msra.mxu0 0.0
    %4972 = vmatprep.subr.mxu0 0.0
    %4973 = vmatpush2.msra.mxu0 0.0
    %4974 = vmatprep.mubr.f32.mxu0 0.0
    %v4975 = vand.u32 %v4906, 4294901760
    %v4976 = vsub.f32 %v4906, %v4975
    %v4977 = vand.u32 %v4976, 4294901760
    %v4978 = vsub.f32 %v4976, %v4977
    %v4979 = vand.u32 %v4978, 4294901760
    %4980 = vmatmul.mubr.f32.gmra.mxu0 %v4979
    %v4981 = vpop.f32.mrf.mxu0
    %v4982 = vadd.f32 %v4904, %v4981
    %v4983 = vpop.f32.mrf.mxu0
    %4984 = vdwg.mxu0
    %4985 = vmatprep.subr.mxu0 0.0
    %4986 = vmatpush1.msra.mxu0 0.0
    %4987 = vmatprep.subr.mxu0 0.0
    %4988 = vmatpush1.msra.mxu0 0.0
    %4989 = vmatprep.subr.mxu0 0.0
    %4990 = vmatpush1.msra.mxu0 0.0
    %4991 = vmatprep.subr.mxu0 0.0
    %4992 = vmatpush1.msra.mxu0 0.0
    %4993 = vmatprep.subr.mxu0 0.0
    %4994 = vmatpush1.msra.mxu0 0.0
    %4995 = vmatprep.subr.mxu0 0.0
    %4996 = vmatpush1.msra.mxu0 0.0
    %4997 = vmatprep.subr.mxu0 0.0
    %4998 = vmatpush1.msra.mxu0 0.0
    %4999 = vmatprep.subr.mxu0 0.0
    %5000 = vmatpush1.msra.mxu0 0.0
    %5001 = vmatprep.subr.mxu0 0.0
    %5002 = vmatpush1.msra.mxu0 0.0
    %5003 = vmatprep.subr.mxu0 0.0
    %5004 = vmatpush1.msra.mxu0 0.0
    %5005 = vmatprep.subr.mxu0 0.0
    %5006 = vmatpush1.msra.mxu0 0.0
    %5007 = vmatprep.subr.mxu0 0.0
    %5008 = vmatpush1.msra.mxu0 0.0
    %5009 = vmatprep.subr.mxu0 0.0
    %5010 = vmatpush1.msra.mxu0 0.0
    %5011 = vmatprep.subr.mxu0 0.0
    %5012 = vmatpush1.msra.mxu0 0.0
    %5013 = vmatprep.subr.mxu0 0.0
    %v5014 = vand.u32 %v4898, 4294901760
    %v5015 = vsub.f32 %v4898, %v5014
    %v5016 = vand.u32 %v5015, 4294901760
    %v5017 = vsub.f32 %v5015, %v5016
    %v5018 = vand.u32 %v5017, 4294901760
    %5019 = vmatpush1.msra.mxu0 %v5018
    %5020 = vmatprep.subr.mxu0 0.0
    %v5021 = vand.u32 %v4897, 4294901760
    %v5022 = vsub.f32 %v4897, %v5021
    %v5023 = vand.u32 %v5022, 4294901760
    %v5024 = vsub.f32 %v5022, %v5023
    %v5025 = vand.u32 %v5024, 4294901760
    %5026 = vmatpush1.msra.mxu0 %v5025
    %5027 = vmatprep.subr.mxu0 0.0
    %5028 = vmatpush2.msra.mxu0 0.0
    %5029 = vmatprep.subr.mxu0 0.0
    %5030 = vmatpush2.msra.mxu0 0.0
    %5031 = vmatprep.subr.mxu0 0.0
    %5032 = vmatpush2.msra.mxu0 0.0
    %5033 = vmatprep.subr.mxu0 0.0
    %5034 = vmatpush2.msra.mxu0 0.0
    %5035 = vmatprep.subr.mxu0 0.0
    %5036 = vmatpush2.msra.mxu0 0.0
    %5037 = vmatprep.subr.mxu0 0.0
    %5038 = vmatpush2.msra.mxu0 0.0
    %5039 = vmatprep.subr.mxu0 0.0
    %5040 = vmatpush2.msra.mxu0 0.0
    %5041 = vmatprep.subr.mxu0 0.0
    %5042 = vmatpush2.msra.mxu0 0.0
    %5043 = vmatprep.subr.mxu0 0.0
    %5044 = vmatpush2.msra.mxu0 0.0
    %5045 = vmatprep.subr.mxu0 0.0
    %5046 = vmatpush2.msra.mxu0 0.0
    %5047 = vmatprep.subr.mxu0 0.0
    %5048 = vmatpush2.msra.mxu0 0.0
    %5049 = vmatprep.subr.mxu0 0.0
    %5050 = vmatpush2.msra.mxu0 0.0
    %5051 = vmatprep.subr.mxu0 0.0
    %5052 = vmatpush2.msra.mxu0 0.0
    %5053 = vmatprep.subr.mxu0 0.0
    %5054 = vmatpush2.msra.mxu0 0.0
    %5055 = vmatprep.subr.mxu0 0.0
    %5056 = vmatpush2.msra.mxu0 0.0
    %5057 = vmatprep.subr.mxu0 0.0
    %5058 = vmatpush2.msra.mxu0 0.0
    %5059 = vmatprep.mubr.f32.mxu0 0.0
    %v5060 = vand.u32 %v4906, 4294901760
    %5061 = vmatmul.mubr.f32.gmra.mxu0 %v5060
    %v5062 = vpop.f32.mrf.mxu0
    %v5063 = vadd.f32 %v4982, %v5062
    %v5064 = vpop.f32.mrf.mxu0
    %5065 = vdwg.mxu0
    %5066 = vmatprep.subr.mxu0 0.0
    %5067 = vmatpush1.msra.mxu0 0.0
    %5068 = vmatprep.subr.mxu0 0.0
    %5069 = vmatpush1.msra.mxu0 0.0
    %5070 = vmatprep.subr.mxu0 0.0
    %5071 = vmatpush1.msra.mxu0 0.0
    %5072 = vmatprep.subr.mxu0 0.0
    %5073 = vmatpush1.msra.mxu0 0.0
    %5074 = vmatprep.subr.mxu0 0.0
    %5075 = vmatpush1.msra.mxu0 0.0
    %5076 = vmatprep.subr.mxu0 0.0
    %5077 = vmatpush1.msra.mxu0 0.0
    %5078 = vmatprep.subr.mxu0 0.0
    %5079 = vmatpush1.msra.mxu0 0.0
    %5080 = vmatprep.subr.mxu0 0.0
    %5081 = vmatpush1.msra.mxu0 0.0
    %5082 = vmatprep.subr.mxu0 0.0
    %5083 = vmatpush1.msra.mxu0 0.0
    %5084 = vmatprep.subr.mxu0 0.0
    %5085 = vmatpush1.msra.mxu0 0.0
    %5086 = vmatprep.subr.mxu0 0.0
    %5087 = vmatpush1.msra.mxu0 0.0
    %5088 = vmatprep.subr.mxu0 0.0
    %5089 = vmatpush1.msra.mxu0 0.0
    %5090 = vmatprep.subr.mxu0 0.0
    %5091 = vmatpush1.msra.mxu0 0.0
    %5092 = vmatprep.subr.mxu0 0.0
    %5093 = vmatpush1.msra.mxu0 0.0
    %5094 = vmatprep.subr.mxu0 0.0
    %v5095 = vand.u32 %v4898, 4294901760
    %v5096 = vsub.f32 %v4898, %v5095
    %5097 = vmatpush1.msra.mxu0 %v5096
    %5098 = vmatprep.subr.mxu0 0.0
    %v5099 = vand.u32 %v4897, 4294901760
    %v5100 = vsub.f32 %v4897, %v5099
    %5101 = vmatpush1.msra.mxu0 %v5100
    %5102 = vmatprep.subr.mxu0 0.0
    %5103 = vmatpush2.msra.mxu0 0.0
    %5104 = vmatprep.subr.mxu0 0.0
    %5105 = vmatpush2.msra.mxu0 0.0
    %5106 = vmatprep.subr.mxu0 0.0
    %5107 = vmatpush2.msra.mxu0 0.0
    %5108 = vmatprep.subr.mxu0 0.0
    %5109 = vmatpush2.msra.mxu0 0.0
    %5110 = vmatprep.subr.mxu0 0.0
    %5111 = vmatpush2.msra.mxu0 0.0
    %5112 = vmatprep.subr.mxu0 0.0
    %5113 = vmatpush2.msra.mxu0 0.0
    %5114 = vmatprep.subr.mxu0 0.0
    %5115 = vmatpush2.msra.mxu0 0.0
    %5116 = vmatprep.subr.mxu0 0.0
    %5117 = vmatpush2.msra.mxu0 0.0
    %5118 = vmatprep.subr.mxu0 0.0
    %5119 = vmatpush2.msra.mxu0 0.0
    %5120 = vmatprep.subr.mxu0 0.0
    %5121 = vmatpush2.msra.mxu0 0.0
    %5122 = vmatprep.subr.mxu0 0.0
    %5123 = vmatpush2.msra.mxu0 0.0
    %5124 = vmatprep.subr.mxu0 0.0
    %5125 = vmatpush2.msra.mxu0 0.0
    %5126 = vmatprep.subr.mxu0 0.0
    %5127 = vmatpush2.msra.mxu0 0.0
    %5128 = vmatprep.subr.mxu0 0.0
    %5129 = vmatpush2.msra.mxu0 0.0
    %5130 = vmatprep.subr.mxu0 0.0
    %5131 = vmatpush2.msra.mxu0 0.0
    %5132 = vmatprep.subr.mxu0 0.0
    %5133 = vmatpush2.msra.mxu0 0.0
    %5134 = vmatprep.mubr.f32.mxu0 0.0
    %v5135 = vand.u32 %v4906, 4294901760
    %v5136 = vsub.f32 %v4906, %v5135
    %5137 = vmatmul.mubr.f32.gmra.mxu0 %v5136
    %v5138 = vpop.f32.mrf.mxu0
    %v5139 = vadd.f32 %v5063, %v5138
    %v5140 = vpop.f32.mrf.mxu0
    %5141 = vdwg.mxu0
    %5142 = vmatprep.subr.mxu0 0.0
    %5143 = vmatpush1.msra.mxu0 0.0
    %5144 = vmatprep.subr.mxu0 0.0
    %5145 = vmatpush1.msra.mxu0 0.0
    %5146 = vmatprep.subr.mxu0 0.0
    %5147 = vmatpush1.msra.mxu0 0.0
    %5148 = vmatprep.subr.mxu0 0.0
    %5149 = vmatpush1.msra.mxu0 0.0
    %5150 = vmatprep.subr.mxu0 0.0
    %5151 = vmatpush1.msra.mxu0 0.0
    %5152 = vmatprep.subr.mxu0 0.0
    %5153 = vmatpush1.msra.mxu0 0.0
    %5154 = vmatprep.subr.mxu0 0.0
    %5155 = vmatpush1.msra.mxu0 0.0
    %5156 = vmatprep.subr.mxu0 0.0
    %5157 = vmatpush1.msra.mxu0 0.0
    %5158 = vmatprep.subr.mxu0 0.0
    %5159 = vmatpush1.msra.mxu0 0.0
    %5160 = vmatprep.subr.mxu0 0.0
    %5161 = vmatpush1.msra.mxu0 0.0
    %5162 = vmatprep.subr.mxu0 0.0
    %5163 = vmatpush1.msra.mxu0 0.0
    %5164 = vmatprep.subr.mxu0 0.0
    %5165 = vmatpush1.msra.mxu0 0.0
    %5166 = vmatprep.subr.mxu0 0.0
    %5167 = vmatpush1.msra.mxu0 0.0
    %5168 = vmatprep.subr.mxu0 0.0
    %5169 = vmatpush1.msra.mxu0 0.0
    %5170 = vmatprep.subr.mxu0 0.0
    %v5171 = vand.u32 %v4898, 4294901760
    %5172 = vmatpush1.msra.mxu0 %v5171
    %5173 = vmatprep.subr.mxu0 0.0
    %v5174 = vand.u32 %v4897, 4294901760
    %5175 = vmatpush1.msra.mxu0 %v5174
    %5176 = vmatprep.subr.mxu0 0.0
    %5177 = vmatpush2.msra.mxu0 0.0
    %5178 = vmatprep.subr.mxu0 0.0
    %5179 = vmatpush2.msra.mxu0 0.0
    %5180 = vmatprep.subr.mxu0 0.0
    %5181 = vmatpush2.msra.mxu0 0.0
    %5182 = vmatprep.subr.mxu0 0.0
    %5183 = vmatpush2.msra.mxu0 0.0
    %5184 = vmatprep.subr.mxu0 0.0
    %5185 = vmatpush2.msra.mxu0 0.0
    %5186 = vmatprep.subr.mxu0 0.0
    %5187 = vmatpush2.msra.mxu0 0.0
    %5188 = vmatprep.subr.mxu0 0.0
    %5189 = vmatpush2.msra.mxu0 0.0
    %5190 = vmatprep.subr.mxu0 0.0
    %5191 = vmatpush2.msra.mxu0 0.0
    %5192 = vmatprep.subr.mxu0 0.0
    %5193 = vmatpush2.msra.mxu0 0.0
    %5194 = vmatprep.subr.mxu0 0.0
    %5195 = vmatpush2.msra.mxu0 0.0
    %5196 = vmatprep.subr.mxu0 0.0
    %5197 = vmatpush2.msra.mxu0 0.0
    %5198 = vmatprep.subr.mxu0 0.0
    %5199 = vmatpush2.msra.mxu0 0.0
    %5200 = vmatprep.subr.mxu0 0.0
    %5201 = vmatpush2.msra.mxu0 0.0
    %5202 = vmatprep.subr.mxu0 0.0
    %5203 = vmatpush2.msra.mxu0 0.0
    %5204 = vmatprep.subr.mxu0 0.0
    %5205 = vmatpush2.msra.mxu0 0.0
    %5206 = vmatprep.subr.mxu0 0.0
    %5207 = vmatpush2.msra.mxu0 0.0
    %5208 = vmatprep.mubr.f32.mxu0 0.0
    %v5209 = vand.u32 %v4906, 4294901760
    %v5210 = vsub.f32 %v4906, %v5209
    %v5211 = vand.u32 %v5210, 4294901760
    %5212 = vmatmul.mubr.f32.gmra.mxu0 %v5211
    %v5213 = vpop.f32.mrf.mxu0
    %v5214 = vadd.f32 %v5139, %v5213
    %v5215 = vpop.f32.mrf.mxu0
    %5216 = vdwg.mxu0
    %5217 = vmatprep.subr.mxu0 0.0
    %5218 = vmatpush1.msra.mxu0 0.0
    %5219 = vmatprep.subr.mxu0 0.0
    %5220 = vmatpush1.msra.mxu0 0.0
    %5221 = vmatprep.subr.mxu0 0.0
    %5222 = vmatpush1.msra.mxu0 0.0
    %5223 = vmatprep.subr.mxu0 0.0
    %5224 = vmatpush1.msra.mxu0 0.0
    %5225 = vmatprep.subr.mxu0 0.0
    %5226 = vmatpush1.msra.mxu0 0.0
    %5227 = vmatprep.subr.mxu0 0.0
    %5228 = vmatpush1.msra.mxu0 0.0
    %5229 = vmatprep.subr.mxu0 0.0
    %5230 = vmatpush1.msra.mxu0 0.0
    %5231 = vmatprep.subr.mxu0 0.0
    %5232 = vmatpush1.msra.mxu0 0.0
    %5233 = vmatprep.subr.mxu0 0.0
    %5234 = vmatpush1.msra.mxu0 0.0
    %5235 = vmatprep.subr.mxu0 0.0
    %5236 = vmatpush1.msra.mxu0 0.0
    %5237 = vmatprep.subr.mxu0 0.0
    %5238 = vmatpush1.msra.mxu0 0.0
    %5239 = vmatprep.subr.mxu0 0.0
    %5240 = vmatpush1.msra.mxu0 0.0
    %5241 = vmatprep.subr.mxu0 0.0
    %5242 = vmatpush1.msra.mxu0 0.0
    %5243 = vmatprep.subr.mxu0 0.0
    %5244 = vmatpush1.msra.mxu0 0.0
    %5245 = vmatprep.subr.mxu0 0.0
    %v5246 = vand.u32 %v4898, 4294901760
    %v5247 = vsub.f32 %v4898, %v5246
    %v5248 = vand.u32 %v5247, 4294901760
    %5249 = vmatpush1.msra.mxu0 %v5248
    %5250 = vmatprep.subr.mxu0 0.0
    %v5251 = vand.u32 %v4897, 4294901760
    %v5252 = vsub.f32 %v4897, %v5251
    %v5253 = vand.u32 %v5252, 4294901760
    %5254 = vmatpush1.msra.mxu0 %v5253
    %5255 = vmatprep.subr.mxu0 0.0
    %5256 = vmatpush2.msra.mxu0 0.0
    %5257 = vmatprep.subr.mxu0 0.0
    %5258 = vmatpush2.msra.mxu0 0.0
    %5259 = vmatprep.subr.mxu0 0.0
    %5260 = vmatpush2.msra.mxu0 0.0
    %5261 = vmatprep.subr.mxu0 0.0
    %5262 = vmatpush2.msra.mxu0 0.0
    %5263 = vmatprep.subr.mxu0 0.0
    %5264 = vmatpush2.msra.mxu0 0.0
    %5265 = vmatprep.subr.mxu0 0.0
    %5266 = vmatpush2.msra.mxu0 0.0
    %5267 = vmatprep.subr.mxu0 0.0
    %5268 = vmatpush2.msra.mxu0 0.0
    %5269 = vmatprep.subr.mxu0 0.0
    %5270 = vmatpush2.msra.mxu0 0.0
    %5271 = vmatprep.subr.mxu0 0.0
    %5272 = vmatpush2.msra.mxu0 0.0
    %5273 = vmatprep.subr.mxu0 0.0
    %5274 = vmatpush2.msra.mxu0 0.0
    %5275 = vmatprep.subr.mxu0 0.0
    %5276 = vmatpush2.msra.mxu0 0.0
    %5277 = vmatprep.subr.mxu0 0.0
    %5278 = vmatpush2.msra.mxu0 0.0
    %5279 = vmatprep.subr.mxu0 0.0
    %5280 = vmatpush2.msra.mxu0 0.0
    %5281 = vmatprep.subr.mxu0 0.0
    %5282 = vmatpush2.msra.mxu0 0.0
    %5283 = vmatprep.subr.mxu0 0.0
    %5284 = vmatpush2.msra.mxu0 0.0
    %5285 = vmatprep.subr.mxu0 0.0
    %5286 = vmatpush2.msra.mxu0 0.0
    %5287 = vmatprep.mubr.f32.mxu0 0.0
    %v5288 = vand.u32 %v4906, 4294901760
    %5289 = vmatmul.mubr.f32.gmra.mxu0 %v5288
    %v5290 = vpop.f32.mrf.mxu0
    %v5291 = vadd.f32 %v5214, %v5290
    %v5292 = vpop.f32.mrf.mxu0
    %5293 = vdwg.mxu0
    %5294 = vmatprep.subr.mxu0 0.0
    %5295 = vmatpush1.msra.mxu0 0.0
    %5296 = vmatprep.subr.mxu0 0.0
    %5297 = vmatpush1.msra.mxu0 0.0
    %5298 = vmatprep.subr.mxu0 0.0
    %5299 = vmatpush1.msra.mxu0 0.0
    %5300 = vmatprep.subr.mxu0 0.0
    %5301 = vmatpush1.msra.mxu0 0.0
    %5302 = vmatprep.subr.mxu0 0.0
    %5303 = vmatpush1.msra.mxu0 0.0
    %5304 = vmatprep.subr.mxu0 0.0
    %5305 = vmatpush1.msra.mxu0 0.0
    %5306 = vmatprep.subr.mxu0 0.0
    %5307 = vmatpush1.msra.mxu0 0.0
    %5308 = vmatprep.subr.mxu0 0.0
    %5309 = vmatpush1.msra.mxu0 0.0
    %5310 = vmatprep.subr.mxu0 0.0
    %5311 = vmatpush1.msra.mxu0 0.0
    %5312 = vmatprep.subr.mxu0 0.0
    %5313 = vmatpush1.msra.mxu0 0.0
    %5314 = vmatprep.subr.mxu0 0.0
    %5315 = vmatpush1.msra.mxu0 0.0
    %5316 = vmatprep.subr.mxu0 0.0
    %5317 = vmatpush1.msra.mxu0 0.0
    %5318 = vmatprep.subr.mxu0 0.0
    %5319 = vmatpush1.msra.mxu0 0.0
    %5320 = vmatprep.subr.mxu0 0.0
    %5321 = vmatpush1.msra.mxu0 0.0
    %5322 = vmatprep.subr.mxu0 0.0
    %v5323 = vand.u32 %v4898, 4294901760
    %5324 = vmatpush1.msra.mxu0 %v5323
    %5325 = vmatprep.subr.mxu0 0.0
    %v5326 = vand.u32 %v4897, 4294901760
    %5327 = vmatpush1.msra.mxu0 %v5326
    %5328 = vmatprep.subr.mxu0 0.0
    %5329 = vmatpush2.msra.mxu0 0.0
    %5330 = vmatprep.subr.mxu0 0.0
    %5331 = vmatpush2.msra.mxu0 0.0
    %5332 = vmatprep.subr.mxu0 0.0
    %5333 = vmatpush2.msra.mxu0 0.0
    %5334 = vmatprep.subr.mxu0 0.0
    %5335 = vmatpush2.msra.mxu0 0.0
    %5336 = vmatprep.subr.mxu0 0.0
    %5337 = vmatpush2.msra.mxu0 0.0
    %5338 = vmatprep.subr.mxu0 0.0
    %5339 = vmatpush2.msra.mxu0 0.0
    %5340 = vmatprep.subr.mxu0 0.0
    %5341 = vmatpush2.msra.mxu0 0.0
    %5342 = vmatprep.subr.mxu0 0.0
    %5343 = vmatpush2.msra.mxu0 0.0
    %5344 = vmatprep.subr.mxu0 0.0
    %5345 = vmatpush2.msra.mxu0 0.0
    %5346 = vmatprep.subr.mxu0 0.0
    %5347 = vmatpush2.msra.mxu0 0.0
    %5348 = vmatprep.subr.mxu0 0.0
    %5349 = vmatpush2.msra.mxu0 0.0
    %5350 = vmatprep.subr.mxu0 0.0
    %5351 = vmatpush2.msra.mxu0 0.0
    %5352 = vmatprep.subr.mxu0 0.0
    %5353 = vmatpush2.msra.mxu0 0.0
    %5354 = vmatprep.subr.mxu0 0.0
    %5355 = vmatpush2.msra.mxu0 0.0
    %5356 = vmatprep.subr.mxu0 0.0
    %5357 = vmatpush2.msra.mxu0 0.0
    %5358 = vmatprep.subr.mxu0 0.0
    %5359 = vmatpush2.msra.mxu0 0.0
    %5360 = vmatprep.mubr.f32.mxu0 0.0
    %v5361 = vand.u32 %v4906, 4294901760
    %5362 = vmatmul.mubr.f32.gmra.mxu0 %v5361
    %v5363 = vpop.f32.mrf.mxu0
    %v5364 = vadd.f32 %v5291, %v5363
    %v5365 = vpop.f32.mrf.mxu0
    %5366 = vdwg.mxu0
    %v5367 = vsel %vm584, %v5364, 0.0
    %v5368 = vrot.slane %v5367, 4
    %v5369 = vadd.f32 %v5367, %v5368
    %v5370 = vrot.slane %v5369, 2
    %v5371 = vadd.f32 %v5369, %v5370
    %v5372 = vrot.slane %v5371, 1
    %v5373 = vadd.f32 %v5371, %v5372
    %v5374 = vmul.f32 %v5373, %v592
    %v5375 = vsub.f32 %v5364, %v5374
    %v5376 = vmul.f32 %v5375, %v5375
    %v5377 = vsel %vm584, %v5376, 0.0
    %v5378 = vrot.slane %v5377, 4
    %v5379 = vadd.f32 %v5377, %v5378
    %v5380 = vrot.slane %v5379, 2
    %v5381 = vadd.f32 %v5379, %v5380
    %v5382 = vrot.slane %v5381, 1
    %v5383 = vadd.f32 %v5381, %v5382
    %v5384 = vmul.f32 %v5383, %v592
    %v5385 = vadd.f32 %v5384, 1e-05
    %v5386 = vrsqrt.pop %v5385
    %v5387 = vmul.f32 %v5375, %v5386
    %v5388 = vld [vmem:[%s4899 + $0x1] sm:$0x1]
    %v5389 = vlaneseq
    %v5390 = vshrl.u32 %v5389, 7
    %v5391 = vsub.s32 0, %v5390
    %v5392 = vrot.slane %v5388, %v5391
    %v5393 = vmul.f32 %v5387, %v5392
    %v5394 = vld [vmem:[%s4899 + $0x2] sm:$0x1]
    %v5395 = vlaneseq
    %v5396 = vshrl.u32 %v5395, 7
    %v5397 = vsub.s32 0, %v5396
    %v5398 = vrot.slane %v5394, %v5397
    %v5399 = vadd.f32 %v5393, %v5398
    %v5400 = vmax.f32 %v5399, 0.0
    %s5401 = scalar_lea.vmem %s6, 96
    %v5402 = vld [vmem:[%s5401] sm:$0xff]
    %v5403 = vld [vmem:[%s5401 + $0x8] sm:$0xff]
    %v5404 = vld [vmem:[%s5401 + $0x10] sm:$0xff]
    %v5405 = vld [vmem:[%s5401 + $0x18] sm:$0x3]
    %v5406 = vld [vmem:[%s4899 + $0x3] sm:$0x1]
    %v5407 = vlaneseq
    %v5408 = vshrl.u32 %v5407, 7
    %v5409 = vsub.s32 0, %v5408
    %v5410 = vrot.slane %v5406, %v5409
    %v5412 = vsel %vm584, %v5400, 0
    %v5415 = vsel %vm632, %v5405, 0
    %5417 = vmatprep.subr.mxu0 0.0
    %5418 = vmatpush1.msra.mxu0 0.0
    %5419 = vmatprep.subr.mxu0 0.0
    %5420 = vmatpush1.msra.mxu0 0.0
    %5421 = vmatprep.subr.mxu0 0.0
    %5422 = vmatpush1.msra.mxu0 0.0
    %5423 = vmatprep.subr.mxu0 0.0
    %5424 = vmatpush1.msra.mxu0 0.0
    %5425 = vmatprep.subr.mxu0 0.0
    %5426 = vmatpush1.msra.mxu0 0.0
    %5427 = vmatprep.subr.mxu0 0.0
    %5428 = vmatpush1.msra.mxu0 0.0
    %5429 = vmatprep.subr.mxu0 0.0
    %5430 = vmatpush1.msra.mxu0 0.0
    %5431 = vmatprep.subr.mxu0 0.0
    %5432 = vmatpush1.msra.mxu0 0.0
    %5433 = vmatprep.subr.mxu0 0.0
    %5434 = vmatpush1.msra.mxu0 0.0
    %5435 = vmatprep.subr.mxu0 0.0
    %5436 = vmatpush1.msra.mxu0 0.0
    %5437 = vmatprep.subr.mxu0 0.0
    %5438 = vmatpush1.msra.mxu0 0.0
    %5439 = vmatprep.subr.mxu0 0.0
    %5440 = vmatpush1.msra.mxu0 0.0
    %5441 = vmatprep.subr.mxu0 0.0
    %v5442 = vand.u32 %v5415, 4294901760
    %5443 = vmatpush1.msra.mxu0 %v5442
    %5444 = vmatprep.subr.mxu0 0.0
    %v5445 = vand.u32 %v5404, 4294901760
    %5446 = vmatpush1.msra.mxu0 %v5445
    %5447 = vmatprep.subr.mxu0 0.0
    %v5448 = vand.u32 %v5403, 4294901760
    %5449 = vmatpush1.msra.mxu0 %v5448
    %5450 = vmatprep.subr.mxu0 0.0
    %v5451 = vand.u32 %v5402, 4294901760
    %5452 = vmatpush1.msra.mxu0 %v5451
    %5453 = vmatprep.subr.mxu0 0.0
    %5454 = vmatpush2.msra.mxu0 0.0
    %5455 = vmatprep.subr.mxu0 0.0
    %5456 = vmatpush2.msra.mxu0 0.0
    %5457 = vmatprep.subr.mxu0 0.0
    %5458 = vmatpush2.msra.mxu0 0.0
    %5459 = vmatprep.subr.mxu0 0.0
    %5460 = vmatpush2.msra.mxu0 0.0
    %5461 = vmatprep.subr.mxu0 0.0
    %5462 = vmatpush2.msra.mxu0 0.0
    %5463 = vmatprep.subr.mxu0 0.0
    %5464 = vmatpush2.msra.mxu0 0.0
    %5465 = vmatprep.subr.mxu0 0.0
    %5466 = vmatpush2.msra.mxu0 0.0
    %5467 = vmatprep.subr.mxu0 0.0
    %5468 = vmatpush2.msra.mxu0 0.0
    %5469 = vmatprep.subr.mxu0 0.0
    %5470 = vmatpush2.msra.mxu0 0.0
    %5471 = vmatprep.subr.mxu0 0.0
    %5472 = vmatpush2.msra.mxu0 0.0
    %5473 = vmatprep.subr.mxu0 0.0
    %5474 = vmatpush2.msra.mxu0 0.0
    %5475 = vmatprep.subr.mxu0 0.0
    %5476 = vmatpush2.msra.mxu0 0.0
    %5477 = vmatprep.subr.mxu0 0.0
    %5478 = vmatpush2.msra.mxu0 0.0
    %5479 = vmatprep.subr.mxu0 0.0
    %5480 = vmatpush2.msra.mxu0 0.0
    %5481 = vmatprep.subr.mxu0 0.0
    %5482 = vmatpush2.msra.mxu0 0.0
    %5483 = vmatprep.subr.mxu0 0.0
    %5484 = vmatpush2.msra.mxu0 0.0
    %5485 = vmatprep.mubr.f32.mxu0 0.0
    %v5486 = vand.u32 %v5412, 4294901760
    %v5487 = vsub.f32 %v5412, %v5486
    %v5488 = vand.u32 %v5487, 4294901760
    %v5489 = vsub.f32 %v5487, %v5488
    %v5490 = vand.u32 %v5489, 4294901760
    %5491 = vmatmul.mubr.f32.gmra.mxu0 %v5490
    %v5492 = vpop.f32.mrf.mxu0
    %v5493 = vadd.f32 %v5410, %v5492
    %v5494 = vpop.f32.mrf.mxu0
    %5495 = vdwg.mxu0
    %5496 = vmatprep.subr.mxu0 0.0
    %5497 = vmatpush1.msra.mxu0 0.0
    %5498 = vmatprep.subr.mxu0 0.0
    %5499 = vmatpush1.msra.mxu0 0.0
    %5500 = vmatprep.subr.mxu0 0.0
    %5501 = vmatpush1.msra.mxu0 0.0
    %5502 = vmatprep.subr.mxu0 0.0
    %5503 = vmatpush1.msra.mxu0 0.0
    %5504 = vmatprep.subr.mxu0 0.0
    %5505 = vmatpush1.msra.mxu0 0.0
    %5506 = vmatprep.subr.mxu0 0.0
    %5507 = vmatpush1.msra.mxu0 0.0
    %5508 = vmatprep.subr.mxu0 0.0
    %5509 = vmatpush1.msra.mxu0 0.0
    %5510 = vmatprep.subr.mxu0 0.0
    %5511 = vmatpush1.msra.mxu0 0.0
    %5512 = vmatprep.subr.mxu0 0.0
    %5513 = vmatpush1.msra.mxu0 0.0
    %5514 = vmatprep.subr.mxu0 0.0
    %5515 = vmatpush1.msra.mxu0 0.0
    %5516 = vmatprep.subr.mxu0 0.0
    %5517 = vmatpush1.msra.mxu0 0.0
    %5518 = vmatprep.subr.mxu0 0.0
    %5519 = vmatpush1.msra.mxu0 0.0
    %5520 = vmatprep.subr.mxu0 0.0
    %v5521 = vand.u32 %v5415, 4294901760
    %v5522 = vsub.f32 %v5415, %v5521
    %v5523 = vand.u32 %v5522, 4294901760
    %v5524 = vsub.f32 %v5522, %v5523
    %v5525 = vand.u32 %v5524, 4294901760
    %5526 = vmatpush1.msra.mxu0 %v5525
    %5527 = vmatprep.subr.mxu0 0.0
    %v5528 = vand.u32 %v5404, 4294901760
    %v5529 = vsub.f32 %v5404, %v5528
    %v5530 = vand.u32 %v5529, 4294901760
    %v5531 = vsub.f32 %v5529, %v5530
    %v5532 = vand.u32 %v5531, 4294901760
    %5533 = vmatpush1.msra.mxu0 %v5532
    %5534 = vmatprep.subr.mxu0 0.0
    %v5535 = vand.u32 %v5403, 4294901760
    %v5536 = vsub.f32 %v5403, %v5535
    %v5537 = vand.u32 %v5536, 4294901760
    %v5538 = vsub.f32 %v5536, %v5537
    %v5539 = vand.u32 %v5538, 4294901760
    %5540 = vmatpush1.msra.mxu0 %v5539
    %5541 = vmatprep.subr.mxu0 0.0
    %v5542 = vand.u32 %v5402, 4294901760
    %v5543 = vsub.f32 %v5402, %v5542
    %v5544 = vand.u32 %v5543, 4294901760
    %v5545 = vsub.f32 %v5543, %v5544
    %v5546 = vand.u32 %v5545, 4294901760
    %5547 = vmatpush1.msra.mxu0 %v5546
    %5548 = vmatprep.subr.mxu0 0.0
    %5549 = vmatpush2.msra.mxu0 0.0
    %5550 = vmatprep.subr.mxu0 0.0
    %5551 = vmatpush2.msra.mxu0 0.0
    %5552 = vmatprep.subr.mxu0 0.0
    %5553 = vmatpush2.msra.mxu0 0.0
    %5554 = vmatprep.subr.mxu0 0.0
    %5555 = vmatpush2.msra.mxu0 0.0
    %5556 = vmatprep.subr.mxu0 0.0
    %5557 = vmatpush2.msra.mxu0 0.0
    %5558 = vmatprep.subr.mxu0 0.0
    %5559 = vmatpush2.msra.mxu0 0.0
    %5560 = vmatprep.subr.mxu0 0.0
    %5561 = vmatpush2.msra.mxu0 0.0
    %5562 = vmatprep.subr.mxu0 0.0
    %5563 = vmatpush2.msra.mxu0 0.0
    %5564 = vmatprep.subr.mxu0 0.0
    %5565 = vmatpush2.msra.mxu0 0.0
    %5566 = vmatprep.subr.mxu0 0.0
    %5567 = vmatpush2.msra.mxu0 0.0
    %5568 = vmatprep.subr.mxu0 0.0
    %5569 = vmatpush2.msra.mxu0 0.0
    %5570 = vmatprep.subr.mxu0 0.0
    %5571 = vmatpush2.msra.mxu0 0.0
    %5572 = vmatprep.subr.mxu0 0.0
    %5573 = vmatpush2.msra.mxu0 0.0
    %5574 = vmatprep.subr.mxu0 0.0
    %5575 = vmatpush2.msra.mxu0 0.0
    %5576 = vmatprep.subr.mxu0 0.0
    %5577 = vmatpush2.msra.mxu0 0.0
    %5578 = vmatprep.subr.mxu0 0.0
    %5579 = vmatpush2.msra.mxu0 0.0
    %5580 = vmatprep.mubr.f32.mxu0 0.0
    %v5581 = vand.u32 %v5412, 4294901760
    %5582 = vmatmul.mubr.f32.gmra.mxu0 %v5581
    %v5583 = vpop.f32.mrf.mxu0
    %v5584 = vadd.f32 %v5493, %v5583
    %v5585 = vpop.f32.mrf.mxu0
    %5586 = vdwg.mxu0
    %5587 = vmatprep.subr.mxu0 0.0
    %5588 = vmatpush1.msra.mxu0 0.0
    %5589 = vmatprep.subr.mxu0 0.0
    %5590 = vmatpush1.msra.mxu0 0.0
    %5591 = vmatprep.subr.mxu0 0.0
    %5592 = vmatpush1.msra.mxu0 0.0
    %5593 = vmatprep.subr.mxu0 0.0
    %5594 = vmatpush1.msra.mxu0 0.0
    %5595 = vmatprep.subr.mxu0 0.0
    %5596 = vmatpush1.msra.mxu0 0.0
    %5597 = vmatprep.subr.mxu0 0.0
    %5598 = vmatpush1.msra.mxu0 0.0
    %5599 = vmatprep.subr.mxu0 0.0
    %5600 = vmatpush1.msra.mxu0 0.0
    %5601 = vmatprep.subr.mxu0 0.0
    %5602 = vmatpush1.msra.mxu0 0.0
    %5603 = vmatprep.subr.mxu0 0.0
    %5604 = vmatpush1.msra.mxu0 0.0
    %5605 = vmatprep.subr.mxu0 0.0
    %5606 = vmatpush1.msra.mxu0 0.0
    %5607 = vmatprep.subr.mxu0 0.0
    %5608 = vmatpush1.msra.mxu0 0.0
    %5609 = vmatprep.subr.mxu0 0.0
    %5610 = vmatpush1.msra.mxu0 0.0
    %5611 = vmatprep.subr.mxu0 0.0
    %v5612 = vand.u32 %v5415, 4294901760
    %v5613 = vsub.f32 %v5415, %v5612
    %5614 = vmatpush1.msra.mxu0 %v5613
    %5615 = vmatprep.subr.mxu0 0.0
    %v5616 = vand.u32 %v5404, 4294901760
    %v5617 = vsub.f32 %v5404, %v5616
    %5618 = vmatpush1.msra.mxu0 %v5617
    %5619 = vmatprep.subr.mxu0 0.0
    %v5620 = vand.u32 %v5403, 4294901760
    %v5621 = vsub.f32 %v5403, %v5620
    %5622 = vmatpush1.msra.mxu0 %v5621
    %5623 = vmatprep.subr.mxu0 0.0
    %v5624 = vand.u32 %v5402, 4294901760
    %v5625 = vsub.f32 %v5402, %v5624
    %5626 = vmatpush1.msra.mxu0 %v5625
    %5627 = vmatprep.subr.mxu0 0.0
    %5628 = vmatpush2.msra.mxu0 0.0
    %5629 = vmatprep.subr.mxu0 0.0
    %5630 = vmatpush2.msra.mxu0 0.0
    %5631 = vmatprep.subr.mxu0 0.0
    %5632 = vmatpush2.msra.mxu0 0.0
    %5633 = vmatprep.subr.mxu0 0.0
    %5634 = vmatpush2.msra.mxu0 0.0
    %5635 = vmatprep.subr.mxu0 0.0
    %5636 = vmatpush2.msra.mxu0 0.0
    %5637 = vmatprep.subr.mxu0 0.0
    %5638 = vmatpush2.msra.mxu0 0.0
    %5639 = vmatprep.subr.mxu0 0.0
    %5640 = vmatpush2.msra.mxu0 0.0
    %5641 = vmatprep.subr.mxu0 0.0
    %5642 = vmatpush2.msra.mxu0 0.0
    %5643 = vmatprep.subr.mxu0 0.0
    %5644 = vmatpush2.msra.mxu0 0.0
    %5645 = vmatprep.subr.mxu0 0.0
    %5646 = vmatpush2.msra.mxu0 0.0
    %5647 = vmatprep.subr.mxu0 0.0
    %5648 = vmatpush2.msra.mxu0 0.0
    %5649 = vmatprep.subr.mxu0 0.0
    %5650 = vmatpush2.msra.mxu0 0.0
    %5651 = vmatprep.subr.mxu0 0.0
    %5652 = vmatpush2.msra.mxu0 0.0
    %5653 = vmatprep.subr.mxu0 0.0
    %5654 = vmatpush2.msra.mxu0 0.0
    %5655 = vmatprep.subr.mxu0 0.0
    %5656 = vmatpush2.msra.mxu0 0.0
    %5657 = vmatprep.subr.mxu0 0.0
    %5658 = vmatpush2.msra.mxu0 0.0
    %5659 = vmatprep.mubr.f32.mxu0 0.0
    %v5660 = vand.u32 %v5412, 4294901760
    %v5661 = vsub.f32 %v5412, %v5660
    %5662 = vmatmul.mubr.f32.gmra.mxu0 %v5661
    %v5663 = vpop.f32.mrf.mxu0
    %v5664 = vadd.f32 %v5584, %v5663
    %v5665 = vpop.f32.mrf.mxu0
    %5666 = vdwg.mxu0
    %5667 = vmatprep.subr.mxu0 0.0
    %5668 = vmatpush1.msra.mxu0 0.0
    %5669 = vmatprep.subr.mxu0 0.0
    %5670 = vmatpush1.msra.mxu0 0.0
    %5671 = vmatprep.subr.mxu0 0.0
    %5672 = vmatpush1.msra.mxu0 0.0
    %5673 = vmatprep.subr.mxu0 0.0
    %5674 = vmatpush1.msra.mxu0 0.0
    %5675 = vmatprep.subr.mxu0 0.0
    %5676 = vmatpush1.msra.mxu0 0.0
    %5677 = vmatprep.subr.mxu0 0.0
    %5678 = vmatpush1.msra.mxu0 0.0
    %5679 = vmatprep.subr.mxu0 0.0
    %5680 = vmatpush1.msra.mxu0 0.0
    %5681 = vmatprep.subr.mxu0 0.0
    %5682 = vmatpush1.msra.mxu0 0.0
    %5683 = vmatprep.subr.mxu0 0.0
    %5684 = vmatpush1.msra.mxu0 0.0
    %5685 = vmatprep.subr.mxu0 0.0
    %5686 = vmatpush1.msra.mxu0 0.0
    %5687 = vmatprep.subr.mxu0 0.0
    %5688 = vmatpush1.msra.mxu0 0.0
    %5689 = vmatprep.subr.mxu0 0.0
    %5690 = vmatpush1.msra.mxu0 0.0
    %5691 = vmatprep.subr.mxu0 0.0
    %v5692 = vand.u32 %v5415, 4294901760
    %5693 = vmatpush1.msra.mxu0 %v5692
    %5694 = vmatprep.subr.mxu0 0.0
    %v5695 = vand.u32 %v5404, 4294901760
    %5696 = vmatpush1.msra.mxu0 %v5695
    %5697 = vmatprep.subr.mxu0 0.0
    %v5698 = vand.u32 %v5403, 4294901760
    %5699 = vmatpush1.msra.mxu0 %v5698
    %5700 = vmatprep.subr.mxu0 0.0
    %v5701 = vand.u32 %v5402, 4294901760
    %5702 = vmatpush1.msra.mxu0 %v5701
    %5703 = vmatprep.subr.mxu0 0.0
    %5704 = vmatpush2.msra.mxu0 0.0
    %5705 = vmatprep.subr.mxu0 0.0
    %5706 = vmatpush2.msra.mxu0 0.0
    %5707 = vmatprep.subr.mxu0 0.0
    %5708 = vmatpush2.msra.mxu0 0.0
    %5709 = vmatprep.subr.mxu0 0.0
    %5710 = vmatpush2.msra.mxu0 0.0
    %5711 = vmatprep.subr.mxu0 0.0
    %5712 = vmatpush2.msra.mxu0 0.0
    %5713 = vmatprep.subr.mxu0 0.0
    %5714 = vmatpush2.msra.mxu0 0.0
    %5715 = vmatprep.subr.mxu0 0.0
    %5716 = vmatpush2.msra.mxu0 0.0
    %5717 = vmatprep.subr.mxu0 0.0
    %5718 = vmatpush2.msra.mxu0 0.0
    %5719 = vmatprep.subr.mxu0 0.0
    %5720 = vmatpush2.msra.mxu0 0.0
    %5721 = vmatprep.subr.mxu0 0.0
    %5722 = vmatpush2.msra.mxu0 0.0
    %5723 = vmatprep.subr.mxu0 0.0
    %5724 = vmatpush2.msra.mxu0 0.0
    %5725 = vmatprep.subr.mxu0 0.0
    %5726 = vmatpush2.msra.mxu0 0.0
    %5727 = vmatprep.subr.mxu0 0.0
    %5728 = vmatpush2.msra.mxu0 0.0
    %5729 = vmatprep.subr.mxu0 0.0
    %5730 = vmatpush2.msra.mxu0 0.0
    %5731 = vmatprep.subr.mxu0 0.0
    %5732 = vmatpush2.msra.mxu0 0.0
    %5733 = vmatprep.subr.mxu0 0.0
    %5734 = vmatpush2.msra.mxu0 0.0
    %5735 = vmatprep.mubr.f32.mxu0 0.0
    %v5736 = vand.u32 %v5412, 4294901760
    %v5737 = vsub.f32 %v5412, %v5736
    %v5738 = vand.u32 %v5737, 4294901760
    %5739 = vmatmul.mubr.f32.gmra.mxu0 %v5738
    %v5740 = vpop.f32.mrf.mxu0
    %v5741 = vadd.f32 %v5664, %v5740
    %v5742 = vpop.f32.mrf.mxu0
    %5743 = vdwg.mxu0
    %5744 = vmatprep.subr.mxu0 0.0
    %5745 = vmatpush1.msra.mxu0 0.0
    %5746 = vmatprep.subr.mxu0 0.0
    %5747 = vmatpush1.msra.mxu0 0.0
    %5748 = vmatprep.subr.mxu0 0.0
    %5749 = vmatpush1.msra.mxu0 0.0
    %5750 = vmatprep.subr.mxu0 0.0
    %5751 = vmatpush1.msra.mxu0 0.0
    %5752 = vmatprep.subr.mxu0 0.0
    %5753 = vmatpush1.msra.mxu0 0.0
    %5754 = vmatprep.subr.mxu0 0.0
    %5755 = vmatpush1.msra.mxu0 0.0
    %5756 = vmatprep.subr.mxu0 0.0
    %5757 = vmatpush1.msra.mxu0 0.0
    %5758 = vmatprep.subr.mxu0 0.0
    %5759 = vmatpush1.msra.mxu0 0.0
    %5760 = vmatprep.subr.mxu0 0.0
    %5761 = vmatpush1.msra.mxu0 0.0
    %5762 = vmatprep.subr.mxu0 0.0
    %5763 = vmatpush1.msra.mxu0 0.0
    %5764 = vmatprep.subr.mxu0 0.0
    %5765 = vmatpush1.msra.mxu0 0.0
    %5766 = vmatprep.subr.mxu0 0.0
    %5767 = vmatpush1.msra.mxu0 0.0
    %5768 = vmatprep.subr.mxu0 0.0
    %v5769 = vand.u32 %v5415, 4294901760
    %v5770 = vsub.f32 %v5415, %v5769
    %v5771 = vand.u32 %v5770, 4294901760
    %5772 = vmatpush1.msra.mxu0 %v5771
    %5773 = vmatprep.subr.mxu0 0.0
    %v5774 = vand.u32 %v5404, 4294901760
    %v5775 = vsub.f32 %v5404, %v5774
    %v5776 = vand.u32 %v5775, 4294901760
    %5777 = vmatpush1.msra.mxu0 %v5776
    %5778 = vmatprep.subr.mxu0 0.0
    %v5779 = vand.u32 %v5403, 4294901760
    %v5780 = vsub.f32 %v5403, %v5779
    %v5781 = vand.u32 %v5780, 4294901760
    %5782 = vmatpush1.msra.mxu0 %v5781
    %5783 = vmatprep.subr.mxu0 0.0
    %v5784 = vand.u32 %v5402, 4294901760
    %v5785 = vsub.f32 %v5402, %v5784
    %v5786 = vand.u32 %v5785, 4294901760
    %5787 = vmatpush1.msra.mxu0 %v5786
    %5788 = vmatprep.subr.mxu0 0.0
    %5789 = vmatpush2.msra.mxu0 0.0
    %5790 = vmatprep.subr.mxu0 0.0
    %5791 = vmatpush2.msra.mxu0 0.0
    %5792 = vmatprep.subr.mxu0 0.0
    %5793 = vmatpush2.msra.mxu0 0.0
    %5794 = vmatprep.subr.mxu0 0.0
    %5795 = vmatpush2.msra.mxu0 0.0
    %5796 = vmatprep.subr.mxu0 0.0
    %5797 = vmatpush2.msra.mxu0 0.0
    %5798 = vmatprep.subr.mxu0 0.0
    %5799 = vmatpush2.msra.mxu0 0.0
    %5800 = vmatprep.subr.mxu0 0.0
    %5801 = vmatpush2.msra.mxu0 0.0
    %5802 = vmatprep.subr.mxu0 0.0
    %5803 = vmatpush2.msra.mxu0 0.0
    %5804 = vmatprep.subr.mxu0 0.0
    %5805 = vmatpush2.msra.mxu0 0.0
    %5806 = vmatprep.subr.mxu0 0.0
    %5807 = vmatpush2.msra.mxu0 0.0
    %5808 = vmatprep.subr.mxu0 0.0
    %5809 = vmatpush2.msra.mxu0 0.0
    %5810 = vmatprep.subr.mxu0 0.0
    %5811 = vmatpush2.msra.mxu0 0.0
    %5812 = vmatprep.subr.mxu0 0.0
    %5813 = vmatpush2.msra.mxu0 0.0
    %5814 = vmatprep.subr.mxu0 0.0
    %5815 = vmatpush2.msra.mxu0 0.0
    %5816 = vmatprep.subr.mxu0 0.0
    %5817 = vmatpush2.msra.mxu0 0.0
    %5818 = vmatprep.subr.mxu0 0.0
    %5819 = vmatpush2.msra.mxu0 0.0
    %5820 = vmatprep.mubr.f32.mxu0 0.0
    %v5821 = vand.u32 %v5412, 4294901760
    %5822 = vmatmul.mubr.f32.gmra.mxu0 %v5821
    %v5823 = vpop.f32.mrf.mxu0
    %v5824 = vadd.f32 %v5741, %v5823
    %v5825 = vpop.f32.mrf.mxu0
    %5826 = vdwg.mxu0
    %5827 = vmatprep.subr.mxu0 0.0
    %5828 = vmatpush1.msra.mxu0 0.0
    %5829 = vmatprep.subr.mxu0 0.0
    %5830 = vmatpush1.msra.mxu0 0.0
    %5831 = vmatprep.subr.mxu0 0.0
    %5832 = vmatpush1.msra.mxu0 0.0
    %5833 = vmatprep.subr.mxu0 0.0
    %5834 = vmatpush1.msra.mxu0 0.0
    %5835 = vmatprep.subr.mxu0 0.0
    %5836 = vmatpush1.msra.mxu0 0.0
    %5837 = vmatprep.subr.mxu0 0.0
    %5838 = vmatpush1.msra.mxu0 0.0
    %5839 = vmatprep.subr.mxu0 0.0
    %5840 = vmatpush1.msra.mxu0 0.0
    %5841 = vmatprep.subr.mxu0 0.0
    %5842 = vmatpush1.msra.mxu0 0.0
    %5843 = vmatprep.subr.mxu0 0.0
    %5844 = vmatpush1.msra.mxu0 0.0
    %5845 = vmatprep.subr.mxu0 0.0
    %5846 = vmatpush1.msra.mxu0 0.0
    %5847 = vmatprep.subr.mxu0 0.0
    %5848 = vmatpush1.msra.mxu0 0.0
    %5849 = vmatprep.subr.mxu0 0.0
    %5850 = vmatpush1.msra.mxu0 0.0
    %5851 = vmatprep.subr.mxu0 0.0
    %v5852 = vand.u32 %v5415, 4294901760
    %5853 = vmatpush1.msra.mxu0 %v5852
    %5854 = vmatprep.subr.mxu0 0.0
    %v5855 = vand.u32 %v5404, 4294901760
    %5856 = vmatpush1.msra.mxu0 %v5855
    %5857 = vmatprep.subr.mxu0 0.0
    %v5858 = vand.u32 %v5403, 4294901760
    %5859 = vmatpush1.msra.mxu0 %v5858
    %5860 = vmatprep.subr.mxu0 0.0
    %v5861 = vand.u32 %v5402, 4294901760
    %5862 = vmatpush1.msra.mxu0 %v5861
    %5863 = vmatprep.subr.mxu0 0.0
    %5864 = vmatpush2.msra.mxu0 0.0
    %5865 = vmatprep.subr.mxu0 0.0
    %5866 = vmatpush2.msra.mxu0 0.0
    %5867 = vmatprep.subr.mxu0 0.0
    %5868 = vmatpush2.msra.mxu0 0.0
    %5869 = vmatprep.subr.mxu0 0.0
    %5870 = vmatpush2.msra.mxu0 0.0
    %5871 = vmatprep.subr.mxu0 0.0
    %5872 = vmatpush2.msra.mxu0 0.0
    %5873 = vmatprep.subr.mxu0 0.0
    %5874 = vmatpush2.msra.mxu0 0.0
    %5875 = vmatprep.subr.mxu0 0.0
    %5876 = vmatpush2.msra.mxu0 0.0
    %5877 = vmatprep.subr.mxu0 0.0
    %5878 = vmatpush2.msra.mxu0 0.0
    %5879 = vmatprep.subr.mxu0 0.0
    %5880 = vmatpush2.msra.mxu0 0.0
    %5881 = vmatprep.subr.mxu0 0.0
    %5882 = vmatpush2.msra.mxu0 0.0
    %5883 = vmatprep.subr.mxu0 0.0
    %5884 = vmatpush2.msra.mxu0 0.0
    %5885 = vmatprep.subr.mxu0 0.0
    %5886 = vmatpush2.msra.mxu0 0.0
    %5887 = vmatprep.subr.mxu0 0.0
    %5888 = vmatpush2.msra.mxu0 0.0
    %5889 = vmatprep.subr.mxu0 0.0
    %5890 = vmatpush2.msra.mxu0 0.0
    %5891 = vmatprep.subr.mxu0 0.0
    %5892 = vmatpush2.msra.mxu0 0.0
    %5893 = vmatprep.subr.mxu0 0.0
    %5894 = vmatpush2.msra.mxu0 0.0
    %5895 = vmatprep.mubr.f32.mxu0 0.0
    %v5896 = vand.u32 %v5412, 4294901760
    %5897 = vmatmul.mubr.f32.gmra.mxu0 %v5896
    %v5898 = vpop.f32.mrf.mxu0
    %v5899 = vadd.f32 %v5824, %v5898
    %v5900 = vpop.f32.mrf.mxu0
    %5901 = vdwg.mxu0
    %v5902 = vsel %vm584, %v5899, 0.0
    %v5903 = vrot.slane %v5902, 4
    %v5904 = vadd.f32 %v5902, %v5903
    %v5905 = vrot.slane %v5904, 2
    %v5906 = vadd.f32 %v5904, %v5905
    %v5907 = vrot.slane %v5906, 1
    %v5908 = vadd.f32 %v5906, %v5907
    %v5909 = vmul.f32 %v5908, %v592
    %v5910 = vsub.f32 %v5899, %v5909
    %v5911 = vmul.f32 %v5910, %v5910
    %v5912 = vsel %vm584, %v5911, 0.0
    %v5913 = vrot.slane %v5912, 4
    %v5914 = vadd.f32 %v5912, %v5913
    %v5915 = vrot.slane %v5914, 2
    %v5916 = vadd.f32 %v5914, %v5915
    %v5917 = vrot.slane %v5916, 1
    %v5918 = vadd.f32 %v5916, %v5917
    %v5919 = vmul.f32 %v5918, %v592
    %v5920 = vadd.f32 %v5919, 1e-05
    %v5921 = vrsqrt.pop %v5920
    %v5922 = vmul.f32 %v5910, %v5921
    %v5923 = vld [vmem:[%s4899 + $0x4] sm:$0x1]
    %v5924 = vlaneseq
    %v5925 = vshrl.u32 %v5924, 7
    %v5926 = vsub.s32 0, %v5925
    %v5927 = vrot.slane %v5923, %v5926
    %v5928 = vmul.f32 %v5922, %v5927
    %v5929 = vld [vmem:[%s4899 + $0x5] sm:$0x1]
    %v5930 = vlaneseq
    %v5931 = vshrl.u32 %v5930, 7
    %v5932 = vsub.s32 0, %v5931
    %v5933 = vrot.slane %v5929, %v5932
    %v5934 = vadd.f32 %v5928, %v5933
    %v5935 = vmax.f32 %v5934, 0.0
    %v5936 = vld [vmem:[%s4899 + $0x6] sm:$0x1]
    %s5937 = scalar_lea.vmem %s7, 96
    %v5938 = vld [vmem:[%s5937] sm:$0xff]
    %v5939 = vld [vmem:[%s5937 + $0x8] sm:$0xff]
    %v5940 = vld [vmem:[%s5937 + $0x10] sm:$0xff]
    %v5941 = vld [vmem:[%s5937 + $0x18] sm:$0x3]
    %v5942 = vlaneseq
    %v5943 = vshrl.u32 %v5942, 7
    %v5944 = vsub.s32 0, %v5943
    %v5945 = vrot.slane %v5936, %v5944
    %v5947 = vsel %vm584, %v5935, 0
    %v5950 = vsel %vm632, %v5941, 0
    %5952 = vmatprep.subr.mxu0 0.0
    %5953 = vmatpush1.msra.mxu0 0.0
    %5954 = vmatprep.subr.mxu0 0.0
    %5955 = vmatpush1.msra.mxu0 0.0
    %5956 = vmatprep.subr.mxu0 0.0
    %5957 = vmatpush1.msra.mxu0 0.0
    %5958 = vmatprep.subr.mxu0 0.0
    %5959 = vmatpush1.msra.mxu0 0.0
    %5960 = vmatprep.subr.mxu0 0.0
    %5961 = vmatpush1.msra.mxu0 0.0
    %5962 = vmatprep.subr.mxu0 0.0
    %5963 = vmatpush1.msra.mxu0 0.0
    %5964 = vmatprep.subr.mxu0 0.0
    %5965 = vmatpush1.msra.mxu0 0.0
    %5966 = vmatprep.subr.mxu0 0.0
    %5967 = vmatpush1.msra.mxu0 0.0
    %5968 = vmatprep.subr.mxu0 0.0
    %5969 = vmatpush1.msra.mxu0 0.0
    %5970 = vmatprep.subr.mxu0 0.0
    %5971 = vmatpush1.msra.mxu0 0.0
    %5972 = vmatprep.subr.mxu0 0.0
    %5973 = vmatpush1.msra.mxu0 0.0
    %5974 = vmatprep.subr.mxu0 0.0
    %5975 = vmatpush1.msra.mxu0 0.0
    %5976 = vmatprep.subr.mxu0 0.0
    %v5977 = vand.u32 %v5950, 4294901760
    %5978 = vmatpush1.msra.mxu0 %v5977
    %5979 = vmatprep.subr.mxu0 0.0
    %v5980 = vand.u32 %v5940, 4294901760
    %5981 = vmatpush1.msra.mxu0 %v5980
    %5982 = vmatprep.subr.mxu0 0.0
    %v5983 = vand.u32 %v5939, 4294901760
    %5984 = vmatpush1.msra.mxu0 %v5983
    %5985 = vmatprep.subr.mxu0 0.0
    %v5986 = vand.u32 %v5938, 4294901760
    %5987 = vmatpush1.msra.mxu0 %v5986
    %5988 = vmatprep.subr.mxu0 0.0
    %5989 = vmatpush2.msra.mxu0 0.0
    %5990 = vmatprep.subr.mxu0 0.0
    %5991 = vmatpush2.msra.mxu0 0.0
    %5992 = vmatprep.subr.mxu0 0.0
    %5993 = vmatpush2.msra.mxu0 0.0
    %5994 = vmatprep.subr.mxu0 0.0
    %5995 = vmatpush2.msra.mxu0 0.0
    %5996 = vmatprep.subr.mxu0 0.0
    %5997 = vmatpush2.msra.mxu0 0.0
    %5998 = vmatprep.subr.mxu0 0.0
    %5999 = vmatpush2.msra.mxu0 0.0
    %6000 = vmatprep.subr.mxu0 0.0
    %6001 = vmatpush2.msra.mxu0 0.0
    %6002 = vmatprep.subr.mxu0 0.0
    %6003 = vmatpush2.msra.mxu0 0.0
    %6004 = vmatprep.subr.mxu0 0.0
    %6005 = vmatpush2.msra.mxu0 0.0
    %6006 = vmatprep.subr.mxu0 0.0
    %6007 = vmatpush2.msra.mxu0 0.0
    %6008 = vmatprep.subr.mxu0 0.0
    %6009 = vmatpush2.msra.mxu0 0.0
    %6010 = vmatprep.subr.mxu0 0.0
    %6011 = vmatpush2.msra.mxu0 0.0
    %6012 = vmatprep.subr.mxu0 0.0
    %6013 = vmatpush2.msra.mxu0 0.0
    %6014 = vmatprep.subr.mxu0 0.0
    %6015 = vmatpush2.msra.mxu0 0.0
    %6016 = vmatprep.subr.mxu0 0.0
    %6017 = vmatpush2.msra.mxu0 0.0
    %6018 = vmatprep.subr.mxu0 0.0
    %6019 = vmatpush2.msra.mxu0 0.0
    %6020 = vmatprep.mubr.f32.mxu0 0.0
    %v6021 = vand.u32 %v5947, 4294901760
    %v6022 = vsub.f32 %v5947, %v6021
    %v6023 = vand.u32 %v6022, 4294901760
    %v6024 = vsub.f32 %v6022, %v6023
    %v6025 = vand.u32 %v6024, 4294901760
    %6026 = vmatmul.mubr.f32.gmra.mxu0 %v6025
    %v6027 = vpop.f32.mrf.mxu0
    %v6028 = vadd.f32 %v5945, %v6027
    %v6029 = vpop.f32.mrf.mxu0
    %6030 = vdwg.mxu0
    %6031 = vmatprep.subr.mxu0 0.0
    %6032 = vmatpush1.msra.mxu0 0.0
    %6033 = vmatprep.subr.mxu0 0.0
    %6034 = vmatpush1.msra.mxu0 0.0
    %6035 = vmatprep.subr.mxu0 0.0
    %6036 = vmatpush1.msra.mxu0 0.0
    %6037 = vmatprep.subr.mxu0 0.0
    %6038 = vmatpush1.msra.mxu0 0.0
    %6039 = vmatprep.subr.mxu0 0.0
    %6040 = vmatpush1.msra.mxu0 0.0
    %6041 = vmatprep.subr.mxu0 0.0
    %6042 = vmatpush1.msra.mxu0 0.0
    %6043 = vmatprep.subr.mxu0 0.0
    %6044 = vmatpush1.msra.mxu0 0.0
    %6045 = vmatprep.subr.mxu0 0.0
    %6046 = vmatpush1.msra.mxu0 0.0
    %6047 = vmatprep.subr.mxu0 0.0
    %6048 = vmatpush1.msra.mxu0 0.0
    %6049 = vmatprep.subr.mxu0 0.0
    %6050 = vmatpush1.msra.mxu0 0.0
    %6051 = vmatprep.subr.mxu0 0.0
    %6052 = vmatpush1.msra.mxu0 0.0
    %6053 = vmatprep.subr.mxu0 0.0
    %6054 = vmatpush1.msra.mxu0 0.0
    %6055 = vmatprep.subr.mxu0 0.0
    %v6056 = vand.u32 %v5950, 4294901760
    %v6057 = vsub.f32 %v5950, %v6056
    %v6058 = vand.u32 %v6057, 4294901760
    %v6059 = vsub.f32 %v6057, %v6058
    %v6060 = vand.u32 %v6059, 4294901760
    %6061 = vmatpush1.msra.mxu0 %v6060
    %6062 = vmatprep.subr.mxu0 0.0
    %v6063 = vand.u32 %v5940, 4294901760
    %v6064 = vsub.f32 %v5940, %v6063
    %v6065 = vand.u32 %v6064, 4294901760
    %v6066 = vsub.f32 %v6064, %v6065
    %v6067 = vand.u32 %v6066, 4294901760
    %6068 = vmatpush1.msra.mxu0 %v6067
    %6069 = vmatprep.subr.mxu0 0.0
    %v6070 = vand.u32 %v5939, 4294901760
    %v6071 = vsub.f32 %v5939, %v6070
    %v6072 = vand.u32 %v6071, 4294901760
    %v6073 = vsub.f32 %v6071, %v6072
    %v6074 = vand.u32 %v6073, 4294901760
    %6075 = vmatpush1.msra.mxu0 %v6074
    %6076 = vmatprep.subr.mxu0 0.0
    %v6077 = vand.u32 %v5938, 4294901760
    %v6078 = vsub.f32 %v5938, %v6077
    %v6079 = vand.u32 %v6078, 4294901760
    %v6080 = vsub.f32 %v6078, %v6079
    %v6081 = vand.u32 %v6080, 4294901760
    %6082 = vmatpush1.msra.mxu0 %v6081
    %6083 = vmatprep.subr.mxu0 0.0
    %6084 = vmatpush2.msra.mxu0 0.0
    %6085 = vmatprep.subr.mxu0 0.0
    %6086 = vmatpush2.msra.mxu0 0.0
    %6087 = vmatprep.subr.mxu0 0.0
    %6088 = vmatpush2.msra.mxu0 0.0
    %6089 = vmatprep.subr.mxu0 0.0
    %6090 = vmatpush2.msra.mxu0 0.0
    %6091 = vmatprep.subr.mxu0 0.0
    %6092 = vmatpush2.msra.mxu0 0.0
    %6093 = vmatprep.subr.mxu0 0.0
    %6094 = vmatpush2.msra.mxu0 0.0
    %6095 = vmatprep.subr.mxu0 0.0
    %6096 = vmatpush2.msra.mxu0 0.0
    %6097 = vmatprep.subr.mxu0 0.0
    %6098 = vmatpush2.msra.mxu0 0.0
    %6099 = vmatprep.subr.mxu0 0.0
    %6100 = vmatpush2.msra.mxu0 0.0
    %6101 = vmatprep.subr.mxu0 0.0
    %6102 = vmatpush2.msra.mxu0 0.0
    %6103 = vmatprep.subr.mxu0 0.0
    %6104 = vmatpush2.msra.mxu0 0.0
    %6105 = vmatprep.subr.mxu0 0.0
    %6106 = vmatpush2.msra.mxu0 0.0
    %6107 = vmatprep.subr.mxu0 0.0
    %6108 = vmatpush2.msra.mxu0 0.0
    %6109 = vmatprep.subr.mxu0 0.0
    %6110 = vmatpush2.msra.mxu0 0.0
    %6111 = vmatprep.subr.mxu0 0.0
    %6112 = vmatpush2.msra.mxu0 0.0
    %6113 = vmatprep.subr.mxu0 0.0
    %6114 = vmatpush2.msra.mxu0 0.0
    %6115 = vmatprep.mubr.f32.mxu0 0.0
    %v6116 = vand.u32 %v5947, 4294901760
    %6117 = vmatmul.mubr.f32.gmra.mxu0 %v6116
    %v6118 = vpop.f32.mrf.mxu0
    %v6119 = vadd.f32 %v6028, %v6118
    %v6120 = vpop.f32.mrf.mxu0
    %6121 = vdwg.mxu0
    %6122 = vmatprep.subr.mxu0 0.0
    %6123 = vmatpush1.msra.mxu0 0.0
    %6124 = vmatprep.subr.mxu0 0.0
    %6125 = vmatpush1.msra.mxu0 0.0
    %6126 = vmatprep.subr.mxu0 0.0
    %6127 = vmatpush1.msra.mxu0 0.0
    %6128 = vmatprep.subr.mxu0 0.0
    %6129 = vmatpush1.msra.mxu0 0.0
    %6130 = vmatprep.subr.mxu0 0.0
    %6131 = vmatpush1.msra.mxu0 0.0
    %6132 = vmatprep.subr.mxu0 0.0
    %6133 = vmatpush1.msra.mxu0 0.0
    %6134 = vmatprep.subr.mxu0 0.0
    %6135 = vmatpush1.msra.mxu0 0.0
    %6136 = vmatprep.subr.mxu0 0.0
    %6137 = vmatpush1.msra.mxu0 0.0
    %6138 = vmatprep.subr.mxu0 0.0
    %6139 = vmatpush1.msra.mxu0 0.0
    %6140 = vmatprep.subr.mxu0 0.0
    %6141 = vmatpush1.msra.mxu0 0.0
    %6142 = vmatprep.subr.mxu0 0.0
    %6143 = vmatpush1.msra.mxu0 0.0
    %6144 = vmatprep.subr.mxu0 0.0
    %6145 = vmatpush1.msra.mxu0 0.0
    %6146 = vmatprep.subr.mxu0 0.0
    %v6147 = vand.u32 %v5950, 4294901760
    %v6148 = vsub.f32 %v5950, %v6147
    %6149 = vmatpush1.msra.mxu0 %v6148
    %6150 = vmatprep.subr.mxu0 0.0
    %v6151 = vand.u32 %v5940, 4294901760
    %v6152 = vsub.f32 %v5940, %v6151
    %6153 = vmatpush1.msra.mxu0 %v6152
    %6154 = vmatprep.subr.mxu0 0.0
    %v6155 = vand.u32 %v5939, 4294901760
    %v6156 = vsub.f32 %v5939, %v6155
    %6157 = vmatpush1.msra.mxu0 %v6156
    %6158 = vmatprep.subr.mxu0 0.0
    %v6159 = vand.u32 %v5938, 4294901760
    %v6160 = vsub.f32 %v5938, %v6159
    %6161 = vmatpush1.msra.mxu0 %v6160
    %6162 = vmatprep.subr.mxu0 0.0
    %6163 = vmatpush2.msra.mxu0 0.0
    %6164 = vmatprep.subr.mxu0 0.0
    %6165 = vmatpush2.msra.mxu0 0.0
    %6166 = vmatprep.subr.mxu0 0.0
    %6167 = vmatpush2.msra.mxu0 0.0
    %6168 = vmatprep.subr.mxu0 0.0
    %6169 = vmatpush2.msra.mxu0 0.0
    %6170 = vmatprep.subr.mxu0 0.0
    %6171 = vmatpush2.msra.mxu0 0.0
    %6172 = vmatprep.subr.mxu0 0.0
    %6173 = vmatpush2.msra.mxu0 0.0
    %6174 = vmatprep.subr.mxu0 0.0
    %6175 = vmatpush2.msra.mxu0 0.0
    %6176 = vmatprep.subr.mxu0 0.0
    %6177 = vmatpush2.msra.mxu0 0.0
    %6178 = vmatprep.subr.mxu0 0.0
    %6179 = vmatpush2.msra.mxu0 0.0
    %6180 = vmatprep.subr.mxu0 0.0
    %6181 = vmatpush2.msra.mxu0 0.0
    %6182 = vmatprep.subr.mxu0 0.0
    %6183 = vmatpush2.msra.mxu0 0.0
    %6184 = vmatprep.subr.mxu0 0.0
    %6185 = vmatpush2.msra.mxu0 0.0
    %6186 = vmatprep.subr.mxu0 0.0
    %6187 = vmatpush2.msra.mxu0 0.0
    %6188 = vmatprep.subr.mxu0 0.0
    %6189 = vmatpush2.msra.mxu0 0.0
    %6190 = vmatprep.subr.mxu0 0.0
    %6191 = vmatpush2.msra.mxu0 0.0
    %6192 = vmatprep.subr.mxu0 0.0
    %6193 = vmatpush2.msra.mxu0 0.0
    %6194 = vmatprep.mubr.f32.mxu0 0.0
    %v6195 = vand.u32 %v5947, 4294901760
    %v6196 = vsub.f32 %v5947, %v6195
    %6197 = vmatmul.mubr.f32.gmra.mxu0 %v6196
    %v6198 = vpop.f32.mrf.mxu0
    %v6199 = vadd.f32 %v6119, %v6198
    %v6200 = vpop.f32.mrf.mxu0
    %6201 = vdwg.mxu0
    %6202 = vmatprep.subr.mxu0 0.0
    %6203 = vmatpush1.msra.mxu0 0.0
    %6204 = vmatprep.subr.mxu0 0.0
    %6205 = vmatpush1.msra.mxu0 0.0
    %6206 = vmatprep.subr.mxu0 0.0
    %6207 = vmatpush1.msra.mxu0 0.0
    %6208 = vmatprep.subr.mxu0 0.0
    %6209 = vmatpush1.msra.mxu0 0.0
    %6210 = vmatprep.subr.mxu0 0.0
    %6211 = vmatpush1.msra.mxu0 0.0
    %6212 = vmatprep.subr.mxu0 0.0
    %6213 = vmatpush1.msra.mxu0 0.0
    %6214 = vmatprep.subr.mxu0 0.0
    %6215 = vmatpush1.msra.mxu0 0.0
    %6216 = vmatprep.subr.mxu0 0.0
    %6217 = vmatpush1.msra.mxu0 0.0
    %6218 = vmatprep.subr.mxu0 0.0
    %6219 = vmatpush1.msra.mxu0 0.0
    %6220 = vmatprep.subr.mxu0 0.0
    %6221 = vmatpush1.msra.mxu0 0.0
    %6222 = vmatprep.subr.mxu0 0.0
    %6223 = vmatpush1.msra.mxu0 0.0
    %6224 = vmatprep.subr.mxu0 0.0
    %6225 = vmatpush1.msra.mxu0 0.0
    %6226 = vmatprep.subr.mxu0 0.0
    %v6227 = vand.u32 %v5950, 4294901760
    %6228 = vmatpush1.msra.mxu0 %v6227
    %6229 = vmatprep.subr.mxu0 0.0
    %v6230 = vand.u32 %v5940, 4294901760
    %6231 = vmatpush1.msra.mxu0 %v6230
    %6232 = vmatprep.subr.mxu0 0.0
    %v6233 = vand.u32 %v5939, 4294901760
    %6234 = vmatpush1.msra.mxu0 %v6233
    %6235 = vmatprep.subr.mxu0 0.0
    %v6236 = vand.u32 %v5938, 4294901760
    %6237 = vmatpush1.msra.mxu0 %v6236
    %6238 = vmatprep.subr.mxu0 0.0
    %6239 = vmatpush2.msra.mxu0 0.0
    %6240 = vmatprep.subr.mxu0 0.0
    %6241 = vmatpush2.msra.mxu0 0.0
    %6242 = vmatprep.subr.mxu0 0.0
    %6243 = vmatpush2.msra.mxu0 0.0
    %6244 = vmatprep.subr.mxu0 0.0
    %6245 = vmatpush2.msra.mxu0 0.0
    %6246 = vmatprep.subr.mxu0 0.0
    %6247 = vmatpush2.msra.mxu0 0.0
    %6248 = vmatprep.subr.mxu0 0.0
    %6249 = vmatpush2.msra.mxu0 0.0
    %6250 = vmatprep.subr.mxu0 0.0
    %6251 = vmatpush2.msra.mxu0 0.0
    %6252 = vmatprep.subr.mxu0 0.0
    %6253 = vmatpush2.msra.mxu0 0.0
    %6254 = vmatprep.subr.mxu0 0.0
    %6255 = vmatpush2.msra.mxu0 0.0
    %6256 = vmatprep.subr.mxu0 0.0
    %6257 = vmatpush2.msra.mxu0 0.0
    %6258 = vmatprep.subr.mxu0 0.0
    %6259 = vmatpush2.msra.mxu0 0.0
    %6260 = vmatprep.subr.mxu0 0.0
    %6261 = vmatpush2.msra.mxu0 0.0
    %6262 = vmatprep.subr.mxu0 0.0
    %6263 = vmatpush2.msra.mxu0 0.0
    %6264 = vmatprep.subr.mxu0 0.0
    %6265 = vmatpush2.msra.mxu0 0.0
    %6266 = vmatprep.subr.mxu0 0.0
    %6267 = vmatpush2.msra.mxu0 0.0
    %6268 = vmatprep.subr.mxu0 0.0
    %6269 = vmatpush2.msra.mxu0 0.0
    %6270 = vmatprep.mubr.f32.mxu0 0.0
    %v6271 = vand.u32 %v5947, 4294901760
    %v6272 = vsub.f32 %v5947, %v6271
    %v6273 = vand.u32 %v6272, 4294901760
    %6274 = vmatmul.mubr.f32.gmra.mxu0 %v6273
    %v6275 = vpop.f32.mrf.mxu0
    %v6276 = vadd.f32 %v6199, %v6275
    %v6277 = vpop.f32.mrf.mxu0
    %6278 = vdwg.mxu0
    %6279 = vmatprep.subr.mxu0 0.0
    %6280 = vmatpush1.msra.mxu0 0.0
    %6281 = vmatprep.subr.mxu0 0.0
    %6282 = vmatpush1.msra.mxu0 0.0
    %6283 = vmatprep.subr.mxu0 0.0
    %6284 = vmatpush1.msra.mxu0 0.0
    %6285 = vmatprep.subr.mxu0 0.0
    %6286 = vmatpush1.msra.mxu0 0.0
    %6287 = vmatprep.subr.mxu0 0.0
    %6288 = vmatpush1.msra.mxu0 0.0
    %6289 = vmatprep.subr.mxu0 0.0
    %6290 = vmatpush1.msra.mxu0 0.0
    %6291 = vmatprep.subr.mxu0 0.0
    %6292 = vmatpush1.msra.mxu0 0.0
    %6293 = vmatprep.subr.mxu0 0.0
    %6294 = vmatpush1.msra.mxu0 0.0
    %6295 = vmatprep.subr.mxu0 0.0
    %6296 = vmatpush1.msra.mxu0 0.0
    %6297 = vmatprep.subr.mxu0 0.0
    %6298 = vmatpush1.msra.mxu0 0.0
    %6299 = vmatprep.subr.mxu0 0.0
    %6300 = vmatpush1.msra.mxu0 0.0
    %6301 = vmatprep.subr.mxu0 0.0
    %6302 = vmatpush1.msra.mxu0 0.0
    %6303 = vmatprep.subr.mxu0 0.0
    %v6304 = vand.u32 %v5950, 4294901760
    %v6305 = vsub.f32 %v5950, %v6304
    %v6306 = vand.u32 %v6305, 4294901760
    %6307 = vmatpush1.msra.mxu0 %v6306
    %6308 = vmatprep.subr.mxu0 0.0
    %v6309 = vand.u32 %v5940, 4294901760
    %v6310 = vsub.f32 %v5940, %v6309
    %v6311 = vand.u32 %v6310, 4294901760
    %6312 = vmatpush1.msra.mxu0 %v6311
    %6313 = vmatprep.subr.mxu0 0.0
    %v6314 = vand.u32 %v5939, 4294901760
    %v6315 = vsub.f32 %v5939, %v6314
    %v6316 = vand.u32 %v6315, 4294901760
    %6317 = vmatpush1.msra.mxu0 %v6316
    %6318 = vmatprep.subr.mxu0 0.0
    %v6319 = vand.u32 %v5938, 4294901760
    %v6320 = vsub.f32 %v5938, %v6319
    %v6321 = vand.u32 %v6320, 4294901760
    %6322 = vmatpush1.msra.mxu0 %v6321
    %6323 = vmatprep.subr.mxu0 0.0
    %6324 = vmatpush2.msra.mxu0 0.0
    %6325 = vmatprep.subr.mxu0 0.0
    %6326 = vmatpush2.msra.mxu0 0.0
    %6327 = vmatprep.subr.mxu0 0.0
    %6328 = vmatpush2.msra.mxu0 0.0
    %6329 = vmatprep.subr.mxu0 0.0
    %6330 = vmatpush2.msra.mxu0 0.0
    %6331 = vmatprep.subr.mxu0 0.0
    %6332 = vmatpush2.msra.mxu0 0.0
    %6333 = vmatprep.subr.mxu0 0.0
    %6334 = vmatpush2.msra.mxu0 0.0
    %6335 = vmatprep.subr.mxu0 0.0
    %6336 = vmatpush2.msra.mxu0 0.0
    %6337 = vmatprep.subr.mxu0 0.0
    %6338 = vmatpush2.msra.mxu0 0.0
    %6339 = vmatprep.subr.mxu0 0.0
    %6340 = vmatpush2.msra.mxu0 0.0
    %6341 = vmatprep.subr.mxu0 0.0
    %6342 = vmatpush2.msra.mxu0 0.0
    %6343 = vmatprep.subr.mxu0 0.0
    %6344 = vmatpush2.msra.mxu0 0.0
    %6345 = vmatprep.subr.mxu0 0.0
    %6346 = vmatpush2.msra.mxu0 0.0
    %6347 = vmatprep.subr.mxu0 0.0
    %6348 = vmatpush2.msra.mxu0 0.0
    %6349 = vmatprep.subr.mxu0 0.0
    %6350 = vmatpush2.msra.mxu0 0.0
    %6351 = vmatprep.subr.mxu0 0.0
    %6352 = vmatpush2.msra.mxu0 0.0
    %6353 = vmatprep.subr.mxu0 0.0
    %6354 = vmatpush2.msra.mxu0 0.0
    %6355 = vmatprep.mubr.f32.mxu0 0.0
    %v6356 = vand.u32 %v5947, 4294901760
    %6357 = vmatmul.mubr.f32.gmra.mxu0 %v6356
    %v6358 = vpop.f32.mrf.mxu0
    %v6359 = vadd.f32 %v6276, %v6358
    %v6360 = vpop.f32.mrf.mxu0
    %6361 = vdwg.mxu0
    %6362 = vmatprep.subr.mxu0 0.0
    %6363 = vmatpush1.msra.mxu0 0.0
    %6364 = vmatprep.subr.mxu0 0.0
    %6365 = vmatpush1.msra.mxu0 0.0
    %6366 = vmatprep.subr.mxu0 0.0
    %6367 = vmatpush1.msra.mxu0 0.0
    %6368 = vmatprep.subr.mxu0 0.0
    %6369 = vmatpush1.msra.mxu0 0.0
    %6370 = vmatprep.subr.mxu0 0.0
    %6371 = vmatpush1.msra.mxu0 0.0
    %6372 = vmatprep.subr.mxu0 0.0
    %6373 = vmatpush1.msra.mxu0 0.0
    %6374 = vmatprep.subr.mxu0 0.0
    %6375 = vmatpush1.msra.mxu0 0.0
    %6376 = vmatprep.subr.mxu0 0.0
    %6377 = vmatpush1.msra.mxu0 0.0
    %6378 = vmatprep.subr.mxu0 0.0
    %6379 = vmatpush1.msra.mxu0 0.0
    %6380 = vmatprep.subr.mxu0 0.0
    %6381 = vmatpush1.msra.mxu0 0.0
    %6382 = vmatprep.subr.mxu0 0.0
    %6383 = vmatpush1.msra.mxu0 0.0
    %6384 = vmatprep.subr.mxu0 0.0
    %6385 = vmatpush1.msra.mxu0 0.0
    %6386 = vmatprep.subr.mxu0 0.0
    %v6387 = vand.u32 %v5950, 4294901760
    %6388 = vmatpush1.msra.mxu0 %v6387
    %6389 = vmatprep.subr.mxu0 0.0
    %v6390 = vand.u32 %v5940, 4294901760
    %6391 = vmatpush1.msra.mxu0 %v6390
    %6392 = vmatprep.subr.mxu0 0.0
    %v6393 = vand.u32 %v5939, 4294901760
    %6394 = vmatpush1.msra.mxu0 %v6393
    %6395 = vmatprep.subr.mxu0 0.0
    %v6396 = vand.u32 %v5938, 4294901760
    %6397 = vmatpush1.msra.mxu0 %v6396
    %6398 = vmatprep.subr.mxu0 0.0
    %6399 = vmatpush2.msra.mxu0 0.0
    %6400 = vmatprep.subr.mxu0 0.0
    %6401 = vmatpush2.msra.mxu0 0.0
    %6402 = vmatprep.subr.mxu0 0.0
    %6403 = vmatpush2.msra.mxu0 0.0
    %6404 = vmatprep.subr.mxu0 0.0
    %6405 = vmatpush2.msra.mxu0 0.0
    %6406 = vmatprep.subr.mxu0 0.0
    %6407 = vmatpush2.msra.mxu0 0.0
    %6408 = vmatprep.subr.mxu0 0.0
    %6409 = vmatpush2.msra.mxu0 0.0
    %6410 = vmatprep.subr.mxu0 0.0
    %6411 = vmatpush2.msra.mxu0 0.0
    %6412 = vmatprep.subr.mxu0 0.0
    %6413 = vmatpush2.msra.mxu0 0.0
    %6414 = vmatprep.subr.mxu0 0.0
    %6415 = vmatpush2.msra.mxu0 0.0
    %6416 = vmatprep.subr.mxu0 0.0
    %6417 = vmatpush2.msra.mxu0 0.0
    %6418 = vmatprep.subr.mxu0 0.0
    %6419 = vmatpush2.msra.mxu0 0.0
    %6420 = vmatprep.subr.mxu0 0.0
    %6421 = vmatpush2.msra.mxu0 0.0
    %6422 = vmatprep.subr.mxu0 0.0
    %6423 = vmatpush2.msra.mxu0 0.0
    %6424 = vmatprep.subr.mxu0 0.0
    %6425 = vmatpush2.msra.mxu0 0.0
    %6426 = vmatprep.subr.mxu0 0.0
    %6427 = vmatpush2.msra.mxu0 0.0
    %6428 = vmatprep.subr.mxu0 0.0
    %6429 = vmatpush2.msra.mxu0 0.0
    %6430 = vmatprep.mubr.f32.mxu0 0.0
    %v6431 = vand.u32 %v5947, 4294901760
    %6432 = vmatmul.mubr.f32.gmra.mxu0 %v6431
    %v6433 = vpop.f32.mrf.mxu0
    %v6434 = vadd.f32 %v6359, %v6433
    %v6435 = vpop.f32.mrf.mxu0
    %6436 = vdwg.mxu0
    %v6437 = vmul.f32 %v6434, -0.8888889
    %v6438 = vmul.f32 %v4871, 0.6
    %s6439 = smul.f32 %s4885, 0.2
    %v6440 = vstv %s6439
    %v6441 = vsub.f32 %v6438, %v6440
    %v6442 = vstv %s4893
    %v6443 = vsub.f32 %v6441, %v6442
    %v6444 = vmul.f32 %v6443, %v6443
    %v6445 = vmul.f32 %v6444, 0.5
    %v6446 = vmul.f32 %v6437, 0.45
    %v6447 = vmul.f32 %v6446, %v6437
    %v6448 = vadd.f32 %v6445, %v6447
    %v6449 = vstv %s4877
    %v6450 = vmul.f32 %v6448, %v6449
    %v6451 = vsub.f32 %v4862, %v6450
    %v6452 = vmul.f32 %v6434, %v4895
    %v6453 = vadd.f32 %v6451, %v6452
    %v6454 = vmul.f32 %v4871, 0.5
    %s6455 = smul.f32 %s4889, 0.3
    %v6456 = vstv %s6455
    %v6457 = vadd.f32 %v6454, %v6456
    %v6458 = vmul.f32 %v6437, 0.8
    %v6459 = vadd.f32 %v6457, %v6458
    %v6460 = vmul.f32 %v6459, %v6449
    %v6461 = vadd.f32 %v4871, %v6460
    %v6462 = vadd.f32 %v6461, %v4895
    %s6463 = scalar_lea.vmem [#allocation12], 24
    %6464 = vst.msk [vmem:[%s6463] sm:$0xff] %vm121, %v6462
    %s6465 = scalar_lea.vmem [#allocation13], 24
    %6466 = vst.msk [vmem:[%s6465] sm:$0xff] %vm121, %v6434
    %s6467 = sadd.s32 %s95, 4
    %s6468 = sld [smem:[#allocation2 + %s6467]]
    %s6469 = sshra.s32 %s6467, 7
    %s6470 = sand.u32 %s6467, 127
    %s6471 = sadd.s32 %s6469, 1
    %s6472 = smul.u32 %s6471, 128
    %s6473 = sshra.s32 %s6467, 7
    %s6474 = sand.u32 %s6467, 127
    %s6475 = sadd.s32 %s6472, %s6474
    %s6476 = sld [smem:[#allocation2 + %s6475]]
    %s6477 = sadd.s32 %s6469, 2
    %s6478 = smul.u32 %s6477, 128
    %s6479 = sadd.s32 %s6478, %s6474
    %s6480 = sld [smem:[#allocation2 + %s6479]]
    %s6481 = sadd.s32 %s6469, 3
    %s6482 = smul.u32 %s6481, 128
    %s6483 = sadd.s32 %s6482, %s6474
    %s6484 = sld [smem:[#allocation2 + %s6483]]
    %s6485 = scalar_lea.vmem [#allocation6], 32
    %v6486 = vld [vmem:[%s6485] sm:$0xff]
    %s6487 = scalar_lea.vmem %s5, 64
    %v6488 = vld [vmem:[%s6487] sm:$0xff]
    %v6489 = vld [vmem:[%s6487 + $0x8] sm:$0xff]
    %s6490 = scalar_lea.vmem [#allocation7], 32
    %v6491 = vld [vmem:[%s6490] sm:$0x1]
    %v6492 = vlaneseq
    %v6493 = vshrl.u32 %v6492, 7
    %v6494 = vsub.s32 0, %v6493
    %v6495 = vrot.slane %v6491, %v6494
    %v6497 = vsel %vm121, %v6462, 0
    %6499 = vmatprep.subr.mxu0 0.0
    %6500 = vmatpush1.msra.mxu0 0.0
    %6501 = vmatprep.subr.mxu0 0.0
    %6502 = vmatpush1.msra.mxu0 0.0
    %6503 = vmatprep.subr.mxu0 0.0
    %6504 = vmatpush1.msra.mxu0 0.0
    %6505 = vmatprep.subr.mxu0 0.0
    %6506 = vmatpush1.msra.mxu0 0.0
    %6507 = vmatprep.subr.mxu0 0.0
    %6508 = vmatpush1.msra.mxu0 0.0
    %6509 = vmatprep.subr.mxu0 0.0
    %6510 = vmatpush1.msra.mxu0 0.0
    %6511 = vmatprep.subr.mxu0 0.0
    %6512 = vmatpush1.msra.mxu0 0.0
    %6513 = vmatprep.subr.mxu0 0.0
    %6514 = vmatpush1.msra.mxu0 0.0
    %6515 = vmatprep.subr.mxu0 0.0
    %6516 = vmatpush1.msra.mxu0 0.0
    %6517 = vmatprep.subr.mxu0 0.0
    %6518 = vmatpush1.msra.mxu0 0.0
    %6519 = vmatprep.subr.mxu0 0.0
    %6520 = vmatpush1.msra.mxu0 0.0
    %6521 = vmatprep.subr.mxu0 0.0
    %6522 = vmatpush1.msra.mxu0 0.0
    %6523 = vmatprep.subr.mxu0 0.0
    %6524 = vmatpush1.msra.mxu0 0.0
    %6525 = vmatprep.subr.mxu0 0.0
    %6526 = vmatpush1.msra.mxu0 0.0
    %6527 = vmatprep.subr.mxu0 0.0
    %v6528 = vand.u32 %v6489, 4294901760
    %6529 = vmatpush1.msra.mxu0 %v6528
    %6530 = vmatprep.subr.mxu0 0.0
    %v6531 = vand.u32 %v6488, 4294901760
    %6532 = vmatpush1.msra.mxu0 %v6531
    %6533 = vmatprep.subr.mxu0 0.0
    %6534 = vmatpush2.msra.mxu0 0.0
    %6535 = vmatprep.subr.mxu0 0.0
    %6536 = vmatpush2.msra.mxu0 0.0
    %6537 = vmatprep.subr.mxu0 0.0
    %6538 = vmatpush2.msra.mxu0 0.0
    %6539 = vmatprep.subr.mxu0 0.0
    %6540 = vmatpush2.msra.mxu0 0.0
    %6541 = vmatprep.subr.mxu0 0.0
    %6542 = vmatpush2.msra.mxu0 0.0
    %6543 = vmatprep.subr.mxu0 0.0
    %6544 = vmatpush2.msra.mxu0 0.0
    %6545 = vmatprep.subr.mxu0 0.0
    %6546 = vmatpush2.msra.mxu0 0.0
    %6547 = vmatprep.subr.mxu0 0.0
    %6548 = vmatpush2.msra.mxu0 0.0
    %6549 = vmatprep.subr.mxu0 0.0
    %6550 = vmatpush2.msra.mxu0 0.0
    %6551 = vmatprep.subr.mxu0 0.0
    %6552 = vmatpush2.msra.mxu0 0.0
    %6553 = vmatprep.subr.mxu0 0.0
    %6554 = vmatpush2.msra.mxu0 0.0
    %6555 = vmatprep.subr.mxu0 0.0
    %6556 = vmatpush2.msra.mxu0 0.0
    %6557 = vmatprep.subr.mxu0 0.0
    %6558 = vmatpush2.msra.mxu0 0.0
    %6559 = vmatprep.subr.mxu0 0.0
    %6560 = vmatpush2.msra.mxu0 0.0
    %6561 = vmatprep.subr.mxu0 0.0
    %6562 = vmatpush2.msra.mxu0 0.0
    %6563 = vmatprep.subr.mxu0 0.0
    %6564 = vmatpush2.msra.mxu0 0.0
    %6565 = vmatprep.mubr.f32.mxu0 0.0
    %v6566 = vand.u32 %v6497, 4294901760
    %v6567 = vsub.f32 %v6497, %v6566
    %v6568 = vand.u32 %v6567, 4294901760
    %v6569 = vsub.f32 %v6567, %v6568
    %v6570 = vand.u32 %v6569, 4294901760
    %6571 = vmatmul.mubr.f32.gmra.mxu0 %v6570
    %v6572 = vpop.f32.mrf.mxu0
    %v6573 = vadd.f32 %v6495, %v6572
    %v6574 = vpop.f32.mrf.mxu0
    %6575 = vdwg.mxu0
    %6576 = vmatprep.subr.mxu0 0.0
    %6577 = vmatpush1.msra.mxu0 0.0
    %6578 = vmatprep.subr.mxu0 0.0
    %6579 = vmatpush1.msra.mxu0 0.0
    %6580 = vmatprep.subr.mxu0 0.0
    %6581 = vmatpush1.msra.mxu0 0.0
    %6582 = vmatprep.subr.mxu0 0.0
    %6583 = vmatpush1.msra.mxu0 0.0
    %6584 = vmatprep.subr.mxu0 0.0
    %6585 = vmatpush1.msra.mxu0 0.0
    %6586 = vmatprep.subr.mxu0 0.0
    %6587 = vmatpush1.msra.mxu0 0.0
    %6588 = vmatprep.subr.mxu0 0.0
    %6589 = vmatpush1.msra.mxu0 0.0
    %6590 = vmatprep.subr.mxu0 0.0
    %6591 = vmatpush1.msra.mxu0 0.0
    %6592 = vmatprep.subr.mxu0 0.0
    %6593 = vmatpush1.msra.mxu0 0.0
    %6594 = vmatprep.subr.mxu0 0.0
    %6595 = vmatpush1.msra.mxu0 0.0
    %6596 = vmatprep.subr.mxu0 0.0
    %6597 = vmatpush1.msra.mxu0 0.0
    %6598 = vmatprep.subr.mxu0 0.0
    %6599 = vmatpush1.msra.mxu0 0.0
    %6600 = vmatprep.subr.mxu0 0.0
    %6601 = vmatpush1.msra.mxu0 0.0
    %6602 = vmatprep.subr.mxu0 0.0
    %6603 = vmatpush1.msra.mxu0 0.0
    %6604 = vmatprep.subr.mxu0 0.0
    %v6605 = vand.u32 %v6489, 4294901760
    %v6606 = vsub.f32 %v6489, %v6605
    %v6607 = vand.u32 %v6606, 4294901760
    %v6608 = vsub.f32 %v6606, %v6607
    %v6609 = vand.u32 %v6608, 4294901760
    %6610 = vmatpush1.msra.mxu0 %v6609
    %6611 = vmatprep.subr.mxu0 0.0
    %v6612 = vand.u32 %v6488, 4294901760
    %v6613 = vsub.f32 %v6488, %v6612
    %v6614 = vand.u32 %v6613, 4294901760
    %v6615 = vsub.f32 %v6613, %v6614
    %v6616 = vand.u32 %v6615, 4294901760
    %6617 = vmatpush1.msra.mxu0 %v6616
    %6618 = vmatprep.subr.mxu0 0.0
    %6619 = vmatpush2.msra.mxu0 0.0
    %6620 = vmatprep.subr.mxu0 0.0
    %6621 = vmatpush2.msra.mxu0 0.0
    %6622 = vmatprep.subr.mxu0 0.0
    %6623 = vmatpush2.msra.mxu0 0.0
    %6624 = vmatprep.subr.mxu0 0.0
    %6625 = vmatpush2.msra.mxu0 0.0
    %6626 = vmatprep.subr.mxu0 0.0
    %6627 = vmatpush2.msra.mxu0 0.0
    %6628 = vmatprep.subr.mxu0 0.0
    %6629 = vmatpush2.msra.mxu0 0.0
    %6630 = vmatprep.subr.mxu0 0.0
    %6631 = vmatpush2.msra.mxu0 0.0
    %6632 = vmatprep.subr.mxu0 0.0
    %6633 = vmatpush2.msra.mxu0 0.0
    %6634 = vmatprep.subr.mxu0 0.0
    %6635 = vmatpush2.msra.mxu0 0.0
    %6636 = vmatprep.subr.mxu0 0.0
    %6637 = vmatpush2.msra.mxu0 0.0
    %6638 = vmatprep.subr.mxu0 0.0
    %6639 = vmatpush2.msra.mxu0 0.0
    %6640 = vmatprep.subr.mxu0 0.0
    %6641 = vmatpush2.msra.mxu0 0.0
    %6642 = vmatprep.subr.mxu0 0.0
    %6643 = vmatpush2.msra.mxu0 0.0
    %6644 = vmatprep.subr.mxu0 0.0
    %6645 = vmatpush2.msra.mxu0 0.0
    %6646 = vmatprep.subr.mxu0 0.0
    %6647 = vmatpush2.msra.mxu0 0.0
    %6648 = vmatprep.subr.mxu0 0.0
    %6649 = vmatpush2.msra.mxu0 0.0
    %6650 = vmatprep.mubr.f32.mxu0 0.0
    %v6651 = vand.u32 %v6497, 4294901760
    %6652 = vmatmul.mubr.f32.gmra.mxu0 %v6651
    %v6653 = vpop.f32.mrf.mxu0
    %v6654 = vadd.f32 %v6573, %v6653
    %v6655 = vpop.f32.mrf.mxu0
    %6656 = vdwg.mxu0
    %6657 = vmatprep.subr.mxu0 0.0
    %6658 = vmatpush1.msra.mxu0 0.0
    %6659 = vmatprep.subr.mxu0 0.0
    %6660 = vmatpush1.msra.mxu0 0.0
    %6661 = vmatprep.subr.mxu0 0.0
    %6662 = vmatpush1.msra.mxu0 0.0
    %6663 = vmatprep.subr.mxu0 0.0
    %6664 = vmatpush1.msra.mxu0 0.0
    %6665 = vmatprep.subr.mxu0 0.0
    %6666 = vmatpush1.msra.mxu0 0.0
    %6667 = vmatprep.subr.mxu0 0.0
    %6668 = vmatpush1.msra.mxu0 0.0
    %6669 = vmatprep.subr.mxu0 0.0
    %6670 = vmatpush1.msra.mxu0 0.0
    %6671 = vmatprep.subr.mxu0 0.0
    %6672 = vmatpush1.msra.mxu0 0.0
    %6673 = vmatprep.subr.mxu0 0.0
    %6674 = vmatpush1.msra.mxu0 0.0
    %6675 = vmatprep.subr.mxu0 0.0
    %6676 = vmatpush1.msra.mxu0 0.0
    %6677 = vmatprep.subr.mxu0 0.0
    %6678 = vmatpush1.msra.mxu0 0.0
    %6679 = vmatprep.subr.mxu0 0.0
    %6680 = vmatpush1.msra.mxu0 0.0
    %6681 = vmatprep.subr.mxu0 0.0
    %6682 = vmatpush1.msra.mxu0 0.0
    %6683 = vmatprep.subr.mxu0 0.0
    %6684 = vmatpush1.msra.mxu0 0.0
    %6685 = vmatprep.subr.mxu0 0.0
    %v6686 = vand.u32 %v6489, 4294901760
    %v6687 = vsub.f32 %v6489, %v6686
    %6688 = vmatpush1.msra.mxu0 %v6687
    %6689 = vmatprep.subr.mxu0 0.0
    %v6690 = vand.u32 %v6488, 4294901760
    %v6691 = vsub.f32 %v6488, %v6690
    %6692 = vmatpush1.msra.mxu0 %v6691
    %6693 = vmatprep.subr.mxu0 0.0
    %6694 = vmatpush2.msra.mxu0 0.0
    %6695 = vmatprep.subr.mxu0 0.0
    %6696 = vmatpush2.msra.mxu0 0.0
    %6697 = vmatprep.subr.mxu0 0.0
    %6698 = vmatpush2.msra.mxu0 0.0
    %6699 = vmatprep.subr.mxu0 0.0
    %6700 = vmatpush2.msra.mxu0 0.0
    %6701 = vmatprep.subr.mxu0 0.0
    %6702 = vmatpush2.msra.mxu0 0.0
    %6703 = vmatprep.subr.mxu0 0.0
    %6704 = vmatpush2.msra.mxu0 0.0
    %6705 = vmatprep.subr.mxu0 0.0
    %6706 = vmatpush2.msra.mxu0 0.0
    %6707 = vmatprep.subr.mxu0 0.0
    %6708 = vmatpush2.msra.mxu0 0.0
    %6709 = vmatprep.subr.mxu0 0.0
    %6710 = vmatpush2.msra.mxu0 0.0
    %6711 = vmatprep.subr.mxu0 0.0
    %6712 = vmatpush2.msra.mxu0 0.0
    %6713 = vmatprep.subr.mxu0 0.0
    %6714 = vmatpush2.msra.mxu0 0.0
    %6715 = vmatprep.subr.mxu0 0.0
    %6716 = vmatpush2.msra.mxu0 0.0
    %6717 = vmatprep.subr.mxu0 0.0
    %6718 = vmatpush2.msra.mxu0 0.0
    %6719 = vmatprep.subr.mxu0 0.0
    %6720 = vmatpush2.msra.mxu0 0.0
    %6721 = vmatprep.subr.mxu0 0.0
    %6722 = vmatpush2.msra.mxu0 0.0
    %6723 = vmatprep.subr.mxu0 0.0
    %6724 = vmatpush2.msra.mxu0 0.0
    %6725 = vmatprep.mubr.f32.mxu0 0.0
    %v6726 = vand.u32 %v6497, 4294901760
    %v6727 = vsub.f32 %v6497, %v6726
    %6728 = vmatmul.mubr.f32.gmra.mxu0 %v6727
    %v6729 = vpop.f32.mrf.mxu0
    %v6730 = vadd.f32 %v6654, %v6729
    %v6731 = vpop.f32.mrf.mxu0
    %6732 = vdwg.mxu0
    %6733 = vmatprep.subr.mxu0 0.0
    %6734 = vmatpush1.msra.mxu0 0.0
    %6735 = vmatprep.subr.mxu0 0.0
    %6736 = vmatpush1.msra.mxu0 0.0
    %6737 = vmatprep.subr.mxu0 0.0
    %6738 = vmatpush1.msra.mxu0 0.0
    %6739 = vmatprep.subr.mxu0 0.0
    %6740 = vmatpush1.msra.mxu0 0.0
    %6741 = vmatprep.subr.mxu0 0.0
    %6742 = vmatpush1.msra.mxu0 0.0
    %6743 = vmatprep.subr.mxu0 0.0
    %6744 = vmatpush1.msra.mxu0 0.0
    %6745 = vmatprep.subr.mxu0 0.0
    %6746 = vmatpush1.msra.mxu0 0.0
    %6747 = vmatprep.subr.mxu0 0.0
    %6748 = vmatpush1.msra.mxu0 0.0
    %6749 = vmatprep.subr.mxu0 0.0
    %6750 = vmatpush1.msra.mxu0 0.0
    %6751 = vmatprep.subr.mxu0 0.0
    %6752 = vmatpush1.msra.mxu0 0.0
    %6753 = vmatprep.subr.mxu0 0.0
    %6754 = vmatpush1.msra.mxu0 0.0
    %6755 = vmatprep.subr.mxu0 0.0
    %6756 = vmatpush1.msra.mxu0 0.0
    %6757 = vmatprep.subr.mxu0 0.0
    %6758 = vmatpush1.msra.mxu0 0.0
    %6759 = vmatprep.subr.mxu0 0.0
    %6760 = vmatpush1.msra.mxu0 0.0
    %6761 = vmatprep.subr.mxu0 0.0
    %v6762 = vand.u32 %v6489, 4294901760
    %6763 = vmatpush1.msra.mxu0 %v6762
    %6764 = vmatprep.subr.mxu0 0.0
    %v6765 = vand.u32 %v6488, 4294901760
    %6766 = vmatpush1.msra.mxu0 %v6765
    %6767 = vmatprep.subr.mxu0 0.0
    %6768 = vmatpush2.msra.mxu0 0.0
    %6769 = vmatprep.subr.mxu0 0.0
    %6770 = vmatpush2.msra.mxu0 0.0
    %6771 = vmatprep.subr.mxu0 0.0
    %6772 = vmatpush2.msra.mxu0 0.0
    %6773 = vmatprep.subr.mxu0 0.0
    %6774 = vmatpush2.msra.mxu0 0.0
    %6775 = vmatprep.subr.mxu0 0.0
    %6776 = vmatpush2.msra.mxu0 0.0
    %6777 = vmatprep.subr.mxu0 0.0
    %6778 = vmatpush2.msra.mxu0 0.0
    %6779 = vmatprep.subr.mxu0 0.0
    %6780 = vmatpush2.msra.mxu0 0.0
    %6781 = vmatprep.subr.mxu0 0.0
    %6782 = vmatpush2.msra.mxu0 0.0
    %6783 = vmatprep.subr.mxu0 0.0
    %6784 = vmatpush2.msra.mxu0 0.0
    %6785 = vmatprep.subr.mxu0 0.0
    %6786 = vmatpush2.msra.mxu0 0.0
    %6787 = vmatprep.subr.mxu0 0.0
    %6788 = vmatpush2.msra.mxu0 0.0
    %6789 = vmatprep.subr.mxu0 0.0
    %6790 = vmatpush2.msra.mxu0 0.0
    %6791 = vmatprep.subr.mxu0 0.0
    %6792 = vmatpush2.msra.mxu0 0.0
    %6793 = vmatprep.subr.mxu0 0.0
    %6794 = vmatpush2.msra.mxu0 0.0
    %6795 = vmatprep.subr.mxu0 0.0
    %6796 = vmatpush2.msra.mxu0 0.0
    %6797 = vmatprep.subr.mxu0 0.0
    %6798 = vmatpush2.msra.mxu0 0.0
    %6799 = vmatprep.mubr.f32.mxu0 0.0
    %v6800 = vand.u32 %v6497, 4294901760
    %v6801 = vsub.f32 %v6497, %v6800
    %v6802 = vand.u32 %v6801, 4294901760
    %6803 = vmatmul.mubr.f32.gmra.mxu0 %v6802
    %v6804 = vpop.f32.mrf.mxu0
    %v6805 = vadd.f32 %v6730, %v6804
    %v6806 = vpop.f32.mrf.mxu0
    %6807 = vdwg.mxu0
    %6808 = vmatprep.subr.mxu0 0.0
    %6809 = vmatpush1.msra.mxu0 0.0
    %6810 = vmatprep.subr.mxu0 0.0
    %6811 = vmatpush1.msra.mxu0 0.0
    %6812 = vmatprep.subr.mxu0 0.0
    %6813 = vmatpush1.msra.mxu0 0.0
    %6814 = vmatprep.subr.mxu0 0.0
    %6815 = vmatpush1.msra.mxu0 0.0
    %6816 = vmatprep.subr.mxu0 0.0
    %6817 = vmatpush1.msra.mxu0 0.0
    %6818 = vmatprep.subr.mxu0 0.0
    %6819 = vmatpush1.msra.mxu0 0.0
    %6820 = vmatprep.subr.mxu0 0.0
    %6821 = vmatpush1.msra.mxu0 0.0
    %6822 = vmatprep.subr.mxu0 0.0
    %6823 = vmatpush1.msra.mxu0 0.0
    %6824 = vmatprep.subr.mxu0 0.0
    %6825 = vmatpush1.msra.mxu0 0.0
    %6826 = vmatprep.subr.mxu0 0.0
    %6827 = vmatpush1.msra.mxu0 0.0
    %6828 = vmatprep.subr.mxu0 0.0
    %6829 = vmatpush1.msra.mxu0 0.0
    %6830 = vmatprep.subr.mxu0 0.0
    %6831 = vmatpush1.msra.mxu0 0.0
    %6832 = vmatprep.subr.mxu0 0.0
    %6833 = vmatpush1.msra.mxu0 0.0
    %6834 = vmatprep.subr.mxu0 0.0
    %6835 = vmatpush1.msra.mxu0 0.0
    %6836 = vmatprep.subr.mxu0 0.0
    %v6837 = vand.u32 %v6489, 4294901760
    %v6838 = vsub.f32 %v6489, %v6837
    %v6839 = vand.u32 %v6838, 4294901760
    %6840 = vmatpush1.msra.mxu0 %v6839
    %6841 = vmatprep.subr.mxu0 0.0
    %v6842 = vand.u32 %v6488, 4294901760
    %v6843 = vsub.f32 %v6488, %v6842
    %v6844 = vand.u32 %v6843, 4294901760
    %6845 = vmatpush1.msra.mxu0 %v6844
    %6846 = vmatprep.subr.mxu0 0.0
    %6847 = vmatpush2.msra.mxu0 0.0
    %6848 = vmatprep.subr.mxu0 0.0
    %6849 = vmatpush2.msra.mxu0 0.0
    %6850 = vmatprep.subr.mxu0 0.0
    %6851 = vmatpush2.msra.mxu0 0.0
    %6852 = vmatprep.subr.mxu0 0.0
    %6853 = vmatpush2.msra.mxu0 0.0
    %6854 = vmatprep.subr.mxu0 0.0
    %6855 = vmatpush2.msra.mxu0 0.0
    %6856 = vmatprep.subr.mxu0 0.0
    %6857 = vmatpush2.msra.mxu0 0.0
    %6858 = vmatprep.subr.mxu0 0.0
    %6859 = vmatpush2.msra.mxu0 0.0
    %6860 = vmatprep.subr.mxu0 0.0
    %6861 = vmatpush2.msra.mxu0 0.0
    %6862 = vmatprep.subr.mxu0 0.0
    %6863 = vmatpush2.msra.mxu0 0.0
    %6864 = vmatprep.subr.mxu0 0.0
    %6865 = vmatpush2.msra.mxu0 0.0
    %6866 = vmatprep.subr.mxu0 0.0
    %6867 = vmatpush2.msra.mxu0 0.0
    %6868 = vmatprep.subr.mxu0 0.0
    %6869 = vmatpush2.msra.mxu0 0.0
    %6870 = vmatprep.subr.mxu0 0.0
    %6871 = vmatpush2.msra.mxu0 0.0
    %6872 = vmatprep.subr.mxu0 0.0
    %6873 = vmatpush2.msra.mxu0 0.0
    %6874 = vmatprep.subr.mxu0 0.0
    %6875 = vmatpush2.msra.mxu0 0.0
    %6876 = vmatprep.subr.mxu0 0.0
    %6877 = vmatpush2.msra.mxu0 0.0
    %6878 = vmatprep.mubr.f32.mxu0 0.0
    %v6879 = vand.u32 %v6497, 4294901760
    %6880 = vmatmul.mubr.f32.gmra.mxu0 %v6879
    %v6881 = vpop.f32.mrf.mxu0
    %v6882 = vadd.f32 %v6805, %v6881
    %v6883 = vpop.f32.mrf.mxu0
    %6884 = vdwg.mxu0
    %6885 = vmatprep.subr.mxu0 0.0
    %6886 = vmatpush1.msra.mxu0 0.0
    %6887 = vmatprep.subr.mxu0 0.0
    %6888 = vmatpush1.msra.mxu0 0.0
    %6889 = vmatprep.subr.mxu0 0.0
    %6890 = vmatpush1.msra.mxu0 0.0
    %6891 = vmatprep.subr.mxu0 0.0
    %6892 = vmatpush1.msra.mxu0 0.0
    %6893 = vmatprep.subr.mxu0 0.0
    %6894 = vmatpush1.msra.mxu0 0.0
    %6895 = vmatprep.subr.mxu0 0.0
    %6896 = vmatpush1.msra.mxu0 0.0
    %6897 = vmatprep.subr.mxu0 0.0
    %6898 = vmatpush1.msra.mxu0 0.0
    %6899 = vmatprep.subr.mxu0 0.0
    %6900 = vmatpush1.msra.mxu0 0.0
    %6901 = vmatprep.subr.mxu0 0.0
    %6902 = vmatpush1.msra.mxu0 0.0
    %6903 = vmatprep.subr.mxu0 0.0
    %6904 = vmatpush1.msra.mxu0 0.0
    %6905 = vmatprep.subr.mxu0 0.0
    %6906 = vmatpush1.msra.mxu0 0.0
    %6907 = vmatprep.subr.mxu0 0.0
    %6908 = vmatpush1.msra.mxu0 0.0
    %6909 = vmatprep.subr.mxu0 0.0
    %6910 = vmatpush1.msra.mxu0 0.0
    %6911 = vmatprep.subr.mxu0 0.0
    %6912 = vmatpush1.msra.mxu0 0.0
    %6913 = vmatprep.subr.mxu0 0.0
    %v6914 = vand.u32 %v6489, 4294901760
    %6915 = vmatpush1.msra.mxu0 %v6914
    %6916 = vmatprep.subr.mxu0 0.0
    %v6917 = vand.u32 %v6488, 4294901760
    %6918 = vmatpush1.msra.mxu0 %v6917
    %6919 = vmatprep.subr.mxu0 0.0
    %6920 = vmatpush2.msra.mxu0 0.0
    %6921 = vmatprep.subr.mxu0 0.0
    %6922 = vmatpush2.msra.mxu0 0.0
    %6923 = vmatprep.subr.mxu0 0.0
    %6924 = vmatpush2.msra.mxu0 0.0
    %6925 = vmatprep.subr.mxu0 0.0
    %6926 = vmatpush2.msra.mxu0 0.0
    %6927 = vmatprep.subr.mxu0 0.0
    %6928 = vmatpush2.msra.mxu0 0.0
    %6929 = vmatprep.subr.mxu0 0.0
    %6930 = vmatpush2.msra.mxu0 0.0
    %6931 = vmatprep.subr.mxu0 0.0
    %6932 = vmatpush2.msra.mxu0 0.0
    %6933 = vmatprep.subr.mxu0 0.0
    %6934 = vmatpush2.msra.mxu0 0.0
    %6935 = vmatprep.subr.mxu0 0.0
    %6936 = vmatpush2.msra.mxu0 0.0
    %6937 = vmatprep.subr.mxu0 0.0
    %6938 = vmatpush2.msra.mxu0 0.0
    %6939 = vmatprep.subr.mxu0 0.0
    %6940 = vmatpush2.msra.mxu0 0.0
    %6941 = vmatprep.subr.mxu0 0.0
    %6942 = vmatpush2.msra.mxu0 0.0
    %6943 = vmatprep.subr.mxu0 0.0
    %6944 = vmatpush2.msra.mxu0 0.0
    %6945 = vmatprep.subr.mxu0 0.0
    %6946 = vmatpush2.msra.mxu0 0.0
    %6947 = vmatprep.subr.mxu0 0.0
    %6948 = vmatpush2.msra.mxu0 0.0
    %6949 = vmatprep.subr.mxu0 0.0
    %6950 = vmatpush2.msra.mxu0 0.0
    %6951 = vmatprep.mubr.f32.mxu0 0.0
    %v6952 = vand.u32 %v6497, 4294901760
    %6953 = vmatmul.mubr.f32.gmra.mxu0 %v6952
    %v6954 = vpop.f32.mrf.mxu0
    %v6955 = vadd.f32 %v6882, %v6954
    %v6956 = vpop.f32.mrf.mxu0
    %6957 = vdwg.mxu0
    %v6958 = vsel %vm584, %v6955, 0.0
    %v6959 = vrot.slane %v6958, 4
    %v6960 = vadd.f32 %v6958, %v6959
    %v6961 = vrot.slane %v6960, 2
    %v6962 = vadd.f32 %v6960, %v6961
    %v6963 = vrot.slane %v6962, 1
    %v6964 = vadd.f32 %v6962, %v6963
    %v6965 = vmul.f32 %v6964, %v592
    %v6966 = vsub.f32 %v6955, %v6965
    %v6967 = vmul.f32 %v6966, %v6966
    %v6968 = vsel %vm584, %v6967, 0.0
    %v6969 = vrot.slane %v6968, 4
    %v6970 = vadd.f32 %v6968, %v6969
    %v6971 = vrot.slane %v6970, 2
    %v6972 = vadd.f32 %v6970, %v6971
    %v6973 = vrot.slane %v6972, 1
    %v6974 = vadd.f32 %v6972, %v6973
    %v6975 = vmul.f32 %v6974, %v592
    %v6976 = vadd.f32 %v6975, 1e-05
    %v6977 = vrsqrt.pop %v6976
    %v6978 = vmul.f32 %v6966, %v6977
    %v6979 = vld [vmem:[%s6490 + $0x1] sm:$0x1]
    %v6980 = vlaneseq
    %v6981 = vshrl.u32 %v6980, 7
    %v6982 = vsub.s32 0, %v6981
    %v6983 = vrot.slane %v6979, %v6982
    %v6984 = vmul.f32 %v6978, %v6983
    %v6985 = vld [vmem:[%s6490 + $0x2] sm:$0x1]
    %v6986 = vlaneseq
    %v6987 = vshrl.u32 %v6986, 7
    %v6988 = vsub.s32 0, %v6987
    %v6989 = vrot.slane %v6985, %v6988
    %v6990 = vadd.f32 %v6984, %v6989
    %v6991 = vmax.f32 %v6990, 0.0
    %s6992 = scalar_lea.vmem %s6, 128
    %v6993 = vld [vmem:[%s6992] sm:$0xff]
    %v6994 = vld [vmem:[%s6992 + $0x8] sm:$0xff]
    %v6995 = vld [vmem:[%s6992 + $0x10] sm:$0xff]
    %v6996 = vld [vmem:[%s6992 + $0x18] sm:$0x3]
    %v6997 = vld [vmem:[%s6490 + $0x3] sm:$0x1]
    %v6998 = vlaneseq
    %v6999 = vshrl.u32 %v6998, 7
    %v7000 = vsub.s32 0, %v6999
    %v7001 = vrot.slane %v6997, %v7000
    %v7003 = vsel %vm584, %v6991, 0
    %v7006 = vsel %vm632, %v6996, 0
    %7008 = vmatprep.subr.mxu0 0.0
    %7009 = vmatpush1.msra.mxu0 0.0
    %7010 = vmatprep.subr.mxu0 0.0
    %7011 = vmatpush1.msra.mxu0 0.0
    %7012 = vmatprep.subr.mxu0 0.0
    %7013 = vmatpush1.msra.mxu0 0.0
    %7014 = vmatprep.subr.mxu0 0.0
    %7015 = vmatpush1.msra.mxu0 0.0
    %7016 = vmatprep.subr.mxu0 0.0
    %7017 = vmatpush1.msra.mxu0 0.0
    %7018 = vmatprep.subr.mxu0 0.0
    %7019 = vmatpush1.msra.mxu0 0.0
    %7020 = vmatprep.subr.mxu0 0.0
    %7021 = vmatpush1.msra.mxu0 0.0
    %7022 = vmatprep.subr.mxu0 0.0
    %7023 = vmatpush1.msra.mxu0 0.0
    %7024 = vmatprep.subr.mxu0 0.0
    %7025 = vmatpush1.msra.mxu0 0.0
    %7026 = vmatprep.subr.mxu0 0.0
    %7027 = vmatpush1.msra.mxu0 0.0
    %7028 = vmatprep.subr.mxu0 0.0
    %7029 = vmatpush1.msra.mxu0 0.0
    %7030 = vmatprep.subr.mxu0 0.0
    %7031 = vmatpush1.msra.mxu0 0.0
    %7032 = vmatprep.subr.mxu0 0.0
    %v7033 = vand.u32 %v7006, 4294901760
    %7034 = vmatpush1.msra.mxu0 %v7033
    %7035 = vmatprep.subr.mxu0 0.0
    %v7036 = vand.u32 %v6995, 4294901760
    %7037 = vmatpush1.msra.mxu0 %v7036
    %7038 = vmatprep.subr.mxu0 0.0
    %v7039 = vand.u32 %v6994, 4294901760
    %7040 = vmatpush1.msra.mxu0 %v7039
    %7041 = vmatprep.subr.mxu0 0.0
    %v7042 = vand.u32 %v6993, 4294901760
    %7043 = vmatpush1.msra.mxu0 %v7042
    %7044 = vmatprep.subr.mxu0 0.0
    %7045 = vmatpush2.msra.mxu0 0.0
    %7046 = vmatprep.subr.mxu0 0.0
    %7047 = vmatpush2.msra.mxu0 0.0
    %7048 = vmatprep.subr.mxu0 0.0
    %7049 = vmatpush2.msra.mxu0 0.0
    %7050 = vmatprep.subr.mxu0 0.0
    %7051 = vmatpush2.msra.mxu0 0.0
    %7052 = vmatprep.subr.mxu0 0.0
    %7053 = vmatpush2.msra.mxu0 0.0
    %7054 = vmatprep.subr.mxu0 0.0
    %7055 = vmatpush2.msra.mxu0 0.0
    %7056 = vmatprep.subr.mxu0 0.0
    %7057 = vmatpush2.msra.mxu0 0.0
    %7058 = vmatprep.subr.mxu0 0.0
    %7059 = vmatpush2.msra.mxu0 0.0
    %7060 = vmatprep.subr.mxu0 0.0
    %7061 = vmatpush2.msra.mxu0 0.0
    %7062 = vmatprep.subr.mxu0 0.0
    %7063 = vmatpush2.msra.mxu0 0.0
    %7064 = vmatprep.subr.mxu0 0.0
    %7065 = vmatpush2.msra.mxu0 0.0
    %7066 = vmatprep.subr.mxu0 0.0
    %7067 = vmatpush2.msra.mxu0 0.0
    %7068 = vmatprep.subr.mxu0 0.0
    %7069 = vmatpush2.msra.mxu0 0.0
    %7070 = vmatprep.subr.mxu0 0.0
    %7071 = vmatpush2.msra.mxu0 0.0
    %7072 = vmatprep.subr.mxu0 0.0
    %7073 = vmatpush2.msra.mxu0 0.0
    %7074 = vmatprep.subr.mxu0 0.0
    %7075 = vmatpush2.msra.mxu0 0.0
    %7076 = vmatprep.mubr.f32.mxu0 0.0
    %v7077 = vand.u32 %v7003, 4294901760
    %v7078 = vsub.f32 %v7003, %v7077
    %v7079 = vand.u32 %v7078, 4294901760
    %v7080 = vsub.f32 %v7078, %v7079
    %v7081 = vand.u32 %v7080, 4294901760
    %7082 = vmatmul.mubr.f32.gmra.mxu0 %v7081
    %v7083 = vpop.f32.mrf.mxu0
    %v7084 = vadd.f32 %v7001, %v7083
    %v7085 = vpop.f32.mrf.mxu0
    %7086 = vdwg.mxu0
    %7087 = vmatprep.subr.mxu0 0.0
    %7088 = vmatpush1.msra.mxu0 0.0
    %7089 = vmatprep.subr.mxu0 0.0
    %7090 = vmatpush1.msra.mxu0 0.0
    %7091 = vmatprep.subr.mxu0 0.0
    %7092 = vmatpush1.msra.mxu0 0.0
    %7093 = vmatprep.subr.mxu0 0.0
    %7094 = vmatpush1.msra.mxu0 0.0
    %7095 = vmatprep.subr.mxu0 0.0
    %7096 = vmatpush1.msra.mxu0 0.0
    %7097 = vmatprep.subr.mxu0 0.0
    %7098 = vmatpush1.msra.mxu0 0.0
    %7099 = vmatprep.subr.mxu0 0.0
    %7100 = vmatpush1.msra.mxu0 0.0
    %7101 = vmatprep.subr.mxu0 0.0
    %7102 = vmatpush1.msra.mxu0 0.0
    %7103 = vmatprep.subr.mxu0 0.0
    %7104 = vmatpush1.msra.mxu0 0.0
    %7105 = vmatprep.subr.mxu0 0.0
    %7106 = vmatpush1.msra.mxu0 0.0
    %7107 = vmatprep.subr.mxu0 0.0
    %7108 = vmatpush1.msra.mxu0 0.0
    %7109 = vmatprep.subr.mxu0 0.0
    %7110 = vmatpush1.msra.mxu0 0.0
    %7111 = vmatprep.subr.mxu0 0.0
    %v7112 = vand.u32 %v7006, 4294901760
    %v7113 = vsub.f32 %v7006, %v7112
    %v7114 = vand.u32 %v7113, 4294901760
    %v7115 = vsub.f32 %v7113, %v7114
    %v7116 = vand.u32 %v7115, 4294901760
    %7117 = vmatpush1.msra.mxu0 %v7116
    %7118 = vmatprep.subr.mxu0 0.0
    %v7119 = vand.u32 %v6995, 4294901760
    %v7120 = vsub.f32 %v6995, %v7119
    %v7121 = vand.u32 %v7120, 4294901760
    %v7122 = vsub.f32 %v7120, %v7121
    %v7123 = vand.u32 %v7122, 4294901760
    %7124 = vmatpush1.msra.mxu0 %v7123
    %7125 = vmatprep.subr.mxu0 0.0
    %v7126 = vand.u32 %v6994, 4294901760
    %v7127 = vsub.f32 %v6994, %v7126
    %v7128 = vand.u32 %v7127, 4294901760
    %v7129 = vsub.f32 %v7127, %v7128
    %v7130 = vand.u32 %v7129, 4294901760
    %7131 = vmatpush1.msra.mxu0 %v7130
    %7132 = vmatprep.subr.mxu0 0.0
    %v7133 = vand.u32 %v6993, 4294901760
    %v7134 = vsub.f32 %v6993, %v7133
    %v7135 = vand.u32 %v7134, 4294901760
    %v7136 = vsub.f32 %v7134, %v7135
    %v7137 = vand.u32 %v7136, 4294901760
    %7138 = vmatpush1.msra.mxu0 %v7137
    %7139 = vmatprep.subr.mxu0 0.0
    %7140 = vmatpush2.msra.mxu0 0.0
    %7141 = vmatprep.subr.mxu0 0.0
    %7142 = vmatpush2.msra.mxu0 0.0
    %7143 = vmatprep.subr.mxu0 0.0
    %7144 = vmatpush2.msra.mxu0 0.0
    %7145 = vmatprep.subr.mxu0 0.0
    %7146 = vmatpush2.msra.mxu0 0.0
    %7147 = vmatprep.subr.mxu0 0.0
    %7148 = vmatpush2.msra.mxu0 0.0
    %7149 = vmatprep.subr.mxu0 0.0
    %7150 = vmatpush2.msra.mxu0 0.0
    %7151 = vmatprep.subr.mxu0 0.0
    %7152 = vmatpush2.msra.mxu0 0.0
    %7153 = vmatprep.subr.mxu0 0.0
    %7154 = vmatpush2.msra.mxu0 0.0
    %7155 = vmatprep.subr.mxu0 0.0
    %7156 = vmatpush2.msra.mxu0 0.0
    %7157 = vmatprep.subr.mxu0 0.0
    %7158 = vmatpush2.msra.mxu0 0.0
    %7159 = vmatprep.subr.mxu0 0.0
    %7160 = vmatpush2.msra.mxu0 0.0
    %7161 = vmatprep.subr.mxu0 0.0
    %7162 = vmatpush2.msra.mxu0 0.0
    %7163 = vmatprep.subr.mxu0 0.0
    %7164 = vmatpush2.msra.mxu0 0.0
    %7165 = vmatprep.subr.mxu0 0.0
    %7166 = vmatpush2.msra.mxu0 0.0
    %7167 = vmatprep.subr.mxu0 0.0
    %7168 = vmatpush2.msra.mxu0 0.0
    %7169 = vmatprep.subr.mxu0 0.0
    %7170 = vmatpush2.msra.mxu0 0.0
    %7171 = vmatprep.mubr.f32.mxu0 0.0
    %v7172 = vand.u32 %v7003, 4294901760
    %7173 = vmatmul.mubr.f32.gmra.mxu0 %v7172
    %v7174 = vpop.f32.mrf.mxu0
    %v7175 = vadd.f32 %v7084, %v7174
    %v7176 = vpop.f32.mrf.mxu0
    %7177 = vdwg.mxu0
    %7178 = vmatprep.subr.mxu0 0.0
    %7179 = vmatpush1.msra.mxu0 0.0
    %7180 = vmatprep.subr.mxu0 0.0
    %7181 = vmatpush1.msra.mxu0 0.0
    %7182 = vmatprep.subr.mxu0 0.0
    %7183 = vmatpush1.msra.mxu0 0.0
    %7184 = vmatprep.subr.mxu0 0.0
    %7185 = vmatpush1.msra.mxu0 0.0
    %7186 = vmatprep.subr.mxu0 0.0
    %7187 = vmatpush1.msra.mxu0 0.0
    %7188 = vmatprep.subr.mxu0 0.0
    %7189 = vmatpush1.msra.mxu0 0.0
    %7190 = vmatprep.subr.mxu0 0.0
    %7191 = vmatpush1.msra.mxu0 0.0
    %7192 = vmatprep.subr.mxu0 0.0
    %7193 = vmatpush1.msra.mxu0 0.0
    %7194 = vmatprep.subr.mxu0 0.0
    %7195 = vmatpush1.msra.mxu0 0.0
    %7196 = vmatprep.subr.mxu0 0.0
    %7197 = vmatpush1.msra.mxu0 0.0
    %7198 = vmatprep.subr.mxu0 0.0
    %7199 = vmatpush1.msra.mxu0 0.0
    %7200 = vmatprep.subr.mxu0 0.0
    %7201 = vmatpush1.msra.mxu0 0.0
    %7202 = vmatprep.subr.mxu0 0.0
    %v7203 = vand.u32 %v7006, 4294901760
    %v7204 = vsub.f32 %v7006, %v7203
    %7205 = vmatpush1.msra.mxu0 %v7204
    %7206 = vmatprep.subr.mxu0 0.0
    %v7207 = vand.u32 %v6995, 4294901760
    %v7208 = vsub.f32 %v6995, %v7207
    %7209 = vmatpush1.msra.mxu0 %v7208
    %7210 = vmatprep.subr.mxu0 0.0
    %v7211 = vand.u32 %v6994, 4294901760
    %v7212 = vsub.f32 %v6994, %v7211
    %7213 = vmatpush1.msra.mxu0 %v7212
    %7214 = vmatprep.subr.mxu0 0.0
    %v7215 = vand.u32 %v6993, 4294901760
    %v7216 = vsub.f32 %v6993, %v7215
    %7217 = vmatpush1.msra.mxu0 %v7216
    %7218 = vmatprep.subr.mxu0 0.0
    %7219 = vmatpush2.msra.mxu0 0.0
    %7220 = vmatprep.subr.mxu0 0.0
    %7221 = vmatpush2.msra.mxu0 0.0
    %7222 = vmatprep.subr.mxu0 0.0
    %7223 = vmatpush2.msra.mxu0 0.0
    %7224 = vmatprep.subr.mxu0 0.0
    %7225 = vmatpush2.msra.mxu0 0.0
    %7226 = vmatprep.subr.mxu0 0.0
    %7227 = vmatpush2.msra.mxu0 0.0
    %7228 = vmatprep.subr.mxu0 0.0
    %7229 = vmatpush2.msra.mxu0 0.0
    %7230 = vmatprep.subr.mxu0 0.0
    %7231 = vmatpush2.msra.mxu0 0.0
    %7232 = vmatprep.subr.mxu0 0.0
    %7233 = vmatpush2.msra.mxu0 0.0
    %7234 = vmatprep.subr.mxu0 0.0
    %7235 = vmatpush2.msra.mxu0 0.0
    %7236 = vmatprep.subr.mxu0 0.0
    %7237 = vmatpush2.msra.mxu0 0.0
    %7238 = vmatprep.subr.mxu0 0.0
    %7239 = vmatpush2.msra.mxu0 0.0
    %7240 = vmatprep.subr.mxu0 0.0
    %7241 = vmatpush2.msra.mxu0 0.0
    %7242 = vmatprep.subr.mxu0 0.0
    %7243 = vmatpush2.msra.mxu0 0.0
    %7244 = vmatprep.subr.mxu0 0.0
    %7245 = vmatpush2.msra.mxu0 0.0
    %7246 = vmatprep.subr.mxu0 0.0
    %7247 = vmatpush2.msra.mxu0 0.0
    %7248 = vmatprep.subr.mxu0 0.0
    %7249 = vmatpush2.msra.mxu0 0.0
    %7250 = vmatprep.mubr.f32.mxu0 0.0
    %v7251 = vand.u32 %v7003, 4294901760
    %v7252 = vsub.f32 %v7003, %v7251
    %7253 = vmatmul.mubr.f32.gmra.mxu0 %v7252
    %v7254 = vpop.f32.mrf.mxu0
    %v7255 = vadd.f32 %v7175, %v7254
    %v7256 = vpop.f32.mrf.mxu0
    %7257 = vdwg.mxu0
    %7258 = vmatprep.subr.mxu0 0.0
    %7259 = vmatpush1.msra.mxu0 0.0
    %7260 = vmatprep.subr.mxu0 0.0
    %7261 = vmatpush1.msra.mxu0 0.0
    %7262 = vmatprep.subr.mxu0 0.0
    %7263 = vmatpush1.msra.mxu0 0.0
    %7264 = vmatprep.subr.mxu0 0.0
    %7265 = vmatpush1.msra.mxu0 0.0
    %7266 = vmatprep.subr.mxu0 0.0
    %7267 = vmatpush1.msra.mxu0 0.0
    %7268 = vmatprep.subr.mxu0 0.0
    %7269 = vmatpush1.msra.mxu0 0.0
    %7270 = vmatprep.subr.mxu0 0.0
    %7271 = vmatpush1.msra.mxu0 0.0
    %7272 = vmatprep.subr.mxu0 0.0
    %7273 = vmatpush1.msra.mxu0 0.0
    %7274 = vmatprep.subr.mxu0 0.0
    %7275 = vmatpush1.msra.mxu0 0.0
    %7276 = vmatprep.subr.mxu0 0.0
    %7277 = vmatpush1.msra.mxu0 0.0
    %7278 = vmatprep.subr.mxu0 0.0
    %7279 = vmatpush1.msra.mxu0 0.0
    %7280 = vmatprep.subr.mxu0 0.0
    %7281 = vmatpush1.msra.mxu0 0.0
    %7282 = vmatprep.subr.mxu0 0.0
    %v7283 = vand.u32 %v7006, 4294901760
    %7284 = vmatpush1.msra.mxu0 %v7283
    %7285 = vmatprep.subr.mxu0 0.0
    %v7286 = vand.u32 %v6995, 4294901760
    %7287 = vmatpush1.msra.mxu0 %v7286
    %7288 = vmatprep.subr.mxu0 0.0
    %v7289 = vand.u32 %v6994, 4294901760
    %7290 = vmatpush1.msra.mxu0 %v7289
    %7291 = vmatprep.subr.mxu0 0.0
    %v7292 = vand.u32 %v6993, 4294901760
    %7293 = vmatpush1.msra.mxu0 %v7292
    %7294 = vmatprep.subr.mxu0 0.0
    %7295 = vmatpush2.msra.mxu0 0.0
    %7296 = vmatprep.subr.mxu0 0.0
    %7297 = vmatpush2.msra.mxu0 0.0
    %7298 = vmatprep.subr.mxu0 0.0
    %7299 = vmatpush2.msra.mxu0 0.0
    %7300 = vmatprep.subr.mxu0 0.0
    %7301 = vmatpush2.msra.mxu0 0.0
    %7302 = vmatprep.subr.mxu0 0.0
    %7303 = vmatpush2.msra.mxu0 0.0
    %7304 = vmatprep.subr.mxu0 0.0
    %7305 = vmatpush2.msra.mxu0 0.0
    %7306 = vmatprep.subr.mxu0 0.0
    %7307 = vmatpush2.msra.mxu0 0.0
    %7308 = vmatprep.subr.mxu0 0.0
    %7309 = vmatpush2.msra.mxu0 0.0
    %7310 = vmatprep.subr.mxu0 0.0
    %7311 = vmatpush2.msra.mxu0 0.0
    %7312 = vmatprep.subr.mxu0 0.0
    %7313 = vmatpush2.msra.mxu0 0.0
    %7314 = vmatprep.subr.mxu0 0.0
    %7315 = vmatpush2.msra.mxu0 0.0
    %7316 = vmatprep.subr.mxu0 0.0
    %7317 = vmatpush2.msra.mxu0 0.0
    %7318 = vmatprep.subr.mxu0 0.0
    %7319 = vmatpush2.msra.mxu0 0.0
    %7320 = vmatprep.subr.mxu0 0.0
    %7321 = vmatpush2.msra.mxu0 0.0
    %7322 = vmatprep.subr.mxu0 0.0
    %7323 = vmatpush2.msra.mxu0 0.0
    %7324 = vmatprep.subr.mxu0 0.0
    %7325 = vmatpush2.msra.mxu0 0.0
    %7326 = vmatprep.mubr.f32.mxu0 0.0
    %v7327 = vand.u32 %v7003, 4294901760
    %v7328 = vsub.f32 %v7003, %v7327
    %v7329 = vand.u32 %v7328, 4294901760
    %7330 = vmatmul.mubr.f32.gmra.mxu0 %v7329
    %v7331 = vpop.f32.mrf.mxu0
    %v7332 = vadd.f32 %v7255, %v7331
    %v7333 = vpop.f32.mrf.mxu0
    %7334 = vdwg.mxu0
    %7335 = vmatprep.subr.mxu0 0.0
    %7336 = vmatpush1.msra.mxu0 0.0
    %7337 = vmatprep.subr.mxu0 0.0
    %7338 = vmatpush1.msra.mxu0 0.0
    %7339 = vmatprep.subr.mxu0 0.0
    %7340 = vmatpush1.msra.mxu0 0.0
    %7341 = vmatprep.subr.mxu0 0.0
    %7342 = vmatpush1.msra.mxu0 0.0
    %7343 = vmatprep.subr.mxu0 0.0
    %7344 = vmatpush1.msra.mxu0 0.0
    %7345 = vmatprep.subr.mxu0 0.0
    %7346 = vmatpush1.msra.mxu0 0.0
    %7347 = vmatprep.subr.mxu0 0.0
    %7348 = vmatpush1.msra.mxu0 0.0
    %7349 = vmatprep.subr.mxu0 0.0
    %7350 = vmatpush1.msra.mxu0 0.0
    %7351 = vmatprep.subr.mxu0 0.0
    %7352 = vmatpush1.msra.mxu0 0.0
    %7353 = vmatprep.subr.mxu0 0.0
    %7354 = vmatpush1.msra.mxu0 0.0
    %7355 = vmatprep.subr.mxu0 0.0
    %7356 = vmatpush1.msra.mxu0 0.0
    %7357 = vmatprep.subr.mxu0 0.0
    %7358 = vmatpush1.msra.mxu0 0.0
    %7359 = vmatprep.subr.mxu0 0.0
    %v7360 = vand.u32 %v7006, 4294901760
    %v7361 = vsub.f32 %v7006, %v7360
    %v7362 = vand.u32 %v7361, 4294901760
    %7363 = vmatpush1.msra.mxu0 %v7362
    %7364 = vmatprep.subr.mxu0 0.0
    %v7365 = vand.u32 %v6995, 4294901760
    %v7366 = vsub.f32 %v6995, %v7365
    %v7367 = vand.u32 %v7366, 4294901760
    %7368 = vmatpush1.msra.mxu0 %v7367
    %7369 = vmatprep.subr.mxu0 0.0
    %v7370 = vand.u32 %v6994, 4294901760
    %v7371 = vsub.f32 %v6994, %v7370
    %v7372 = vand.u32 %v7371, 4294901760
    %7373 = vmatpush1.msra.mxu0 %v7372
    %7374 = vmatprep.subr.mxu0 0.0
    %v7375 = vand.u32 %v6993, 4294901760
    %v7376 = vsub.f32 %v6993, %v7375
    %v7377 = vand.u32 %v7376, 4294901760
    %7378 = vmatpush1.msra.mxu0 %v7377
    %7379 = vmatprep.subr.mxu0 0.0
    %7380 = vmatpush2.msra.mxu0 0.0
    %7381 = vmatprep.subr.mxu0 0.0
    %7382 = vmatpush2.msra.mxu0 0.0
    %7383 = vmatprep.subr.mxu0 0.0
    %7384 = vmatpush2.msra.mxu0 0.0
    %7385 = vmatprep.subr.mxu0 0.0
    %7386 = vmatpush2.msra.mxu0 0.0
    %7387 = vmatprep.subr.mxu0 0.0
    %7388 = vmatpush2.msra.mxu0 0.0
    %7389 = vmatprep.subr.mxu0 0.0
    %7390 = vmatpush2.msra.mxu0 0.0
    %7391 = vmatprep.subr.mxu0 0.0
    %7392 = vmatpush2.msra.mxu0 0.0
    %7393 = vmatprep.subr.mxu0 0.0
    %7394 = vmatpush2.msra.mxu0 0.0
    %7395 = vmatprep.subr.mxu0 0.0
    %7396 = vmatpush2.msra.mxu0 0.0
    %7397 = vmatprep.subr.mxu0 0.0
    %7398 = vmatpush2.msra.mxu0 0.0
    %7399 = vmatprep.subr.mxu0 0.0
    %7400 = vmatpush2.msra.mxu0 0.0
    %7401 = vmatprep.subr.mxu0 0.0
    %7402 = vmatpush2.msra.mxu0 0.0
    %7403 = vmatprep.subr.mxu0 0.0
    %7404 = vmatpush2.msra.mxu0 0.0
    %7405 = vmatprep.subr.mxu0 0.0
    %7406 = vmatpush2.msra.mxu0 0.0
    %7407 = vmatprep.subr.mxu0 0.0
    %7408 = vmatpush2.msra.mxu0 0.0
    %7409 = vmatprep.subr.mxu0 0.0
    %7410 = vmatpush2.msra.mxu0 0.0
    %7411 = vmatprep.mubr.f32.mxu0 0.0
    %v7412 = vand.u32 %v7003, 4294901760
    %7413 = vmatmul.mubr.f32.gmra.mxu0 %v7412
    %v7414 = vpop.f32.mrf.mxu0
    %v7415 = vadd.f32 %v7332, %v7414
    %v7416 = vpop.f32.mrf.mxu0
    %7417 = vdwg.mxu0
    %7418 = vmatprep.subr.mxu0 0.0
    %7419 = vmatpush1.msra.mxu0 0.0
    %7420 = vmatprep.subr.mxu0 0.0
    %7421 = vmatpush1.msra.mxu0 0.0
    %7422 = vmatprep.subr.mxu0 0.0
    %7423 = vmatpush1.msra.mxu0 0.0
    %7424 = vmatprep.subr.mxu0 0.0
    %7425 = vmatpush1.msra.mxu0 0.0
    %7426 = vmatprep.subr.mxu0 0.0
    %7427 = vmatpush1.msra.mxu0 0.0
    %7428 = vmatprep.subr.mxu0 0.0
    %7429 = vmatpush1.msra.mxu0 0.0
    %7430 = vmatprep.subr.mxu0 0.0
    %7431 = vmatpush1.msra.mxu0 0.0
    %7432 = vmatprep.subr.mxu0 0.0
    %7433 = vmatpush1.msra.mxu0 0.0
    %7434 = vmatprep.subr.mxu0 0.0
    %7435 = vmatpush1.msra.mxu0 0.0
    %7436 = vmatprep.subr.mxu0 0.0
    %7437 = vmatpush1.msra.mxu0 0.0
    %7438 = vmatprep.subr.mxu0 0.0
    %7439 = vmatpush1.msra.mxu0 0.0
    %7440 = vmatprep.subr.mxu0 0.0
    %7441 = vmatpush1.msra.mxu0 0.0
    %7442 = vmatprep.subr.mxu0 0.0
    %v7443 = vand.u32 %v7006, 4294901760
    %7444 = vmatpush1.msra.mxu0 %v7443
    %7445 = vmatprep.subr.mxu0 0.0
    %v7446 = vand.u32 %v6995, 4294901760
    %7447 = vmatpush1.msra.mxu0 %v7446
    %7448 = vmatprep.subr.mxu0 0.0
    %v7449 = vand.u32 %v6994, 4294901760
    %7450 = vmatpush1.msra.mxu0 %v7449
    %7451 = vmatprep.subr.mxu0 0.0
    %v7452 = vand.u32 %v6993, 4294901760
    %7453 = vmatpush1.msra.mxu0 %v7452
    %7454 = vmatprep.subr.mxu0 0.0
    %7455 = vmatpush2.msra.mxu0 0.0
    %7456 = vmatprep.subr.mxu0 0.0
    %7457 = vmatpush2.msra.mxu0 0.0
    %7458 = vmatprep.subr.mxu0 0.0
    %7459 = vmatpush2.msra.mxu0 0.0
    %7460 = vmatprep.subr.mxu0 0.0
    %7461 = vmatpush2.msra.mxu0 0.0
    %7462 = vmatprep.subr.mxu0 0.0
    %7463 = vmatpush2.msra.mxu0 0.0
    %7464 = vmatprep.subr.mxu0 0.0
    %7465 = vmatpush2.msra.mxu0 0.0
    %7466 = vmatprep.subr.mxu0 0.0
    %7467 = vmatpush2.msra.mxu0 0.0
    %7468 = vmatprep.subr.mxu0 0.0
    %7469 = vmatpush2.msra.mxu0 0.0
    %7470 = vmatprep.subr.mxu0 0.0
    %7471 = vmatpush2.msra.mxu0 0.0
    %7472 = vmatprep.subr.mxu0 0.0
    %7473 = vmatpush2.msra.mxu0 0.0
    %7474 = vmatprep.subr.mxu0 0.0
    %7475 = vmatpush2.msra.mxu0 0.0
    %7476 = vmatprep.subr.mxu0 0.0
    %7477 = vmatpush2.msra.mxu0 0.0
    %7478 = vmatprep.subr.mxu0 0.0
    %7479 = vmatpush2.msra.mxu0 0.0
    %7480 = vmatprep.subr.mxu0 0.0
    %7481 = vmatpush2.msra.mxu0 0.0
    %7482 = vmatprep.subr.mxu0 0.0
    %7483 = vmatpush2.msra.mxu0 0.0
    %7484 = vmatprep.subr.mxu0 0.0
    %7485 = vmatpush2.msra.mxu0 0.0
    %7486 = vmatprep.mubr.f32.mxu0 0.0
    %v7487 = vand.u32 %v7003, 4294901760
    %7488 = vmatmul.mubr.f32.gmra.mxu0 %v7487
    %v7489 = vpop.f32.mrf.mxu0
    %v7490 = vadd.f32 %v7415, %v7489
    %v7491 = vpop.f32.mrf.mxu0
    %7492 = vdwg.mxu0
    %v7493 = vsel %vm584, %v7490, 0.0
    %v7494 = vrot.slane %v7493, 4
    %v7495 = vadd.f32 %v7493, %v7494
    %v7496 = vrot.slane %v7495, 2
    %v7497 = vadd.f32 %v7495, %v7496
    %v7498 = vrot.slane %v7497, 1
    %v7499 = vadd.f32 %v7497, %v7498
    %v7500 = vmul.f32 %v7499, %v592
    %v7501 = vsub.f32 %v7490, %v7500
    %v7502 = vmul.f32 %v7501, %v7501
    %v7503 = vsel %vm584, %v7502, 0.0
    %v7504 = vrot.slane %v7503, 4
    %v7505 = vadd.f32 %v7503, %v7504
    %v7506 = vrot.slane %v7505, 2
    %v7507 = vadd.f32 %v7505, %v7506
    %v7508 = vrot.slane %v7507, 1
    %v7509 = vadd.f32 %v7507, %v7508
    %v7510 = vmul.f32 %v7509, %v592
    %v7511 = vadd.f32 %v7510, 1e-05
    %v7512 = vrsqrt.pop %v7511
    %v7513 = vmul.f32 %v7501, %v7512
    %v7514 = vld [vmem:[%s6490 + $0x4] sm:$0x1]
    %v7515 = vlaneseq
    %v7516 = vshrl.u32 %v7515, 7
    %v7517 = vsub.s32 0, %v7516
    %v7518 = vrot.slane %v7514, %v7517
    %v7519 = vmul.f32 %v7513, %v7518
    %v7520 = vld [vmem:[%s6490 + $0x5] sm:$0x1]
    %v7521 = vlaneseq
    %v7522 = vshrl.u32 %v7521, 7
    %v7523 = vsub.s32 0, %v7522
    %v7524 = vrot.slane %v7520, %v7523
    %v7525 = vadd.f32 %v7519, %v7524
    %v7526 = vmax.f32 %v7525, 0.0
    %v7527 = vld [vmem:[%s6490 + $0x6] sm:$0x1]
    %s7528 = scalar_lea.vmem %s7, 128
    %v7529 = vld [vmem:[%s7528] sm:$0xff]
    %v7530 = vld [vmem:[%s7528 + $0x8] sm:$0xff]
    %v7531 = vld [vmem:[%s7528 + $0x10] sm:$0xff]
    %v7532 = vld [vmem:[%s7528 + $0x18] sm:$0x3]
    %v7533 = vlaneseq
    %v7534 = vshrl.u32 %v7533, 7
    %v7535 = vsub.s32 0, %v7534
    %v7536 = vrot.slane %v7527, %v7535
    %v7538 = vsel %vm584, %v7526, 0
    %v7541 = vsel %vm632, %v7532, 0
    %7543 = vmatprep.subr.mxu0 0.0
    %7544 = vmatpush1.msra.mxu0 0.0
    %7545 = vmatprep.subr.mxu0 0.0
    %7546 = vmatpush1.msra.mxu0 0.0
    %7547 = vmatprep.subr.mxu0 0.0
    %7548 = vmatpush1.msra.mxu0 0.0
    %7549 = vmatprep.subr.mxu0 0.0
    %7550 = vmatpush1.msra.mxu0 0.0
    %7551 = vmatprep.subr.mxu0 0.0
    %7552 = vmatpush1.msra.mxu0 0.0
    %7553 = vmatprep.subr.mxu0 0.0
    %7554 = vmatpush1.msra.mxu0 0.0
    %7555 = vmatprep.subr.mxu0 0.0
    %7556 = vmatpush1.msra.mxu0 0.0
    %7557 = vmatprep.subr.mxu0 0.0
    %7558 = vmatpush1.msra.mxu0 0.0
    %7559 = vmatprep.subr.mxu0 0.0
    %7560 = vmatpush1.msra.mxu0 0.0
    %7561 = vmatprep.subr.mxu0 0.0
    %7562 = vmatpush1.msra.mxu0 0.0
    %7563 = vmatprep.subr.mxu0 0.0
    %7564 = vmatpush1.msra.mxu0 0.0
    %7565 = vmatprep.subr.mxu0 0.0
    %7566 = vmatpush1.msra.mxu0 0.0
    %7567 = vmatprep.subr.mxu0 0.0
    %v7568 = vand.u32 %v7541, 4294901760
    %7569 = vmatpush1.msra.mxu0 %v7568
    %7570 = vmatprep.subr.mxu0 0.0
    %v7571 = vand.u32 %v7531, 4294901760
    %7572 = vmatpush1.msra.mxu0 %v7571
    %7573 = vmatprep.subr.mxu0 0.0
    %v7574 = vand.u32 %v7530, 4294901760
    %7575 = vmatpush1.msra.mxu0 %v7574
    %7576 = vmatprep.subr.mxu0 0.0
    %v7577 = vand.u32 %v7529, 4294901760
    %7578 = vmatpush1.msra.mxu0 %v7577
    %7579 = vmatprep.subr.mxu0 0.0
    %7580 = vmatpush2.msra.mxu0 0.0
    %7581 = vmatprep.subr.mxu0 0.0
    %7582 = vmatpush2.msra.mxu0 0.0
    %7583 = vmatprep.subr.mxu0 0.0
    %7584 = vmatpush2.msra.mxu0 0.0
    %7585 = vmatprep.subr.mxu0 0.0
    %7586 = vmatpush2.msra.mxu0 0.0
    %7587 = vmatprep.subr.mxu0 0.0
    %7588 = vmatpush2.msra.mxu0 0.0
    %7589 = vmatprep.subr.mxu0 0.0
    %7590 = vmatpush2.msra.mxu0 0.0
    %7591 = vmatprep.subr.mxu0 0.0
    %7592 = vmatpush2.msra.mxu0 0.0
    %7593 = vmatprep.subr.mxu0 0.0
    %7594 = vmatpush2.msra.mxu0 0.0
    %7595 = vmatprep.subr.mxu0 0.0
    %7596 = vmatpush2.msra.mxu0 0.0
    %7597 = vmatprep.subr.mxu0 0.0
    %7598 = vmatpush2.msra.mxu0 0.0
    %7599 = vmatprep.subr.mxu0 0.0
    %7600 = vmatpush2.msra.mxu0 0.0
    %7601 = vmatprep.subr.mxu0 0.0
    %7602 = vmatpush2.msra.mxu0 0.0
    %7603 = vmatprep.subr.mxu0 0.0
    %7604 = vmatpush2.msra.mxu0 0.0
    %7605 = vmatprep.subr.mxu0 0.0
    %7606 = vmatpush2.msra.mxu0 0.0
    %7607 = vmatprep.subr.mxu0 0.0
    %7608 = vmatpush2.msra.mxu0 0.0
    %7609 = vmatprep.subr.mxu0 0.0
    %7610 = vmatpush2.msra.mxu0 0.0
    %7611 = vmatprep.mubr.f32.mxu0 0.0
    %v7612 = vand.u32 %v7538, 4294901760
    %v7613 = vsub.f32 %v7538, %v7612
    %v7614 = vand.u32 %v7613, 4294901760
    %v7615 = vsub.f32 %v7613, %v7614
    %v7616 = vand.u32 %v7615, 4294901760
    %7617 = vmatmul.mubr.f32.gmra.mxu0 %v7616
    %v7618 = vpop.f32.mrf.mxu0
    %v7619 = vadd.f32 %v7536, %v7618
    %v7620 = vpop.f32.mrf.mxu0
    %7621 = vdwg.mxu0
    %7622 = vmatprep.subr.mxu0 0.0
    %7623 = vmatpush1.msra.mxu0 0.0
    %7624 = vmatprep.subr.mxu0 0.0
    %7625 = vmatpush1.msra.mxu0 0.0
    %7626 = vmatprep.subr.mxu0 0.0
    %7627 = vmatpush1.msra.mxu0 0.0
    %7628 = vmatprep.subr.mxu0 0.0
    %7629 = vmatpush1.msra.mxu0 0.0
    %7630 = vmatprep.subr.mxu0 0.0
    %7631 = vmatpush1.msra.mxu0 0.0
    %7632 = vmatprep.subr.mxu0 0.0
    %7633 = vmatpush1.msra.mxu0 0.0
    %7634 = vmatprep.subr.mxu0 0.0
    %7635 = vmatpush1.msra.mxu0 0.0
    %7636 = vmatprep.subr.mxu0 0.0
    %7637 = vmatpush1.msra.mxu0 0.0
    %7638 = vmatprep.subr.mxu0 0.0
    %7639 = vmatpush1.msra.mxu0 0.0
    %7640 = vmatprep.subr.mxu0 0.0
    %7641 = vmatpush1.msra.mxu0 0.0
    %7642 = vmatprep.subr.mxu0 0.0
    %7643 = vmatpush1.msra.mxu0 0.0
    %7644 = vmatprep.subr.mxu0 0.0
    %7645 = vmatpush1.msra.mxu0 0.0
    %7646 = vmatprep.subr.mxu0 0.0
    %v7647 = vand.u32 %v7541, 4294901760
    %v7648 = vsub.f32 %v7541, %v7647
    %v7649 = vand.u32 %v7648, 4294901760
    %v7650 = vsub.f32 %v7648, %v7649
    %v7651 = vand.u32 %v7650, 4294901760
    %7652 = vmatpush1.msra.mxu0 %v7651
    %7653 = vmatprep.subr.mxu0 0.0
    %v7654 = vand.u32 %v7531, 4294901760
    %v7655 = vsub.f32 %v7531, %v7654
    %v7656 = vand.u32 %v7655, 4294901760
    %v7657 = vsub.f32 %v7655, %v7656
    %v7658 = vand.u32 %v7657, 4294901760
    %7659 = vmatpush1.msra.mxu0 %v7658
    %7660 = vmatprep.subr.mxu0 0.0
    %v7661 = vand.u32 %v7530, 4294901760
    %v7662 = vsub.f32 %v7530, %v7661
    %v7663 = vand.u32 %v7662, 4294901760
    %v7664 = vsub.f32 %v7662, %v7663
    %v7665 = vand.u32 %v7664, 4294901760
    %7666 = vmatpush1.msra.mxu0 %v7665
    %7667 = vmatprep.subr.mxu0 0.0
    %v7668 = vand.u32 %v7529, 4294901760
    %v7669 = vsub.f32 %v7529, %v7668
    %v7670 = vand.u32 %v7669, 4294901760
    %v7671 = vsub.f32 %v7669, %v7670
    %v7672 = vand.u32 %v7671, 4294901760
    %7673 = vmatpush1.msra.mxu0 %v7672
    %7674 = vmatprep.subr.mxu0 0.0
    %7675 = vmatpush2.msra.mxu0 0.0
    %7676 = vmatprep.subr.mxu0 0.0
    %7677 = vmatpush2.msra.mxu0 0.0
    %7678 = vmatprep.subr.mxu0 0.0
    %7679 = vmatpush2.msra.mxu0 0.0
    %7680 = vmatprep.subr.mxu0 0.0
    %7681 = vmatpush2.msra.mxu0 0.0
    %7682 = vmatprep.subr.mxu0 0.0
    %7683 = vmatpush2.msra.mxu0 0.0
    %7684 = vmatprep.subr.mxu0 0.0
    %7685 = vmatpush2.msra.mxu0 0.0
    %7686 = vmatprep.subr.mxu0 0.0
    %7687 = vmatpush2.msra.mxu0 0.0
    %7688 = vmatprep.subr.mxu0 0.0
    %7689 = vmatpush2.msra.mxu0 0.0
    %7690 = vmatprep.subr.mxu0 0.0
    %7691 = vmatpush2.msra.mxu0 0.0
    %7692 = vmatprep.subr.mxu0 0.0
    %7693 = vmatpush2.msra.mxu0 0.0
    %7694 = vmatprep.subr.mxu0 0.0
    %7695 = vmatpush2.msra.mxu0 0.0
    %7696 = vmatprep.subr.mxu0 0.0
    %7697 = vmatpush2.msra.mxu0 0.0
    %7698 = vmatprep.subr.mxu0 0.0
    %7699 = vmatpush2.msra.mxu0 0.0
    %7700 = vmatprep.subr.mxu0 0.0
    %7701 = vmatpush2.msra.mxu0 0.0
    %7702 = vmatprep.subr.mxu0 0.0
    %7703 = vmatpush2.msra.mxu0 0.0
    %7704 = vmatprep.subr.mxu0 0.0
    %7705 = vmatpush2.msra.mxu0 0.0
    %7706 = vmatprep.mubr.f32.mxu0 0.0
    %v7707 = vand.u32 %v7538, 4294901760
    %7708 = vmatmul.mubr.f32.gmra.mxu0 %v7707
    %v7709 = vpop.f32.mrf.mxu0
    %v7710 = vadd.f32 %v7619, %v7709
    %v7711 = vpop.f32.mrf.mxu0
    %7712 = vdwg.mxu0
    %7713 = vmatprep.subr.mxu0 0.0
    %7714 = vmatpush1.msra.mxu0 0.0
    %7715 = vmatprep.subr.mxu0 0.0
    %7716 = vmatpush1.msra.mxu0 0.0
    %7717 = vmatprep.subr.mxu0 0.0
    %7718 = vmatpush1.msra.mxu0 0.0
    %7719 = vmatprep.subr.mxu0 0.0
    %7720 = vmatpush1.msra.mxu0 0.0
    %7721 = vmatprep.subr.mxu0 0.0
    %7722 = vmatpush1.msra.mxu0 0.0
    %7723 = vmatprep.subr.mxu0 0.0
    %7724 = vmatpush1.msra.mxu0 0.0
    %7725 = vmatprep.subr.mxu0 0.0
    %7726 = vmatpush1.msra.mxu0 0.0
    %7727 = vmatprep.subr.mxu0 0.0
    %7728 = vmatpush1.msra.mxu0 0.0
    %7729 = vmatprep.subr.mxu0 0.0
    %7730 = vmatpush1.msra.mxu0 0.0
    %7731 = vmatprep.subr.mxu0 0.0
    %7732 = vmatpush1.msra.mxu0 0.0
    %7733 = vmatprep.subr.mxu0 0.0
    %7734 = vmatpush1.msra.mxu0 0.0
    %7735 = vmatprep.subr.mxu0 0.0
    %7736 = vmatpush1.msra.mxu0 0.0
    %7737 = vmatprep.subr.mxu0 0.0
    %v7738 = vand.u32 %v7541, 4294901760
    %v7739 = vsub.f32 %v7541, %v7738
    %7740 = vmatpush1.msra.mxu0 %v7739
    %7741 = vmatprep.subr.mxu0 0.0
    %v7742 = vand.u32 %v7531, 4294901760
    %v7743 = vsub.f32 %v7531, %v7742
    %7744 = vmatpush1.msra.mxu0 %v7743
    %7745 = vmatprep.subr.mxu0 0.0
    %v7746 = vand.u32 %v7530, 4294901760
    %v7747 = vsub.f32 %v7530, %v7746
    %7748 = vmatpush1.msra.mxu0 %v7747
    %7749 = vmatprep.subr.mxu0 0.0
    %v7750 = vand.u32 %v7529, 4294901760
    %v7751 = vsub.f32 %v7529, %v7750
    %7752 = vmatpush1.msra.mxu0 %v7751
    %7753 = vmatprep.subr.mxu0 0.0
    %7754 = vmatpush2.msra.mxu0 0.0
    %7755 = vmatprep.subr.mxu0 0.0
    %7756 = vmatpush2.msra.mxu0 0.0
    %7757 = vmatprep.subr.mxu0 0.0
    %7758 = vmatpush2.msra.mxu0 0.0
    %7759 = vmatprep.subr.mxu0 0.0
    %7760 = vmatpush2.msra.mxu0 0.0
    %7761 = vmatprep.subr.mxu0 0.0
    %7762 = vmatpush2.msra.mxu0 0.0
    %7763 = vmatprep.subr.mxu0 0.0
    %7764 = vmatpush2.msra.mxu0 0.0
    %7765 = vmatprep.subr.mxu0 0.0
    %7766 = vmatpush2.msra.mxu0 0.0
    %7767 = vmatprep.subr.mxu0 0.0
    %7768 = vmatpush2.msra.mxu0 0.0
    %7769 = vmatprep.subr.mxu0 0.0
    %7770 = vmatpush2.msra.mxu0 0.0
    %7771 = vmatprep.subr.mxu0 0.0
    %7772 = vmatpush2.msra.mxu0 0.0
    %7773 = vmatprep.subr.mxu0 0.0
    %7774 = vmatpush2.msra.mxu0 0.0
    %7775 = vmatprep.subr.mxu0 0.0
    %7776 = vmatpush2.msra.mxu0 0.0
    %7777 = vmatprep.subr.mxu0 0.0
    %7778 = vmatpush2.msra.mxu0 0.0
    %7779 = vmatprep.subr.mxu0 0.0
    %7780 = vmatpush2.msra.mxu0 0.0
    %7781 = vmatprep.subr.mxu0 0.0
    %7782 = vmatpush2.msra.mxu0 0.0
    %7783 = vmatprep.subr.mxu0 0.0
    %7784 = vmatpush2.msra.mxu0 0.0
    %7785 = vmatprep.mubr.f32.mxu0 0.0
    %v7786 = vand.u32 %v7538, 4294901760
    %v7787 = vsub.f32 %v7538, %v7786
    %7788 = vmatmul.mubr.f32.gmra.mxu0 %v7787
    %v7789 = vpop.f32.mrf.mxu0
    %v7790 = vadd.f32 %v7710, %v7789
    %v7791 = vpop.f32.mrf.mxu0
    %7792 = vdwg.mxu0
    %7793 = vmatprep.subr.mxu0 0.0
    %7794 = vmatpush1.msra.mxu0 0.0
    %7795 = vmatprep.subr.mxu0 0.0
    %7796 = vmatpush1.msra.mxu0 0.0
    %7797 = vmatprep.subr.mxu0 0.0
    %7798 = vmatpush1.msra.mxu0 0.0
    %7799 = vmatprep.subr.mxu0 0.0
    %7800 = vmatpush1.msra.mxu0 0.0
    %7801 = vmatprep.subr.mxu0 0.0
    %7802 = vmatpush1.msra.mxu0 0.0
    %7803 = vmatprep.subr.mxu0 0.0
    %7804 = vmatpush1.msra.mxu0 0.0
    %7805 = vmatprep.subr.mxu0 0.0
    %7806 = vmatpush1.msra.mxu0 0.0
    %7807 = vmatprep.subr.mxu0 0.0
    %7808 = vmatpush1.msra.mxu0 0.0
    %7809 = vmatprep.subr.mxu0 0.0
    %7810 = vmatpush1.msra.mxu0 0.0
    %7811 = vmatprep.subr.mxu0 0.0
    %7812 = vmatpush1.msra.mxu0 0.0
    %7813 = vmatprep.subr.mxu0 0.0
    %7814 = vmatpush1.msra.mxu0 0.0
    %7815 = vmatprep.subr.mxu0 0.0
    %7816 = vmatpush1.msra.mxu0 0.0
    %7817 = vmatprep.subr.mxu0 0.0
    %v7818 = vand.u32 %v7541, 4294901760
    %7819 = vmatpush1.msra.mxu0 %v7818
    %7820 = vmatprep.subr.mxu0 0.0
    %v7821 = vand.u32 %v7531, 4294901760
    %7822 = vmatpush1.msra.mxu0 %v7821
    %7823 = vmatprep.subr.mxu0 0.0
    %v7824 = vand.u32 %v7530, 4294901760
    %7825 = vmatpush1.msra.mxu0 %v7824
    %7826 = vmatprep.subr.mxu0 0.0
    %v7827 = vand.u32 %v7529, 4294901760
    %7828 = vmatpush1.msra.mxu0 %v7827
    %7829 = vmatprep.subr.mxu0 0.0
    %7830 = vmatpush2.msra.mxu0 0.0
    %7831 = vmatprep.subr.mxu0 0.0
    %7832 = vmatpush2.msra.mxu0 0.0
    %7833 = vmatprep.subr.mxu0 0.0
    %7834 = vmatpush2.msra.mxu0 0.0
    %7835 = vmatprep.subr.mxu0 0.0
    %7836 = vmatpush2.msra.mxu0 0.0
    %7837 = vmatprep.subr.mxu0 0.0
    %7838 = vmatpush2.msra.mxu0 0.0
    %7839 = vmatprep.subr.mxu0 0.0
    %7840 = vmatpush2.msra.mxu0 0.0
    %7841 = vmatprep.subr.mxu0 0.0
    %7842 = vmatpush2.msra.mxu0 0.0
    %7843 = vmatprep.subr.mxu0 0.0
    %7844 = vmatpush2.msra.mxu0 0.0
    %7845 = vmatprep.subr.mxu0 0.0
    %7846 = vmatpush2.msra.mxu0 0.0
    %7847 = vmatprep.subr.mxu0 0.0
    %7848 = vmatpush2.msra.mxu0 0.0
    %7849 = vmatprep.subr.mxu0 0.0
    %7850 = vmatpush2.msra.mxu0 0.0
    %7851 = vmatprep.subr.mxu0 0.0
    %7852 = vmatpush2.msra.mxu0 0.0
    %7853 = vmatprep.subr.mxu0 0.0
    %7854 = vmatpush2.msra.mxu0 0.0
    %7855 = vmatprep.subr.mxu0 0.0
    %7856 = vmatpush2.msra.mxu0 0.0
    %7857 = vmatprep.subr.mxu0 0.0
    %7858 = vmatpush2.msra.mxu0 0.0
    %7859 = vmatprep.subr.mxu0 0.0
    %7860 = vmatpush2.msra.mxu0 0.0
    %7861 = vmatprep.mubr.f32.mxu0 0.0
    %v7862 = vand.u32 %v7538, 4294901760
    %v7863 = vsub.f32 %v7538, %v7862
    %v7864 = vand.u32 %v7863, 4294901760
    %7865 = vmatmul.mubr.f32.gmra.mxu0 %v7864
    %v7866 = vpop.f32.mrf.mxu0
    %v7867 = vadd.f32 %v7790, %v7866
    %v7868 = vpop.f32.mrf.mxu0
    %7869 = vdwg.mxu0
    %7870 = vmatprep.subr.mxu0 0.0
    %7871 = vmatpush1.msra.mxu0 0.0
    %7872 = vmatprep.subr.mxu0 0.0
    %7873 = vmatpush1.msra.mxu0 0.0
    %7874 = vmatprep.subr.mxu0 0.0
    %7875 = vmatpush1.msra.mxu0 0.0
    %7876 = vmatprep.subr.mxu0 0.0
    %7877 = vmatpush1.msra.mxu0 0.0
    %7878 = vmatprep.subr.mxu0 0.0
    %7879 = vmatpush1.msra.mxu0 0.0
    %7880 = vmatprep.subr.mxu0 0.0
    %7881 = vmatpush1.msra.mxu0 0.0
    %7882 = vmatprep.subr.mxu0 0.0
    %7883 = vmatpush1.msra.mxu0 0.0
    %7884 = vmatprep.subr.mxu0 0.0
    %7885 = vmatpush1.msra.mxu0 0.0
    %7886 = vmatprep.subr.mxu0 0.0
    %7887 = vmatpush1.msra.mxu0 0.0
    %7888 = vmatprep.subr.mxu0 0.0
    %7889 = vmatpush1.msra.mxu0 0.0
    %7890 = vmatprep.subr.mxu0 0.0
    %7891 = vmatpush1.msra.mxu0 0.0
    %7892 = vmatprep.subr.mxu0 0.0
    %7893 = vmatpush1.msra.mxu0 0.0
    %7894 = vmatprep.subr.mxu0 0.0
    %v7895 = vand.u32 %v7541, 4294901760
    %v7896 = vsub.f32 %v7541, %v7895
    %v7897 = vand.u32 %v7896, 4294901760
    %7898 = vmatpush1.msra.mxu0 %v7897
    %7899 = vmatprep.subr.mxu0 0.0
    %v7900 = vand.u32 %v7531, 4294901760
    %v7901 = vsub.f32 %v7531, %v7900
    %v7902 = vand.u32 %v7901, 4294901760
    %7903 = vmatpush1.msra.mxu0 %v7902
    %7904 = vmatprep.subr.mxu0 0.0
    %v7905 = vand.u32 %v7530, 4294901760
    %v7906 = vsub.f32 %v7530, %v7905
    %v7907 = vand.u32 %v7906, 4294901760
    %7908 = vmatpush1.msra.mxu0 %v7907
    %7909 = vmatprep.subr.mxu0 0.0
    %v7910 = vand.u32 %v7529, 4294901760
    %v7911 = vsub.f32 %v7529, %v7910
    %v7912 = vand.u32 %v7911, 4294901760
    %7913 = vmatpush1.msra.mxu0 %v7912
    %7914 = vmatprep.subr.mxu0 0.0
    %7915 = vmatpush2.msra.mxu0 0.0
    %7916 = vmatprep.subr.mxu0 0.0
    %7917 = vmatpush2.msra.mxu0 0.0
    %7918 = vmatprep.subr.mxu0 0.0
    %7919 = vmatpush2.msra.mxu0 0.0
    %7920 = vmatprep.subr.mxu0 0.0
    %7921 = vmatpush2.msra.mxu0 0.0
    %7922 = vmatprep.subr.mxu0 0.0
    %7923 = vmatpush2.msra.mxu0 0.0
    %7924 = vmatprep.subr.mxu0 0.0
    %7925 = vmatpush2.msra.mxu0 0.0
    %7926 = vmatprep.subr.mxu0 0.0
    %7927 = vmatpush2.msra.mxu0 0.0
    %7928 = vmatprep.subr.mxu0 0.0
    %7929 = vmatpush2.msra.mxu0 0.0
    %7930 = vmatprep.subr.mxu0 0.0
    %7931 = vmatpush2.msra.mxu0 0.0
    %7932 = vmatprep.subr.mxu0 0.0
    %7933 = vmatpush2.msra.mxu0 0.0
    %7934 = vmatprep.subr.mxu0 0.0
    %7935 = vmatpush2.msra.mxu0 0.0
    %7936 = vmatprep.subr.mxu0 0.0
    %7937 = vmatpush2.msra.mxu0 0.0
    %7938 = vmatprep.subr.mxu0 0.0
    %7939 = vmatpush2.msra.mxu0 0.0
    %7940 = vmatprep.subr.mxu0 0.0
    %7941 = vmatpush2.msra.mxu0 0.0
    %7942 = vmatprep.subr.mxu0 0.0
    %7943 = vmatpush2.msra.mxu0 0.0
    %7944 = vmatprep.subr.mxu0 0.0
    %7945 = vmatpush2.msra.mxu0 0.0
    %7946 = vmatprep.mubr.f32.mxu0 0.0
    %v7947 = vand.u32 %v7538, 4294901760
    %7948 = vmatmul.mubr.f32.gmra.mxu0 %v7947
    %v7949 = vpop.f32.mrf.mxu0
    %v7950 = vadd.f32 %v7867, %v7949
    %v7951 = vpop.f32.mrf.mxu0
    %7952 = vdwg.mxu0
    %7953 = vmatprep.subr.mxu0 0.0
    %7954 = vmatpush1.msra.mxu0 0.0
    %7955 = vmatprep.subr.mxu0 0.0
    %7956 = vmatpush1.msra.mxu0 0.0
    %7957 = vmatprep.subr.mxu0 0.0
    %7958 = vmatpush1.msra.mxu0 0.0
    %7959 = vmatprep.subr.mxu0 0.0
    %7960 = vmatpush1.msra.mxu0 0.0
    %7961 = vmatprep.subr.mxu0 0.0
    %7962 = vmatpush1.msra.mxu0 0.0
    %7963 = vmatprep.subr.mxu0 0.0
    %7964 = vmatpush1.msra.mxu0 0.0
    %7965 = vmatprep.subr.mxu0 0.0
    %7966 = vmatpush1.msra.mxu0 0.0
    %7967 = vmatprep.subr.mxu0 0.0
    %7968 = vmatpush1.msra.mxu0 0.0
    %7969 = vmatprep.subr.mxu0 0.0
    %7970 = vmatpush1.msra.mxu0 0.0
    %7971 = vmatprep.subr.mxu0 0.0
    %7972 = vmatpush1.msra.mxu0 0.0
    %7973 = vmatprep.subr.mxu0 0.0
    %7974 = vmatpush1.msra.mxu0 0.0
    %7975 = vmatprep.subr.mxu0 0.0
    %7976 = vmatpush1.msra.mxu0 0.0
    %7977 = vmatprep.subr.mxu0 0.0
    %v7978 = vand.u32 %v7541, 4294901760
    %7979 = vmatpush1.msra.mxu0 %v7978
    %7980 = vmatprep.subr.mxu0 0.0
    %v7981 = vand.u32 %v7531, 4294901760
    %7982 = vmatpush1.msra.mxu0 %v7981
    %7983 = vmatprep.subr.mxu0 0.0
    %v7984 = vand.u32 %v7530, 4294901760
    %7985 = vmatpush1.msra.mxu0 %v7984
    %7986 = vmatprep.subr.mxu0 0.0
    %v7987 = vand.u32 %v7529, 4294901760
    %7988 = vmatpush1.msra.mxu0 %v7987
    %7989 = vmatprep.subr.mxu0 0.0
    %7990 = vmatpush2.msra.mxu0 0.0
    %7991 = vmatprep.subr.mxu0 0.0
    %7992 = vmatpush2.msra.mxu0 0.0
    %7993 = vmatprep.subr.mxu0 0.0
    %7994 = vmatpush2.msra.mxu0 0.0
    %7995 = vmatprep.subr.mxu0 0.0
    %7996 = vmatpush2.msra.mxu0 0.0
    %7997 = vmatprep.subr.mxu0 0.0
    %7998 = vmatpush2.msra.mxu0 0.0
    %7999 = vmatprep.subr.mxu0 0.0
    %8000 = vmatpush2.msra.mxu0 0.0
    %8001 = vmatprep.subr.mxu0 0.0
    %8002 = vmatpush2.msra.mxu0 0.0
    %8003 = vmatprep.subr.mxu0 0.0
    %8004 = vmatpush2.msra.mxu0 0.0
    %8005 = vmatprep.subr.mxu0 0.0
    %8006 = vmatpush2.msra.mxu0 0.0
    %8007 = vmatprep.subr.mxu0 0.0
    %8008 = vmatpush2.msra.mxu0 0.0
    %8009 = vmatprep.subr.mxu0 0.0
    %8010 = vmatpush2.msra.mxu0 0.0
    %8011 = vmatprep.subr.mxu0 0.0
    %8012 = vmatpush2.msra.mxu0 0.0
    %8013 = vmatprep.subr.mxu0 0.0
    %8014 = vmatpush2.msra.mxu0 0.0
    %8015 = vmatprep.subr.mxu0 0.0
    %8016 = vmatpush2.msra.mxu0 0.0
    %8017 = vmatprep.subr.mxu0 0.0
    %8018 = vmatpush2.msra.mxu0 0.0
    %8019 = vmatprep.subr.mxu0 0.0
    %8020 = vmatpush2.msra.mxu0 0.0
    %8021 = vmatprep.mubr.f32.mxu0 0.0
    %v8022 = vand.u32 %v7538, 4294901760
    %8023 = vmatmul.mubr.f32.gmra.mxu0 %v8022
    %v8024 = vpop.f32.mrf.mxu0
    %v8025 = vadd.f32 %v7950, %v8024
    %v8026 = vpop.f32.mrf.mxu0
    %8027 = vdwg.mxu0
    %v8028 = vmul.f32 %v8025, -0.8888889
    %v8029 = vmul.f32 %v6462, 0.6
    %s8030 = smul.f32 %s6476, 0.2
    %v8031 = vstv %s8030
    %v8032 = vsub.f32 %v8029, %v8031
    %v8033 = vstv %s6484
    %v8034 = vsub.f32 %v8032, %v8033
    %v8035 = vmul.f32 %v8034, %v8034
    %v8036 = vmul.f32 %v8035, 0.5
    %v8037 = vmul.f32 %v8028, 0.45
    %v8038 = vmul.f32 %v8037, %v8028
    %v8039 = vadd.f32 %v8036, %v8038
    %v8040 = vstv %s6468
    %v8041 = vmul.f32 %v8039, %v8040
    %v8042 = vsub.f32 %v6453, %v8041
    %v8043 = vmul.f32 %v8025, %v6486
    %v8044 = vadd.f32 %v8042, %v8043
    %v8045 = vmul.f32 %v6462, 0.5
    %s8046 = smul.f32 %s6480, 0.3
    %v8047 = vstv %s8046
    %v8048 = vadd.f32 %v8045, %v8047
    %v8049 = vmul.f32 %v8028, 0.8
    %v8050 = vadd.f32 %v8048, %v8049
    %v8051 = vmul.f32 %v8050, %v8040
    %v8052 = vadd.f32 %v6462, %v8051
    %v8053 = vadd.f32 %v8052, %v6486
    %s8054 = scalar_lea.vmem [#allocation12], 32
    %8055 = vst.msk [vmem:[%s8054] sm:$0xff] %vm121, %v8053
    %s8056 = scalar_lea.vmem [#allocation13], 32
    %8057 = vst.msk [vmem:[%s8056] sm:$0xff] %vm121, %v8025
    %8058 = vst.msk [vmem:[#allocation10] sm:$0xff] %vm121, %v8053
    %8059 = vst.msk [vmem:[#allocation9] sm:$0xff] %vm121, %v8044
    // Predicated region
    $region54: #{tpu_custom_call.1} parent=1 // pred_check
      _
    $region55: #{tpu_custom_call.1} parent=1 // pred_check_branch
      %8061 = sbr.rel (0) target = $region57
    $region56: #{tpu_custom_call.1} parent=1 // pred_region
      %s8063 = ssub.s32 128, 128
      %8064 = vsyncadd [#allocation4], %s8063
      %s8066 = sshll.u32 [#allocation9], 4
      %s8067 = int_to_ptr.vmem [resolvable:$true] %s8066
      %8069 = dma.vmem_to_hbm [thread:$0]  %s8067, 128, %s9, [#allocation4]
    $region57: #{tpu_custom_call.1} parent=1 // pred_fallthru
      _
    // Predicated region
    $region58: #{tpu_custom_call.1} parent=1 // pred_check
      _
    $region59: #{tpu_custom_call.1} parent=1 // pred_check_branch
      %8071 = sbr.rel (0) target = $region61
    $region60: #{tpu_custom_call.1} parent=1 // pred_region
      %s8073 = ssub.s32 128, 128
      %8074 = vsyncadd [#allocation11], %s8073
      %s8076 = sshll.u32 [#allocation10], 4
      %s8077 = int_to_ptr.vmem [resolvable:$true] %s8076
      %8079 = dma.vmem_to_hbm [thread:$0]  %s8077, 128, %s10, [#allocation11]
    $region61: #{tpu_custom_call.1} parent=1 // pred_fallthru
      _
    // Predicated region
    $region62: #{tpu_custom_call.1} parent=1 // pred_check
      _
    $region63: #{tpu_custom_call.1} parent=1 // pred_check_branch
      %8081 = sbr.rel (0) target = $region65
    $region64: #{tpu_custom_call.1} parent=1 // pred_region
      %s8083 = ssub.s32 640, 640
      %8084 = vsyncadd [#allocation11], %s8083
      %s8085 = sshll.u32 [#allocation12], 4
      %s8086 = int_to_ptr.vmem [resolvable:$true] %s8085
      %8091 = dma.vmem_to_hbm [thread:$0]  %s8086, 640, %s11, [#allocation11], 128, 128, 8
    $region65: #{tpu_custom_call.1} parent=1 // pred_fallthru
      _
    // Predicated region
    $region66: #{tpu_custom_call.1} parent=1 // pred_check
      _
    $region67: #{tpu_custom_call.1} parent=1 // pred_check_branch
      %8093 = sbr.rel (0) target = $region69
    $region68: #{tpu_custom_call.1} parent=1 // pred_region
      %s8095 = ssub.s32 640, 640
      %8096 = vsyncadd [#allocation14], %s8095
      %s8097 = sshll.u32 [#allocation13], 4
      %s8098 = int_to_ptr.vmem [resolvable:$true] %s8097
      %8103 = dma.vmem_to_hbm [thread:$0]  %s8098, 640, %s12, [#allocation14], 128, 128, 8
    $region69: #{tpu_custom_call.1} parent=1 // pred_fallthru
      _
    // Predicated region
    $region70: #{tpu_custom_call.1} parent=1 // pred_check
      _
    $region71: #{tpu_custom_call.1} parent=1 // pred_check_branch
      %8105 = sbr.rel (0) target = $region73
    $region72: #{tpu_custom_call.1} parent=1 // pred_region
      %8106 = dma.done [#allocation4], 128
    $region73: #{tpu_custom_call.1} parent=1 // pred_fallthru
      _
    // Predicated region
    $region74: #{tpu_custom_call.1} parent=1 // pred_check
      _
    $region75: #{tpu_custom_call.1} parent=1 // pred_check_branch
      %8108 = sbr.rel (0) target = $region77
    $region76: #{tpu_custom_call.1} parent=1 // pred_region
      %8109 = dma.done [#allocation11], 128
    $region77: #{tpu_custom_call.1} parent=1 // pred_fallthru
      _
    // Predicated region
    $region78: #{tpu_custom_call.1} parent=1 // pred_check
      _
    $region79: #{tpu_custom_call.1} parent=1 // pred_check_branch
      %8111 = sbr.rel (0) target = $region81
    $region80: #{tpu_custom_call.1} parent=1 // pred_region
      %8112 = dma.done [#allocation11], 640
    $region81: #{tpu_custom_call.1} parent=1 // pred_fallthru
      _
    // Predicated region
    $region82: #{tpu_custom_call.1} parent=1 // pred_check
      _
    $region83: #{tpu_custom_call.1} parent=1 // pred_check_branch
      %8114 = sbr.rel (0) target = $region85
    $region84: #{tpu_custom_call.1} parent=1 // pred_region
      %8115 = dma.done [#allocation14], 640
    $region85: #{tpu_custom_call.1} parent=1 // pred_fallthru
      _
    %8116 = vsyncpa [#allocation3], 1
    %8117 = vsyncpa [#allocation8], 1
    %8118 = vsyncpa [#allocation4], 1
    %8119 = vsyncpa [#allocation11], 1
    %8120 = vsyncpa [#allocation14], 1
    %8121 = vsyncpa [#allocation5], 1

</llo_original>
